<compile_context>
chip_gen: v6e
topology: v6e:2x2x1
jax: 0.10.0
libtpu: 0.0.40
codegen_flags: <defaults>
</compile_context>

<pallas_src>
import functools

import numpy as np
import jax
import jax.numpy as jnp
from jax import lax
from jax.experimental import pallas as pl
from jax.experimental.pallas import tpu as pltpu


# ----------------------------- model config ---------------------------------
ENCODER_PAIRS = 2          # reduced from the torch default (4) for small shapes
INITIAL_FEATURES = 8       # reduced from 32 for small shapes
FEATURES_EXPANDED = 2
INPUT_CHANNELS = 1
OUTPUT_CHANNELS = 1
KSIZE = 3                  # conv_kern_size
TRANS_K = 2                # trans_kern_size (== stride of transpose conv)
LANES = 128                # TPU vreg lane width


# ----------------------------- parameters -----------------------------------
def _conv_init(key, kh, kw, cin, cout):
    kwk, kbk = jax.random.split(key)
    bound = 1.0 / jnp.sqrt(float(cin * kh * kw))
    w = jax.random.uniform(kwk, (kh, kw, cin, cout), jnp.float32, -bound, bound)
    b = jax.random.uniform(kbk, (cout,), jnp.float32, -bound, bound)
    return w, b


def _tconv_init(key, cin, cout):
    kwk, kbk = jax.random.split(key)
    bound = 1.0 / jnp.sqrt(float(cin * TRANS_K * TRANS_K))
    w = jax.random.uniform(kwk, (cin, TRANS_K, TRANS_K, cout), jnp.float32,
                           -bound, bound)
    b = jax.random.uniform(kbk, (cout,), jnp.float32, -bound, bound)
    return w, b


def init_unet_params(key):
    enc, dec = [], []
    c_in = INPUT_CHANNELS
    for i in range(ENCODER_PAIRS + 1):
        c_out = c_in * (INITIAL_FEATURES if i == 0 else FEATURES_EXPANDED)
        key, k1, k2 = jax.random.split(key, 3)
        enc.append((_conv_init(k1, KSIZE, KSIZE, c_in, c_out),
                    _conv_init(k2, KSIZE, KSIZE, c_out, c_out)))
        c_in = c_out
    for _ in range(ENCODER_PAIRS):
        c_out = c_in // FEATURES_EXPANDED
        key, kt, k1, k2 = jax.random.split(key, 4)
        dec.append((_tconv_init(kt, c_in, c_out),
                    _conv_init(k1, KSIZE, KSIZE, c_in, c_out),   # concat input
                    _conv_init(k2, KSIZE, KSIZE, c_out, c_out)))
        c_in = c_out
    key, kf = jax.random.split(key)
    final = _conv_init(kf, KSIZE, KSIZE, c_in, OUTPUT_CHANNELS)
    return {"encoder": enc, "decoder": dec, "final": final}


# ------------------------- pure-JAX f32 reference ----------------------------
def _conv_ref(x, w, b):
    y = lax.conv_general_dilated(x, w, (1, 1), "SAME",
                                 dimension_numbers=("NHWC", "HWIO", "NHWC"))
    return y + b


def unet_reference(params, x_nchw):
    """Pure-JAX f32 reference of the PyTorch forward pass (for validation)."""
    x = jnp.transpose(x_nchw, (0, 2, 3, 1))
    skips = []
    for i, (c1, c2) in enumerate(params["encoder"]):
        x = jax.nn.relu(_conv_ref(x, *c1))
        x = jax.nn.relu(_conv_ref(x, *c2))
        if i != ENCODER_PAIRS:
            skips.append(x)
            n, h, w, c = x.shape
            x = x.reshape(n, h // 2, 2, w // 2, 2, c).max(axis=(2, 4))
    for j, (tc, c1, c2) in enumerate(params["decoder"]):
        wt, bt = tc
        n, h, w, _ = x.shape
        cout = wt.shape[-1]
        up = jnp.einsum("bhwc,cdeo->bhdweo", x, wt).reshape(n, 2 * h, 2 * w,
                                                            cout) + bt
        # torchvision resized_crop(top=0, left=0, h, w, size=[h, w]) is an
        # identity crop whenever the spatial dims match (always true here).
        skip = skips[ENCODER_PAIRS - 1 - j]
        x = jnp.concatenate([up, skip], axis=-1)     # torch.cat((x, skip), 1)
        x = jax.nn.relu(_conv_ref(x, *c1))
        x = jax.nn.relu(_conv_ref(x, *c2))
    wf, bf = params["final"]
    x = jax.nn.sigmoid(_conv_ref(x, wf, bf))
    return jnp.transpose(x, (0, 3, 1, 2))


# ---------------------- banded-matrix weight packing -------------------------
def _band_from_conv(w, kh, w_out, cin, cout, s_in, k_rows):
    """Banded matrix for one kh tap of a 3x3 'same' conv in [H, W*C] layout.

    Input lane  = (j * s_in) * cin + ci   (s_in=2 for un-compacted pooled data)
    Output lane = wo * cout + co
    The band also implements the zero padding along W.
    """
    m = np.zeros((k_rows, LANES), np.float32)
    wk = np.asarray(w, np.float32)[kh]                  # [3, cin, cout]
    for wo in range(w_out):
        for kw in range(KSIZE):
            j = wo + kw - 1
            if 0 <= j < w_out:
                r0 = j * s_in * cin
                m[r0:r0 + cin, wo * cout:(wo + 1) * cout] = wk[kw]
    return m


def _band_from_tconv(wt, dh, w_in, cin, cout):
    """Block-diagonal matrix producing the dh-parity output rows of a
    ConvTranspose2d(k=2, s=2) in [H, W*C] layout."""
    m = np.zeros((w_in * cin, LANES), np.float32)
    wtn = np.asarray(wt, np.float32)                    # [cin, 2, 2, cout]
    for j in range(w_in):
        for dw in range(TRANS_K):
            c0 = (TRANS_K * j + dw) * cout
            m[j * cin:(j + 1) * cin, c0:c0 + cout] = wtn[:, dh, dw, :]
    return m


def _bias_row(b, w_blocks, cout):
    r = np.zeros((1, LANES), np.float32)
    r[0, :w_blocks * cout] = np.tile(np.asarray(b, np.float32), w_blocks)
    return r


def build_packed_params(params, H, W):
    """Pack every weight/bias into ONE f32 [rows, 128] buffer (banded MXU
    matrices + per-conv bias rows) and return it with a static offset layout.
    Called eagerly (outside jit) on concrete parameter arrays."""
    P = ENCODER_PAIRS
    assert H % (1 << P) == 0 and W % (1 << P) == 0
    chans, c = [], INPUT_CHANNELS
    for i in range(P + 1):
        c = c * (INITIAL_FEATURES if i == 0 else FEATURES_EXPANDED)
        chans.append(c)
    for i in range(P + 1):
        assert (W >> i) * chans[i] <= LANES, "W*C must fit in 128 lanes"
    assert W * INPUT_CHANNELS <= LANES

    blocks, bias_rows = [], []
    row = 0

    def add_blocks(mats):
        nonlocal row
        off = row
        for m in mats:
            blocks.append(m)
            row += m.shape[0]
        return off

    def add_bias(r):
        bias_rows.append(r)
        return len(bias_rows) - 1

    layout = {"enc": [], "dec": [], "H": H, "W": W}

    c_prev = INPUT_CHANNELS
    for i in range(P + 1):
        c_out = chans[i]
        w_i = W >> i
        (w1, b1), (w2, b2) = params["encoder"][i]
        if i == 0:
            s_in, k_a = 1, w_i * c_prev          # compact input (cin = 1)
        else:
            s_in, k_a = 2, 2 * w_i * c_prev      # un-compacted pooled input
        off_a = add_blocks([_band_from_conv(w1, kh, w_i, c_prev, c_out, s_in, k_a)
                            for kh in range(KSIZE)])
        k_b = w_i * c_out
        off_b = add_blocks([_band_from_conv(w2, kh, w_i, c_out, c_out, 1, k_b)
                            for kh in range(KSIZE)])
        layout["enc"].append(dict(
            a=dict(off=off_a, k=k_a, bias=add_bias(_bias_row(b1, w_i, c_out))),
            b=dict(off=off_b, k=k_b, bias=add_bias(_bias_row(b2, w_i, c_out)))))
        c_prev = c_out

    for j in range(P):
        lvl = P - 1 - j                          # spatial level after upsampling
        w_out = W >> lvl
        w_in = w_out // 2
        c_in = chans[lvl + 1]
        c_out = chans[lvl]
        (wt, bt), (w1, b1), (w2, b2) = params["decoder"][j]
        off_t = add_blocks([_band_from_tconv(wt, dh, w_in, c_in, c_out)
                            for dh in range(TRANS_K)])
        w1 = np.asarray(w1, np.float32)          # [3,3, 2*c_out, c_out]
        k_c = w_out * c_out
        off_u = add_blocks([_band_from_conv(w1[:, :, :c_out, :], kh, w_out,
                                            c_out, c_out, 1, k_c)
                            for kh in range(KSIZE)])     # "up" half of concat
        off_s = add_blocks([_band_from_conv(w1[:, :, c_out:, :], kh, w_out,
                                            c_out, c_out, 1, k_c)
                            for kh in range(KSIZE)])     # "skip" half
        off_2 = add_blocks([_band_from_conv(w2, kh, w_out, c_out, c_out, 1, k_c)
                            for kh in range(KSIZE)])
        b1i = add_bias(_bias_row(b1, w_out, c_out))
        layout["dec"].append(dict(
            t=dict(off=off_t, k=w_in * c_in,
                   bias=add_bias(_bias_row(bt, TRANS_K * w_in, c_out))),
            up=dict(off=off_u, k=k_c, bias=b1i),
            sk=dict(off=off_s, k=k_c, bias=b1i),
            b=dict(off=off_2, k=k_c, bias=add_bias(_bias_row(b2, w_out, c_out)))))

    wf, bf = params["final"]
    k_f = W * chans[0]
    off_f = add_blocks([_band_from_conv(wf, kh, W, chans[0], OUTPUT_CHANNELS, 1,
                                        k_f) for kh in range(KSIZE)])
    layout["final"] = dict(off=off_f, k=k_f,
                           bias=add_bias(_bias_row(bf, W, OUTPUT_CHANNELS)),
                           n=W * OUTPUT_CHANNELS)

    layout["bias_base"] = row
    pbuf = np.concatenate(blocks + bias_rows, axis=0)
    pad = (-pbuf.shape[0]) % 8
    if pad:
        pbuf = np.concatenate([pbuf, np.zeros((pad, LANES), np.float32)], axis=0)
    return jnp.asarray(pbuf), layout


# ----------------------------- fused kernel ----------------------------------
def _unet_kernel(x_ref, p_ref, o_ref, *scratch, layout, B, H, W):
    P = ENCODER_PAIRS
    pads = scratch[:P + 1]           # H-padded activation scratch per level
    skips = scratch[P + 1:]          # skip-connection scratch per level
    bias_base = layout["bias_base"]

    # Zero ONLY the two H-border rows of every scratch (W padding is encoded in
    # the banded matrices; interiors are fully overwritten before every read).
    # No program_id guard -> correct under megacore sharding of the batch grid.
    zrow = jnp.zeros((B, 1, LANES), jnp.float32)
    for s in scratch:
        hp = s.shape[1]
        s[:, 0:1, :] = zrow
        s[:, hp - 1:hp, :] = zrow

    def conv_band(src, h, spec, with_bias=True):
        """3x3 'same' conv = 3 banded MXU matmuls (one per kh tap)."""
        off, k = spec["off"], spec["k"]
        acc = None
        for kh in range(KSIZE):
            lhs = src[:, kh:kh + h, :k].reshape(B * h, k)
            rhs = p_ref[off + kh * k: off + (kh + 1) * k, :]
            t = jnp.dot(lhs, rhs, preferred_element_type=jnp.float32)
            acc = t if acc is None else acc + t
        if with_bias:
            bi = bias_base + spec["bias"]
            acc = acc + p_ref[bi:bi + 1, :]
        return acc                                        # [B*h, 128] f32

    chans, c = [], INPUT_CHANNELS
    for i in range(P + 1):
        c = c * (INITIAL_FEATURES if i == 0 else FEATURES_EXPANDED)
        chans.append(c)

    # ------------------------------ input ------------------------------------
    # x block is (B, H, W): W on lanes == the level-0 (Cin=1) lane layout.
    pads[0][:, 1:H + 1, :W * INPUT_CHANNELS] = x_ref[...]

    # ------------------------------ encoder ----------------------------------
    x_val = None
    for i in range(P + 1):
        h_i = H >> i
        ei = layout["enc"][i]
        y = jnp.maximum(conv_band(pads[i], h_i, ei["a"]), 0.0)
        pads[i][:, 1:h_i + 1, :] = y.reshape(B, h_i, LANES)
        y = jnp.maximum(conv_band(pads[i], h_i, ei["b"]), 0.0)
        if i == P:
            x_val = y                                     # bottleneck output
        else:
            y3 = y.reshape(B, h_i, LANES)
            skips[i][:, 1:h_i + 1, :] = y3                # save skip connection
            # Fused 2x2 max-pool: one lane shift for the horizontal pairs, then
            # row-pair maxima straight into the next level's padded scratch.
            # The result stays "un-compacted" (odd w-blocks unread downstream).
            c_i = chans[i]
            shifted = jnp.concatenate(
                [y3[:, :, c_i:], jnp.zeros((B, h_i, c_i), jnp.float32)], axis=-1)
            wmax = jnp.maximum(y3, shifted)
            for r in range(h_i // 2):
                pads[i + 1][:, 1 + r:2 + r, :] = jnp.maximum(
                    wmax[:, 2 * r:2 * r + 1, :], wmax[:, 2 * r + 1:2 * r + 2, :])

    # ------------------------------ decoder ----------------------------------
    for j in range(P):
        lvl = P - 1 - j
        h_in = H >> (lvl + 1)
        h_out = H >> lvl
        dj = layout["dec"][j]
        # ConvTranspose2d(k=2, s=2): one block-diagonal matmul per output-row
        # parity, written straight into the next conv's padded scratch.
        toff, tk, tb = dj["t"]["off"], dj["t"]["k"], dj["t"]["bias"]
        trow = p_ref[bias_base + tb: bias_base + tb + 1, :]
        for dh in range(TRANS_K):
            rhs = p_ref[toff + dh * tk: toff + (dh + 1) * tk, :]
            u = (jnp.dot(x_val, rhs, preferred_element_type=jnp.float32)
                 + trow).reshape(B, h_in, LANES)
            for r in range(h_in):
                rr = 1 + TRANS_K * r + dh
                pads[lvl][:, rr:rr + 1, :] = u[:, r:r + 1, :]
        # conv(concat([up, skip])) fused as split-K: conv_up(up)+conv_skip(skip)
        acc = conv_band(pads[lvl], h_out, dj["up"])
        acc = acc + conv_band(skips[lvl], h_out, dj["sk"], with_bias=False)
        y = jnp.maximum(acc, 0.0)
        pads[lvl][:, 1:h_out + 1, :] = y.reshape(B, h_out, LANES)
        x_val = jnp.maximum(conv_band(pads[lvl], h_out, dj["b"]), 0.0)

    # --------------------- final 3x3 conv (Cout=1) + sigmoid -----------------
    pads[0][:, 1:H + 1, :] = x_val.reshape(B, H, LANES)
    lf = layout["final"]
    logits = conv_band(pads[0], H, lf)                    # [B*H, 128]
    out = jax.nn.sigmoid(logits[:, :lf["n"]])             # [B*H, W]
    o_ref[...] = out.reshape(B, H, W)


# ----------------------------- forward wrapper --------------------------------
def unet_forward(pbuf, x_nchw, *, layout, batch_block=None):
    N, C, H, W = x_nchw.shape
    assert C == INPUT_CHANNELS and OUTPUT_CHANNELS == 1
    assert H == layout["H"] and W == layout["W"]
    B = N if batch_block is None else batch_block
    assert N % B == 0
    P = ENCODER_PAIRS

    x = x_nchw.reshape(N, H, W)                   # drop the size-1 channel dim
    kern = functools.partial(_unet_kernel, layout=layout, B=B, H=H, W=W)
    scratch = [pltpu.VMEM((B, (H >> l) + 2, LANES), jnp.float32)
               for l in range(P + 1)]             # per-level padded activations
    scratch += [pltpu.VMEM((B, (H >> l) + 2, LANES), jnp.float32)
                for l in range(P)]                # per-level skip connections

    out = pl.pallas_call(
        kern,
        out_shape=jax.ShapeDtypeStruct((N, H, W), jnp.float32),
        grid=(N // B,),
        in_specs=[pl.BlockSpec((B, H, W), lambda n: (n, 0, 0)),
                  # single packed param buffer, constant index map -> one DMA
                  pl.BlockSpec(pbuf.shape, lambda n: (0, 0))],
        out_specs=pl.BlockSpec((B, H, W), lambda n: (n, 0, 0)),
        scratch_shapes=scratch,
        compiler_params=pltpu.CompilerParams(
            dimension_semantics=("parallel",)),   # v7x: batch blocks across TCs
    )(x, pbuf)
    return out[:, None, :, :]                     # (N, H, W) -> NCHW


# ----------------------------------- main -------------------------------------
if __name__ == "__main__":
    key = jax.random.PRNGKey(0)
    pkey, xkey = jax.random.split(key)
    params = init_unet_params(pkey)

    N, H, W = 4, 16, 16
    x = jax.random.normal(xkey, (N, INPUT_CHANNELS, H, W), jnp.float32)

    pbuf, layout = build_packed_params(params, H, W)
    fwd = jax.jit(functools.partial(unet_forward, layout=layout, batch_block=2))
    out = jax.block_until_ready(fwd(pbuf, x))

    assert out.shape == (N, OUTPUT_CHANNELS, H, W), out.shape
    assert bool(jnp.all(jnp.isfinite(out)))
    assert bool(jnp.all((out >= 0.0) & (out <= 1.0)))     # sigmoid output range

    # Numerics check against the pure-JAX f32 reference (loose enough to cover
    # MXU / XLA-conv precision-mode differences, tight enough to catch bugs).
    ref = jax.block_until_ready(unet_reference(params, x))
    max_err = float(jnp.max(jnp.abs(out - ref)))
    assert max_err < 2e-2, f"kernel deviates from f32 reference: {max_err}"
    print("KERNEL_OK")
</pallas_src>

<mosaic_0001>
module attributes {stable_mosaic.version = 11 : i64} {
  func.func @_unet_kernel(%arg0: i32, %arg1: memref<2x16x16xf32, #tpu.memory_space<vmem>>, %arg2: memref<5184x128xf32, #tpu.memory_space<vmem>>, %arg3: memref<2x16x16xf32, #tpu.memory_space<vmem>>, %arg4: memref<2x18x128xf32, #tpu.memory_space<vmem>>, %arg5: memref<2x10x128xf32, #tpu.memory_space<vmem>>, %arg6: memref<2x6x128xf32, #tpu.memory_space<vmem>>, %arg7: memref<2x18x128xf32, #tpu.memory_space<vmem>>, %arg8: memref<2x10x128xf32, #tpu.memory_space<vmem>>) attributes {dimension_semantics = [#tpu.dimension_semantics<parallel>], iteration_bounds = array<i64: 2>, scalar_prefetch = 0 : i64, scratch_operands = 5 : i64, tpu.core_type = #tpu.core_type<tc>, window_params = [{transform_indices = @transform_0, window_bounds = array<i64: 2, 16, 16>}, {pipeline_mode = #tpu.pipeline_mode<synchronous>, transform_indices = @transform_1, window_bounds = array<i64: 5184, 128>}, {transform_indices = @transform_2, window_bounds = array<i64: 2, 16, 16>}]} {
    %cst = arith.constant 0.000000e+00 : f32
    %0 = vector.broadcast %cst : f32 to vector<2x1x128xf32>
    %c0 = arith.constant 0 : index
    %c0_0 = arith.constant 0 : index
    %c0_1 = arith.constant 0 : index
    %1 = vector.load %arg4[%c0, %c0_0, %c0_1] : memref<2x18x128xf32, #tpu.memory_space<vmem>>, vector<2x1x128xf32>
    tpu.vector_store %arg4[%c0, %c0_0, %c0_1], %0 {strides = array<i32>} : memref<2x18x128xf32, #tpu.memory_space<vmem>>, vector<2x1x128xf32>,
    %c0_2 = arith.constant 0 : index
    %c17 = arith.constant 17 : index
    %c0_3 = arith.constant 0 : index
    %2 = vector.load %arg4[%c0_2, %c17, %c0_3] : memref<2x18x128xf32, #tpu.memory_space<vmem>>, vector<2x1x128xf32>
    tpu.vector_store %arg4[%c0_2, %c17, %c0_3], %0 {strides = array<i32>} : memref<2x18x128xf32, #tpu.memory_space<vmem>>, vector<2x1x128xf32>,
    %c0_4 = arith.constant 0 : index
    %c0_5 = arith.constant 0 : index
    %c0_6 = arith.constant 0 : index
    %3 = vector.load %arg5[%c0_4, %c0_5, %c0_6] : memref<2x10x128xf32, #tpu.memory_space<vmem>>, vector<2x1x128xf32>
    tpu.vector_store %arg5[%c0_4, %c0_5, %c0_6], %0 {strides = array<i32>} : memref<2x10x128xf32, #tpu.memory_space<vmem>>, vector<2x1x128xf32>,
    %c0_7 = arith.constant 0 : index
    %c9 = arith.constant 9 : index
    %c0_8 = arith.constant 0 : index
    %4 = vector.load %arg5[%c0_7, %c9, %c0_8] : memref<2x10x128xf32, #tpu.memory_space<vmem>>, vector<2x1x128xf32>
    tpu.vector_store %arg5[%c0_7, %c9, %c0_8], %0 {strides = array<i32>} : memref<2x10x128xf32, #tpu.memory_space<vmem>>, vector<2x1x128xf32>,
    %c0_9 = arith.constant 0 : index
    %c0_10 = arith.constant 0 : index
    %c0_11 = arith.constant 0 : index
    %5 = vector.load %arg6[%c0_9, %c0_10, %c0_11] : memref<2x6x128xf32, #tpu.memory_space<vmem>>, vector<2x1x128xf32>
    tpu.vector_store %arg6[%c0_9, %c0_10, %c0_11], %0 {strides = array<i32>} : memref<2x6x128xf32, #tpu.memory_space<vmem>>, vector<2x1x128xf32>,
    %c0_12 = arith.constant 0 : index
    %c5 = arith.constant 5 : index
    %c0_13 = arith.constant 0 : index
    %6 = vector.load %arg6[%c0_12, %c5, %c0_13] : memref<2x6x128xf32, #tpu.memory_space<vmem>>, vector<2x1x128xf32>
    tpu.vector_store %arg6[%c0_12, %c5, %c0_13], %0 {strides = array<i32>} : memref<2x6x128xf32, #tpu.memory_space<vmem>>, vector<2x1x128xf32>,
    %c0_14 = arith.constant 0 : index
    %c0_15 = arith.constant 0 : index
    %c0_16 = arith.constant 0 : index
    %7 = vector.load %arg7[%c0_14, %c0_15, %c0_16] : memref<2x18x128xf32, #tpu.memory_space<vmem>>, vector<2x1x128xf32>
    tpu.vector_store %arg7[%c0_14, %c0_15, %c0_16], %0 {strides = array<i32>} : memref<2x18x128xf32, #tpu.memory_space<vmem>>, vector<2x1x128xf32>,
    %c0_17 = arith.constant 0 : index
    %c17_18 = arith.constant 17 : index
    %c0_19 = arith.constant 0 : index
    %8 = vector.load %arg7[%c0_17, %c17_18, %c0_19] : memref<2x18x128xf32, #tpu.memory_space<vmem>>, vector<2x1x128xf32>
    tpu.vector_store %arg7[%c0_17, %c17_18, %c0_19], %0 {strides = array<i32>} : memref<2x18x128xf32, #tpu.memory_space<vmem>>, vector<2x1x128xf32>,
    %c0_20 = arith.constant 0 : index
    %c0_21 = arith.constant 0 : index
    %c0_22 = arith.constant 0 : index
    %9 = vector.load %arg8[%c0_20, %c0_21, %c0_22] : memref<2x10x128xf32, #tpu.memory_space<vmem>>, vector<2x1x128xf32>
    tpu.vector_store %arg8[%c0_20, %c0_21, %c0_22], %0 {strides = array<i32>} : memref<2x10x128xf32, #tpu.memory_space<vmem>>, vector<2x1x128xf32>,
    %c0_23 = arith.constant 0 : index
    %c9_24 = arith.constant 9 : index
    %c0_25 = arith.constant 0 : index
    %10 = vector.load %arg8[%c0_23, %c9_24, %c0_25] : memref<2x10x128xf32, #tpu.memory_space<vmem>>, vector<2x1x128xf32>
    tpu.vector_store %arg8[%c0_23, %c9_24, %c0_25], %0 {strides = array<i32>} : memref<2x10x128xf32, #tpu.memory_space<vmem>>, vector<2x1x128xf32>,
    %c0_26 = arith.constant 0 : index
    %c0_27 = arith.constant 0 : index
    %c0_28 = arith.constant 0 : index
    %11 = vector.load %arg1[%c0_26, %c0_27, %c0_28] : memref<2x16x16xf32, #tpu.memory_space<vmem>>, vector<2x16x16xf32>
    %c0_29 = arith.constant 0 : index
    %c1 = arith.constant 1 : index
    %c0_30 = arith.constant 0 : index
    %12 = vector.load %arg4[%c0_29, %c1, %c0_30] : memref<2x18x128xf32, #tpu.memory_space<vmem>>, vector<2x16x16xf32>
    tpu.vector_store %arg4[%c0_29, %c1, %c0_30], %11 {strides = array<i32>} : memref<2x18x128xf32, #tpu.memory_space<vmem>>, vector<2x16x16xf32>,
    %c0_31 = arith.constant 0 : index
    %c0_32 = arith.constant 0 : index
    %c0_33 = arith.constant 0 : index
    %13 = vector.load %arg4[%c0_31, %c0_32, %c0_33] : memref<2x18x128xf32, #tpu.memory_space<vmem>>, vector<2x16x16xf32>
    %14 = vector.shape_cast %13 : vector<2x16x16xf32> to vector<32x16xf32>
    %c0_34 = arith.constant 0 : index
    %c0_35 = arith.constant 0 : index
    %15 = vector.load %arg2[%c0_34, %c0_35] : memref<5184x128xf32, #tpu.memory_space<vmem>>, vector<16x128xf32>
    %cst_36 = arith.constant dense<0.000000e+00> : vector<32x128xf32>
    %16 = tpu.matmul %14, %15, %cst_36 {dimension_numbers = #tpu.dot_dimension_numbers<[1], [0], [0], [1], [0, 0, 1, 1], [], []>} : vector<32x16xf32>, vector<16x128xf32>, vector<32x128xf32> -> vector<32x128xf32>
    %c0_37 = arith.constant 0 : index
    %c1_38 = arith.constant 1 : index
    %c0_39 = arith.constant 0 : index
    %17 = vector.load %arg4[%c0_37, %c1_38, %c0_39] : memref<2x18x128xf32, #tpu.memory_space<vmem>>, vector<2x16x16xf32>
    %18 = vector.shape_cast %17 : vector<2x16x16xf32> to vector<32x16xf32>
    %c16 = arith.constant 16 : index
    %c0_40 = arith.constant 0 : index
    %19 = vector.load %arg2[%c16, %c0_40] : memref<5184x128xf32, #tpu.memory_space<vmem>>, vector<16x128xf32>
    %cst_41 = arith.constant dense<0.000000e+00> : vector<32x128xf32>
    %20 = tpu.matmul %18, %19, %cst_41 {dimension_numbers = #tpu.dot_dimension_numbers<[1], [0], [0], [1], [0, 0, 1, 1], [], []>} : vector<32x16xf32>, vector<16x128xf32>, vector<32x128xf32> -> vector<32x128xf32>
    %21 = arith.addf %16, %20 : vector<32x128xf32>
    %c0_42 = arith.constant 0 : index
    %c2 = arith.constant 2 : index
    %c0_43 = arith.constant 0 : index
    %22 = vector.load %arg4[%c0_42, %c2, %c0_43] : memref<2x18x128xf32, #tpu.memory_space<vmem>>, vector<2x16x16xf32>
    %23 = vector.shape_cast %22 : vector<2x16x16xf32> to vector<32x16xf32>
    %c32 = arith.constant 32 : index
    %c0_44 = arith.constant 0 : index
    %24 = vector.load %arg2[%c32, %c0_44] : memref<5184x128xf32, #tpu.memory_space<vmem>>, vector<16x128xf32>
    %cst_45 = arith.constant dense<0.000000e+00> : vector<32x128xf32>
    %25 = tpu.matmul %23, %24, %cst_45 {dimension_numbers = #tpu.dot_dimension_numbers<[1], [0], [0], [1], [0, 0, 1, 1], [], []>} : vector<32x16xf32>, vector<16x128xf32>, vector<32x128xf32> -> vector<32x128xf32>
    %26 = arith.addf %21, %25 : vector<32x128xf32>
    %c5168 = arith.constant 5168 : index
    %c0_46 = arith.constant 0 : index
    %27 = vector.load %arg2[%c5168, %c0_46] : memref<5184x128xf32, #tpu.memory_space<vmem>>, vector<1x128xf32>
    %28 = vector.broadcast %27 : vector<1x128xf32> to vector<32x128xf32>
    %29 = arith.addf %26, %28 : vector<32x128xf32>
    %cst_47 = arith.constant 0.000000e+00 : f32
    %30 = vector.broadcast %cst_47 : f32 to vector<32x128xf32>
    %31 = arith.maximumf %29, %30 : vector<32x128xf32>
    %32 = vector.shape_cast %31 : vector<32x128xf32> to vector<2x16x128xf32>
    %c0_48 = arith.constant 0 : index
    %c1_49 = arith.constant 1 : index
    %c0_50 = arith.constant 0 : index
    %33 = vector.load %arg4[%c0_48, %c1_49, %c0_50] : memref<2x18x128xf32, #tpu.memory_space<vmem>>, vector<2x16x128xf32>
    tpu.vector_store %arg4[%c0_48, %c1_49, %c0_50], %32 {strides = array<i32>} : memref<2x18x128xf32, #tpu.memory_space<vmem>>, vector<2x16x128xf32>,
    %c0_51 = arith.constant 0 : index
    %c0_52 = arith.constant 0 : index
    %c0_53 = arith.constant 0 : index
    %34 = vector.load %arg4[%c0_51, %c0_52, %c0_53] : memref<2x18x128xf32, #tpu.memory_space<vmem>>, vector<2x16x128xf32>
    %35 = vector.shape_cast %34 : vector<2x16x128xf32> to vector<32x128xf32>
    %c48 = arith.constant 48 : index
    %c0_54 = arith.constant 0 : index
    %36 = vector.load %arg2[%c48, %c0_54] : memref<5184x128xf32, #tpu.memory_space<vmem>>, vector<128x128xf32>
    %cst_55 = arith.constant dense<0.000000e+00> : vector<32x128xf32>
    %37 = tpu.matmul %35, %36, %cst_55 {dimension_numbers = #tpu.dot_dimension_numbers<[1], [0], [0], [1], [0, 0, 1, 1], [], []>} : vector<32x128xf32>, vector<128x128xf32>, vector<32x128xf32> -> vector<32x128xf32>
    %c0_56 = arith.constant 0 : index
    %c1_57 = arith.constant 1 : index
    %c0_58 = arith.constant 0 : index
    %38 = vector.load %arg4[%c0_56, %c1_57, %c0_58] : memref<2x18x128xf32, #tpu.memory_space<vmem>>, vector<2x16x128xf32>
    %39 = vector.shape_cast %38 : vector<2x16x128xf32> to vector<32x128xf32>
    %c176 = arith.constant 176 : index
    %c0_59 = arith.constant 0 : index
    %40 = vector.load %arg2[%c176, %c0_59] : memref<5184x128xf32, #tpu.memory_space<vmem>>, vector<128x128xf32>
    %cst_60 = arith.constant dense<0.000000e+00> : vector<32x128xf32>
    %41 = tpu.matmul %39, %40, %cst_60 {dimension_numbers = #tpu.dot_dimension_numbers<[1], [0], [0], [1], [0, 0, 1, 1], [], []>} : vector<32x128xf32>, vector<128x128xf32>, vector<32x128xf32> -> vector<32x128xf32>
    %42 = arith.addf %37, %41 : vector<32x128xf32>
    %c0_61 = arith.constant 0 : index
    %c2_62 = arith.constant 2 : index
    %c0_63 = arith.constant 0 : index
    %43 = vector.load %arg4[%c0_61, %c2_62, %c0_63] : memref<2x18x128xf32, #tpu.memory_space<vmem>>, vector<2x16x128xf32>
    %44 = vector.shape_cast %43 : vector<2x16x128xf32> to vector<32x128xf32>
    %c304 = arith.constant 304 : index
    %c0_64 = arith.constant 0 : index
    %45 = vector.load %arg2[%c304, %c0_64] : memref<5184x128xf32, #tpu.memory_space<vmem>>, vector<128x128xf32>
    %cst_65 = arith.constant dense<0.000000e+00> : vector<32x128xf32>
    %46 = tpu.matmul %44, %45, %cst_65 {dimension_numbers = #tpu.dot_dimension_numbers<[1], [0], [0], [1], [0, 0, 1, 1], [], []>} : vector<32x128xf32>, vector<128x128xf32>, vector<32x128xf32> -> vector<32x128xf32>
    %47 = arith.addf %42, %46 : vector<32x128xf32>
    %c5169 = arith.constant 5169 : index
    %c0_66 = arith.constant 0 : index
    %48 = vector.load %arg2[%c5169, %c0_66] : memref<5184x128xf32, #tpu.memory_space<vmem>>, vector<1x128xf32>
    %49 = vector.broadcast %48 : vector<1x128xf32> to vector<32x128xf32>
    %50 = arith.addf %47, %49 : vector<32x128xf32>
    %cst_67 = arith.constant 0.000000e+00 : f32
    %51 = vector.broadcast %cst_67 : f32 to vector<32x128xf32>
    %52 = arith.maximumf %50, %51 : vector<32x128xf32>
    %53 = vector.shape_cast %52 : vector<32x128xf32> to vector<2x16x128xf32>
    %c0_68 = arith.constant 0 : index
    %c1_69 = arith.constant 1 : index
    %c0_70 = arith.constant 0 : index
    %54 = vector.load %arg7[%c0_68, %c1_69, %c0_70] : memref<2x18x128xf32, #tpu.memory_space<vmem>>, vector<2x16x128xf32>
    tpu.vector_store %arg7[%c0_68, %c1_69, %c0_70], %53 {strides = array<i32>} : memref<2x18x128xf32, #tpu.memory_space<vmem>>, vector<2x16x128xf32>,
    %55 = vector.extract_strided_slice %53 {offsets = [0, 0, 8], sizes = [2, 16, 120], strides = [1, 1, 1]} : vector<2x16x128xf32> to vector<2x16x120xf32>
    %cst_71 = arith.constant 0.000000e+00 : f32
    %56 = vector.broadcast %cst_71 : f32 to vector<2x16x8xf32>
    %57 = tpu.concatenate %55, %56 in 2 : vector<2x16x120xf32>, vector<2x16x8xf32> -> vector<2x16x128xf32>
    %58 = arith.maximumf %53, %57 : vector<2x16x128xf32>
    %59 = vector.extract_strided_slice %58 {offsets = [0, 0, 0], sizes = [2, 1, 128], strides = [1, 1, 1]} : vector<2x16x128xf32> to vector<2x1x128xf32>
    %60 = vector.extract_strided_slice %58 {offsets = [0, 1, 0], sizes = [2, 1, 128], strides = [1, 1, 1]} : vector<2x16x128xf32> to vector<2x1x128xf32>
    %61 = arith.maximumf %59, %60 : vector<2x1x128xf32>
    %c0_72 = arith.constant 0 : index
    %c1_73 = arith.constant 1 : index
    %c0_74 = arith.constant 0 : index
    %62 = vector.load %arg5[%c0_72, %c1_73, %c0_74] : memref<2x10x128xf32, #tpu.memory_space<vmem>>, vector<2x1x128xf32>
    tpu.vector_store %arg5[%c0_72, %c1_73, %c0_74], %61 {strides = array<i32>} : memref<2x10x128xf32, #tpu.memory_space<vmem>>, vector<2x1x128xf32>,
    %63 = vector.extract_strided_slice %58 {offsets = [0, 2, 0], sizes = [2, 1, 128], strides = [1, 1, 1]} : vector<2x16x128xf32> to vector<2x1x128xf32>
    %64 = vector.extract_strided_slice %58 {offsets = [0, 3, 0], sizes = [2, 1, 128], strides = [1, 1, 1]} : vector<2x16x128xf32> to vector<2x1x128xf32>
    %65 = arith.maximumf %63, %64 : vector<2x1x128xf32>
    %c0_75 = arith.constant 0 : index
    %c2_76 = arith.constant 2 : index
    %c0_77 = arith.constant 0 : index
    %66 = vector.load %arg5[%c0_75, %c2_76, %c0_77] : memref<2x10x128xf32, #tpu.memory_space<vmem>>, vector<2x1x128xf32>
    tpu.vector_store %arg5[%c0_75, %c2_76, %c0_77], %65 {strides = array<i32>} : memref<2x10x128xf32, #tpu.memory_space<vmem>>, vector<2x1x128xf32>,
    %67 = vector.extract_strided_slice %58 {offsets = [0, 4, 0], sizes = [2, 1, 128], strides = [1, 1, 1]} : vector<2x16x128xf32> to vector<2x1x128xf32>
    %68 = vector.extract_strided_slice %58 {offsets = [0, 5, 0], sizes = [2, 1, 128], strides = [1, 1, 1]} : vector<2x16x128xf32> to vector<2x1x128xf32>
    %69 = arith.maximumf %67, %68 : vector<2x1x128xf32>
    %c0_78 = arith.constant 0 : index
    %c3 = arith.constant 3 : index
    %c0_79 = arith.constant 0 : index
    %70 = vector.load %arg5[%c0_78, %c3, %c0_79] : memref<2x10x128xf32, #tpu.memory_space<vmem>>, vector<2x1x128xf32>
    tpu.vector_store %arg5[%c0_78, %c3, %c0_79], %69 {strides = array<i32>} : memref<2x10x128xf32, #tpu.memory_space<vmem>>, vector<2x1x128xf32>,
    %71 = vector.extract_strided_slice %58 {offsets = [0, 6, 0], sizes = [2, 1, 128], strides = [1, 1, 1]} : vector<2x16x128xf32> to vector<2x1x128xf32>
    %72 = vector.extract_strided_slice %58 {offsets = [0, 7, 0], sizes = [2, 1, 128], strides = [1, 1, 1]} : vector<2x16x128xf32> to vector<2x1x128xf32>
    %73 = arith.maximumf %71, %72 : vector<2x1x128xf32>
    %c0_80 = arith.constant 0 : index
    %c4 = arith.constant 4 : index
    %c0_81 = arith.constant 0 : index
    %74 = vector.load %arg5[%c0_80, %c4, %c0_81] : memref<2x10x128xf32, #tpu.memory_space<vmem>>, vector<2x1x128xf32>
    tpu.vector_store %arg5[%c0_80, %c4, %c0_81], %73 {strides = array<i32>} : memref<2x10x128xf32, #tpu.memory_space<vmem>>, vector<2x1x128xf32>,
    %75 = vector.extract_strided_slice %58 {offsets = [0, 8, 0], sizes = [2, 1, 128], strides = [1, 1, 1]} : vector<2x16x128xf32> to vector<2x1x128xf32>
    %76 = vector.extract_strided_slice %58 {offsets = [0, 9, 0], sizes = [2, 1, 128], strides = [1, 1, 1]} : vector<2x16x128xf32> to vector<2x1x128xf32>
    %77 = arith.maximumf %75, %76 : vector<2x1x128xf32>
    %c0_82 = arith.constant 0 : index
    %c5_83 = arith.constant 5 : index
    %c0_84 = arith.constant 0 : index
    %78 = vector.load %arg5[%c0_82, %c5_83, %c0_84] : memref<2x10x128xf32, #tpu.memory_space<vmem>>, vector<2x1x128xf32>
    tpu.vector_store %arg5[%c0_82, %c5_83, %c0_84], %77 {strides = array<i32>} : memref<2x10x128xf32, #tpu.memory_space<vmem>>, vector<2x1x128xf32>,
    %79 = vector.extract_strided_slice %58 {offsets = [0, 10, 0], sizes = [2, 1, 128], strides = [1, 1, 1]} : vector<2x16x128xf32> to vector<2x1x128xf32>
    %80 = vector.extract_strided_slice %58 {offsets = [0, 11, 0], sizes = [2, 1, 128], strides = [1, 1, 1]} : vector<2x16x128xf32> to vector<2x1x128xf32>
    %81 = arith.maximumf %79, %80 : vector<2x1x128xf32>
    %c0_85 = arith.constant 0 : index
    %c6 = arith.constant 6 : index
    %c0_86 = arith.constant 0 : index
    %82 = vector.load %arg5[%c0_85, %c6, %c0_86] : memref<2x10x128xf32, #tpu.memory_space<vmem>>, vector<2x1x128xf32>
    tpu.vector_store %arg5[%c0_85, %c6, %c0_86], %81 {strides = array<i32>} : memref<2x10x128xf32, #tpu.memory_space<vmem>>, vector<2x1x128xf32>,
    %83 = vector.extract_strided_slice %58 {offsets = [0, 12, 0], sizes = [2, 1, 128], strides = [1, 1, 1]} : vector<2x16x128xf32> to vector<2x1x128xf32>
    %84 = vector.extract_strided_slice %58 {offsets = [0, 13, 0], sizes = [2, 1, 128], strides = [1, 1, 1]} : vector<2x16x128xf32> to vector<2x1x128xf32>
    %85 = arith.maximumf %83, %84 : vector<2x1x128xf32>
    %c0_87 = arith.constant 0 : index
    %c7 = arith.constant 7 : index
    %c0_88 = arith.constant 0 : index
    %86 = vector.load %arg5[%c0_87, %c7, %c0_88] : memref<2x10x128xf32, #tpu.memory_space<vmem>>, vector<2x1x128xf32>
    tpu.vector_store %arg5[%c0_87, %c7, %c0_88], %85 {strides = array<i32>} : memref<2x10x128xf32, #tpu.memory_space<vmem>>, vector<2x1x128xf32>,
    %87 = vector.extract_strided_slice %58 {offsets = [0, 14, 0], sizes = [2, 1, 128], strides = [1, 1, 1]} : vector<2x16x128xf32> to vector<2x1x128xf32>
    %88 = vector.extract_strided_slice %58 {offsets = [0, 15, 0], sizes = [2, 1, 128], strides = [1, 1, 1]} : vector<2x16x128xf32> to vector<2x1x128xf32>
    %89 = arith.maximumf %87, %88 : vector<2x1x128xf32>
    %c0_89 = arith.constant 0 : index
    %c8 = arith.constant 8 : index
    %c0_90 = arith.constant 0 : index
    %90 = vector.load %arg5[%c0_89, %c8, %c0_90] : memref<2x10x128xf32, #tpu.memory_space<vmem>>, vector<2x1x128xf32>
    tpu.vector_store %arg5[%c0_89, %c8, %c0_90], %89 {strides = array<i32>} : memref<2x10x128xf32, #tpu.memory_space<vmem>>, vector<2x1x128xf32>,
    %c0_91 = arith.constant 0 : index
    %c0_92 = arith.constant 0 : index
    %c0_93 = arith.constant 0 : index
    %91 = vector.load %arg5[%c0_91, %c0_92, %c0_93] : memref<2x10x128xf32, #tpu.memory_space<vmem>>, vector<2x8x128xf32>
    %92 = vector.shape_cast %91 : vector<2x8x128xf32> to vector<16x128xf32>
    %c432 = arith.constant 432 : index
    %c0_94 = arith.constant 0 : index
    %93 = vector.load %arg2[%c432, %c0_94] : memref<5184x128xf32, #tpu.memory_space<vmem>>, vector<128x128xf32>
    %cst_95 = arith.constant dense<0.000000e+00> : vector<16x128xf32>
    %94 = tpu.matmul %92, %93, %cst_95 {dimension_numbers = #tpu.dot_dimension_numbers<[1], [0], [0], [1], [0, 0, 1, 1], [], []>} : vector<16x128xf32>, vector<128x128xf32>, vector<16x128xf32> -> vector<16x128xf32>
    %c0_96 = arith.constant 0 : index
    %c1_97 = arith.constant 1 : index
    %c0_98 = arith.constant 0 : index
    %95 = vector.load %arg5[%c0_96, %c1_97, %c0_98] : memref<2x10x128xf32, #tpu.memory_space<vmem>>, vector<2x8x128xf32>
    %96 = vector.shape_cast %95 : vector<2x8x128xf32> to vector<16x128xf32>
    %c560 = arith.constant 560 : index
    %c0_99 = arith.constant 0 : index
    %97 = vector.load %arg2[%c560, %c0_99] : memref<5184x128xf32, #tpu.memory_space<vmem>>, vector<128x128xf32>
    %cst_100 = arith.constant dense<0.000000e+00> : vector<16x128xf32>
    %98 = tpu.matmul %96, %97, %cst_100 {dimension_numbers = #tpu.dot_dimension_numbers<[1], [0], [0], [1], [0, 0, 1, 1], [], []>} : vector<16x128xf32>, vector<128x128xf32>, vector<16x128xf32> -> vector<16x128xf32>
    %99 = arith.addf %94, %98 : vector<16x128xf32>
    %c0_101 = arith.constant 0 : index
    %c2_102 = arith.constant 2 : index
    %c0_103 = arith.constant 0 : index
    %100 = vector.load %arg5[%c0_101, %c2_102, %c0_103] : memref<2x10x128xf32, #tpu.memory_space<vmem>>, vector<2x8x128xf32>
    %101 = vector.shape_cast %100 : vector<2x8x128xf32> to vector<16x128xf32>
    %c688 = arith.constant 688 : index
    %c0_104 = arith.constant 0 : index
    %102 = vector.load %arg2[%c688, %c0_104] : memref<5184x128xf32, #tpu.memory_space<vmem>>, vector<128x128xf32>
    %cst_105 = arith.constant dense<0.000000e+00> : vector<16x128xf32>
    %103 = tpu.matmul %101, %102, %cst_105 {dimension_numbers = #tpu.dot_dimension_numbers<[1], [0], [0], [1], [0, 0, 1, 1], [], []>} : vector<16x128xf32>, vector<128x128xf32>, vector<16x128xf32> -> vector<16x128xf32>
    %104 = arith.addf %99, %103 : vector<16x128xf32>
    %c5170 = arith.constant 5170 : index
    %c0_106 = arith.constant 0 : index
    %105 = vector.load %arg2[%c5170, %c0_106] : memref<5184x128xf32, #tpu.memory_space<vmem>>, vector<1x128xf32>
    %106 = vector.broadcast %105 : vector<1x128xf32> to vector<16x128xf32>
    %107 = arith.addf %104, %106 : vector<16x128xf32>
    %cst_107 = arith.constant 0.000000e+00 : f32
    %108 = vector.broadcast %cst_107 : f32 to vector<16x128xf32>
    %109 = arith.maximumf %107, %108 : vector<16x128xf32>
    %110 = vector.shape_cast %109 : vector<16x128xf32> to vector<2x8x128xf32>
    %c0_108 = arith.constant 0 : index
    %c1_109 = arith.constant 1 : index
    %c0_110 = arith.constant 0 : index
    %111 = vector.load %arg5[%c0_108, %c1_109, %c0_110] : memref<2x10x128xf32, #tpu.memory_space<vmem>>, vector<2x8x128xf32>
    tpu.vector_store %arg5[%c0_108, %c1_109, %c0_110], %110 {strides = array<i32>} : memref<2x10x128xf32, #tpu.memory_space<vmem>>, vector<2x8x128xf32>,
    %c0_111 = arith.constant 0 : index
    %c0_112 = arith.constant 0 : index
    %c0_113 = arith.constant 0 : index
    %112 = vector.load %arg5[%c0_111, %c0_112, %c0_113] : memref<2x10x128xf32, #tpu.memory_space<vmem>>, vector<2x8x128xf32>
    %113 = vector.shape_cast %112 : vector<2x8x128xf32> to vector<16x128xf32>
    %c816 = arith.constant 816 : index
    %c0_114 = arith.constant 0 : index
    %114 = vector.load %arg2[%c816, %c0_114] : memref<5184x128xf32, #tpu.memory_space<vmem>>, vector<128x128xf32>
    %cst_115 = arith.constant dense<0.000000e+00> : vector<16x128xf32>
    %115 = tpu.matmul %113, %114, %cst_115 {dimension_numbers = #tpu.dot_dimension_numbers<[1], [0], [0], [1], [0, 0, 1, 1], [], []>} : vector<16x128xf32>, vector<128x128xf32>, vector<16x128xf32> -> vector<16x128xf32>
    %c0_116 = arith.constant 0 : index
    %c1_117 = arith.constant 1 : index
    %c0_118 = arith.constant 0 : index
    %116 = vector.load %arg5[%c0_116, %c1_117, %c0_118] : memref<2x10x128xf32, #tpu.memory_space<vmem>>, vector<2x8x128xf32>
    %117 = vector.shape_cast %116 : vector<2x8x128xf32> to vector<16x128xf32>
    %c944 = arith.constant 944 : index
    %c0_119 = arith.constant 0 : index
    %118 = vector.load %arg2[%c944, %c0_119] : memref<5184x128xf32, #tpu.memory_space<vmem>>, vector<128x128xf32>
    %cst_120 = arith.constant dense<0.000000e+00> : vector<16x128xf32>
    %119 = tpu.matmul %117, %118, %cst_120 {dimension_numbers = #tpu.dot_dimension_numbers<[1], [0], [0], [1], [0, 0, 1, 1], [], []>} : vector<16x128xf32>, vector<128x128xf32>, vector<16x128xf32> -> vector<16x128xf32>
    %120 = arith.addf %115, %119 : vector<16x128xf32>
    %c0_121 = arith.constant 0 : index
    %c2_122 = arith.constant 2 : index
    %c0_123 = arith.constant 0 : index
    %121 = vector.load %arg5[%c0_121, %c2_122, %c0_123] : memref<2x10x128xf32, #tpu.memory_space<vmem>>, vector<2x8x128xf32>
    %122 = vector.shape_cast %121 : vector<2x8x128xf32> to vector<16x128xf32>
    %c1072 = arith.constant 1072 : index
    %c0_124 = arith.constant 0 : index
    %123 = vector.load %arg2[%c1072, %c0_124] : memref<5184x128xf32, #tpu.memory_space<vmem>>, vector<128x128xf32>
    %cst_125 = arith.constant dense<0.000000e+00> : vector<16x128xf32>
    %124 = tpu.matmul %122, %123, %cst_125 {dimension_numbers = #tpu.dot_dimension_numbers<[1], [0], [0], [1], [0, 0, 1, 1], [], []>} : vector<16x128xf32>, vector<128x128xf32>, vector<16x128xf32> -> vector<16x128xf32>
    %125 = arith.addf %120, %124 : vector<16x128xf32>
    %c5171 = arith.constant 5171 : index
    %c0_126 = arith.constant 0 : index
    %126 = vector.load %arg2[%c5171, %c0_126] : memref<5184x128xf32, #tpu.memory_space<vmem>>, vector<1x128xf32>
    %127 = vector.broadcast %126 : vector<1x128xf32> to vector<16x128xf32>
    %128 = arith.addf %125, %127 : vector<16x128xf32>
    %cst_127 = arith.constant 0.000000e+00 : f32
    %129 = vector.broadcast %cst_127 : f32 to vector<16x128xf32>
    %130 = arith.maximumf %128, %129 : vector<16x128xf32>
    %131 = vector.shape_cast %130 : vector<16x128xf32> to vector<2x8x128xf32>
    %c0_128 = arith.constant 0 : index
    %c1_129 = arith.constant 1 : index
    %c0_130 = arith.constant 0 : index
    %132 = vector.load %arg8[%c0_128, %c1_129, %c0_130] : memref<2x10x128xf32, #tpu.memory_space<vmem>>, vector<2x8x128xf32>
    tpu.vector_store %arg8[%c0_128, %c1_129, %c0_130], %131 {strides = array<i32>} : memref<2x10x128xf32, #tpu.memory_space<vmem>>, vector<2x8x128xf32>,
    %133 = vector.extract_strided_slice %131 {offsets = [0, 0, 16], sizes = [2, 8, 112], strides = [1, 1, 1]} : vector<2x8x128xf32> to vector<2x8x112xf32>
    %cst_131 = arith.constant 0.000000e+00 : f32
    %134 = vector.broadcast %cst_131 : f32 to vector<2x8x16xf32>
    %135 = tpu.concatenate %133, %134 in 2 : vector<2x8x112xf32>, vector<2x8x16xf32> -> vector<2x8x128xf32>
    %136 = arith.maximumf %131, %135 : vector<2x8x128xf32>
    %137 = vector.extract_strided_slice %136 {offsets = [0, 0, 0], sizes = [2, 1, 128], strides = [1, 1, 1]} : vector<2x8x128xf32> to vector<2x1x128xf32>
    %138 = vector.extract_strided_slice %136 {offsets = [0, 1, 0], sizes = [2, 1, 128], strides = [1, 1, 1]} : vector<2x8x128xf32> to vector<2x1x128xf32>
    %139 = arith.maximumf %137, %138 : vector<2x1x128xf32>
    %c0_132 = arith.constant 0 : index
    %c1_133 = arith.constant 1 : index
    %c0_134 = arith.constant 0 : index
    %140 = vector.load %arg6[%c0_132, %c1_133, %c0_134] : memref<2x6x128xf32, #tpu.memory_space<vmem>>, vector<2x1x128xf32>
    tpu.vector_store %arg6[%c0_132, %c1_133, %c0_134], %139 {strides = array<i32>} : memref<2x6x128xf32, #tpu.memory_space<vmem>>, vector<2x1x128xf32>,
    %141 = vector.extract_strided_slice %136 {offsets = [0, 2, 0], sizes = [2, 1, 128], strides = [1, 1, 1]} : vector<2x8x128xf32> to vector<2x1x128xf32>
    %142 = vector.extract_strided_slice %136 {offsets = [0, 3, 0], sizes = [2, 1, 128], strides = [1, 1, 1]} : vector<2x8x128xf32> to vector<2x1x128xf32>
    %143 = arith.maximumf %141, %142 : vector<2x1x128xf32>
    %c0_135 = arith.constant 0 : index
    %c2_136 = arith.constant 2 : index
    %c0_137 = arith.constant 0 : index
    %144 = vector.load %arg6[%c0_135, %c2_136, %c0_137] : memref<2x6x128xf32, #tpu.memory_space<vmem>>, vector<2x1x128xf32>
    tpu.vector_store %arg6[%c0_135, %c2_136, %c0_137], %143 {strides = array<i32>} : memref<2x6x128xf32, #tpu.memory_space<vmem>>, vector<2x1x128xf32>,
    %145 = vector.extract_strided_slice %136 {offsets = [0, 4, 0], sizes = [2, 1, 128], strides = [1, 1, 1]} : vector<2x8x128xf32> to vector<2x1x128xf32>
    %146 = vector.extract_strided_slice %136 {offsets = [0, 5, 0], sizes = [2, 1, 128], strides = [1, 1, 1]} : vector<2x8x128xf32> to vector<2x1x128xf32>
    %147 = arith.maximumf %145, %146 : vector<2x1x128xf32>
    %c0_138 = arith.constant 0 : index
    %c3_139 = arith.constant 3 : index
    %c0_140 = arith.constant 0 : index
    %148 = vector.load %arg6[%c0_138, %c3_139, %c0_140] : memref<2x6x128xf32, #tpu.memory_space<vmem>>, vector<2x1x128xf32>
    tpu.vector_store %arg6[%c0_138, %c3_139, %c0_140], %147 {strides = array<i32>} : memref<2x6x128xf32, #tpu.memory_space<vmem>>, vector<2x1x128xf32>,
    %149 = vector.extract_strided_slice %136 {offsets = [0, 6, 0], sizes = [2, 1, 128], strides = [1, 1, 1]} : vector<2x8x128xf32> to vector<2x1x128xf32>
    %150 = vector.extract_strided_slice %136 {offsets = [0, 7, 0], sizes = [2, 1, 128], strides = [1, 1, 1]} : vector<2x8x128xf32> to vector<2x1x128xf32>
    %151 = arith.maximumf %149, %150 : vector<2x1x128xf32>
    %c0_141 = arith.constant 0 : index
    %c4_142 = arith.constant 4 : index
    %c0_143 = arith.constant 0 : index
    %152 = vector.load %arg6[%c0_141, %c4_142, %c0_143] : memref<2x6x128xf32, #tpu.memory_space<vmem>>, vector<2x1x128xf32>
    tpu.vector_store %arg6[%c0_141, %c4_142, %c0_143], %151 {strides = array<i32>} : memref<2x6x128xf32, #tpu.memory_space<vmem>>, vector<2x1x128xf32>,
    %c0_144 = arith.constant 0 : index
    %c0_145 = arith.constant 0 : index
    %c0_146 = arith.constant 0 : index
    %153 = vector.load %arg6[%c0_144, %c0_145, %c0_146] : memref<2x6x128xf32, #tpu.memory_space<vmem>>, vector<2x4x128xf32>
    %154 = vector.shape_cast %153 : vector<2x4x128xf32> to vector<8x128xf32>
    %c1200 = arith.constant 1200 : index
    %c0_147 = arith.constant 0 : index
    %155 = vector.load %arg2[%c1200, %c0_147] : memref<5184x128xf32, #tpu.memory_space<vmem>>, vector<128x128xf32>
    %cst_148 = arith.constant dense<0.000000e+00> : vector<8x128xf32>
    %156 = tpu.matmul %154, %155, %cst_148 {dimension_numbers = #tpu.dot_dimension_numbers<[1], [0], [0], [1], [0, 0, 1, 1], [], []>} : vector<8x128xf32>, vector<128x128xf32>, vector<8x128xf32> -> vector<8x128xf32>
    %c0_149 = arith.constant 0 : index
    %c1_150 = arith.constant 1 : index
    %c0_151 = arith.constant 0 : index
    %157 = vector.load %arg6[%c0_149, %c1_150, %c0_151] : memref<2x6x128xf32, #tpu.memory_space<vmem>>, vector<2x4x128xf32>
    %158 = vector.shape_cast %157 : vector<2x4x128xf32> to vector<8x128xf32>
    %c1328 = arith.constant 1328 : index
    %c0_152 = arith.constant 0 : index
    %159 = vector.load %arg2[%c1328, %c0_152] : memref<5184x128xf32, #tpu.memory_space<vmem>>, vector<128x128xf32>
    %cst_153 = arith.constant dense<0.000000e+00> : vector<8x128xf32>
    %160 = tpu.matmul %158, %159, %cst_153 {dimension_numbers = #tpu.dot_dimension_numbers<[1], [0], [0], [1], [0, 0, 1, 1], [], []>} : vector<8x128xf32>, vector<128x128xf32>, vector<8x128xf32> -> vector<8x128xf32>
    %161 = arith.addf %156, %160 : vector<8x128xf32>
    %c0_154 = arith.constant 0 : index
    %c2_155 = arith.constant 2 : index
    %c0_156 = arith.constant 0 : index
    %162 = vector.load %arg6[%c0_154, %c2_155, %c0_156] : memref<2x6x128xf32, #tpu.memory_space<vmem>>, vector<2x4x128xf32>
    %163 = vector.shape_cast %162 : vector<2x4x128xf32> to vector<8x128xf32>
    %c1456 = arith.constant 1456 : index
    %c0_157 = arith.constant 0 : index
    %164 = vector.load %arg2[%c1456, %c0_157] : memref<5184x128xf32, #tpu.memory_space<vmem>>, vector<128x128xf32>
    %cst_158 = arith.constant dense<0.000000e+00> : vector<8x128xf32>
    %165 = tpu.matmul %163, %164, %cst_158 {dimension_numbers = #tpu.dot_dimension_numbers<[1], [0], [0], [1], [0, 0, 1, 1], [], []>} : vector<8x128xf32>, vector<128x128xf32>, vector<8x128xf32> -> vector<8x128xf32>
    %166 = arith.addf %161, %165 : vector<8x128xf32>
    %c5172 = arith.constant 5172 : index
    %c0_159 = arith.constant 0 : index
    %167 = vector.load %arg2[%c5172, %c0_159] : memref<5184x128xf32, #tpu.memory_space<vmem>>, vector<1x128xf32>
    %168 = vector.broadcast %167 : vector<1x128xf32> to vector<8x128xf32>
    %169 = arith.addf %166, %168 : vector<8x128xf32>
    %cst_160 = arith.constant 0.000000e+00 : f32
    %170 = vector.broadcast %cst_160 : f32 to vector<8x128xf32>
    %171 = arith.maximumf %169, %170 : vector<8x128xf32>
    %172 = vector.shape_cast %171 : vector<8x128xf32> to vector<2x4x128xf32>
    %c0_161 = arith.constant 0 : index
    %c1_162 = arith.constant 1 : index
    %c0_163 = arith.constant 0 : index
    %173 = vector.load %arg6[%c0_161, %c1_162, %c0_163] : memref<2x6x128xf32, #tpu.memory_space<vmem>>, vector<2x4x128xf32>
    tpu.vector_store %arg6[%c0_161, %c1_162, %c0_163], %172 {strides = array<i32>} : memref<2x6x128xf32, #tpu.memory_space<vmem>>, vector<2x4x128xf32>,
    %c0_164 = arith.constant 0 : index
    %c0_165 = arith.constant 0 : index
    %c0_166 = arith.constant 0 : index
    %174 = vector.load %arg6[%c0_164, %c0_165, %c0_166] : memref<2x6x128xf32, #tpu.memory_space<vmem>>, vector<2x4x128xf32>
    %175 = vector.shape_cast %174 : vector<2x4x128xf32> to vector<8x128xf32>
    %c1584 = arith.constant 1584 : index
    %c0_167 = arith.constant 0 : index
    %176 = vector.load %arg2[%c1584, %c0_167] : memref<5184x128xf32, #tpu.memory_space<vmem>>, vector<128x128xf32>
    %cst_168 = arith.constant dense<0.000000e+00> : vector<8x128xf32>
    %177 = tpu.matmul %175, %176, %cst_168 {dimension_numbers = #tpu.dot_dimension_numbers<[1], [0], [0], [1], [0, 0, 1, 1], [], []>} : vector<8x128xf32>, vector<128x128xf32>, vector<8x128xf32> -> vector<8x128xf32>
    %c0_169 = arith.constant 0 : index
    %c1_170 = arith.constant 1 : index
    %c0_171 = arith.constant 0 : index
    %178 = vector.load %arg6[%c0_169, %c1_170, %c0_171] : memref<2x6x128xf32, #tpu.memory_space<vmem>>, vector<2x4x128xf32>
    %179 = vector.shape_cast %178 : vector<2x4x128xf32> to vector<8x128xf32>
    %c1712 = arith.constant 1712 : index
    %c0_172 = arith.constant 0 : index
    %180 = vector.load %arg2[%c1712, %c0_172] : memref<5184x128xf32, #tpu.memory_space<vmem>>, vector<128x128xf32>
    %cst_173 = arith.constant dense<0.000000e+00> : vector<8x128xf32>
    %181 = tpu.matmul %179, %180, %cst_173 {dimension_numbers = #tpu.dot_dimension_numbers<[1], [0], [0], [1], [0, 0, 1, 1], [], []>} : vector<8x128xf32>, vector<128x128xf32>, vector<8x128xf32> -> vector<8x128xf32>
    %182 = arith.addf %177, %181 : vector<8x128xf32>
    %c0_174 = arith.constant 0 : index
    %c2_175 = arith.constant 2 : index
    %c0_176 = arith.constant 0 : index
    %183 = vector.load %arg6[%c0_174, %c2_175, %c0_176] : memref<2x6x128xf32, #tpu.memory_space<vmem>>, vector<2x4x128xf32>
    %184 = vector.shape_cast %183 : vector<2x4x128xf32> to vector<8x128xf32>
    %c1840 = arith.constant 1840 : index
    %c0_177 = arith.constant 0 : index
    %185 = vector.load %arg2[%c1840, %c0_177] : memref<5184x128xf32, #tpu.memory_space<vmem>>, vector<128x128xf32>
    %cst_178 = arith.constant dense<0.000000e+00> : vector<8x128xf32>
    %186 = tpu.matmul %184, %185, %cst_178 {dimension_numbers = #tpu.dot_dimension_numbers<[1], [0], [0], [1], [0, 0, 1, 1], [], []>} : vector<8x128xf32>, vector<128x128xf32>, vector<8x128xf32> -> vector<8x128xf32>
    %187 = arith.addf %182, %186 : vector<8x128xf32>
    %c5173 = arith.constant 5173 : index
    %c0_179 = arith.constant 0 : index
    %188 = vector.load %arg2[%c5173, %c0_179] : memref<5184x128xf32, #tpu.memory_space<vmem>>, vector<1x128xf32>
    %189 = vector.broadcast %188 : vector<1x128xf32> to vector<8x128xf32>
    %190 = arith.addf %187, %189 : vector<8x128xf32>
    %cst_180 = arith.constant 0.000000e+00 : f32
    %191 = vector.broadcast %cst_180 : f32 to vector<8x128xf32>
    %192 = arith.maximumf %190, %191 : vector<8x128xf32>
    %c5175 = arith.constant 5175 : index
    %c0_181 = arith.constant 0 : index
    %193 = vector.load %arg2[%c5175, %c0_181] : memref<5184x128xf32, #tpu.memory_space<vmem>>, vector<1x128xf32>
    %c1968 = arith.constant 1968 : index
    %c0_182 = arith.constant 0 : index
    %194 = vector.load %arg2[%c1968, %c0_182] : memref<5184x128xf32, #tpu.memory_space<vmem>>, vector<128x128xf32>
    %cst_183 = arith.constant dense<0.000000e+00> : vector<8x128xf32>
    %195 = tpu.matmul %192, %194, %cst_183 {dimension_numbers = #tpu.dot_dimension_numbers<[1], [0], [0], [1], [0, 0, 1, 1], [], []>} : vector<8x128xf32>, vector<128x128xf32>, vector<8x128xf32> -> vector<8x128xf32>
    %196 = vector.broadcast %193 : vector<1x128xf32> to vector<8x128xf32>
    %197 = arith.addf %195, %196 : vector<8x128xf32>
    %198 = vector.shape_cast %197 : vector<8x128xf32> to vector<2x4x128xf32>
    %199 = vector.extract_strided_slice %198 {offsets = [0, 0, 0], sizes = [2, 1, 128], strides = [1, 1, 1]} : vector<2x4x128xf32> to vector<2x1x128xf32>
    %c0_184 = arith.constant 0 : index
    %c1_185 = arith.constant 1 : index
    %c0_186 = arith.constant 0 : index
    %200 = vector.load %arg5[%c0_184, %c1_185, %c0_186] : memref<2x10x128xf32, #tpu.memory_space<vmem>>, vector<2x1x128xf32>
    tpu.vector_store %arg5[%c0_184, %c1_185, %c0_186], %199 {strides = array<i32>} : memref<2x10x128xf32, #tpu.memory_space<vmem>>, vector<2x1x128xf32>,
    %201 = vector.extract_strided_slice %198 {offsets = [0, 1, 0], sizes = [2, 1, 128], strides = [1, 1, 1]} : vector<2x4x128xf32> to vector<2x1x128xf32>
    %c0_187 = arith.constant 0 : index
    %c3_188 = arith.constant 3 : index
    %c0_189 = arith.constant 0 : index
    %202 = vector.load %arg5[%c0_187, %c3_188, %c0_189] : memref<2x10x128xf32, #tpu.memory_space<vmem>>, vector<2x1x128xf32>
    tpu.vector_store %arg5[%c0_187, %c3_188, %c0_189], %201 {strides = array<i32>} : memref<2x10x128xf32, #tpu.memory_space<vmem>>, vector<2x1x128xf32>,
    %203 = vector.extract_strided_slice %198 {offsets = [0, 2, 0], sizes = [2, 1, 128], strides = [1, 1, 1]} : vector<2x4x128xf32> to vector<2x1x128xf32>
    %c0_190 = arith.constant 0 : index
    %c5_191 = arith.constant 5 : index
    %c0_192 = arith.constant 0 : index
    %204 = vector.load %arg5[%c0_190, %c5_191, %c0_192] : memref<2x10x128xf32, #tpu.memory_space<vmem>>, vector<2x1x128xf32>
    tpu.vector_store %arg5[%c0_190, %c5_191, %c0_192], %203 {strides = array<i32>} : memref<2x10x128xf32, #tpu.memory_space<vmem>>, vector<2x1x128xf32>,
    %205 = vector.extract_strided_slice %198 {offsets = [0, 3, 0], sizes = [2, 1, 128], strides = [1, 1, 1]} : vector<2x4x128xf32> to vector<2x1x128xf32>
    %c0_193 = arith.constant 0 : index
    %c7_194 = arith.constant 7 : index
    %c0_195 = arith.constant 0 : index
    %206 = vector.load %arg5[%c0_193, %c7_194, %c0_195] : memref<2x10x128xf32, #tpu.memory_space<vmem>>, vector<2x1x128xf32>
    tpu.vector_store %arg5[%c0_193, %c7_194, %c0_195], %205 {strides = array<i32>} : memref<2x10x128xf32, #tpu.memory_space<vmem>>, vector<2x1x128xf32>,
    %c2096 = arith.constant 2096 : index
    %c0_196 = arith.constant 0 : index
    %207 = vector.load %arg2[%c2096, %c0_196] : memref<5184x128xf32, #tpu.memory_space<vmem>>, vector<128x128xf32>
    %cst_197 = arith.constant dense<0.000000e+00> : vector<8x128xf32>
    %208 = tpu.matmul %192, %207, %cst_197 {dimension_numbers = #tpu.dot_dimension_numbers<[1], [0], [0], [1], [0, 0, 1, 1], [], []>} : vector<8x128xf32>, vector<128x128xf32>, vector<8x128xf32> -> vector<8x128xf32>
    %209 = vector.broadcast %193 : vector<1x128xf32> to vector<8x128xf32>
    %210 = arith.addf %208, %209 : vector<8x128xf32>
    %211 = vector.shape_cast %210 : vector<8x128xf32> to vector<2x4x128xf32>
    %212 = vector.extract_strided_slice %211 {offsets = [0, 0, 0], sizes = [2, 1, 128], strides = [1, 1, 1]} : vector<2x4x128xf32> to vector<2x1x128xf32>
    %c0_198 = arith.constant 0 : index
    %c2_199 = arith.constant 2 : index
    %c0_200 = arith.constant 0 : index
    %213 = vector.load %arg5[%c0_198, %c2_199, %c0_200] : memref<2x10x128xf32, #tpu.memory_space<vmem>>, vector<2x1x128xf32>
    tpu.vector_store %arg5[%c0_198, %c2_199, %c0_200], %212 {strides = array<i32>} : memref<2x10x128xf32, #tpu.memory_space<vmem>>, vector<2x1x128xf32>,
    %214 = vector.extract_strided_slice %211 {offsets = [0, 1, 0], sizes = [2, 1, 128], strides = [1, 1, 1]} : vector<2x4x128xf32> to vector<2x1x128xf32>
    %c0_201 = arith.constant 0 : index
    %c4_202 = arith.constant 4 : index
    %c0_203 = arith.constant 0 : index
    %215 = vector.load %arg5[%c0_201, %c4_202, %c0_203] : memref<2x10x128xf32, #tpu.memory_space<vmem>>, vector<2x1x128xf32>
    tpu.vector_store %arg5[%c0_201, %c4_202, %c0_203], %214 {strides = array<i32>} : memref<2x10x128xf32, #tpu.memory_space<vmem>>, vector<2x1x128xf32>,
    %216 = vector.extract_strided_slice %211 {offsets = [0, 2, 0], sizes = [2, 1, 128], strides = [1, 1, 1]} : vector<2x4x128xf32> to vector<2x1x128xf32>
    %c0_204 = arith.constant 0 : index
    %c6_205 = arith.constant 6 : index
    %c0_206 = arith.constant 0 : index
    %217 = vector.load %arg5[%c0_204, %c6_205, %c0_206] : memref<2x10x128xf32, #tpu.memory_space<vmem>>, vector<2x1x128xf32>
    tpu.vector_store %arg5[%c0_204, %c6_205, %c0_206], %216 {strides = array<i32>} : memref<2x10x128xf32, #tpu.memory_space<vmem>>, vector<2x1x128xf32>,
    %218 = vector.extract_strided_slice %211 {offsets = [0, 3, 0], sizes = [2, 1, 128], strides = [1, 1, 1]} : vector<2x4x128xf32> to vector<2x1x128xf32>
    %c0_207 = arith.constant 0 : index
    %c8_208 = arith.constant 8 : index
    %c0_209 = arith.constant 0 : index
    %219 = vector.load %arg5[%c0_207, %c8_208, %c0_209] : memref<2x10x128xf32, #tpu.memory_space<vmem>>, vector<2x1x128xf32>
    tpu.vector_store %arg5[%c0_207, %c8_208, %c0_209], %218 {strides = array<i32>} : memref<2x10x128xf32, #tpu.memory_space<vmem>>, vector<2x1x128xf32>,
    %c0_210 = arith.constant 0 : index
    %c0_211 = arith.constant 0 : index
    %c0_212 = arith.constant 0 : index
    %220 = vector.load %arg5[%c0_210, %c0_211, %c0_212] : memref<2x10x128xf32, #tpu.memory_space<vmem>>, vector<2x8x128xf32>
    %221 = vector.shape_cast %220 : vector<2x8x128xf32> to vector<16x128xf32>
    %c2224 = arith.constant 2224 : index
    %c0_213 = arith.constant 0 : index
    %222 = vector.load %arg2[%c2224, %c0_213] : memref<5184x128xf32, #tpu.memory_space<vmem>>, vector<128x128xf32>
    %cst_214 = arith.constant dense<0.000000e+00> : vector<16x128xf32>
    %223 = tpu.matmul %221, %222, %cst_214 {dimension_numbers = #tpu.dot_dimension_numbers<[1], [0], [0], [1], [0, 0, 1, 1], [], []>} : vector<16x128xf32>, vector<128x128xf32>, vector<16x128xf32> -> vector<16x128xf32>
    %c0_215 = arith.constant 0 : index
    %c1_216 = arith.constant 1 : index
    %c0_217 = arith.constant 0 : index
    %224 = vector.load %arg5[%c0_215, %c1_216, %c0_217] : memref<2x10x128xf32, #tpu.memory_space<vmem>>, vector<2x8x128xf32>
    %225 = vector.shape_cast %224 : vector<2x8x128xf32> to vector<16x128xf32>
    %c2352 = arith.constant 2352 : index
    %c0_218 = arith.constant 0 : index
    %226 = vector.load %arg2[%c2352, %c0_218] : memref<5184x128xf32, #tpu.memory_space<vmem>>, vector<128x128xf32>
    %cst_219 = arith.constant dense<0.000000e+00> : vector<16x128xf32>
    %227 = tpu.matmul %225, %226, %cst_219 {dimension_numbers = #tpu.dot_dimension_numbers<[1], [0], [0], [1], [0, 0, 1, 1], [], []>} : vector<16x128xf32>, vector<128x128xf32>, vector<16x128xf32> -> vector<16x128xf32>
    %228 = arith.addf %223, %227 : vector<16x128xf32>
    %c0_220 = arith.constant 0 : index
    %c2_221 = arith.constant 2 : index
    %c0_222 = arith.constant 0 : index
    %229 = vector.load %arg5[%c0_220, %c2_221, %c0_222] : memref<2x10x128xf32, #tpu.memory_space<vmem>>, vector<2x8x128xf32>
    %230 = vector.shape_cast %229 : vector<2x8x128xf32> to vector<16x128xf32>
    %c2480 = arith.constant 2480 : index
    %c0_223 = arith.constant 0 : index
    %231 = vector.load %arg2[%c2480, %c0_223] : memref<5184x128xf32, #tpu.memory_space<vmem>>, vector<128x128xf32>
    %cst_224 = arith.constant dense<0.000000e+00> : vector<16x128xf32>
    %232 = tpu.matmul %230, %231, %cst_224 {dimension_numbers = #tpu.dot_dimension_numbers<[1], [0], [0], [1], [0, 0, 1, 1], [], []>} : vector<16x128xf32>, vector<128x128xf32>, vector<16x128xf32> -> vector<16x128xf32>
    %233 = arith.addf %228, %232 : vector<16x128xf32>
    %c5174 = arith.constant 5174 : index
    %c0_225 = arith.constant 0 : index
    %234 = vector.load %arg2[%c5174, %c0_225] : memref<5184x128xf32, #tpu.memory_space<vmem>>, vector<1x128xf32>
    %235 = vector.broadcast %234 : vector<1x128xf32> to vector<16x128xf32>
    %236 = arith.addf %233, %235 : vector<16x128xf32>
    %c0_226 = arith.constant 0 : index
    %c0_227 = arith.constant 0 : index
    %c0_228 = arith.constant 0 : index
    %237 = vector.load %arg8[%c0_226, %c0_227, %c0_228] : memref<2x10x128xf32, #tpu.memory_space<vmem>>, vector<2x8x128xf32>
    %238 = vector.shape_cast %237 : vector<2x8x128xf32> to vector<16x128xf32>
    %c2608 = arith.constant 2608 : index
    %c0_229 = arith.constant 0 : index
    %239 = vector.load %arg2[%c2608, %c0_229] : memref<5184x128xf32, #tpu.memory_space<vmem>>, vector<128x128xf32>
    %cst_230 = arith.constant dense<0.000000e+00> : vector<16x128xf32>
    %240 = tpu.matmul %238, %239, %cst_230 {dimension_numbers = #tpu.dot_dimension_numbers<[1], [0], [0], [1], [0, 0, 1, 1], [], []>} : vector<16x128xf32>, vector<128x128xf32>, vector<16x128xf32> -> vector<16x128xf32>
    %c0_231 = arith.constant 0 : index
    %c1_232 = arith.constant 1 : index
    %c0_233 = arith.constant 0 : index
    %241 = vector.load %arg8[%c0_231, %c1_232, %c0_233] : memref<2x10x128xf32, #tpu.memory_space<vmem>>, vector<2x8x128xf32>
    %242 = vector.shape_cast %241 : vector<2x8x128xf32> to vector<16x128xf32>
    %c2736 = arith.constant 2736 : index
    %c0_234 = arith.constant 0 : index
    %243 = vector.load %arg2[%c2736, %c0_234] : memref<5184x128xf32, #tpu.memory_space<vmem>>, vector<128x128xf32>
    %cst_235 = arith.constant dense<0.000000e+00> : vector<16x128xf32>
    %244 = tpu.matmul %242, %243, %cst_235 {dimension_numbers = #tpu.dot_dimension_numbers<[1], [0], [0], [1], [0, 0, 1, 1], [], []>} : vector<16x128xf32>, vector<128x128xf32>, vector<16x128xf32> -> vector<16x128xf32>
    %245 = arith.addf %240, %244 : vector<16x128xf32>
    %c0_236 = arith.constant 0 : index
    %c2_237 = arith.constant 2 : index
    %c0_238 = arith.constant 0 : index
    %246 = vector.load %arg8[%c0_236, %c2_237, %c0_238] : memref<2x10x128xf32, #tpu.memory_space<vmem>>, vector<2x8x128xf32>
    %247 = vector.shape_cast %246 : vector<2x8x128xf32> to vector<16x128xf32>
    %c2864 = arith.constant 2864 : index
    %c0_239 = arith.constant 0 : index
    %248 = vector.load %arg2[%c2864, %c0_239] : memref<5184x128xf32, #tpu.memory_space<vmem>>, vector<128x128xf32>
    %cst_240 = arith.constant dense<0.000000e+00> : vector<16x128xf32>
    %249 = tpu.matmul %247, %248, %cst_240 {dimension_numbers = #tpu.dot_dimension_numbers<[1], [0], [0], [1], [0, 0, 1, 1], [], []>} : vector<16x128xf32>, vector<128x128xf32>, vector<16x128xf32> -> vector<16x128xf32>
    %250 = arith.addf %245, %249 : vector<16x128xf32>
    %251 = arith.addf %236, %250 : vector<16x128xf32>
    %cst_241 = arith.constant 0.000000e+00 : f32
    %252 = vector.broadcast %cst_241 : f32 to vector<16x128xf32>
    %253 = arith.maximumf %251, %252 : vector<16x128xf32>
    %254 = vector.shape_cast %253 : vector<16x128xf32> to vector<2x8x128xf32>
    %c0_242 = arith.constant 0 : index
    %c1_243 = arith.constant 1 : index
    %c0_244 = arith.constant 0 : index
    %255 = vector.load %arg5[%c0_242, %c1_243, %c0_244] : memref<2x10x128xf32, #tpu.memory_space<vmem>>, vector<2x8x128xf32>
    tpu.vector_store %arg5[%c0_242, %c1_243, %c0_244], %254 {strides = array<i32>} : memref<2x10x128xf32, #tpu.memory_space<vmem>>, vector<2x8x128xf32>,
    %c0_245 = arith.constant 0 : index
    %c0_246 = arith.constant 0 : index
    %c0_247 = arith.constant 0 : index
    %256 = vector.load %arg5[%c0_245, %c0_246, %c0_247] : memref<2x10x128xf32, #tpu.memory_space<vmem>>, vector<2x8x128xf32>
    %257 = vector.shape_cast %256 : vector<2x8x128xf32> to vector<16x128xf32>
    %c2992 = arith.constant 2992 : index
    %c0_248 = arith.constant 0 : index
    %258 = vector.load %arg2[%c2992, %c0_248] : memref<5184x128xf32, #tpu.memory_space<vmem>>, vector<128x128xf32>
    %cst_249 = arith.constant dense<0.000000e+00> : vector<16x128xf32>
    %259 = tpu.matmul %257, %258, %cst_249 {dimension_numbers = #tpu.dot_dimension_numbers<[1], [0], [0], [1], [0, 0, 1, 1], [], []>} : vector<16x128xf32>, vector<128x128xf32>, vector<16x128xf32> -> vector<16x128xf32>
    %c0_250 = arith.constant 0 : index
    %c1_251 = arith.constant 1 : index
    %c0_252 = arith.constant 0 : index
    %260 = vector.load %arg5[%c0_250, %c1_251, %c0_252] : memref<2x10x128xf32, #tpu.memory_space<vmem>>, vector<2x8x128xf32>
    %261 = vector.shape_cast %260 : vector<2x8x128xf32> to vector<16x128xf32>
    %c3120 = arith.constant 3120 : index
    %c0_253 = arith.constant 0 : index
    %262 = vector.load %arg2[%c3120, %c0_253] : memref<5184x128xf32, #tpu.memory_space<vmem>>, vector<128x128xf32>
    %cst_254 = arith.constant dense<0.000000e+00> : vector<16x128xf32>
    %263 = tpu.matmul %261, %262, %cst_254 {dimension_numbers = #tpu.dot_dimension_numbers<[1], [0], [0], [1], [0, 0, 1, 1], [], []>} : vector<16x128xf32>, vector<128x128xf32>, vector<16x128xf32> -> vector<16x128xf32>
    %264 = arith.addf %259, %263 : vector<16x128xf32>
    %c0_255 = arith.constant 0 : index
    %c2_256 = arith.constant 2 : index
    %c0_257 = arith.constant 0 : index
    %265 = vector.load %arg5[%c0_255, %c2_256, %c0_257] : memref<2x10x128xf32, #tpu.memory_space<vmem>>, vector<2x8x128xf32>
    %266 = vector.shape_cast %265 : vector<2x8x128xf32> to vector<16x128xf32>
    %c3248 = arith.constant 3248 : index
    %c0_258 = arith.constant 0 : index
    %267 = vector.load %arg2[%c3248, %c0_258] : memref<5184x128xf32, #tpu.memory_space<vmem>>, vector<128x128xf32>
    %cst_259 = arith.constant dense<0.000000e+00> : vector<16x128xf32>
    %268 = tpu.matmul %266, %267, %cst_259 {dimension_numbers = #tpu.dot_dimension_numbers<[1], [0], [0], [1], [0, 0, 1, 1], [], []>} : vector<16x128xf32>, vector<128x128xf32>, vector<16x128xf32> -> vector<16x128xf32>
    %269 = arith.addf %264, %268 : vector<16x128xf32>
    %c5176 = arith.constant 5176 : index
    %c0_260 = arith.constant 0 : index
    %270 = vector.load %arg2[%c5176, %c0_260] : memref<5184x128xf32, #tpu.memory_space<vmem>>, vector<1x128xf32>
    %271 = vector.broadcast %270 : vector<1x128xf32> to vector<16x128xf32>
    %272 = arith.addf %269, %271 : vector<16x128xf32>
    %cst_261 = arith.constant 0.000000e+00 : f32
    %273 = vector.broadcast %cst_261 : f32 to vector<16x128xf32>
    %274 = arith.maximumf %272, %273 : vector<16x128xf32>
    %c5178 = arith.constant 5178 : index
    %c0_262 = arith.constant 0 : index
    %275 = vector.load %arg2[%c5178, %c0_262] : memref<5184x128xf32, #tpu.memory_space<vmem>>, vector<1x128xf32>
    %c3376 = arith.constant 3376 : index
    %c0_263 = arith.constant 0 : index
    %276 = vector.load %arg2[%c3376, %c0_263] : memref<5184x128xf32, #tpu.memory_space<vmem>>, vector<128x128xf32>
    %cst_264 = arith.constant dense<0.000000e+00> : vector<16x128xf32>
    %277 = tpu.matmul %274, %276, %cst_264 {dimension_numbers = #tpu.dot_dimension_numbers<[1], [0], [0], [1], [0, 0, 1, 1], [], []>} : vector<16x128xf32>, vector<128x128xf32>, vector<16x128xf32> -> vector<16x128xf32>
    %278 = vector.broadcast %275 : vector<1x128xf32> to vector<16x128xf32>
    %279 = arith.addf %277, %278 : vector<16x128xf32>
    %280 = vector.shape_cast %279 : vector<16x128xf32> to vector<2x8x128xf32>
    %281 = vector.extract_strided_slice %280 {offsets = [0, 0, 0], sizes = [2, 1, 128], strides = [1, 1, 1]} : vector<2x8x128xf32> to vector<2x1x128xf32>
    %c0_265 = arith.constant 0 : index
    %c1_266 = arith.constant 1 : index
    %c0_267 = arith.constant 0 : index
    %282 = vector.load %arg4[%c0_265, %c1_266, %c0_267] : memref<2x18x128xf32, #tpu.memory_space<vmem>>, vector<2x1x128xf32>
    tpu.vector_store %arg4[%c0_265, %c1_266, %c0_267], %281 {strides = array<i32>} : memref<2x18x128xf32, #tpu.memory_space<vmem>>, vector<2x1x128xf32>,
    %283 = vector.extract_strided_slice %280 {offsets = [0, 1, 0], sizes = [2, 1, 128], strides = [1, 1, 1]} : vector<2x8x128xf32> to vector<2x1x128xf32>
    %c0_268 = arith.constant 0 : index
    %c3_269 = arith.constant 3 : index
    %c0_270 = arith.constant 0 : index
    %284 = vector.load %arg4[%c0_268, %c3_269, %c0_270] : memref<2x18x128xf32, #tpu.memory_space<vmem>>, vector<2x1x128xf32>
    tpu.vector_store %arg4[%c0_268, %c3_269, %c0_270], %283 {strides = array<i32>} : memref<2x18x128xf32, #tpu.memory_space<vmem>>, vector<2x1x128xf32>,
    %285 = vector.extract_strided_slice %280 {offsets = [0, 2, 0], sizes = [2, 1, 128], strides = [1, 1, 1]} : vector<2x8x128xf32> to vector<2x1x128xf32>
    %c0_271 = arith.constant 0 : index
    %c5_272 = arith.constant 5 : index
    %c0_273 = arith.constant 0 : index
    %286 = vector.load %arg4[%c0_271, %c5_272, %c0_273] : memref<2x18x128xf32, #tpu.memory_space<vmem>>, vector<2x1x128xf32>
    tpu.vector_store %arg4[%c0_271, %c5_272, %c0_273], %285 {strides = array<i32>} : memref<2x18x128xf32, #tpu.memory_space<vmem>>, vector<2x1x128xf32>,
    %287 = vector.extract_strided_slice %280 {offsets = [0, 3, 0], sizes = [2, 1, 128], strides = [1, 1, 1]} : vector<2x8x128xf32> to vector<2x1x128xf32>
    %c0_274 = arith.constant 0 : index
    %c7_275 = arith.constant 7 : index
    %c0_276 = arith.constant 0 : index
    %288 = vector.load %arg4[%c0_274, %c7_275, %c0_276] : memref<2x18x128xf32, #tpu.memory_space<vmem>>, vector<2x1x128xf32>
    tpu.vector_store %arg4[%c0_274, %c7_275, %c0_276], %287 {strides = array<i32>} : memref<2x18x128xf32, #tpu.memory_space<vmem>>, vector<2x1x128xf32>,
    %289 = vector.extract_strided_slice %280 {offsets = [0, 4, 0], sizes = [2, 1, 128], strides = [1, 1, 1]} : vector<2x8x128xf32> to vector<2x1x128xf32>
    %c0_277 = arith.constant 0 : index
    %c9_278 = arith.constant 9 : index
    %c0_279 = arith.constant 0 : index
    %290 = vector.load %arg4[%c0_277, %c9_278, %c0_279] : memref<2x18x128xf32, #tpu.memory_space<vmem>>, vector<2x1x128xf32>
    tpu.vector_store %arg4[%c0_277, %c9_278, %c0_279], %289 {strides = array<i32>} : memref<2x18x128xf32, #tpu.memory_space<vmem>>, vector<2x1x128xf32>,
    %291 = vector.extract_strided_slice %280 {offsets = [0, 5, 0], sizes = [2, 1, 128], strides = [1, 1, 1]} : vector<2x8x128xf32> to vector<2x1x128xf32>
    %c0_280 = arith.constant 0 : index
    %c11 = arith.constant 11 : index
    %c0_281 = arith.constant 0 : index
    %292 = vector.load %arg4[%c0_280, %c11, %c0_281] : memref<2x18x128xf32, #tpu.memory_space<vmem>>, vector<2x1x128xf32>
    tpu.vector_store %arg4[%c0_280, %c11, %c0_281], %291 {strides = array<i32>} : memref<2x18x128xf32, #tpu.memory_space<vmem>>, vector<2x1x128xf32>,
    %293 = vector.extract_strided_slice %280 {offsets = [0, 6, 0], sizes = [2, 1, 128], strides = [1, 1, 1]} : vector<2x8x128xf32> to vector<2x1x128xf32>
    %c0_282 = arith.constant 0 : index
    %c13 = arith.constant 13 : index
    %c0_283 = arith.constant 0 : index
    %294 = vector.load %arg4[%c0_282, %c13, %c0_283] : memref<2x18x128xf32, #tpu.memory_space<vmem>>, vector<2x1x128xf32>
    tpu.vector_store %arg4[%c0_282, %c13, %c0_283], %293 {strides = array<i32>} : memref<2x18x128xf32, #tpu.memory_space<vmem>>, vector<2x1x128xf32>,
    %295 = vector.extract_strided_slice %280 {offsets = [0, 7, 0], sizes = [2, 1, 128], strides = [1, 1, 1]} : vector<2x8x128xf32> to vector<2x1x128xf32>
    %c0_284 = arith.constant 0 : index
    %c15 = arith.constant 15 : index
    %c0_285 = arith.constant 0 : index
    %296 = vector.load %arg4[%c0_284, %c15, %c0_285] : memref<2x18x128xf32, #tpu.memory_space<vmem>>, vector<2x1x128xf32>
    tpu.vector_store %arg4[%c0_284, %c15, %c0_285], %295 {strides = array<i32>} : memref<2x18x128xf32, #tpu.memory_space<vmem>>, vector<2x1x128xf32>,
    %c3504 = arith.constant 3504 : index
    %c0_286 = arith.constant 0 : index
    %297 = vector.load %arg2[%c3504, %c0_286] : memref<5184x128xf32, #tpu.memory_space<vmem>>, vector<128x128xf32>
    %cst_287 = arith.constant dense<0.000000e+00> : vector<16x128xf32>
    %298 = tpu.matmul %274, %297, %cst_287 {dimension_numbers = #tpu.dot_dimension_numbers<[1], [0], [0], [1], [0, 0, 1, 1], [], []>} : vector<16x128xf32>, vector<128x128xf32>, vector<16x128xf32> -> vector<16x128xf32>
    %299 = vector.broadcast %275 : vector<1x128xf32> to vector<16x128xf32>
    %300 = arith.addf %298, %299 : vector<16x128xf32>
    %301 = vector.shape_cast %300 : vector<16x128xf32> to vector<2x8x128xf32>
    %302 = vector.extract_strided_slice %301 {offsets = [0, 0, 0], sizes = [2, 1, 128], strides = [1, 1, 1]} : vector<2x8x128xf32> to vector<2x1x128xf32>
    %c0_288 = arith.constant 0 : index
    %c2_289 = arith.constant 2 : index
    %c0_290 = arith.constant 0 : index
    %303 = vector.load %arg4[%c0_288, %c2_289, %c0_290] : memref<2x18x128xf32, #tpu.memory_space<vmem>>, vector<2x1x128xf32>
    tpu.vector_store %arg4[%c0_288, %c2_289, %c0_290], %302 {strides = array<i32>} : memref<2x18x128xf32, #tpu.memory_space<vmem>>, vector<2x1x128xf32>,
    %304 = vector.extract_strided_slice %301 {offsets = [0, 1, 0], sizes = [2, 1, 128], strides = [1, 1, 1]} : vector<2x8x128xf32> to vector<2x1x128xf32>
    %c0_291 = arith.constant 0 : index
    %c4_292 = arith.constant 4 : index
    %c0_293 = arith.constant 0 : index
    %305 = vector.load %arg4[%c0_291, %c4_292, %c0_293] : memref<2x18x128xf32, #tpu.memory_space<vmem>>, vector<2x1x128xf32>
    tpu.vector_store %arg4[%c0_291, %c4_292, %c0_293], %304 {strides = array<i32>} : memref<2x18x128xf32, #tpu.memory_space<vmem>>, vector<2x1x128xf32>,
    %306 = vector.extract_strided_slice %301 {offsets = [0, 2, 0], sizes = [2, 1, 128], strides = [1, 1, 1]} : vector<2x8x128xf32> to vector<2x1x128xf32>
    %c0_294 = arith.constant 0 : index
    %c6_295 = arith.constant 6 : index
    %c0_296 = arith.constant 0 : index
    %307 = vector.load %arg4[%c0_294, %c6_295, %c0_296] : memref<2x18x128xf32, #tpu.memory_space<vmem>>, vector<2x1x128xf32>
    tpu.vector_store %arg4[%c0_294, %c6_295, %c0_296], %306 {strides = array<i32>} : memref<2x18x128xf32, #tpu.memory_space<vmem>>, vector<2x1x128xf32>,
    %308 = vector.extract_strided_slice %301 {offsets = [0, 3, 0], sizes = [2, 1, 128], strides = [1, 1, 1]} : vector<2x8x128xf32> to vector<2x1x128xf32>
    %c0_297 = arith.constant 0 : index
    %c8_298 = arith.constant 8 : index
    %c0_299 = arith.constant 0 : index
    %309 = vector.load %arg4[%c0_297, %c8_298, %c0_299] : memref<2x18x128xf32, #tpu.memory_space<vmem>>, vector<2x1x128xf32>
    tpu.vector_store %arg4[%c0_297, %c8_298, %c0_299], %308 {strides = array<i32>} : memref<2x18x128xf32, #tpu.memory_space<vmem>>, vector<2x1x128xf32>,
    %310 = vector.extract_strided_slice %301 {offsets = [0, 4, 0], sizes = [2, 1, 128], strides = [1, 1, 1]} : vector<2x8x128xf32> to vector<2x1x128xf32>
    %c0_300 = arith.constant 0 : index
    %c10 = arith.constant 10 : index
    %c0_301 = arith.constant 0 : index
    %311 = vector.load %arg4[%c0_300, %c10, %c0_301] : memref<2x18x128xf32, #tpu.memory_space<vmem>>, vector<2x1x128xf32>
    tpu.vector_store %arg4[%c0_300, %c10, %c0_301], %310 {strides = array<i32>} : memref<2x18x128xf32, #tpu.memory_space<vmem>>, vector<2x1x128xf32>,
    %312 = vector.extract_strided_slice %301 {offsets = [0, 5, 0], sizes = [2, 1, 128], strides = [1, 1, 1]} : vector<2x8x128xf32> to vector<2x1x128xf32>
    %c0_302 = arith.constant 0 : index
    %c12 = arith.constant 12 : index
    %c0_303 = arith.constant 0 : index
    %313 = vector.load %arg4[%c0_302, %c12, %c0_303] : memref<2x18x128xf32, #tpu.memory_space<vmem>>, vector<2x1x128xf32>
    tpu.vector_store %arg4[%c0_302, %c12, %c0_303], %312 {strides = array<i32>} : memref<2x18x128xf32, #tpu.memory_space<vmem>>, vector<2x1x128xf32>,
    %314 = vector.extract_strided_slice %301 {offsets = [0, 6, 0], sizes = [2, 1, 128], strides = [1, 1, 1]} : vector<2x8x128xf32> to vector<2x1x128xf32>
    %c0_304 = arith.constant 0 : index
    %c14 = arith.constant 14 : index
    %c0_305 = arith.constant 0 : index
    %315 = vector.load %arg4[%c0_304, %c14, %c0_305] : memref<2x18x128xf32, #tpu.memory_space<vmem>>, vector<2x1x128xf32>
    tpu.vector_store %arg4[%c0_304, %c14, %c0_305], %314 {strides = array<i32>} : memref<2x18x128xf32, #tpu.memory_space<vmem>>, vector<2x1x128xf32>,
    %316 = vector.extract_strided_slice %301 {offsets = [0, 7, 0], sizes = [2, 1, 128], strides = [1, 1, 1]} : vector<2x8x128xf32> to vector<2x1x128xf32>
    %c0_306 = arith.constant 0 : index
    %c16_307 = arith.constant 16 : index
    %c0_308 = arith.constant 0 : index
    %317 = vector.load %arg4[%c0_306, %c16_307, %c0_308] : memref<2x18x128xf32, #tpu.memory_space<vmem>>, vector<2x1x128xf32>
    tpu.vector_store %arg4[%c0_306, %c16_307, %c0_308], %316 {strides = array<i32>} : memref<2x18x128xf32, #tpu.memory_space<vmem>>, vector<2x1x128xf32>,
    %c0_309 = arith.constant 0 : index
    %c0_310 = arith.constant 0 : index
    %c0_311 = arith.constant 0 : index
    %318 = vector.load %arg4[%c0_309, %c0_310, %c0_311] : memref<2x18x128xf32, #tpu.memory_space<vmem>>, vector<2x16x128xf32>
    %319 = vector.shape_cast %318 : vector<2x16x128xf32> to vector<32x128xf32>
    %c3632 = arith.constant 3632 : index
    %c0_312 = arith.constant 0 : index
    %320 = vector.load %arg2[%c3632, %c0_312] : memref<5184x128xf32, #tpu.memory_space<vmem>>, vector<128x128xf32>
    %cst_313 = arith.constant dense<0.000000e+00> : vector<32x128xf32>
    %321 = tpu.matmul %319, %320, %cst_313 {dimension_numbers = #tpu.dot_dimension_numbers<[1], [0], [0], [1], [0, 0, 1, 1], [], []>} : vector<32x128xf32>, vector<128x128xf32>, vector<32x128xf32> -> vector<32x128xf32>
    %c0_314 = arith.constant 0 : index
    %c1_315 = arith.constant 1 : index
    %c0_316 = arith.constant 0 : index
    %322 = vector.load %arg4[%c0_314, %c1_315, %c0_316] : memref<2x18x128xf32, #tpu.memory_space<vmem>>, vector<2x16x128xf32>
    %323 = vector.shape_cast %322 : vector<2x16x128xf32> to vector<32x128xf32>
    %c3760 = arith.constant 3760 : index
    %c0_317 = arith.constant 0 : index
    %324 = vector.load %arg2[%c3760, %c0_317] : memref<5184x128xf32, #tpu.memory_space<vmem>>, vector<128x128xf32>
    %cst_318 = arith.constant dense<0.000000e+00> : vector<32x128xf32>
    %325 = tpu.matmul %323, %324, %cst_318 {dimension_numbers = #tpu.dot_dimension_numbers<[1], [0], [0], [1], [0, 0, 1, 1], [], []>} : vector<32x128xf32>, vector<128x128xf32>, vector<32x128xf32> -> vector<32x128xf32>
    %326 = arith.addf %321, %325 : vector<32x128xf32>
    %c0_319 = arith.constant 0 : index
    %c2_320 = arith.constant 2 : index
    %c0_321 = arith.constant 0 : index
    %327 = vector.load %arg4[%c0_319, %c2_320, %c0_321] : memref<2x18x128xf32, #tpu.memory_space<vmem>>, vector<2x16x128xf32>
    %328 = vector.shape_cast %327 : vector<2x16x128xf32> to vector<32x128xf32>
    %c3888 = arith.constant 3888 : index
    %c0_322 = arith.constant 0 : index
    %329 = vector.load %arg2[%c3888, %c0_322] : memref<5184x128xf32, #tpu.memory_space<vmem>>, vector<128x128xf32>
    %cst_323 = arith.constant dense<0.000000e+00> : vector<32x128xf32>
    %330 = tpu.matmul %328, %329, %cst_323 {dimension_numbers = #tpu.dot_dimension_numbers<[1], [0], [0], [1], [0, 0, 1, 1], [], []>} : vector<32x128xf32>, vector<128x128xf32>, vector<32x128xf32> -> vector<32x128xf32>
    %331 = arith.addf %326, %330 : vector<32x128xf32>
    %c5177 = arith.constant 5177 : index
    %c0_324 = arith.constant 0 : index
    %332 = vector.load %arg2[%c5177, %c0_324] : memref<5184x128xf32, #tpu.memory_space<vmem>>, vector<1x128xf32>
    %333 = vector.broadcast %332 : vector<1x128xf32> to vector<32x128xf32>
    %334 = arith.addf %331, %333 : vector<32x128xf32>
    %c0_325 = arith.constant 0 : index
    %c0_326 = arith.constant 0 : index
    %c0_327 = arith.constant 0 : index
    %335 = vector.load %arg7[%c0_325, %c0_326, %c0_327] : memref<2x18x128xf32, #tpu.memory_space<vmem>>, vector<2x16x128xf32>
    %336 = vector.shape_cast %335 : vector<2x16x128xf32> to vector<32x128xf32>
    %c4016 = arith.constant 4016 : index
    %c0_328 = arith.constant 0 : index
    %337 = vector.load %arg2[%c4016, %c0_328] : memref<5184x128xf32, #tpu.memory_space<vmem>>, vector<128x128xf32>
    %cst_329 = arith.constant dense<0.000000e+00> : vector<32x128xf32>
    %338 = tpu.matmul %336, %337, %cst_329 {dimension_numbers = #tpu.dot_dimension_numbers<[1], [0], [0], [1], [0, 0, 1, 1], [], []>} : vector<32x128xf32>, vector<128x128xf32>, vector<32x128xf32> -> vector<32x128xf32>
    %c0_330 = arith.constant 0 : index
    %c1_331 = arith.constant 1 : index
    %c0_332 = arith.constant 0 : index
    %339 = vector.load %arg7[%c0_330, %c1_331, %c0_332] : memref<2x18x128xf32, #tpu.memory_space<vmem>>, vector<2x16x128xf32>
    %340 = vector.shape_cast %339 : vector<2x16x128xf32> to vector<32x128xf32>
    %c4144 = arith.constant 4144 : index
    %c0_333 = arith.constant 0 : index
    %341 = vector.load %arg2[%c4144, %c0_333] : memref<5184x128xf32, #tpu.memory_space<vmem>>, vector<128x128xf32>
    %cst_334 = arith.constant dense<0.000000e+00> : vector<32x128xf32>
    %342 = tpu.matmul %340, %341, %cst_334 {dimension_numbers = #tpu.dot_dimension_numbers<[1], [0], [0], [1], [0, 0, 1, 1], [], []>} : vector<32x128xf32>, vector<128x128xf32>, vector<32x128xf32> -> vector<32x128xf32>
    %343 = arith.addf %338, %342 : vector<32x128xf32>
    %c0_335 = arith.constant 0 : index
    %c2_336 = arith.constant 2 : index
    %c0_337 = arith.constant 0 : index
    %344 = vector.load %arg7[%c0_335, %c2_336, %c0_337] : memref<2x18x128xf32, #tpu.memory_space<vmem>>, vector<2x16x128xf32>
    %345 = vector.shape_cast %344 : vector<2x16x128xf32> to vector<32x128xf32>
    %c4272 = arith.constant 4272 : index
    %c0_338 = arith.constant 0 : index
    %346 = vector.load %arg2[%c4272, %c0_338] : memref<5184x128xf32, #tpu.memory_space<vmem>>, vector<128x128xf32>
    %cst_339 = arith.constant dense<0.000000e+00> : vector<32x128xf32>
    %347 = tpu.matmul %345, %346, %cst_339 {dimension_numbers = #tpu.dot_dimension_numbers<[1], [0], [0], [1], [0, 0, 1, 1], [], []>} : vector<32x128xf32>, vector<128x128xf32>, vector<32x128xf32> -> vector<32x128xf32>
    %348 = arith.addf %343, %347 : vector<32x128xf32>
    %349 = arith.addf %334, %348 : vector<32x128xf32>
    %cst_340 = arith.constant 0.000000e+00 : f32
    %350 = vector.broadcast %cst_340 : f32 to vector<32x128xf32>
    %351 = arith.maximumf %349, %350 : vector<32x128xf32>
    %352 = vector.shape_cast %351 : vector<32x128xf32> to vector<2x16x128xf32>
    %c0_341 = arith.constant 0 : index
    %c1_342 = arith.constant 1 : index
    %c0_343 = arith.constant 0 : index
    %353 = vector.load %arg4[%c0_341, %c1_342, %c0_343] : memref<2x18x128xf32, #tpu.memory_space<vmem>>, vector<2x16x128xf32>
    tpu.vector_store %arg4[%c0_341, %c1_342, %c0_343], %352 {strides = array<i32>} : memref<2x18x128xf32, #tpu.memory_space<vmem>>, vector<2x16x128xf32>,
    %c0_344 = arith.constant 0 : index
    %c0_345 = arith.constant 0 : index
    %c0_346 = arith.constant 0 : index
    %354 = vector.load %arg4[%c0_344, %c0_345, %c0_346] : memref<2x18x128xf32, #tpu.memory_space<vmem>>, vector<2x16x128xf32>
    %355 = vector.shape_cast %354 : vector<2x16x128xf32> to vector<32x128xf32>
    %c4400 = arith.constant 4400 : index
    %c0_347 = arith.constant 0 : index
    %356 = vector.load %arg2[%c4400, %c0_347] : memref<5184x128xf32, #tpu.memory_space<vmem>>, vector<128x128xf32>
    %cst_348 = arith.constant dense<0.000000e+00> : vector<32x128xf32>
    %357 = tpu.matmul %355, %356, %cst_348 {dimension_numbers = #tpu.dot_dimension_numbers<[1], [0], [0], [1], [0, 0, 1, 1], [], []>} : vector<32x128xf32>, vector<128x128xf32>, vector<32x128xf32> -> vector<32x128xf32>
    %c0_349 = arith.constant 0 : index
    %c1_350 = arith.constant 1 : index
    %c0_351 = arith.constant 0 : index
    %358 = vector.load %arg4[%c0_349, %c1_350, %c0_351] : memref<2x18x128xf32, #tpu.memory_space<vmem>>, vector<2x16x128xf32>
    %359 = vector.shape_cast %358 : vector<2x16x128xf32> to vector<32x128xf32>
    %c4528 = arith.constant 4528 : index
    %c0_352 = arith.constant 0 : index
    %360 = vector.load %arg2[%c4528, %c0_352] : memref<5184x128xf32, #tpu.memory_space<vmem>>, vector<128x128xf32>
    %cst_353 = arith.constant dense<0.000000e+00> : vector<32x128xf32>
    %361 = tpu.matmul %359, %360, %cst_353 {dimension_numbers = #tpu.dot_dimension_numbers<[1], [0], [0], [1], [0, 0, 1, 1], [], []>} : vector<32x128xf32>, vector<128x128xf32>, vector<32x128xf32> -> vector<32x128xf32>
    %362 = arith.addf %357, %361 : vector<32x128xf32>
    %c0_354 = arith.constant 0 : index
    %c2_355 = arith.constant 2 : index
    %c0_356 = arith.constant 0 : index
    %363 = vector.load %arg4[%c0_354, %c2_355, %c0_356] : memref<2x18x128xf32, #tpu.memory_space<vmem>>, vector<2x16x128xf32>
    %364 = vector.shape_cast %363 : vector<2x16x128xf32> to vector<32x128xf32>
    %c4656 = arith.constant 4656 : index
    %c0_357 = arith.constant 0 : index
    %365 = vector.load %arg2[%c4656, %c0_357] : memref<5184x128xf32, #tpu.memory_space<vmem>>, vector<128x128xf32>
    %cst_358 = arith.constant dense<0.000000e+00> : vector<32x128xf32>
    %366 = tpu.matmul %364, %365, %cst_358 {dimension_numbers = #tpu.dot_dimension_numbers<[1], [0], [0], [1], [0, 0, 1, 1], [], []>} : vector<32x128xf32>, vector<128x128xf32>, vector<32x128xf32> -> vector<32x128xf32>
    %367 = arith.addf %362, %366 : vector<32x128xf32>
    %c5179 = arith.constant 5179 : index
    %c0_359 = arith.constant 0 : index
    %368 = vector.load %arg2[%c5179, %c0_359] : memref<5184x128xf32, #tpu.memory_space<vmem>>, vector<1x128xf32>
    %369 = vector.broadcast %368 : vector<1x128xf32> to vector<32x128xf32>
    %370 = arith.addf %367, %369 : vector<32x128xf32>
    %cst_360 = arith.constant 0.000000e+00 : f32
    %371 = vector.broadcast %cst_360 : f32 to vector<32x128xf32>
    %372 = arith.maximumf %370, %371 : vector<32x128xf32>
    %373 = vector.shape_cast %372 : vector<32x128xf32> to vector<2x16x128xf32>
    %c0_361 = arith.constant 0 : index
    %c1_362 = arith.constant 1 : index
    %c0_363 = arith.constant 0 : index
    %374 = vector.load %arg4[%c0_361, %c1_362, %c0_363] : memref<2x18x128xf32, #tpu.memory_space<vmem>>, vector<2x16x128xf32>
    tpu.vector_store %arg4[%c0_361, %c1_362, %c0_363], %373 {strides = array<i32>} : memref<2x18x128xf32, #tpu.memory_space<vmem>>, vector<2x16x128xf32>,
    %c0_364 = arith.constant 0 : index
    %c0_365 = arith.constant 0 : index
    %c0_366 = arith.constant 0 : index
    %375 = vector.load %arg4[%c0_364, %c0_365, %c0_366] : memref<2x18x128xf32, #tpu.memory_space<vmem>>, vector<2x16x128xf32>
    %376 = vector.shape_cast %375 : vector<2x16x128xf32> to vector<32x128xf32>
    %c4784 = arith.constant 4784 : index
    %c0_367 = arith.constant 0 : index
    %377 = vector.load %arg2[%c4784, %c0_367] : memref<5184x128xf32, #tpu.memory_space<vmem>>, vector<128x128xf32>
    %cst_368 = arith.constant dense<0.000000e+00> : vector<32x128xf32>
    %378 = tpu.matmul %376, %377, %cst_368 {dimension_numbers = #tpu.dot_dimension_numbers<[1], [0], [0], [1], [0, 0, 1, 1], [], []>} : vector<32x128xf32>, vector<128x128xf32>, vector<32x128xf32> -> vector<32x128xf32>
    %c0_369 = arith.constant 0 : index
    %c1_370 = arith.constant 1 : index
    %c0_371 = arith.constant 0 : index
    %379 = vector.load %arg4[%c0_369, %c1_370, %c0_371] : memref<2x18x128xf32, #tpu.memory_space<vmem>>, vector<2x16x128xf32>
    %380 = vector.shape_cast %379 : vector<2x16x128xf32> to vector<32x128xf32>
    %c4912 = arith.constant 4912 : index
    %c0_372 = arith.constant 0 : index
    %381 = vector.load %arg2[%c4912, %c0_372] : memref<5184x128xf32, #tpu.memory_space<vmem>>, vector<128x128xf32>
    %cst_373 = arith.constant dense<0.000000e+00> : vector<32x128xf32>
    %382 = tpu.matmul %380, %381, %cst_373 {dimension_numbers = #tpu.dot_dimension_numbers<[1], [0], [0], [1], [0, 0, 1, 1], [], []>} : vector<32x128xf32>, vector<128x128xf32>, vector<32x128xf32> -> vector<32x128xf32>
    %383 = arith.addf %378, %382 : vector<32x128xf32>
    %c0_374 = arith.constant 0 : index
    %c2_375 = arith.constant 2 : index
    %c0_376 = arith.constant 0 : index
    %384 = vector.load %arg4[%c0_374, %c2_375, %c0_376] : memref<2x18x128xf32, #tpu.memory_space<vmem>>, vector<2x16x128xf32>
    %385 = vector.shape_cast %384 : vector<2x16x128xf32> to vector<32x128xf32>
    %c5040 = arith.constant 5040 : index
    %c0_377 = arith.constant 0 : index
    %386 = vector.load %arg2[%c5040, %c0_377] : memref<5184x128xf32, #tpu.memory_space<vmem>>, vector<128x128xf32>
    %cst_378 = arith.constant dense<0.000000e+00> : vector<32x128xf32>
    %387 = tpu.matmul %385, %386, %cst_378 {dimension_numbers = #tpu.dot_dimension_numbers<[1], [0], [0], [1], [0, 0, 1, 1], [], []>} : vector<32x128xf32>, vector<128x128xf32>, vector<32x128xf32> -> vector<32x128xf32>
    %388 = arith.addf %383, %387 : vector<32x128xf32>
    %c5180 = arith.constant 5180 : index
    %c0_379 = arith.constant 0 : index
    %389 = vector.load %arg2[%c5180, %c0_379] : memref<5184x128xf32, #tpu.memory_space<vmem>>, vector<1x128xf32>
    %390 = vector.broadcast %389 : vector<1x128xf32> to vector<32x128xf32>
    %391 = arith.addf %388, %390 : vector<32x128xf32>
    %392 = vector.extract_strided_slice %391 {offsets = [0, 0], sizes = [32, 16], strides = [1, 1]} : vector<32x128xf32> to vector<32x16xf32>
    %393 = arith.negf %392 : vector<32x16xf32>
    %394 = math.exp %393 : vector<32x16xf32>
    %cst_380 = arith.constant 1.000000e+00 : f32
    %395 = vector.broadcast %cst_380 : f32 to vector<32x16xf32>
    %396 = arith.addf %395, %394 : vector<32x16xf32>
    %397 = arith.divf %395, %396 : vector<32x16xf32>
    %398 = vector.shape_cast %397 : vector<32x16xf32> to vector<2x16x16xf32>
    %c0_381 = arith.constant 0 : index
    %c0_382 = arith.constant 0 : index
    %c0_383 = arith.constant 0 : index
    %399 = vector.load %arg3[%c0_381, %c0_382, %c0_383] : memref<2x16x16xf32, #tpu.memory_space<vmem>>, vector<2x16x16xf32>
    tpu.vector_store %arg3[%c0_381, %c0_382, %c0_383], %398 {strides = array<i32>} : memref<2x16x16xf32, #tpu.memory_space<vmem>>, vector<2x16x16xf32>,
    return
  }
  func.func @transform_0(%arg0: i32) -> (i32, i32, i32) {
    %c0_i32 = arith.constant 0 : i32
    %c0_i32_0 = arith.constant 0 : i32
    %c0_i32_1 = arith.constant 0 : i32
    return %arg0, %c0_i32, %c0_i32_0 : i32, i32, i32
  }
  func.func @transform_1(%arg0: i32) -> (i32, i32) {
    %c0_i32 = arith.constant 0 : i32
    %c0_i32_0 = arith.constant 0 : i32
    %c0_i32_1 = arith.constant 0 : i32
    return %c0_i32, %c0_i32_0 : i32, i32
  }
  func.func @transform_2(%arg0: i32) -> (i32, i32, i32) {
    %c0_i32 = arith.constant 0 : i32
    %c0_i32_0 = arith.constant 0 : i32
    %c0_i32_1 = arith.constant 0 : i32
    return %arg0, %c0_i32, %c0_i32_0 : i32, i32, i32
  }
}

</mosaic_0001>

<llo_original>
// kernel: unet_forward.1
$region0: #{unet_forward.1}
  #allocation0 [shape = 'u32[]', space=smem, size = 0x4, offset = 0x4, fixed_abs, tag = 'smem constant byte address 0x4 - core index']
  #allocation1 [shape = 'u32[144,128]{1,0:T(1,128)}', space=vmem, size = 0x12000, scoped, tag = 'internal scratch']
  #allocation2 [shape = 'f32[2,18,128]{2,1,0:T(8,128)}', space=vmem, size = 0x6000, scoped, tag = 'scratch operand']
  #allocation3 [shape = 'f32[2,10,128]{2,1,0:T(8,128)}', space=vmem, size = 0x4000, scoped, tag = 'scratch operand']
  #allocation4 [shape = 'f32[2,6,128]{2,1,0:T(8,128)}', space=vmem, size = 0x2000, scoped, tag = 'scratch operand']
  #allocation5 [shape = 'f32[2,18,128]{2,1,0:T(8,128)}', space=vmem, size = 0x6000, scoped, tag = 'scratch operand']
  #allocation6 [shape = 'f32[2,10,128]{2,1,0:T(8,128)}', space=vmem, size = 0x4000, scoped, tag = 'scratch operand']
  %s0 = inlined_call_operand.hbm [shape: f32[4,16,16], index: 0, kind: input, shape index: {}]
  %s1 = inlined_call_operand.hbm [shape: f32[5184,128], index: 1, kind: input, shape index: {}]
  %s2 = inlined_call_operand.hbm [shape: f32[4,16,16], index: 2, kind: output, shape index: {}]
  %s3 = sld [smem:[#allocation0]]
  $region49: #{unet_forward.1} parent=0
    _
  %s5 = ssub.s32 1, %s3
  %s6 = scalar_select 0, %s5, %s3
  $region1: #{unet_forward.1} parent=0
    #allocation7 [shape = 'u8[32768]{0}', space=vmem, size = 0x8000, scoped, tag = 'input window, operand 0']
    #allocation8 [shape = 's32[2]{0}', space=sflag, size = 0x8, scoped, tag = 'scoped memory for unet_forward.1']
    #allocation9 [shape = 's32[2]{0}', space=sflag, size = 0x8, scoped, tag = 'scoped memory for unet_forward.1']
    #allocation10 [shape = 'u8[2654208]{0}', space=vmem, size = 0x288000, scoped, tag = 'input window, operand 1, single buffered']
    #allocation11 [shape = 's32[1]{0}', space=sflag, size = 0x4, scoped, tag = 'scoped memory for unet_forward.1']
    #allocation12 [shape = 'u8[32768]{0}', space=vmem, size = 0x8000, scoped, tag = 'output window, operand 0']
    %7 = vsyncpa [#allocation8], 0
    %s8 = scalar_lea.sflag [#allocation8], 1
    %9 = vsyncpa %s8, 0
    %10 = vsyncpa [#allocation11], 0
    %11 = vsyncpa [#allocation9], 0
    %s12 = scalar_lea.sflag [#allocation9], 1
    %13 = vsyncpa %s12, 0
    loop: start=0, step=1, limit=4
    $region2: #{unet_forward.1} parent=1 // loop_pre_header
      _
    $region3: #{unet_forward.1} parent=1 // loop_header
      %s15 = sphi 0, %s19
      %p16 = scmp.ge.s32.totalorder %s15, 4
      %s25 = sphi 0, %s27
      %s28 = sphi 0, %s25
      %s29 = sphi 0, %s28
      %s45 = sphi 0, %s29
      %s49 = sphi 0, %s49
      %s51 = sphi 0, %s49
      %s52 = sphi 0, %s51
      %s66 = sphi 0, %s52
      %s72 = sphi 0, %s74
      %s75 = sphi 0, %s72
      %s76 = sphi 0, %s75
      %s92 = sphi 0, %s76
    $region4: #{unet_forward.1} parent=1 // loop_header_branch
      %18 = sbr.rel (%p16) target = $region8
    $region5: #{unet_forward.1} parent=1 // loop_body
      %s20 = ssub.s32 %s15, 1
      %s21 = ssub.s32 %s15, 2
      %s22 = sadd.s32 %s15, 1
      %s23 = ssub.s32 %s15, %s22
      %p24 = scmp.eq.s32.totalorder %s23, 0
      %s26 = sadd.s32 %s25, 1
      %s27 = scalar_select %p24, %s25, %s26
      %p30 = pneg %p24
      %p31 = scmp.eq.s32.totalorder %s15, 1
      %p32 = por %p30, %p31
      %p33 = scmp.ne.s32.totalorder %s25, %s28
      %p34 = scmp.eq.s32.totalorder %s15, 0
      %p35 = por %p33, %p34
      %p36 = scmp.ne.s32.totalorder %s25, %s28
      %p37 = scmp.eq.s32.totalorder %s20, 1
      %p38 = por %p36, %p37
      %p39 = scmp.ne.s32.totalorder %s28, %s29
      %p40 = scmp.eq.s32.totalorder %s20, 0
      %p41 = por %p39, %p40
      %p42 = scmp.ne.s32.totalorder %s28, %s29
      %p43 = scmp.eq.s32.totalorder %s21, 1
      %p44 = por %p42, %p43
      %p46 = scmp.ne.s32.totalorder %s29, %s45
      %p47 = scmp.eq.s32.totalorder %s21, 0
      %p48 = por %p46, %p47
      %s50 = sadd.s32 %s49, 1
      %p53 = scmp.eq.s32.totalorder %s15, 1
      %p54 = scmp.ne.s32.totalorder %s49, %s51
      %p55 = scmp.eq.s32.totalorder %s15, 0
      %p56 = por %p54, %p55
      %p57 = scmp.ne.s32.totalorder %s49, %s51
      %p58 = scmp.eq.s32.totalorder %s20, 1
      %p59 = por %p57, %p58
      %p60 = scmp.ne.s32.totalorder %s51, %s52
      %p61 = scmp.eq.s32.totalorder %s20, 0
      %p62 = por %p60, %p61
      %p63 = scmp.ne.s32.totalorder %s51, %s52
      %p64 = scmp.eq.s32.totalorder %s21, 1
      %p65 = por %p63, %p64
      %p67 = scmp.ne.s32.totalorder %s52, %s66
      %p68 = scmp.eq.s32.totalorder %s21, 0
      %p69 = por %p67, %p68
      %s70 = ssub.s32 %s15, %s22
      %p71 = scmp.eq.s32.totalorder %s70, 0
      %s73 = sadd.s32 %s72, 1
      %s74 = scalar_select %p71, %s72, %s73
      %p77 = pneg %p71
      %p78 = scmp.eq.s32.totalorder %s15, 1
      %p79 = por %p77, %p78
      %p80 = scmp.ne.s32.totalorder %s72, %s75
      %p81 = scmp.eq.s32.totalorder %s15, 0
      %p82 = por %p80, %p81
      %p83 = scmp.ne.s32.totalorder %s72, %s75
      %p84 = scmp.eq.s32.totalorder %s20, 1
      %p85 = por %p83, %p84
      %p86 = scmp.ne.s32.totalorder %s75, %s76
      %p87 = scmp.eq.s32.totalorder %s20, 0
      %p88 = por %p86, %p87
      %p89 = scmp.ne.s32.totalorder %s75, %s76
      %p90 = scmp.eq.s32.totalorder %s21, 1
      %p91 = por %p89, %p90
      %p93 = scmp.ne.s32.totalorder %s76, %s92
      %p94 = scmp.eq.s32.totalorder %s21, 0
      %p95 = por %p93, %p94
      %p96 = scmp.le.s32.totalorder 1, %s15
      %p97 = scmp.lt.s32.totalorder %s15, 3
      %p98 = pnand %p96, %p97
      %p99 = pneg %p98
      // Predicated region
      $region9: #{unet_forward.1} parent=5 // pred_check
        _
      $region10: #{unet_forward.1} parent=5 // pred_check_branch
        %101 = sbr.rel (%p98) target = $region12
      $region11: #{unet_forward.1} parent=5 // pred_region
        %s102 = ssub.s32 %s15, 1
        // Predicated region
        $region13: #{unet_forward.1} parent=11 // pred_check
          %p103 = pneg %p62
        $region14: #{unet_forward.1} parent=11 // pred_check_branch
          %105 = sbr.rel (%p103) target = $region16
        $region15: #{unet_forward.1} parent=11 // pred_region
          %s107 = ssub.s32 82944, 82944
          %108 = vsyncadd [#allocation11], %s107
          %s109 = sshll.u32 [#allocation10], 4
          %s110 = int_to_ptr.vmem [resolvable:$true] %s109
          %115 = dma.hbm_to_vmem [thread:$0]  %s1, 82944, %s110, [#allocation11], 128, 128, 8
        $region16: #{unet_forward.1} parent=11 // pred_fallthru
          _
      $region12: #{unet_forward.1} parent=5 // pred_fallthru
        _
      %p116 = scmp.lt.s32.totalorder %s15, 2
      // Predicated region
      $region17: #{unet_forward.1} parent=5 // pred_check
        %p117 = pneg %p116
      $region18: #{unet_forward.1} parent=5 // pred_check_branch
        %119 = sbr.rel (%p117) target = $region20
      $region19: #{unet_forward.1} parent=5 // pred_region
        // Predicated region
        $region21: #{unet_forward.1} parent=19 // pred_check
          %p120 = pneg %p35
        $region22: #{unet_forward.1} parent=19 // pred_check_branch
          %122 = sbr.rel (%p120) target = $region24
        $region23: #{unet_forward.1} parent=19 // pred_region
          %s123 = sand.u32 %s25, 1
          %s124 = scalar_lea.sflag [#allocation8], %s123
          %s125 = sand.u32 %s25, 1
          %s126 = smul.addr %s125, 32
          %s127 = scalar_lea.vmem [#allocation7], %s126
          %s128 = smul.u32 2, %s15
          %s130 = ssub.s32 512, 512
          %131 = vsyncadd %s124, %s130
          %s132 = smul.addr %s128, 2
          %s133 = smul.addr %s132, 128
          %s134 = scalar_lea.hbm %s0, %s133
          %s135 = sshll.u32 %s127, 4
          %s136 = int_to_ptr.vmem [resolvable:$true] %s135
          %141 = dma.hbm_to_vmem [thread:$0]  %s134, 512, %s136, %s124, 128, 128, 8
        $region24: #{unet_forward.1} parent=19 // pred_fallthru
          _
      $region20: #{unet_forward.1} parent=5 // pred_fallthru
        _
      %p142 = scmp.le.s32.totalorder 1, %s15
      %p143 = scmp.lt.s32.totalorder %s15, 3
      %p144 = pnand %p142, %p143
      %p145 = pneg %p144
      // Predicated region
      $region25: #{unet_forward.1} parent=5 // pred_check
        _
      $region26: #{unet_forward.1} parent=5 // pred_check_branch
        %147 = sbr.rel (%p144) target = $region28
      $region27: #{unet_forward.1} parent=5 // pred_region
        %s148 = ssub.s32 %s15, 1
        %s149 = sand.u32 %s28, 1
        %s150 = scalar_lea.sflag [#allocation8], %s149
        %s151 = sand.u32 %s28, 1
        %s152 = smul.addr %s151, 32
        %s153 = scalar_lea.vmem [#allocation7], %s152
        // Predicated region
        $region29: #{unet_forward.1} parent=27 // pred_check
          %p154 = pneg %p41
        $region30: #{unet_forward.1} parent=27 // pred_check_branch
          %156 = sbr.rel (%p154) target = $region32
        $region31: #{unet_forward.1} parent=27 // pred_region
          %157 = dma.done %s150, 512
        $region32: #{unet_forward.1} parent=27 // pred_fallthru
          _
        // Predicated region
        $region33: #{unet_forward.1} parent=27 // pred_check
          %p158 = pneg %p62
        $region34: #{unet_forward.1} parent=27 // pred_check_branch
          %160 = sbr.rel (%p158) target = $region36
        $region35: #{unet_forward.1} parent=27 // pred_region
          %161 = dma.done [#allocation11], 82944
        $region36: #{unet_forward.1} parent=27 // pred_fallthru
          _
        %s162 = sand.u32 %s28, 1
        %s163 = scalar_lea.sflag [#allocation8], %s162
        %s164 = sand.u32 %s28, 1
        %s165 = smul.addr %s164, 32
        %s166 = scalar_lea.vmem [#allocation7], %s165
        %p167 = pneg %p41
        %p168 = pneg %p38
        %p169 = pneg %p62
        %p170 = pneg %p59
        %p171 = pneg %p88
        %p172 = pneg %p85
        %s173 = sand.u32 %s75, 1
        %s174 = scalar_lea.sflag [#allocation9], %s173
        %s175 = sand.u32 %s75, 1
        %s176 = smul.addr %s175, 32
        %s177 = scalar_lea.vmem [#allocation12], %s176
        %s178 = smul.u32 2, %s20
        %s179 = smul.u32 2, %s20
        %180 = vst [vmem:[#allocation2] sm:$0x1] 0.0
        %181 = vst [vmem:[#allocation2 + $0x18] sm:$0x1] 0.0
        %182 = vst [vmem:[#allocation2 + $0x11] sm:$0x1] 0.0
        %183 = vst [vmem:[#allocation2 + $0x29] sm:$0x1] 0.0
        %184 = vst [vmem:[#allocation3] sm:$0x1] 0.0
        %185 = vst [vmem:[#allocation3 + $0x10] sm:$0x1] 0.0
        %186 = vst [vmem:[#allocation3 + $0x9] sm:$0x1] 0.0
        %187 = vst [vmem:[#allocation3 + $0x19] sm:$0x1] 0.0
        %188 = vst [vmem:[#allocation4] sm:$0x1] 0.0
        %189 = vst [vmem:[#allocation4 + $0x8] sm:$0x1] 0.0
        %190 = vst [vmem:[#allocation4 + $0x5] sm:$0x1] 0.0
        %191 = vst [vmem:[#allocation4 + $0xd] sm:$0x1] 0.0
        %192 = vst [vmem:[#allocation5] sm:$0x1] 0.0
        %193 = vst [vmem:[#allocation5 + $0x18] sm:$0x1] 0.0
        %194 = vst [vmem:[#allocation5 + $0x11] sm:$0x1] 0.0
        %195 = vst [vmem:[#allocation5 + $0x29] sm:$0x1] 0.0
        %196 = vst [vmem:[#allocation6] sm:$0x1] 0.0
        %197 = vst [vmem:[#allocation6 + $0x10] sm:$0x1] 0.0
        %198 = vst [vmem:[#allocation6 + $0x9] sm:$0x1] 0.0
        %199 = vst [vmem:[#allocation6 + $0x19] sm:$0x1] 0.0
        %v200 = vld [vmem:[%s153] sm:$0xff]
        %v201 = vld [vmem:[%s153 + $0x8] sm:$0xff]
        %v202 = vld [vmem:[%s153 + $0x10] sm:$0xff]
        %v203 = vld [vmem:[%s153 + $0x18] sm:$0xff]
        %vm204 = vcmask 130048
        %205 = vst.msk [vmem:[#allocation2 + $0x1] sm:$0xff] %vm204, %v200
        %206 = vst.msk [vmem:[#allocation2 + $0x9] sm:$0xff] %vm204, %v201
        %207 = vst.msk [vmem:[#allocation2 + $0x19] sm:$0xff] %vm204, %v202
        %208 = vst.msk [vmem:[#allocation2 + $0x21] sm:$0xff] %vm204, %v203
        %v209 = vld [vmem:[#allocation2] sm:$0xff]
        %v210 = vld [vmem:[#allocation2 + $0x8] sm:$0xff]
        %v211 = vld [vmem:[#allocation2 + $0x18] sm:$0xff]
        %v212 = vld [vmem:[#allocation2 + $0x20] sm:$0xff]
        %v213 = vld [vmem:[#allocation10] sm:$0xff]
        %v214 = vld [vmem:[#allocation10 + $0x8] sm:$0xff]
        %v215 = vld [vmem:[#allocation2 + $0x1] sm:$0xff]
        %v216 = vld [vmem:[#allocation2 + $0x9] sm:$0xff]
        %v217 = vld [vmem:[#allocation2 + $0x19] sm:$0xff]
        %v218 = vld [vmem:[#allocation2 + $0x21] sm:$0xff]
        %v219 = vld [vmem:[#allocation10 + $0x10] sm:$0xff]
        %v220 = vld [vmem:[#allocation10 + $0x18] sm:$0xff]
        %v222 = vsel %vm204, %v215, 0
        %v225 = vsel %vm204, %v216, 0
        %v228 = vsel %vm204, %v217, 0
        %v231 = vsel %vm204, %v218, 0
        %233 = vmatprep.subr.mxu0 0.0
        %234 = vmatpush1.msra.mxu0 0.0
        %235 = vmatprep.subr.mxu0 0.0
        %236 = vmatpush1.msra.mxu0 0.0
        %237 = vmatprep.subr.mxu0 0.0
        %238 = vmatpush1.msra.mxu0 0.0
        %239 = vmatprep.subr.mxu0 0.0
        %240 = vmatpush1.msra.mxu0 0.0
        %241 = vmatprep.subr.mxu0 0.0
        %242 = vmatpush1.msra.mxu0 0.0
        %243 = vmatprep.subr.mxu0 0.0
        %244 = vmatpush1.msra.mxu0 0.0
        %245 = vmatprep.subr.mxu0 0.0
        %246 = vmatpush1.msra.mxu0 0.0
        %247 = vmatprep.subr.mxu0 0.0
        %248 = vmatpush1.msra.mxu0 0.0
        %249 = vmatprep.subr.mxu0 0.0
        %250 = vmatpush1.msra.mxu0 0.0
        %251 = vmatprep.subr.mxu0 0.0
        %252 = vmatpush1.msra.mxu0 0.0
        %253 = vmatprep.subr.mxu0 0.0
        %254 = vmatpush1.msra.mxu0 0.0
        %255 = vmatprep.subr.mxu0 0.0
        %256 = vmatpush1.msra.mxu0 0.0
        %257 = vmatprep.subr.mxu0 0.0
        %258 = vmatpush1.msra.mxu0 0.0
        %259 = vmatprep.subr.mxu0 0.0
        %260 = vmatpush1.msra.mxu0 0.0
        %261 = vmatprep.subr.mxu0 0.0
        %262 = vmatpush1.msra.mxu0 %v220
        %263 = vmatprep.subr.mxu0 0.0
        %264 = vmatpush1.msra.mxu0 %v219
        %265 = vmatprep.subr.mxu0 0.0
        %266 = vmatpush2.msra.mxu0 0.0
        %267 = vmatprep.subr.mxu0 0.0
        %268 = vmatpush2.msra.mxu0 0.0
        %269 = vmatprep.subr.mxu0 0.0
        %270 = vmatpush2.msra.mxu0 0.0
        %271 = vmatprep.subr.mxu0 0.0
        %272 = vmatpush2.msra.mxu0 0.0
        %273 = vmatprep.subr.mxu0 0.0
        %274 = vmatpush2.msra.mxu0 0.0
        %275 = vmatprep.subr.mxu0 0.0
        %276 = vmatpush2.msra.mxu0 0.0
        %277 = vmatprep.subr.mxu0 0.0
        %278 = vmatpush2.msra.mxu0 0.0
        %279 = vmatprep.subr.mxu0 0.0
        %280 = vmatpush2.msra.mxu0 0.0
        %281 = vmatprep.subr.mxu0 0.0
        %282 = vmatpush2.msra.mxu0 0.0
        %283 = vmatprep.subr.mxu0 0.0
        %284 = vmatpush2.msra.mxu0 0.0
        %285 = vmatprep.subr.mxu0 0.0
        %286 = vmatpush2.msra.mxu0 0.0
        %287 = vmatprep.subr.mxu0 0.0
        %288 = vmatpush2.msra.mxu0 0.0
        %289 = vmatprep.subr.mxu0 0.0
        %290 = vmatpush2.msra.mxu0 0.0
        %291 = vmatprep.subr.mxu0 0.0
        %292 = vmatpush2.msra.mxu0 0.0
        %293 = vmatprep.subr.mxu0 0.0
        %294 = vmatpush2.msra.mxu0 0.0
        %295 = vmatprep.subr.mxu0 0.0
        %296 = vmatpush2.msra.mxu0 0.0
        %297 = vmatprep.mubr.f32.mxu0 0.0
        %298 = vmatmul.mubr.f32.gmra.mxu0 %v222
        %v299 = vpop.f32.mrf.mxu0
        %v300 = vadd.f32 0.0, %v299
        %v301 = vpop.f32.mrf.mxu0
        %302 = vmatprep.mubr.f32.mxu0 0.0
        %303 = vmatmul.mubr.f32.gmra.mxu0 %v225
        %v304 = vpop.f32.mrf.mxu0
        %v305 = vadd.f32 0.0, %v304
        %v306 = vpop.f32.mrf.mxu0
        %307 = vmatprep.mubr.f32.mxu0 0.0
        %308 = vmatmul.mubr.f32.gmra.mxu0 %v228
        %v309 = vpop.f32.mrf.mxu0
        %v310 = vadd.f32 0.0, %v309
        %v311 = vpop.f32.mrf.mxu0
        %312 = vmatprep.mubr.f32.mxu0 0.0
        %313 = vmatmul.mubr.f32.gmra.mxu0 %v231
        %v314 = vpop.f32.mrf.mxu0
        %v315 = vadd.f32 0.0, %v314
        %v316 = vpop.f32.mrf.mxu0
        %317 = vdwg.mxu0
        %v319 = vsel %vm204, %v209, 0
        %v322 = vsel %vm204, %v210, 0
        %v325 = vsel %vm204, %v211, 0
        %v328 = vsel %vm204, %v212, 0
        %330 = vmatprep.subr.mxu0 0.0
        %331 = vmatpush1.msra.mxu0 0.0
        %332 = vmatprep.subr.mxu0 0.0
        %333 = vmatpush1.msra.mxu0 0.0
        %334 = vmatprep.subr.mxu0 0.0
        %335 = vmatpush1.msra.mxu0 0.0
        %336 = vmatprep.subr.mxu0 0.0
        %337 = vmatpush1.msra.mxu0 0.0
        %338 = vmatprep.subr.mxu0 0.0
        %339 = vmatpush1.msra.mxu0 0.0
        %340 = vmatprep.subr.mxu0 0.0
        %341 = vmatpush1.msra.mxu0 0.0
        %342 = vmatprep.subr.mxu0 0.0
        %343 = vmatpush1.msra.mxu0 0.0
        %344 = vmatprep.subr.mxu0 0.0
        %345 = vmatpush1.msra.mxu0 0.0
        %346 = vmatprep.subr.mxu0 0.0
        %347 = vmatpush1.msra.mxu0 0.0
        %348 = vmatprep.subr.mxu0 0.0
        %349 = vmatpush1.msra.mxu0 0.0
        %350 = vmatprep.subr.mxu0 0.0
        %351 = vmatpush1.msra.mxu0 0.0
        %352 = vmatprep.subr.mxu0 0.0
        %353 = vmatpush1.msra.mxu0 0.0
        %354 = vmatprep.subr.mxu0 0.0
        %355 = vmatpush1.msra.mxu0 0.0
        %356 = vmatprep.subr.mxu0 0.0
        %357 = vmatpush1.msra.mxu0 0.0
        %358 = vmatprep.subr.mxu0 0.0
        %359 = vmatpush1.msra.mxu0 %v214
        %360 = vmatprep.subr.mxu0 0.0
        %361 = vmatpush1.msra.mxu0 %v213
        %362 = vmatprep.subr.mxu0 0.0
        %363 = vmatpush2.msra.mxu0 0.0
        %364 = vmatprep.subr.mxu0 0.0
        %365 = vmatpush2.msra.mxu0 0.0
        %366 = vmatprep.subr.mxu0 0.0
        %367 = vmatpush2.msra.mxu0 0.0
        %368 = vmatprep.subr.mxu0 0.0
        %369 = vmatpush2.msra.mxu0 0.0
        %370 = vmatprep.subr.mxu0 0.0
        %371 = vmatpush2.msra.mxu0 0.0
        %372 = vmatprep.subr.mxu0 0.0
        %373 = vmatpush2.msra.mxu0 0.0
        %374 = vmatprep.subr.mxu0 0.0
        %375 = vmatpush2.msra.mxu0 0.0
        %376 = vmatprep.subr.mxu0 0.0
        %377 = vmatpush2.msra.mxu0 0.0
        %378 = vmatprep.subr.mxu0 0.0
        %379 = vmatpush2.msra.mxu0 0.0
        %380 = vmatprep.subr.mxu0 0.0
        %381 = vmatpush2.msra.mxu0 0.0
        %382 = vmatprep.subr.mxu0 0.0
        %383 = vmatpush2.msra.mxu0 0.0
        %384 = vmatprep.subr.mxu0 0.0
        %385 = vmatpush2.msra.mxu0 0.0
        %386 = vmatprep.subr.mxu0 0.0
        %387 = vmatpush2.msra.mxu0 0.0
        %388 = vmatprep.subr.mxu0 0.0
        %389 = vmatpush2.msra.mxu0 0.0
        %390 = vmatprep.subr.mxu0 0.0
        %391 = vmatpush2.msra.mxu0 0.0
        %392 = vmatprep.subr.mxu0 0.0
        %393 = vmatpush2.msra.mxu0 0.0
        %394 = vmatprep.mubr.f32.mxu0 0.0
        %395 = vmatmul.mubr.f32.gmra.mxu0 %v319
        %v396 = vpop.f32.mrf.mxu0
        %v397 = vadd.f32 %v300, %v396
        %v398 = vpop.f32.mrf.mxu0
        %399 = vmatprep.mubr.f32.mxu0 0.0
        %400 = vmatmul.mubr.f32.gmra.mxu0 %v322
        %v401 = vpop.f32.mrf.mxu0
        %v402 = vadd.f32 %v305, %v401
        %v403 = vpop.f32.mrf.mxu0
        %404 = vmatprep.mubr.f32.mxu0 0.0
        %405 = vmatmul.mubr.f32.gmra.mxu0 %v325
        %v406 = vpop.f32.mrf.mxu0
        %v407 = vadd.f32 %v310, %v406
        %v408 = vpop.f32.mrf.mxu0
        %409 = vmatprep.mubr.f32.mxu0 0.0
        %410 = vmatmul.mubr.f32.gmra.mxu0 %v328
        %v411 = vpop.f32.mrf.mxu0
        %v412 = vadd.f32 %v315, %v411
        %v413 = vpop.f32.mrf.mxu0
        %414 = vdwg.mxu0
        %v415 = vld [vmem:[#allocation2 + $0x2] sm:$0xff]
        %v416 = vld [vmem:[#allocation2 + $0xa] sm:$0xff]
        %v417 = vld [vmem:[#allocation2 + $0x1a] sm:$0xff]
        %v418 = vld [vmem:[#allocation2 + $0x22] sm:$0xff]
        %v419 = vld [vmem:[#allocation10 + $0x20] sm:$0xff]
        %v420 = vld [vmem:[#allocation10 + $0x28] sm:$0xff]
        %v422 = vsel %vm204, %v415, 0
        %v425 = vsel %vm204, %v416, 0
        %v428 = vsel %vm204, %v417, 0
        %v431 = vsel %vm204, %v418, 0
        %433 = vmatprep.subr.mxu0 0.0
        %434 = vmatpush1.msra.mxu0 0.0
        %435 = vmatprep.subr.mxu0 0.0
        %436 = vmatpush1.msra.mxu0 0.0
        %437 = vmatprep.subr.mxu0 0.0
        %438 = vmatpush1.msra.mxu0 0.0
        %439 = vmatprep.subr.mxu0 0.0
        %440 = vmatpush1.msra.mxu0 0.0
        %441 = vmatprep.subr.mxu0 0.0
        %442 = vmatpush1.msra.mxu0 0.0
        %443 = vmatprep.subr.mxu0 0.0
        %444 = vmatpush1.msra.mxu0 0.0
        %445 = vmatprep.subr.mxu0 0.0
        %446 = vmatpush1.msra.mxu0 0.0
        %447 = vmatprep.subr.mxu0 0.0
        %448 = vmatpush1.msra.mxu0 0.0
        %449 = vmatprep.subr.mxu0 0.0
        %450 = vmatpush1.msra.mxu0 0.0
        %451 = vmatprep.subr.mxu0 0.0
        %452 = vmatpush1.msra.mxu0 0.0
        %453 = vmatprep.subr.mxu0 0.0
        %454 = vmatpush1.msra.mxu0 0.0
        %455 = vmatprep.subr.mxu0 0.0
        %456 = vmatpush1.msra.mxu0 0.0
        %457 = vmatprep.subr.mxu0 0.0
        %458 = vmatpush1.msra.mxu0 0.0
        %459 = vmatprep.subr.mxu0 0.0
        %460 = vmatpush1.msra.mxu0 0.0
        %461 = vmatprep.subr.mxu0 0.0
        %462 = vmatpush1.msra.mxu0 %v420
        %463 = vmatprep.subr.mxu0 0.0
        %464 = vmatpush1.msra.mxu0 %v419
        %465 = vmatprep.subr.mxu0 0.0
        %466 = vmatpush2.msra.mxu0 0.0
        %467 = vmatprep.subr.mxu0 0.0
        %468 = vmatpush2.msra.mxu0 0.0
        %469 = vmatprep.subr.mxu0 0.0
        %470 = vmatpush2.msra.mxu0 0.0
        %471 = vmatprep.subr.mxu0 0.0
        %472 = vmatpush2.msra.mxu0 0.0
        %473 = vmatprep.subr.mxu0 0.0
        %474 = vmatpush2.msra.mxu0 0.0
        %475 = vmatprep.subr.mxu0 0.0
        %476 = vmatpush2.msra.mxu0 0.0
        %477 = vmatprep.subr.mxu0 0.0
        %478 = vmatpush2.msra.mxu0 0.0
        %479 = vmatprep.subr.mxu0 0.0
        %480 = vmatpush2.msra.mxu0 0.0
        %481 = vmatprep.subr.mxu0 0.0
        %482 = vmatpush2.msra.mxu0 0.0
        %483 = vmatprep.subr.mxu0 0.0
        %484 = vmatpush2.msra.mxu0 0.0
        %485 = vmatprep.subr.mxu0 0.0
        %486 = vmatpush2.msra.mxu0 0.0
        %487 = vmatprep.subr.mxu0 0.0
        %488 = vmatpush2.msra.mxu0 0.0
        %489 = vmatprep.subr.mxu0 0.0
        %490 = vmatpush2.msra.mxu0 0.0
        %491 = vmatprep.subr.mxu0 0.0
        %492 = vmatpush2.msra.mxu0 0.0
        %493 = vmatprep.subr.mxu0 0.0
        %494 = vmatpush2.msra.mxu0 0.0
        %495 = vmatprep.subr.mxu0 0.0
        %496 = vmatpush2.msra.mxu0 0.0
        %497 = vmatprep.mubr.f32.mxu0 0.0
        %498 = vmatmul.mubr.f32.gmra.mxu0 %v422
        %v499 = vpop.f32.mrf.mxu0
        %v500 = vadd.f32 0.0, %v499
        %v501 = vpop.f32.mrf.mxu0
        %502 = vmatprep.mubr.f32.mxu0 0.0
        %503 = vmatmul.mubr.f32.gmra.mxu0 %v425
        %v504 = vpop.f32.mrf.mxu0
        %v505 = vadd.f32 0.0, %v504
        %v506 = vpop.f32.mrf.mxu0
        %507 = vmatprep.mubr.f32.mxu0 0.0
        %508 = vmatmul.mubr.f32.gmra.mxu0 %v428
        %v509 = vpop.f32.mrf.mxu0
        %v510 = vadd.f32 0.0, %v509
        %v511 = vpop.f32.mrf.mxu0
        %512 = vmatprep.mubr.f32.mxu0 0.0
        %513 = vmatmul.mubr.f32.gmra.mxu0 %v431
        %v514 = vpop.f32.mrf.mxu0
        %v515 = vadd.f32 0.0, %v514
        %v516 = vpop.f32.mrf.mxu0
        %517 = vdwg.mxu0
        %v518 = vadd.f32 %v397, %v500
        %v519 = vadd.f32 %v402, %v505
        %v520 = vadd.f32 %v407, %v510
        %v521 = vadd.f32 %v412, %v515
        %v522 = vld [vmem:[#allocation10 + $0x1430] sm:$0x1]
        %v523 = vlaneseq
        %v524 = vshrl.u32 %v523, 7
        %v525 = vsub.s32 0, %v524
        %v526 = vrot.slane %v522, %v525
        %v527 = vadd.f32 %v518, %v526
        %v528 = vadd.f32 %v519, %v526
        %v529 = vadd.f32 %v520, %v526
        %v530 = vadd.f32 %v521, %v526
        %v531 = vmax.f32 %v527, 0.0
        %v532 = vmax.f32 %v528, 0.0
        %v533 = vmax.f32 %v529, 0.0
        %v534 = vmax.f32 %v530, 0.0
        %535 = vst [vmem:[#allocation2 + $0x1] sm:$0xff] %v531
        %536 = vst [vmem:[#allocation2 + $0x9] sm:$0xff] %v532
        %537 = vst [vmem:[#allocation2 + $0x19] sm:$0xff] %v533
        %538 = vst [vmem:[#allocation2 + $0x21] sm:$0xff] %v534
        %v539 = vld [vmem:[#allocation2] sm:$0xff]
        %v540 = vld [vmem:[#allocation2 + $0x8] sm:$0xff]
        %v541 = vld [vmem:[#allocation2 + $0x18] sm:$0xff]
        %v542 = vld [vmem:[#allocation2 + $0x20] sm:$0xff]
        %v543 = vld [vmem:[#allocation10 + $0x30] sm:$0xff]
        %v544 = vld [vmem:[#allocation10 + $0x38] sm:$0xff]
        %v545 = vld [vmem:[#allocation10 + $0x40] sm:$0xff]
        %v546 = vld [vmem:[#allocation10 + $0x48] sm:$0xff]
        %v547 = vld [vmem:[#allocation10 + $0x50] sm:$0xff]
        %v548 = vld [vmem:[#allocation10 + $0x58] sm:$0xff]
        %v549 = vld [vmem:[#allocation10 + $0x60] sm:$0xff]
        %v550 = vld [vmem:[#allocation10 + $0x68] sm:$0xff]
        %v551 = vld [vmem:[#allocation10 + $0x70] sm:$0xff]
        %v552 = vld [vmem:[#allocation10 + $0x78] sm:$0xff]
        %v553 = vld [vmem:[#allocation10 + $0x80] sm:$0xff]
        %v554 = vld [vmem:[#allocation10 + $0x88] sm:$0xff]
        %v555 = vld [vmem:[#allocation10 + $0x90] sm:$0xff]
        %v556 = vld [vmem:[#allocation10 + $0x98] sm:$0xff]
        %v557 = vld [vmem:[#allocation10 + $0xa0] sm:$0xff]
        %v558 = vld [vmem:[#allocation10 + $0xa8] sm:$0xff]
        %v559 = vld [vmem:[#allocation2 + $0x1] sm:$0xff]
        %v560 = vld [vmem:[#allocation2 + $0x9] sm:$0xff]
        %v561 = vld [vmem:[#allocation2 + $0x19] sm:$0xff]
        %v562 = vld [vmem:[#allocation2 + $0x21] sm:$0xff]
        %v563 = vld [vmem:[#allocation10 + $0xb0] sm:$0xff]
        %v564 = vld [vmem:[#allocation10 + $0xb8] sm:$0xff]
        %v565 = vld [vmem:[#allocation10 + $0xc0] sm:$0xff]
        %v566 = vld [vmem:[#allocation10 + $0xc8] sm:$0xff]
        %v567 = vld [vmem:[#allocation10 + $0xd0] sm:$0xff]
        %v568 = vld [vmem:[#allocation10 + $0xd8] sm:$0xff]
        %v569 = vld [vmem:[#allocation10 + $0xe0] sm:$0xff]
        %v570 = vld [vmem:[#allocation10 + $0xe8] sm:$0xff]
        %v571 = vld [vmem:[#allocation10 + $0xf0] sm:$0xff]
        %v572 = vld [vmem:[#allocation10 + $0xf8] sm:$0xff]
        %v573 = vld [vmem:[#allocation10 + $0x100] sm:$0xff]
        %v574 = vld [vmem:[#allocation10 + $0x108] sm:$0xff]
        %v575 = vld [vmem:[#allocation10 + $0x110] sm:$0xff]
        %v576 = vld [vmem:[#allocation10 + $0x118] sm:$0xff]
        %v577 = vld [vmem:[#allocation10 + $0x120] sm:$0xff]
        %v578 = vld [vmem:[#allocation10 + $0x128] sm:$0xff]
        %579 = vmatprep.subr.mxu0 0.0
        %580 = vmatpush1.msra.mxu0 %v578
        %581 = vmatprep.subr.mxu0 0.0
        %582 = vmatpush1.msra.mxu0 %v577
        %583 = vmatprep.subr.mxu0 0.0
        %584 = vmatpush1.msra.mxu0 %v576
        %585 = vmatprep.subr.mxu0 0.0
        %586 = vmatpush1.msra.mxu0 %v575
        %587 = vmatprep.subr.mxu0 0.0
        %588 = vmatpush1.msra.mxu0 %v574
        %589 = vmatprep.subr.mxu0 0.0
        %590 = vmatpush1.msra.mxu0 %v573
        %591 = vmatprep.subr.mxu0 0.0
        %592 = vmatpush1.msra.mxu0 %v572
        %593 = vmatprep.subr.mxu0 0.0
        %594 = vmatpush1.msra.mxu0 %v571
        %595 = vmatprep.subr.mxu0 0.0
        %596 = vmatpush1.msra.mxu0 %v570
        %597 = vmatprep.subr.mxu0 0.0
        %598 = vmatpush1.msra.mxu0 %v569
        %599 = vmatprep.subr.mxu0 0.0
        %600 = vmatpush1.msra.mxu0 %v568
        %601 = vmatprep.subr.mxu0 0.0
        %602 = vmatpush1.msra.mxu0 %v567
        %603 = vmatprep.subr.mxu0 0.0
        %604 = vmatpush1.msra.mxu0 %v566
        %605 = vmatprep.subr.mxu0 0.0
        %606 = vmatpush1.msra.mxu0 %v565
        %607 = vmatprep.subr.mxu0 0.0
        %608 = vmatpush1.msra.mxu0 %v564
        %609 = vmatprep.subr.mxu0 0.0
        %610 = vmatpush1.msra.mxu0 %v563
        %611 = vmatprep.subr.mxu0 0.0
        %612 = vmatpush2.msra.mxu0 0.0
        %613 = vmatprep.subr.mxu0 0.0
        %614 = vmatpush2.msra.mxu0 0.0
        %615 = vmatprep.subr.mxu0 0.0
        %616 = vmatpush2.msra.mxu0 0.0
        %617 = vmatprep.subr.mxu0 0.0
        %618 = vmatpush2.msra.mxu0 0.0
        %619 = vmatprep.subr.mxu0 0.0
        %620 = vmatpush2.msra.mxu0 0.0
        %621 = vmatprep.subr.mxu0 0.0
        %622 = vmatpush2.msra.mxu0 0.0
        %623 = vmatprep.subr.mxu0 0.0
        %624 = vmatpush2.msra.mxu0 0.0
        %625 = vmatprep.subr.mxu0 0.0
        %626 = vmatpush2.msra.mxu0 0.0
        %627 = vmatprep.subr.mxu0 0.0
        %628 = vmatpush2.msra.mxu0 0.0
        %629 = vmatprep.subr.mxu0 0.0
        %630 = vmatpush2.msra.mxu0 0.0
        %631 = vmatprep.subr.mxu0 0.0
        %632 = vmatpush2.msra.mxu0 0.0
        %633 = vmatprep.subr.mxu0 0.0
        %634 = vmatpush2.msra.mxu0 0.0
        %635 = vmatprep.subr.mxu0 0.0
        %636 = vmatpush2.msra.mxu0 0.0
        %637 = vmatprep.subr.mxu0 0.0
        %638 = vmatpush2.msra.mxu0 0.0
        %639 = vmatprep.subr.mxu0 0.0
        %640 = vmatpush2.msra.mxu0 0.0
        %641 = vmatprep.subr.mxu0 0.0
        %642 = vmatpush2.msra.mxu0 0.0
        %643 = vmatprep.mubr.f32.mxu0 0.0
        %644 = vmatmul.mubr.f32.gmra.mxu0 %v559
        %v645 = vpop.f32.mrf.mxu0
        %v646 = vadd.f32 0.0, %v645
        %v647 = vpop.f32.mrf.mxu0
        %648 = vmatprep.mubr.f32.mxu0 0.0
        %649 = vmatmul.mubr.f32.gmra.mxu0 %v560
        %v650 = vpop.f32.mrf.mxu0
        %v651 = vadd.f32 0.0, %v650
        %v652 = vpop.f32.mrf.mxu0
        %653 = vmatprep.mubr.f32.mxu0 0.0
        %654 = vmatmul.mubr.f32.gmra.mxu0 %v561
        %v655 = vpop.f32.mrf.mxu0
        %v656 = vadd.f32 0.0, %v655
        %v657 = vpop.f32.mrf.mxu0
        %658 = vmatprep.mubr.f32.mxu0 0.0
        %659 = vmatmul.mubr.f32.gmra.mxu0 %v562
        %v660 = vpop.f32.mrf.mxu0
        %v661 = vadd.f32 0.0, %v660
        %v662 = vpop.f32.mrf.mxu0
        %663 = vdwg.mxu0
        %664 = vmatprep.subr.mxu0 0.0
        %665 = vmatpush1.msra.mxu0 %v558
        %666 = vmatprep.subr.mxu0 0.0
        %667 = vmatpush1.msra.mxu0 %v557
        %668 = vmatprep.subr.mxu0 0.0
        %669 = vmatpush1.msra.mxu0 %v556
        %670 = vmatprep.subr.mxu0 0.0
        %671 = vmatpush1.msra.mxu0 %v555
        %672 = vmatprep.subr.mxu0 0.0
        %673 = vmatpush1.msra.mxu0 %v554
        %674 = vmatprep.subr.mxu0 0.0
        %675 = vmatpush1.msra.mxu0 %v553
        %676 = vmatprep.subr.mxu0 0.0
        %677 = vmatpush1.msra.mxu0 %v552
        %678 = vmatprep.subr.mxu0 0.0
        %679 = vmatpush1.msra.mxu0 %v551
        %680 = vmatprep.subr.mxu0 0.0
        %681 = vmatpush1.msra.mxu0 %v550
        %682 = vmatprep.subr.mxu0 0.0
        %683 = vmatpush1.msra.mxu0 %v549
        %684 = vmatprep.subr.mxu0 0.0
        %685 = vmatpush1.msra.mxu0 %v548
        %686 = vmatprep.subr.mxu0 0.0
        %687 = vmatpush1.msra.mxu0 %v547
        %688 = vmatprep.subr.mxu0 0.0
        %689 = vmatpush1.msra.mxu0 %v546
        %690 = vmatprep.subr.mxu0 0.0
        %691 = vmatpush1.msra.mxu0 %v545
        %692 = vmatprep.subr.mxu0 0.0
        %693 = vmatpush1.msra.mxu0 %v544
        %694 = vmatprep.subr.mxu0 0.0
        %695 = vmatpush1.msra.mxu0 %v543
        %696 = vmatprep.subr.mxu0 0.0
        %697 = vmatpush2.msra.mxu0 0.0
        %698 = vmatprep.subr.mxu0 0.0
        %699 = vmatpush2.msra.mxu0 0.0
        %700 = vmatprep.subr.mxu0 0.0
        %701 = vmatpush2.msra.mxu0 0.0
        %702 = vmatprep.subr.mxu0 0.0
        %703 = vmatpush2.msra.mxu0 0.0
        %704 = vmatprep.subr.mxu0 0.0
        %705 = vmatpush2.msra.mxu0 0.0
        %706 = vmatprep.subr.mxu0 0.0
        %707 = vmatpush2.msra.mxu0 0.0
        %708 = vmatprep.subr.mxu0 0.0
        %709 = vmatpush2.msra.mxu0 0.0
        %710 = vmatprep.subr.mxu0 0.0
        %711 = vmatpush2.msra.mxu0 0.0
        %712 = vmatprep.subr.mxu0 0.0
        %713 = vmatpush2.msra.mxu0 0.0
        %714 = vmatprep.subr.mxu0 0.0
        %715 = vmatpush2.msra.mxu0 0.0
        %716 = vmatprep.subr.mxu0 0.0
        %717 = vmatpush2.msra.mxu0 0.0
        %718 = vmatprep.subr.mxu0 0.0
        %719 = vmatpush2.msra.mxu0 0.0
        %720 = vmatprep.subr.mxu0 0.0
        %721 = vmatpush2.msra.mxu0 0.0
        %722 = vmatprep.subr.mxu0 0.0
        %723 = vmatpush2.msra.mxu0 0.0
        %724 = vmatprep.subr.mxu0 0.0
        %725 = vmatpush2.msra.mxu0 0.0
        %726 = vmatprep.subr.mxu0 0.0
        %727 = vmatpush2.msra.mxu0 0.0
        %728 = vmatprep.mubr.f32.mxu0 0.0
        %729 = vmatmul.mubr.f32.gmra.mxu0 %v539
        %v730 = vpop.f32.mrf.mxu0
        %v731 = vadd.f32 %v646, %v730
        %v732 = vpop.f32.mrf.mxu0
        %733 = vmatprep.mubr.f32.mxu0 0.0
        %734 = vmatmul.mubr.f32.gmra.mxu0 %v540
        %v735 = vpop.f32.mrf.mxu0
        %v736 = vadd.f32 %v651, %v735
        %v737 = vpop.f32.mrf.mxu0
        %738 = vmatprep.mubr.f32.mxu0 0.0
        %739 = vmatmul.mubr.f32.gmra.mxu0 %v541
        %v740 = vpop.f32.mrf.mxu0
        %v741 = vadd.f32 %v656, %v740
        %v742 = vpop.f32.mrf.mxu0
        %743 = vmatprep.mubr.f32.mxu0 0.0
        %744 = vmatmul.mubr.f32.gmra.mxu0 %v542
        %v745 = vpop.f32.mrf.mxu0
        %v746 = vadd.f32 %v661, %v745
        %v747 = vpop.f32.mrf.mxu0
        %748 = vdwg.mxu0
        %v749 = vld [vmem:[#allocation2 + $0x2] sm:$0xff]
        %v750 = vld [vmem:[#allocation2 + $0xa] sm:$0xff]
        %v751 = vld [vmem:[#allocation2 + $0x1a] sm:$0xff]
        %v752 = vld [vmem:[#allocation2 + $0x22] sm:$0xff]
        %v753 = vld [vmem:[#allocation10 + $0x130] sm:$0xff]
        %v754 = vld [vmem:[#allocation10 + $0x138] sm:$0xff]
        %v755 = vld [vmem:[#allocation10 + $0x140] sm:$0xff]
        %v756 = vld [vmem:[#allocation10 + $0x148] sm:$0xff]
        %v757 = vld [vmem:[#allocation10 + $0x150] sm:$0xff]
        %v758 = vld [vmem:[#allocation10 + $0x158] sm:$0xff]
        %v759 = vld [vmem:[#allocation10 + $0x160] sm:$0xff]
        %v760 = vld [vmem:[#allocation10 + $0x168] sm:$0xff]
        %v761 = vld [vmem:[#allocation10 + $0x170] sm:$0xff]
        %v762 = vld [vmem:[#allocation10 + $0x178] sm:$0xff]
        %v763 = vld [vmem:[#allocation10 + $0x180] sm:$0xff]
        %v764 = vld [vmem:[#allocation10 + $0x188] sm:$0xff]
        %v765 = vld [vmem:[#allocation10 + $0x190] sm:$0xff]
        %v766 = vld [vmem:[#allocation10 + $0x198] sm:$0xff]
        %v767 = vld [vmem:[#allocation10 + $0x1a0] sm:$0xff]
        %v768 = vld [vmem:[#allocation10 + $0x1a8] sm:$0xff]
        %769 = vmatprep.subr.mxu0 0.0
        %770 = vmatpush1.msra.mxu0 %v768
        %771 = vmatprep.subr.mxu0 0.0
        %772 = vmatpush1.msra.mxu0 %v767
        %773 = vmatprep.subr.mxu0 0.0
        %774 = vmatpush1.msra.mxu0 %v766
        %775 = vmatprep.subr.mxu0 0.0
        %776 = vmatpush1.msra.mxu0 %v765
        %777 = vmatprep.subr.mxu0 0.0
        %778 = vmatpush1.msra.mxu0 %v764
        %779 = vmatprep.subr.mxu0 0.0
        %780 = vmatpush1.msra.mxu0 %v763
        %781 = vmatprep.subr.mxu0 0.0
        %782 = vmatpush1.msra.mxu0 %v762
        %783 = vmatprep.subr.mxu0 0.0
        %784 = vmatpush1.msra.mxu0 %v761
        %785 = vmatprep.subr.mxu0 0.0
        %786 = vmatpush1.msra.mxu0 %v760
        %787 = vmatprep.subr.mxu0 0.0
        %788 = vmatpush1.msra.mxu0 %v759
        %789 = vmatprep.subr.mxu0 0.0
        %790 = vmatpush1.msra.mxu0 %v758
        %791 = vmatprep.subr.mxu0 0.0
        %792 = vmatpush1.msra.mxu0 %v757
        %793 = vmatprep.subr.mxu0 0.0
        %794 = vmatpush1.msra.mxu0 %v756
        %795 = vmatprep.subr.mxu0 0.0
        %796 = vmatpush1.msra.mxu0 %v755
        %797 = vmatprep.subr.mxu0 0.0
        %798 = vmatpush1.msra.mxu0 %v754
        %799 = vmatprep.subr.mxu0 0.0
        %800 = vmatpush1.msra.mxu0 %v753
        %801 = vmatprep.subr.mxu0 0.0
        %802 = vmatpush2.msra.mxu0 0.0
        %803 = vmatprep.subr.mxu0 0.0
        %804 = vmatpush2.msra.mxu0 0.0
        %805 = vmatprep.subr.mxu0 0.0
        %806 = vmatpush2.msra.mxu0 0.0
        %807 = vmatprep.subr.mxu0 0.0
        %808 = vmatpush2.msra.mxu0 0.0
        %809 = vmatprep.subr.mxu0 0.0
        %810 = vmatpush2.msra.mxu0 0.0
        %811 = vmatprep.subr.mxu0 0.0
        %812 = vmatpush2.msra.mxu0 0.0
        %813 = vmatprep.subr.mxu0 0.0
        %814 = vmatpush2.msra.mxu0 0.0
        %815 = vmatprep.subr.mxu0 0.0
        %816 = vmatpush2.msra.mxu0 0.0
        %817 = vmatprep.subr.mxu0 0.0
        %818 = vmatpush2.msra.mxu0 0.0
        %819 = vmatprep.subr.mxu0 0.0
        %820 = vmatpush2.msra.mxu0 0.0
        %821 = vmatprep.subr.mxu0 0.0
        %822 = vmatpush2.msra.mxu0 0.0
        %823 = vmatprep.subr.mxu0 0.0
        %824 = vmatpush2.msra.mxu0 0.0
        %825 = vmatprep.subr.mxu0 0.0
        %826 = vmatpush2.msra.mxu0 0.0
        %827 = vmatprep.subr.mxu0 0.0
        %828 = vmatpush2.msra.mxu0 0.0
        %829 = vmatprep.subr.mxu0 0.0
        %830 = vmatpush2.msra.mxu0 0.0
        %831 = vmatprep.subr.mxu0 0.0
        %832 = vmatpush2.msra.mxu0 0.0
        %833 = vmatprep.mubr.f32.mxu0 0.0
        %834 = vmatmul.mubr.f32.gmra.mxu0 %v749
        %v835 = vpop.f32.mrf.mxu0
        %v836 = vadd.f32 0.0, %v835
        %v837 = vpop.f32.mrf.mxu0
        %838 = vmatprep.mubr.f32.mxu0 0.0
        %839 = vmatmul.mubr.f32.gmra.mxu0 %v750
        %v840 = vpop.f32.mrf.mxu0
        %v841 = vadd.f32 0.0, %v840
        %v842 = vpop.f32.mrf.mxu0
        %843 = vmatprep.mubr.f32.mxu0 0.0
        %844 = vmatmul.mubr.f32.gmra.mxu0 %v751
        %v845 = vpop.f32.mrf.mxu0
        %v846 = vadd.f32 0.0, %v845
        %v847 = vpop.f32.mrf.mxu0
        %848 = vmatprep.mubr.f32.mxu0 0.0
        %849 = vmatmul.mubr.f32.gmra.mxu0 %v752
        %v850 = vpop.f32.mrf.mxu0
        %v851 = vadd.f32 0.0, %v850
        %v852 = vpop.f32.mrf.mxu0
        %853 = vdwg.mxu0
        %v854 = vadd.f32 %v731, %v836
        %v855 = vadd.f32 %v736, %v841
        %v856 = vadd.f32 %v741, %v846
        %v857 = vadd.f32 %v746, %v851
        %v858 = vld [vmem:[#allocation10 + $0x1431] sm:$0x1]
        %v859 = vlaneseq
        %v860 = vshrl.u32 %v859, 7
        %v861 = vsub.s32 0, %v860
        %v862 = vrot.slane %v858, %v861
        %v863 = vadd.f32 %v854, %v862
        %v864 = vadd.f32 %v855, %v862
        %v865 = vadd.f32 %v856, %v862
        %v866 = vadd.f32 %v857, %v862
        %v867 = vmax.f32 %v863, 0.0
        %v868 = vmax.f32 %v864, 0.0
        %v869 = vmax.f32 %v865, 0.0
        %v870 = vmax.f32 %v866, 0.0
        %871 = vst [vmem:[#allocation5 + $0x1] sm:$0xff] %v867
        %872 = vst [vmem:[#allocation5 + $0x9] sm:$0xff] %v868
        %873 = vst [vmem:[#allocation5 + $0x19] sm:$0xff] %v869
        %874 = vst [vmem:[#allocation5 + $0x21] sm:$0xff] %v870
        %879 = vrot.lane.b32.xlu0 %v867, 120
        %v880 = vpop.permute.xlu0 %879
        %881 = vrot.lane.b32.xlu0 %v868, 120
        %v882 = vpop.permute.xlu0 %881
        %883 = vrot.lane.b32.xlu0 %v869, 120
        %v884 = vpop.permute.xlu0 %883
        %885 = vrot.lane.b32.xlu0 %v870, 120
        %v886 = vpop.permute.xlu0 %885
        %vm891 = vcmask 982016
        %v892 = vsel %vm891, %v880, 0.0
        %v893 = vsel %vm891, %v882, 0.0
        %v894 = vsel %vm891, %v884, 0.0
        %v895 = vsel %vm891, %v886, 0.0
        %v896 = vmax.f32 %v867, %v892
        %v897 = vmax.f32 %v868, %v893
        %v898 = vmax.f32 %v869, %v894
        %v899 = vmax.f32 %v870, %v895
        %v902 = vrot.slane %v896, 1
        %v903 = vrot.slane %v898, 1
        %v906 = vmax.f32 %v896, %v902
        %v907 = vmax.f32 %v898, %v903
        %908 = vst [vmem:[#allocation3 + $0x1] sm:$0x1] %v906
        %909 = vst [vmem:[#allocation3 + $0x11] sm:$0x1] %v907
        %910 = vst [vmem:[#allocation3] sm:$0x4] %v906
        %911 = vst [vmem:[#allocation3 + $0x10] sm:$0x4] %v907
        %912 = vst [vmem:[#allocation3 - $0x1] sm:$0x10] %v906
        %913 = vst [vmem:[#allocation3 + $0xf] sm:$0x10] %v907
        %914 = vst [vmem:[#allocation3 - $0x2] sm:$0x40] %v906
        %915 = vst [vmem:[#allocation3 + $0xe] sm:$0x40] %v907
        %v918 = vrot.slane %v897, 1
        %v919 = vrot.slane %v899, 1
        %v922 = vmax.f32 %v897, %v918
        %v923 = vmax.f32 %v899, %v919
        %924 = vst [vmem:[#allocation3 + $0x5] sm:$0x1] %v922
        %925 = vst [vmem:[#allocation3 + $0x15] sm:$0x1] %v923
        %926 = vst [vmem:[#allocation3 + $0x4] sm:$0x4] %v922
        %927 = vst [vmem:[#allocation3 + $0x14] sm:$0x4] %v923
        %928 = vst [vmem:[#allocation3 + $0x3] sm:$0x10] %v922
        %929 = vst [vmem:[#allocation3 + $0x13] sm:$0x10] %v923
        %930 = vst [vmem:[#allocation3 + $0x2] sm:$0x40] %v922
        %931 = vst [vmem:[#allocation3 + $0x12] sm:$0x40] %v923
        %v932 = vld [vmem:[#allocation3] sm:$0xff]
        %v933 = vld [vmem:[#allocation3 + $0x10] sm:$0xff]
        %v934 = vld [vmem:[#allocation10 + $0x1b0] sm:$0xff]
        %v935 = vld [vmem:[#allocation10 + $0x1b8] sm:$0xff]
        %v936 = vld [vmem:[#allocation10 + $0x1c0] sm:$0xff]
        %v937 = vld [vmem:[#allocation10 + $0x1c8] sm:$0xff]
        %v938 = vld [vmem:[#allocation10 + $0x1d0] sm:$0xff]
        %v939 = vld [vmem:[#allocation10 + $0x1d8] sm:$0xff]
        %v940 = vld [vmem:[#allocation10 + $0x1e0] sm:$0xff]
        %v941 = vld [vmem:[#allocation10 + $0x1e8] sm:$0xff]
        %v942 = vld [vmem:[#allocation10 + $0x1f0] sm:$0xff]
        %v943 = vld [vmem:[#allocation10 + $0x1f8] sm:$0xff]
        %v944 = vld [vmem:[#allocation10 + $0x200] sm:$0xff]
        %v945 = vld [vmem:[#allocation10 + $0x208] sm:$0xff]
        %v946 = vld [vmem:[#allocation10 + $0x210] sm:$0xff]
        %v947 = vld [vmem:[#allocation10 + $0x218] sm:$0xff]
        %v948 = vld [vmem:[#allocation10 + $0x220] sm:$0xff]
        %v949 = vld [vmem:[#allocation10 + $0x228] sm:$0xff]
        %v950 = vld [vmem:[#allocation3 + $0x1] sm:$0xff]
        %v951 = vld [vmem:[#allocation3 + $0x11] sm:$0xff]
        %v952 = vld [vmem:[#allocation10 + $0x230] sm:$0xff]
        %v953 = vld [vmem:[#allocation10 + $0x238] sm:$0xff]
        %v954 = vld [vmem:[#allocation10 + $0x240] sm:$0xff]
        %v955 = vld [vmem:[#allocation10 + $0x248] sm:$0xff]
        %v956 = vld [vmem:[#allocation10 + $0x250] sm:$0xff]
        %v957 = vld [vmem:[#allocation10 + $0x258] sm:$0xff]
        %v958 = vld [vmem:[#allocation10 + $0x260] sm:$0xff]
        %v959 = vld [vmem:[#allocation10 + $0x268] sm:$0xff]
        %v960 = vld [vmem:[#allocation10 + $0x270] sm:$0xff]
        %v961 = vld [vmem:[#allocation10 + $0x278] sm:$0xff]
        %v962 = vld [vmem:[#allocation10 + $0x280] sm:$0xff]
        %v963 = vld [vmem:[#allocation10 + $0x288] sm:$0xff]
        %v964 = vld [vmem:[#allocation10 + $0x290] sm:$0xff]
        %v965 = vld [vmem:[#allocation10 + $0x298] sm:$0xff]
        %v966 = vld [vmem:[#allocation10 + $0x2a0] sm:$0xff]
        %v967 = vld [vmem:[#allocation10 + $0x2a8] sm:$0xff]
        %968 = vmatprep.subr.mxu0 0.0
        %969 = vmatpush1.msra.mxu0 %v967
        %970 = vmatprep.subr.mxu0 0.0
        %971 = vmatpush1.msra.mxu0 %v966
        %972 = vmatprep.subr.mxu0 0.0
        %973 = vmatpush1.msra.mxu0 %v965
        %974 = vmatprep.subr.mxu0 0.0
        %975 = vmatpush1.msra.mxu0 %v964
        %976 = vmatprep.subr.mxu0 0.0
        %977 = vmatpush1.msra.mxu0 %v963
        %978 = vmatprep.subr.mxu0 0.0
        %979 = vmatpush1.msra.mxu0 %v962
        %980 = vmatprep.subr.mxu0 0.0
        %981 = vmatpush1.msra.mxu0 %v961
        %982 = vmatprep.subr.mxu0 0.0
        %983 = vmatpush1.msra.mxu0 %v960
        %984 = vmatprep.subr.mxu0 0.0
        %985 = vmatpush1.msra.mxu0 %v959
        %986 = vmatprep.subr.mxu0 0.0
        %987 = vmatpush1.msra.mxu0 %v958
        %988 = vmatprep.subr.mxu0 0.0
        %989 = vmatpush1.msra.mxu0 %v957
        %990 = vmatprep.subr.mxu0 0.0
        %991 = vmatpush1.msra.mxu0 %v956
        %992 = vmatprep.subr.mxu0 0.0
        %993 = vmatpush1.msra.mxu0 %v955
        %994 = vmatprep.subr.mxu0 0.0
        %995 = vmatpush1.msra.mxu0 %v954
        %996 = vmatprep.subr.mxu0 0.0
        %997 = vmatpush1.msra.mxu0 %v953
        %998 = vmatprep.subr.mxu0 0.0
        %999 = vmatpush1.msra.mxu0 %v952
        %1000 = vmatprep.subr.mxu0 0.0
        %1001 = vmatpush2.msra.mxu0 0.0
        %1002 = vmatprep.subr.mxu0 0.0
        %1003 = vmatpush2.msra.mxu0 0.0
        %1004 = vmatprep.subr.mxu0 0.0
        %1005 = vmatpush2.msra.mxu0 0.0
        %1006 = vmatprep.subr.mxu0 0.0
        %1007 = vmatpush2.msra.mxu0 0.0
        %1008 = vmatprep.subr.mxu0 0.0
        %1009 = vmatpush2.msra.mxu0 0.0
        %1010 = vmatprep.subr.mxu0 0.0
        %1011 = vmatpush2.msra.mxu0 0.0
        %1012 = vmatprep.subr.mxu0 0.0
        %1013 = vmatpush2.msra.mxu0 0.0
        %1014 = vmatprep.subr.mxu0 0.0
        %1015 = vmatpush2.msra.mxu0 0.0
        %1016 = vmatprep.subr.mxu0 0.0
        %1017 = vmatpush2.msra.mxu0 0.0
        %1018 = vmatprep.subr.mxu0 0.0
        %1019 = vmatpush2.msra.mxu0 0.0
        %1020 = vmatprep.subr.mxu0 0.0
        %1021 = vmatpush2.msra.mxu0 0.0
        %1022 = vmatprep.subr.mxu0 0.0
        %1023 = vmatpush2.msra.mxu0 0.0
        %1024 = vmatprep.subr.mxu0 0.0
        %1025 = vmatpush2.msra.mxu0 0.0
        %1026 = vmatprep.subr.mxu0 0.0
        %1027 = vmatpush2.msra.mxu0 0.0
        %1028 = vmatprep.subr.mxu0 0.0
        %1029 = vmatpush2.msra.mxu0 0.0
        %1030 = vmatprep.subr.mxu0 0.0
        %1031 = vmatpush2.msra.mxu0 0.0
        %1032 = vmatprep.mubr.f32.mxu0 0.0
        %1033 = vmatmul.mubr.f32.gmra.mxu0 %v950
        %v1034 = vpop.f32.mrf.mxu0
        %v1035 = vadd.f32 0.0, %v1034
        %v1036 = vpop.f32.mrf.mxu0
        %1037 = vmatprep.mubr.f32.mxu0 0.0
        %1038 = vmatmul.mubr.f32.gmra.mxu0 %v951
        %v1039 = vpop.f32.mrf.mxu0
        %v1040 = vadd.f32 0.0, %v1039
        %v1041 = vpop.f32.mrf.mxu0
        %1042 = vdwg.mxu0
        %1043 = vmatprep.subr.mxu0 0.0
        %1044 = vmatpush1.msra.mxu0 %v949
        %1045 = vmatprep.subr.mxu0 0.0
        %1046 = vmatpush1.msra.mxu0 %v948
        %1047 = vmatprep.subr.mxu0 0.0
        %1048 = vmatpush1.msra.mxu0 %v947
        %1049 = vmatprep.subr.mxu0 0.0
        %1050 = vmatpush1.msra.mxu0 %v946
        %1051 = vmatprep.subr.mxu0 0.0
        %1052 = vmatpush1.msra.mxu0 %v945
        %1053 = vmatprep.subr.mxu0 0.0
        %1054 = vmatpush1.msra.mxu0 %v944
        %1055 = vmatprep.subr.mxu0 0.0
        %1056 = vmatpush1.msra.mxu0 %v943
        %1057 = vmatprep.subr.mxu0 0.0
        %1058 = vmatpush1.msra.mxu0 %v942
        %1059 = vmatprep.subr.mxu0 0.0
        %1060 = vmatpush1.msra.mxu0 %v941
        %1061 = vmatprep.subr.mxu0 0.0
        %1062 = vmatpush1.msra.mxu0 %v940
        %1063 = vmatprep.subr.mxu0 0.0
        %1064 = vmatpush1.msra.mxu0 %v939
        %1065 = vmatprep.subr.mxu0 0.0
        %1066 = vmatpush1.msra.mxu0 %v938
        %1067 = vmatprep.subr.mxu0 0.0
        %1068 = vmatpush1.msra.mxu0 %v937
        %1069 = vmatprep.subr.mxu0 0.0
        %1070 = vmatpush1.msra.mxu0 %v936
        %1071 = vmatprep.subr.mxu0 0.0
        %1072 = vmatpush1.msra.mxu0 %v935
        %1073 = vmatprep.subr.mxu0 0.0
        %1074 = vmatpush1.msra.mxu0 %v934
        %1075 = vmatprep.subr.mxu0 0.0
        %1076 = vmatpush2.msra.mxu0 0.0
        %1077 = vmatprep.subr.mxu0 0.0
        %1078 = vmatpush2.msra.mxu0 0.0
        %1079 = vmatprep.subr.mxu0 0.0
        %1080 = vmatpush2.msra.mxu0 0.0
        %1081 = vmatprep.subr.mxu0 0.0
        %1082 = vmatpush2.msra.mxu0 0.0
        %1083 = vmatprep.subr.mxu0 0.0
        %1084 = vmatpush2.msra.mxu0 0.0
        %1085 = vmatprep.subr.mxu0 0.0
        %1086 = vmatpush2.msra.mxu0 0.0
        %1087 = vmatprep.subr.mxu0 0.0
        %1088 = vmatpush2.msra.mxu0 0.0
        %1089 = vmatprep.subr.mxu0 0.0
        %1090 = vmatpush2.msra.mxu0 0.0
        %1091 = vmatprep.subr.mxu0 0.0
        %1092 = vmatpush2.msra.mxu0 0.0
        %1093 = vmatprep.subr.mxu0 0.0
        %1094 = vmatpush2.msra.mxu0 0.0
        %1095 = vmatprep.subr.mxu0 0.0
        %1096 = vmatpush2.msra.mxu0 0.0
        %1097 = vmatprep.subr.mxu0 0.0
        %1098 = vmatpush2.msra.mxu0 0.0
        %1099 = vmatprep.subr.mxu0 0.0
        %1100 = vmatpush2.msra.mxu0 0.0
        %1101 = vmatprep.subr.mxu0 0.0
        %1102 = vmatpush2.msra.mxu0 0.0
        %1103 = vmatprep.subr.mxu0 0.0
        %1104 = vmatpush2.msra.mxu0 0.0
        %1105 = vmatprep.subr.mxu0 0.0
        %1106 = vmatpush2.msra.mxu0 0.0
        %1107 = vmatprep.mubr.f32.mxu0 0.0
        %1108 = vmatmul.mubr.f32.gmra.mxu0 %v932
        %v1109 = vpop.f32.mrf.mxu0
        %v1110 = vadd.f32 %v1035, %v1109
        %v1111 = vpop.f32.mrf.mxu0
        %1112 = vmatprep.mubr.f32.mxu0 0.0
        %1113 = vmatmul.mubr.f32.gmra.mxu0 %v933
        %v1114 = vpop.f32.mrf.mxu0
        %v1115 = vadd.f32 %v1040, %v1114
        %v1116 = vpop.f32.mrf.mxu0
        %1117 = vdwg.mxu0
        %v1118 = vld [vmem:[#allocation3 + $0x2] sm:$0xff]
        %v1119 = vld [vmem:[#allocation3 + $0x12] sm:$0xff]
        %v1120 = vld [vmem:[#allocation10 + $0x2b0] sm:$0xff]
        %v1121 = vld [vmem:[#allocation10 + $0x2b8] sm:$0xff]
        %v1122 = vld [vmem:[#allocation10 + $0x2c0] sm:$0xff]
        %v1123 = vld [vmem:[#allocation10 + $0x2c8] sm:$0xff]
        %v1124 = vld [vmem:[#allocation10 + $0x2d0] sm:$0xff]
        %v1125 = vld [vmem:[#allocation10 + $0x2d8] sm:$0xff]
        %v1126 = vld [vmem:[#allocation10 + $0x2e0] sm:$0xff]
        %v1127 = vld [vmem:[#allocation10 + $0x2e8] sm:$0xff]
        %v1128 = vld [vmem:[#allocation10 + $0x2f0] sm:$0xff]
        %v1129 = vld [vmem:[#allocation10 + $0x2f8] sm:$0xff]
        %v1130 = vld [vmem:[#allocation10 + $0x300] sm:$0xff]
        %v1131 = vld [vmem:[#allocation10 + $0x308] sm:$0xff]
        %v1132 = vld [vmem:[#allocation10 + $0x310] sm:$0xff]
        %v1133 = vld [vmem:[#allocation10 + $0x318] sm:$0xff]
        %v1134 = vld [vmem:[#allocation10 + $0x320] sm:$0xff]
        %v1135 = vld [vmem:[#allocation10 + $0x328] sm:$0xff]
        %1136 = vmatprep.subr.mxu0 0.0
        %1137 = vmatpush1.msra.mxu0 %v1135
        %1138 = vmatprep.subr.mxu0 0.0
        %1139 = vmatpush1.msra.mxu0 %v1134
        %1140 = vmatprep.subr.mxu0 0.0
        %1141 = vmatpush1.msra.mxu0 %v1133
        %1142 = vmatprep.subr.mxu0 0.0
        %1143 = vmatpush1.msra.mxu0 %v1132
        %1144 = vmatprep.subr.mxu0 0.0
        %1145 = vmatpush1.msra.mxu0 %v1131
        %1146 = vmatprep.subr.mxu0 0.0
        %1147 = vmatpush1.msra.mxu0 %v1130
        %1148 = vmatprep.subr.mxu0 0.0
        %1149 = vmatpush1.msra.mxu0 %v1129
        %1150 = vmatprep.subr.mxu0 0.0
        %1151 = vmatpush1.msra.mxu0 %v1128
        %1152 = vmatprep.subr.mxu0 0.0
        %1153 = vmatpush1.msra.mxu0 %v1127
        %1154 = vmatprep.subr.mxu0 0.0
        %1155 = vmatpush1.msra.mxu0 %v1126
        %1156 = vmatprep.subr.mxu0 0.0
        %1157 = vmatpush1.msra.mxu0 %v1125
        %1158 = vmatprep.subr.mxu0 0.0
        %1159 = vmatpush1.msra.mxu0 %v1124
        %1160 = vmatprep.subr.mxu0 0.0
        %1161 = vmatpush1.msra.mxu0 %v1123
        %1162 = vmatprep.subr.mxu0 0.0
        %1163 = vmatpush1.msra.mxu0 %v1122
        %1164 = vmatprep.subr.mxu0 0.0
        %1165 = vmatpush1.msra.mxu0 %v1121
        %1166 = vmatprep.subr.mxu0 0.0
        %1167 = vmatpush1.msra.mxu0 %v1120
        %1168 = vmatprep.subr.mxu0 0.0
        %1169 = vmatpush2.msra.mxu0 0.0
        %1170 = vmatprep.subr.mxu0 0.0
        %1171 = vmatpush2.msra.mxu0 0.0
        %1172 = vmatprep.subr.mxu0 0.0
        %1173 = vmatpush2.msra.mxu0 0.0
        %1174 = vmatprep.subr.mxu0 0.0
        %1175 = vmatpush2.msra.mxu0 0.0
        %1176 = vmatprep.subr.mxu0 0.0
        %1177 = vmatpush2.msra.mxu0 0.0
        %1178 = vmatprep.subr.mxu0 0.0
        %1179 = vmatpush2.msra.mxu0 0.0
        %1180 = vmatprep.subr.mxu0 0.0
        %1181 = vmatpush2.msra.mxu0 0.0
        %1182 = vmatprep.subr.mxu0 0.0
        %1183 = vmatpush2.msra.mxu0 0.0
        %1184 = vmatprep.subr.mxu0 0.0
        %1185 = vmatpush2.msra.mxu0 0.0
        %1186 = vmatprep.subr.mxu0 0.0
        %1187 = vmatpush2.msra.mxu0 0.0
        %1188 = vmatprep.subr.mxu0 0.0
        %1189 = vmatpush2.msra.mxu0 0.0
        %1190 = vmatprep.subr.mxu0 0.0
        %1191 = vmatpush2.msra.mxu0 0.0
        %1192 = vmatprep.subr.mxu0 0.0
        %1193 = vmatpush2.msra.mxu0 0.0
        %1194 = vmatprep.subr.mxu0 0.0
        %1195 = vmatpush2.msra.mxu0 0.0
        %1196 = vmatprep.subr.mxu0 0.0
        %1197 = vmatpush2.msra.mxu0 0.0
        %1198 = vmatprep.subr.mxu0 0.0
        %1199 = vmatpush2.msra.mxu0 0.0
        %1200 = vmatprep.mubr.f32.mxu0 0.0
        %1201 = vmatmul.mubr.f32.gmra.mxu0 %v1118
        %v1202 = vpop.f32.mrf.mxu0
        %v1203 = vadd.f32 0.0, %v1202
        %v1204 = vpop.f32.mrf.mxu0
        %1205 = vmatprep.mubr.f32.mxu0 0.0
        %1206 = vmatmul.mubr.f32.gmra.mxu0 %v1119
        %v1207 = vpop.f32.mrf.mxu0
        %v1208 = vadd.f32 0.0, %v1207
        %v1209 = vpop.f32.mrf.mxu0
        %1210 = vdwg.mxu0
        %v1211 = vadd.f32 %v1110, %v1203
        %v1212 = vadd.f32 %v1115, %v1208
        %v1213 = vld [vmem:[#allocation10 + $0x1432] sm:$0x1]
        %v1214 = vlaneseq
        %v1215 = vshrl.u32 %v1214, 7
        %v1216 = vsub.s32 0, %v1215
        %v1217 = vrot.slane %v1213, %v1216
        %v1218 = vadd.f32 %v1211, %v1217
        %v1219 = vadd.f32 %v1212, %v1217
        %v1220 = vmax.f32 %v1218, 0.0
        %v1221 = vmax.f32 %v1219, 0.0
        %1222 = vst [vmem:[#allocation3 + $0x1] sm:$0xff] %v1220
        %1223 = vst [vmem:[#allocation3 + $0x11] sm:$0xff] %v1221
        %v1224 = vld [vmem:[#allocation3] sm:$0xff]
        %v1225 = vld [vmem:[#allocation3 + $0x10] sm:$0xff]
        %v1226 = vld [vmem:[#allocation10 + $0x330] sm:$0xff]
        %v1227 = vld [vmem:[#allocation10 + $0x338] sm:$0xff]
        %v1228 = vld [vmem:[#allocation10 + $0x340] sm:$0xff]
        %v1229 = vld [vmem:[#allocation10 + $0x348] sm:$0xff]
        %v1230 = vld [vmem:[#allocation10 + $0x350] sm:$0xff]
        %v1231 = vld [vmem:[#allocation10 + $0x358] sm:$0xff]
        %v1232 = vld [vmem:[#allocation10 + $0x360] sm:$0xff]
        %v1233 = vld [vmem:[#allocation10 + $0x368] sm:$0xff]
        %v1234 = vld [vmem:[#allocation10 + $0x370] sm:$0xff]
        %v1235 = vld [vmem:[#allocation10 + $0x378] sm:$0xff]
        %v1236 = vld [vmem:[#allocation10 + $0x380] sm:$0xff]
        %v1237 = vld [vmem:[#allocation10 + $0x388] sm:$0xff]
        %v1238 = vld [vmem:[#allocation10 + $0x390] sm:$0xff]
        %v1239 = vld [vmem:[#allocation10 + $0x398] sm:$0xff]
        %v1240 = vld [vmem:[#allocation10 + $0x3a0] sm:$0xff]
        %v1241 = vld [vmem:[#allocation10 + $0x3a8] sm:$0xff]
        %v1242 = vld [vmem:[#allocation3 + $0x1] sm:$0xff]
        %v1243 = vld [vmem:[#allocation3 + $0x11] sm:$0xff]
        %v1244 = vld [vmem:[#allocation10 + $0x3b0] sm:$0xff]
        %v1245 = vld [vmem:[#allocation10 + $0x3b8] sm:$0xff]
        %v1246 = vld [vmem:[#allocation10 + $0x3c0] sm:$0xff]
        %v1247 = vld [vmem:[#allocation10 + $0x3c8] sm:$0xff]
        %v1248 = vld [vmem:[#allocation10 + $0x3d0] sm:$0xff]
        %v1249 = vld [vmem:[#allocation10 + $0x3d8] sm:$0xff]
        %v1250 = vld [vmem:[#allocation10 + $0x3e0] sm:$0xff]
        %v1251 = vld [vmem:[#allocation10 + $0x3e8] sm:$0xff]
        %v1252 = vld [vmem:[#allocation10 + $0x3f0] sm:$0xff]
        %v1253 = vld [vmem:[#allocation10 + $0x3f8] sm:$0xff]
        %v1254 = vld [vmem:[#allocation10 + $0x400] sm:$0xff]
        %v1255 = vld [vmem:[#allocation10 + $0x408] sm:$0xff]
        %v1256 = vld [vmem:[#allocation10 + $0x410] sm:$0xff]
        %v1257 = vld [vmem:[#allocation10 + $0x418] sm:$0xff]
        %v1258 = vld [vmem:[#allocation10 + $0x420] sm:$0xff]
        %v1259 = vld [vmem:[#allocation10 + $0x428] sm:$0xff]
        %1260 = vmatprep.subr.mxu0 0.0
        %1261 = vmatpush1.msra.mxu0 %v1259
        %1262 = vmatprep.subr.mxu0 0.0
        %1263 = vmatpush1.msra.mxu0 %v1258
        %1264 = vmatprep.subr.mxu0 0.0
        %1265 = vmatpush1.msra.mxu0 %v1257
        %1266 = vmatprep.subr.mxu0 0.0
        %1267 = vmatpush1.msra.mxu0 %v1256
        %1268 = vmatprep.subr.mxu0 0.0
        %1269 = vmatpush1.msra.mxu0 %v1255
        %1270 = vmatprep.subr.mxu0 0.0
        %1271 = vmatpush1.msra.mxu0 %v1254
        %1272 = vmatprep.subr.mxu0 0.0
        %1273 = vmatpush1.msra.mxu0 %v1253
        %1274 = vmatprep.subr.mxu0 0.0
        %1275 = vmatpush1.msra.mxu0 %v1252
        %1276 = vmatprep.subr.mxu0 0.0
        %1277 = vmatpush1.msra.mxu0 %v1251
        %1278 = vmatprep.subr.mxu0 0.0
        %1279 = vmatpush1.msra.mxu0 %v1250
        %1280 = vmatprep.subr.mxu0 0.0
        %1281 = vmatpush1.msra.mxu0 %v1249
        %1282 = vmatprep.subr.mxu0 0.0
        %1283 = vmatpush1.msra.mxu0 %v1248
        %1284 = vmatprep.subr.mxu0 0.0
        %1285 = vmatpush1.msra.mxu0 %v1247
        %1286 = vmatprep.subr.mxu0 0.0
        %1287 = vmatpush1.msra.mxu0 %v1246
        %1288 = vmatprep.subr.mxu0 0.0
        %1289 = vmatpush1.msra.mxu0 %v1245
        %1290 = vmatprep.subr.mxu0 0.0
        %1291 = vmatpush1.msra.mxu0 %v1244
        %1292 = vmatprep.subr.mxu0 0.0
        %1293 = vmatpush2.msra.mxu0 0.0
        %1294 = vmatprep.subr.mxu0 0.0
        %1295 = vmatpush2.msra.mxu0 0.0
        %1296 = vmatprep.subr.mxu0 0.0
        %1297 = vmatpush2.msra.mxu0 0.0
        %1298 = vmatprep.subr.mxu0 0.0
        %1299 = vmatpush2.msra.mxu0 0.0
        %1300 = vmatprep.subr.mxu0 0.0
        %1301 = vmatpush2.msra.mxu0 0.0
        %1302 = vmatprep.subr.mxu0 0.0
        %1303 = vmatpush2.msra.mxu0 0.0
        %1304 = vmatprep.subr.mxu0 0.0
        %1305 = vmatpush2.msra.mxu0 0.0
        %1306 = vmatprep.subr.mxu0 0.0
        %1307 = vmatpush2.msra.mxu0 0.0
        %1308 = vmatprep.subr.mxu0 0.0
        %1309 = vmatpush2.msra.mxu0 0.0
        %1310 = vmatprep.subr.mxu0 0.0
        %1311 = vmatpush2.msra.mxu0 0.0
        %1312 = vmatprep.subr.mxu0 0.0
        %1313 = vmatpush2.msra.mxu0 0.0
        %1314 = vmatprep.subr.mxu0 0.0
        %1315 = vmatpush2.msra.mxu0 0.0
        %1316 = vmatprep.subr.mxu0 0.0
        %1317 = vmatpush2.msra.mxu0 0.0
        %1318 = vmatprep.subr.mxu0 0.0
        %1319 = vmatpush2.msra.mxu0 0.0
        %1320 = vmatprep.subr.mxu0 0.0
        %1321 = vmatpush2.msra.mxu0 0.0
        %1322 = vmatprep.subr.mxu0 0.0
        %1323 = vmatpush2.msra.mxu0 0.0
        %1324 = vmatprep.mubr.f32.mxu0 0.0
        %1325 = vmatmul.mubr.f32.gmra.mxu0 %v1242
        %v1326 = vpop.f32.mrf.mxu0
        %v1327 = vadd.f32 0.0, %v1326
        %v1328 = vpop.f32.mrf.mxu0
        %1329 = vmatprep.mubr.f32.mxu0 0.0
        %1330 = vmatmul.mubr.f32.gmra.mxu0 %v1243
        %v1331 = vpop.f32.mrf.mxu0
        %v1332 = vadd.f32 0.0, %v1331
        %v1333 = vpop.f32.mrf.mxu0
        %1334 = vdwg.mxu0
        %1335 = vmatprep.subr.mxu0 0.0
        %1336 = vmatpush1.msra.mxu0 %v1241
        %1337 = vmatprep.subr.mxu0 0.0
        %1338 = vmatpush1.msra.mxu0 %v1240
        %1339 = vmatprep.subr.mxu0 0.0
        %1340 = vmatpush1.msra.mxu0 %v1239
        %1341 = vmatprep.subr.mxu0 0.0
        %1342 = vmatpush1.msra.mxu0 %v1238
        %1343 = vmatprep.subr.mxu0 0.0
        %1344 = vmatpush1.msra.mxu0 %v1237
        %1345 = vmatprep.subr.mxu0 0.0
        %1346 = vmatpush1.msra.mxu0 %v1236
        %1347 = vmatprep.subr.mxu0 0.0
        %1348 = vmatpush1.msra.mxu0 %v1235
        %1349 = vmatprep.subr.mxu0 0.0
        %1350 = vmatpush1.msra.mxu0 %v1234
        %1351 = vmatprep.subr.mxu0 0.0
        %1352 = vmatpush1.msra.mxu0 %v1233
        %1353 = vmatprep.subr.mxu0 0.0
        %1354 = vmatpush1.msra.mxu0 %v1232
        %1355 = vmatprep.subr.mxu0 0.0
        %1356 = vmatpush1.msra.mxu0 %v1231
        %1357 = vmatprep.subr.mxu0 0.0
        %1358 = vmatpush1.msra.mxu0 %v1230
        %1359 = vmatprep.subr.mxu0 0.0
        %1360 = vmatpush1.msra.mxu0 %v1229
        %1361 = vmatprep.subr.mxu0 0.0
        %1362 = vmatpush1.msra.mxu0 %v1228
        %1363 = vmatprep.subr.mxu0 0.0
        %1364 = vmatpush1.msra.mxu0 %v1227
        %1365 = vmatprep.subr.mxu0 0.0
        %1366 = vmatpush1.msra.mxu0 %v1226
        %1367 = vmatprep.subr.mxu0 0.0
        %1368 = vmatpush2.msra.mxu0 0.0
        %1369 = vmatprep.subr.mxu0 0.0
        %1370 = vmatpush2.msra.mxu0 0.0
        %1371 = vmatprep.subr.mxu0 0.0
        %1372 = vmatpush2.msra.mxu0 0.0
        %1373 = vmatprep.subr.mxu0 0.0
        %1374 = vmatpush2.msra.mxu0 0.0
        %1375 = vmatprep.subr.mxu0 0.0
        %1376 = vmatpush2.msra.mxu0 0.0
        %1377 = vmatprep.subr.mxu0 0.0
        %1378 = vmatpush2.msra.mxu0 0.0
        %1379 = vmatprep.subr.mxu0 0.0
        %1380 = vmatpush2.msra.mxu0 0.0
        %1381 = vmatprep.subr.mxu0 0.0
        %1382 = vmatpush2.msra.mxu0 0.0
        %1383 = vmatprep.subr.mxu0 0.0
        %1384 = vmatpush2.msra.mxu0 0.0
        %1385 = vmatprep.subr.mxu0 0.0
        %1386 = vmatpush2.msra.mxu0 0.0
        %1387 = vmatprep.subr.mxu0 0.0
        %1388 = vmatpush2.msra.mxu0 0.0
        %1389 = vmatprep.subr.mxu0 0.0
        %1390 = vmatpush2.msra.mxu0 0.0
        %1391 = vmatprep.subr.mxu0 0.0
        %1392 = vmatpush2.msra.mxu0 0.0
        %1393 = vmatprep.subr.mxu0 0.0
        %1394 = vmatpush2.msra.mxu0 0.0
        %1395 = vmatprep.subr.mxu0 0.0
        %1396 = vmatpush2.msra.mxu0 0.0
        %1397 = vmatprep.subr.mxu0 0.0
        %1398 = vmatpush2.msra.mxu0 0.0
        %1399 = vmatprep.mubr.f32.mxu0 0.0
        %1400 = vmatmul.mubr.f32.gmra.mxu0 %v1224
        %v1401 = vpop.f32.mrf.mxu0
        %v1402 = vadd.f32 %v1327, %v1401
        %v1403 = vpop.f32.mrf.mxu0
        %1404 = vmatprep.mubr.f32.mxu0 0.0
        %1405 = vmatmul.mubr.f32.gmra.mxu0 %v1225
        %v1406 = vpop.f32.mrf.mxu0
        %v1407 = vadd.f32 %v1332, %v1406
        %v1408 = vpop.f32.mrf.mxu0
        %1409 = vdwg.mxu0
        %v1410 = vld [vmem:[#allocation3 + $0x2] sm:$0xff]
        %v1411 = vld [vmem:[#allocation3 + $0x12] sm:$0xff]
        %v1412 = vld [vmem:[#allocation10 + $0x430] sm:$0xff]
        %v1413 = vld [vmem:[#allocation10 + $0x438] sm:$0xff]
        %v1414 = vld [vmem:[#allocation10 + $0x440] sm:$0xff]
        %v1415 = vld [vmem:[#allocation10 + $0x448] sm:$0xff]
        %v1416 = vld [vmem:[#allocation10 + $0x450] sm:$0xff]
        %v1417 = vld [vmem:[#allocation10 + $0x458] sm:$0xff]
        %v1418 = vld [vmem:[#allocation10 + $0x460] sm:$0xff]
        %v1419 = vld [vmem:[#allocation10 + $0x468] sm:$0xff]
        %v1420 = vld [vmem:[#allocation10 + $0x470] sm:$0xff]
        %v1421 = vld [vmem:[#allocation10 + $0x478] sm:$0xff]
        %v1422 = vld [vmem:[#allocation10 + $0x480] sm:$0xff]
        %v1423 = vld [vmem:[#allocation10 + $0x488] sm:$0xff]
        %v1424 = vld [vmem:[#allocation10 + $0x490] sm:$0xff]
        %v1425 = vld [vmem:[#allocation10 + $0x498] sm:$0xff]
        %v1426 = vld [vmem:[#allocation10 + $0x4a0] sm:$0xff]
        %v1427 = vld [vmem:[#allocation10 + $0x4a8] sm:$0xff]
        %1428 = vmatprep.subr.mxu0 0.0
        %1429 = vmatpush1.msra.mxu0 %v1427
        %1430 = vmatprep.subr.mxu0 0.0
        %1431 = vmatpush1.msra.mxu0 %v1426
        %1432 = vmatprep.subr.mxu0 0.0
        %1433 = vmatpush1.msra.mxu0 %v1425
        %1434 = vmatprep.subr.mxu0 0.0
        %1435 = vmatpush1.msra.mxu0 %v1424
        %1436 = vmatprep.subr.mxu0 0.0
        %1437 = vmatpush1.msra.mxu0 %v1423
        %1438 = vmatprep.subr.mxu0 0.0
        %1439 = vmatpush1.msra.mxu0 %v1422
        %1440 = vmatprep.subr.mxu0 0.0
        %1441 = vmatpush1.msra.mxu0 %v1421
        %1442 = vmatprep.subr.mxu0 0.0
        %1443 = vmatpush1.msra.mxu0 %v1420
        %1444 = vmatprep.subr.mxu0 0.0
        %1445 = vmatpush1.msra.mxu0 %v1419
        %1446 = vmatprep.subr.mxu0 0.0
        %1447 = vmatpush1.msra.mxu0 %v1418
        %1448 = vmatprep.subr.mxu0 0.0
        %1449 = vmatpush1.msra.mxu0 %v1417
        %1450 = vmatprep.subr.mxu0 0.0
        %1451 = vmatpush1.msra.mxu0 %v1416
        %1452 = vmatprep.subr.mxu0 0.0
        %1453 = vmatpush1.msra.mxu0 %v1415
        %1454 = vmatprep.subr.mxu0 0.0
        %1455 = vmatpush1.msra.mxu0 %v1414
        %1456 = vmatprep.subr.mxu0 0.0
        %1457 = vmatpush1.msra.mxu0 %v1413
        %1458 = vmatprep.subr.mxu0 0.0
        %1459 = vmatpush1.msra.mxu0 %v1412
        %1460 = vmatprep.subr.mxu0 0.0
        %1461 = vmatpush2.msra.mxu0 0.0
        %1462 = vmatprep.subr.mxu0 0.0
        %1463 = vmatpush2.msra.mxu0 0.0
        %1464 = vmatprep.subr.mxu0 0.0
        %1465 = vmatpush2.msra.mxu0 0.0
        %1466 = vmatprep.subr.mxu0 0.0
        %1467 = vmatpush2.msra.mxu0 0.0
        %1468 = vmatprep.subr.mxu0 0.0
        %1469 = vmatpush2.msra.mxu0 0.0
        %1470 = vmatprep.subr.mxu0 0.0
        %1471 = vmatpush2.msra.mxu0 0.0
        %1472 = vmatprep.subr.mxu0 0.0
        %1473 = vmatpush2.msra.mxu0 0.0
        %1474 = vmatprep.subr.mxu0 0.0
        %1475 = vmatpush2.msra.mxu0 0.0
        %1476 = vmatprep.subr.mxu0 0.0
        %1477 = vmatpush2.msra.mxu0 0.0
        %1478 = vmatprep.subr.mxu0 0.0
        %1479 = vmatpush2.msra.mxu0 0.0
        %1480 = vmatprep.subr.mxu0 0.0
        %1481 = vmatpush2.msra.mxu0 0.0
        %1482 = vmatprep.subr.mxu0 0.0
        %1483 = vmatpush2.msra.mxu0 0.0
        %1484 = vmatprep.subr.mxu0 0.0
        %1485 = vmatpush2.msra.mxu0 0.0
        %1486 = vmatprep.subr.mxu0 0.0
        %1487 = vmatpush2.msra.mxu0 0.0
        %1488 = vmatprep.subr.mxu0 0.0
        %1489 = vmatpush2.msra.mxu0 0.0
        %1490 = vmatprep.subr.mxu0 0.0
        %1491 = vmatpush2.msra.mxu0 0.0
        %1492 = vmatprep.mubr.f32.mxu0 0.0
        %1493 = vmatmul.mubr.f32.gmra.mxu0 %v1410
        %v1494 = vpop.f32.mrf.mxu0
        %v1495 = vadd.f32 0.0, %v1494
        %v1496 = vpop.f32.mrf.mxu0
        %1497 = vmatprep.mubr.f32.mxu0 0.0
        %1498 = vmatmul.mubr.f32.gmra.mxu0 %v1411
        %v1499 = vpop.f32.mrf.mxu0
        %v1500 = vadd.f32 0.0, %v1499
        %v1501 = vpop.f32.mrf.mxu0
        %1502 = vdwg.mxu0
        %v1503 = vadd.f32 %v1402, %v1495
        %v1504 = vadd.f32 %v1407, %v1500
        %v1505 = vld [vmem:[#allocation10 + $0x1433] sm:$0x1]
        %v1506 = vlaneseq
        %v1507 = vshrl.u32 %v1506, 7
        %v1508 = vsub.s32 0, %v1507
        %v1509 = vrot.slane %v1505, %v1508
        %v1510 = vadd.f32 %v1503, %v1509
        %v1511 = vadd.f32 %v1504, %v1509
        %v1512 = vmax.f32 %v1510, 0.0
        %v1513 = vmax.f32 %v1511, 0.0
        %1514 = vst [vmem:[#allocation6 + $0x1] sm:$0xff] %v1512
        %1515 = vst [vmem:[#allocation6 + $0x11] sm:$0xff] %v1513
        %1518 = vrot.lane.b32.xlu0 %v1512, 112
        %v1519 = vpop.permute.xlu0 %1518
        %1520 = vrot.lane.b32.xlu0 %v1513, 112
        %v1521 = vpop.permute.xlu0 %1520
        %vm1524 = vcmask 916480
        %v1525 = vsel %vm1524, %v1519, 0.0
        %v1526 = vsel %vm1524, %v1521, 0.0
        %v1527 = vmax.f32 %v1512, %v1525
        %v1528 = vmax.f32 %v1513, %v1526
        %v1531 = vrot.slane %v1527, 1
        %v1532 = vrot.slane %v1528, 1
        %v1535 = vmax.f32 %v1527, %v1531
        %v1536 = vmax.f32 %v1528, %v1532
        %1537 = vst [vmem:[#allocation4 + $0x1] sm:$0x1] %v1535
        %1538 = vst [vmem:[#allocation4 + $0x9] sm:$0x1] %v1536
        %1539 = vst [vmem:[#allocation4] sm:$0x4] %v1535
        %1540 = vst [vmem:[#allocation4 + $0x8] sm:$0x4] %v1536
        %1541 = vst [vmem:[#allocation4 - $0x1] sm:$0x10] %v1535
        %1542 = vst [vmem:[#allocation4 + $0x7] sm:$0x10] %v1536
        %1543 = vst [vmem:[#allocation4 - $0x2] sm:$0x40] %v1535
        %1544 = vst [vmem:[#allocation4 + $0x6] sm:$0x40] %v1536
        %v1545 = vld [vmem:[#allocation4] sm:$0xf]
        %v1546 = vld [vmem:[#allocation4 + $0x8] sm:$0xf]
        %v1547 = vld [vmem:[#allocation10 + $0x4b0] sm:$0xff]
        %v1548 = vld [vmem:[#allocation10 + $0x4b8] sm:$0xff]
        %v1549 = vld [vmem:[#allocation10 + $0x4c0] sm:$0xff]
        %v1550 = vld [vmem:[#allocation10 + $0x4c8] sm:$0xff]
        %v1551 = vld [vmem:[#allocation10 + $0x4d0] sm:$0xff]
        %v1552 = vld [vmem:[#allocation10 + $0x4d8] sm:$0xff]
        %v1553 = vld [vmem:[#allocation10 + $0x4e0] sm:$0xff]
        %v1554 = vld [vmem:[#allocation10 + $0x4e8] sm:$0xff]
        %v1555 = vld [vmem:[#allocation10 + $0x4f0] sm:$0xff]
        %v1556 = vld [vmem:[#allocation10 + $0x4f8] sm:$0xff]
        %v1557 = vld [vmem:[#allocation10 + $0x500] sm:$0xff]
        %v1558 = vld [vmem:[#allocation10 + $0x508] sm:$0xff]
        %v1559 = vld [vmem:[#allocation10 + $0x510] sm:$0xff]
        %v1560 = vld [vmem:[#allocation10 + $0x518] sm:$0xff]
        %v1561 = vld [vmem:[#allocation10 + $0x520] sm:$0xff]
        %v1562 = vld [vmem:[#allocation10 + $0x528] sm:$0xff]
        %v1563 = vld [vmem:[#allocation4 + $0x1] sm:$0xf]
        %v1564 = vld [vmem:[#allocation4 + $0x9] sm:$0xf]
        %v1565 = vld [vmem:[#allocation10 + $0x530] sm:$0xff]
        %v1566 = vld [vmem:[#allocation10 + $0x538] sm:$0xff]
        %v1567 = vld [vmem:[#allocation10 + $0x540] sm:$0xff]
        %v1568 = vld [vmem:[#allocation10 + $0x548] sm:$0xff]
        %v1569 = vld [vmem:[#allocation10 + $0x550] sm:$0xff]
        %v1570 = vld [vmem:[#allocation10 + $0x558] sm:$0xff]
        %v1571 = vld [vmem:[#allocation10 + $0x560] sm:$0xff]
        %v1572 = vld [vmem:[#allocation10 + $0x568] sm:$0xff]
        %v1573 = vld [vmem:[#allocation10 + $0x570] sm:$0xff]
        %v1574 = vld [vmem:[#allocation10 + $0x578] sm:$0xff]
        %v1575 = vld [vmem:[#allocation10 + $0x580] sm:$0xff]
        %v1576 = vld [vmem:[#allocation10 + $0x588] sm:$0xff]
        %v1577 = vld [vmem:[#allocation10 + $0x590] sm:$0xff]
        %v1578 = vld [vmem:[#allocation10 + $0x598] sm:$0xff]
        %v1579 = vld [vmem:[#allocation10 + $0x5a0] sm:$0xff]
        %v1580 = vld [vmem:[#allocation10 + $0x5a8] sm:$0xff]
        %v1583 = vcombine.low %v1563, %v1564
        %1585 = vmatprep.subr.mxu0 0.0
        %1586 = vmatpush1.msra.mxu0 %v1580
        %1587 = vmatprep.subr.mxu0 0.0
        %1588 = vmatpush1.msra.mxu0 %v1579
        %1589 = vmatprep.subr.mxu0 0.0
        %1590 = vmatpush1.msra.mxu0 %v1578
        %1591 = vmatprep.subr.mxu0 0.0
        %1592 = vmatpush1.msra.mxu0 %v1577
        %1593 = vmatprep.subr.mxu0 0.0
        %1594 = vmatpush1.msra.mxu0 %v1576
        %1595 = vmatprep.subr.mxu0 0.0
        %1596 = vmatpush1.msra.mxu0 %v1575
        %1597 = vmatprep.subr.mxu0 0.0
        %1598 = vmatpush1.msra.mxu0 %v1574
        %1599 = vmatprep.subr.mxu0 0.0
        %1600 = vmatpush1.msra.mxu0 %v1573
        %1601 = vmatprep.subr.mxu0 0.0
        %1602 = vmatpush1.msra.mxu0 %v1572
        %1603 = vmatprep.subr.mxu0 0.0
        %1604 = vmatpush1.msra.mxu0 %v1571
        %1605 = vmatprep.subr.mxu0 0.0
        %1606 = vmatpush1.msra.mxu0 %v1570
        %1607 = vmatprep.subr.mxu0 0.0
        %1608 = vmatpush1.msra.mxu0 %v1569
        %1609 = vmatprep.subr.mxu0 0.0
        %1610 = vmatpush1.msra.mxu0 %v1568
        %1611 = vmatprep.subr.mxu0 0.0
        %1612 = vmatpush1.msra.mxu0 %v1567
        %1613 = vmatprep.subr.mxu0 0.0
        %1614 = vmatpush1.msra.mxu0 %v1566
        %1615 = vmatprep.subr.mxu0 0.0
        %1616 = vmatpush1.msra.mxu0 %v1565
        %1617 = vmatprep.subr.mxu0 0.0
        %1618 = vmatpush2.msra.mxu0 0.0
        %1619 = vmatprep.subr.mxu0 0.0
        %1620 = vmatpush2.msra.mxu0 0.0
        %1621 = vmatprep.subr.mxu0 0.0
        %1622 = vmatpush2.msra.mxu0 0.0
        %1623 = vmatprep.subr.mxu0 0.0
        %1624 = vmatpush2.msra.mxu0 0.0
        %1625 = vmatprep.subr.mxu0 0.0
        %1626 = vmatpush2.msra.mxu0 0.0
        %1627 = vmatprep.subr.mxu0 0.0
        %1628 = vmatpush2.msra.mxu0 0.0
        %1629 = vmatprep.subr.mxu0 0.0
        %1630 = vmatpush2.msra.mxu0 0.0
        %1631 = vmatprep.subr.mxu0 0.0
        %1632 = vmatpush2.msra.mxu0 0.0
        %1633 = vmatprep.subr.mxu0 0.0
        %1634 = vmatpush2.msra.mxu0 0.0
        %1635 = vmatprep.subr.mxu0 0.0
        %1636 = vmatpush2.msra.mxu0 0.0
        %1637 = vmatprep.subr.mxu0 0.0
        %1638 = vmatpush2.msra.mxu0 0.0
        %1639 = vmatprep.subr.mxu0 0.0
        %1640 = vmatpush2.msra.mxu0 0.0
        %1641 = vmatprep.subr.mxu0 0.0
        %1642 = vmatpush2.msra.mxu0 0.0
        %1643 = vmatprep.subr.mxu0 0.0
        %1644 = vmatpush2.msra.mxu0 0.0
        %1645 = vmatprep.subr.mxu0 0.0
        %1646 = vmatpush2.msra.mxu0 0.0
        %1647 = vmatprep.subr.mxu0 0.0
        %1648 = vmatpush2.msra.mxu0 0.0
        %1649 = vmatprep.mubr.f32.mxu0 0.0
        %1650 = vmatmul.mubr.f32.gmra.mxu0 %v1583
        %v1651 = vpop.f32.mrf.mxu0
        %v1652 = vadd.f32 0.0, %v1651
        %v1653 = vpop.f32.mrf.mxu0
        %1654 = vdwg.mxu0
        %v1657 = vcombine.low %v1545, %v1546
        %1659 = vmatprep.subr.mxu0 0.0
        %1660 = vmatpush1.msra.mxu0 %v1562
        %1661 = vmatprep.subr.mxu0 0.0
        %1662 = vmatpush1.msra.mxu0 %v1561
        %1663 = vmatprep.subr.mxu0 0.0
        %1664 = vmatpush1.msra.mxu0 %v1560
        %1665 = vmatprep.subr.mxu0 0.0
        %1666 = vmatpush1.msra.mxu0 %v1559
        %1667 = vmatprep.subr.mxu0 0.0
        %1668 = vmatpush1.msra.mxu0 %v1558
        %1669 = vmatprep.subr.mxu0 0.0
        %1670 = vmatpush1.msra.mxu0 %v1557
        %1671 = vmatprep.subr.mxu0 0.0
        %1672 = vmatpush1.msra.mxu0 %v1556
        %1673 = vmatprep.subr.mxu0 0.0
        %1674 = vmatpush1.msra.mxu0 %v1555
        %1675 = vmatprep.subr.mxu0 0.0
        %1676 = vmatpush1.msra.mxu0 %v1554
        %1677 = vmatprep.subr.mxu0 0.0
        %1678 = vmatpush1.msra.mxu0 %v1553
        %1679 = vmatprep.subr.mxu0 0.0
        %1680 = vmatpush1.msra.mxu0 %v1552
        %1681 = vmatprep.subr.mxu0 0.0
        %1682 = vmatpush1.msra.mxu0 %v1551
        %1683 = vmatprep.subr.mxu0 0.0
        %1684 = vmatpush1.msra.mxu0 %v1550
        %1685 = vmatprep.subr.mxu0 0.0
        %1686 = vmatpush1.msra.mxu0 %v1549
        %1687 = vmatprep.subr.mxu0 0.0
        %1688 = vmatpush1.msra.mxu0 %v1548
        %1689 = vmatprep.subr.mxu0 0.0
        %1690 = vmatpush1.msra.mxu0 %v1547
        %1691 = vmatprep.subr.mxu0 0.0
        %1692 = vmatpush2.msra.mxu0 0.0
        %1693 = vmatprep.subr.mxu0 0.0
        %1694 = vmatpush2.msra.mxu0 0.0
        %1695 = vmatprep.subr.mxu0 0.0
        %1696 = vmatpush2.msra.mxu0 0.0
        %1697 = vmatprep.subr.mxu0 0.0
        %1698 = vmatpush2.msra.mxu0 0.0
        %1699 = vmatprep.subr.mxu0 0.0
        %1700 = vmatpush2.msra.mxu0 0.0
        %1701 = vmatprep.subr.mxu0 0.0
        %1702 = vmatpush2.msra.mxu0 0.0
        %1703 = vmatprep.subr.mxu0 0.0
        %1704 = vmatpush2.msra.mxu0 0.0
        %1705 = vmatprep.subr.mxu0 0.0
        %1706 = vmatpush2.msra.mxu0 0.0
        %1707 = vmatprep.subr.mxu0 0.0
        %1708 = vmatpush2.msra.mxu0 0.0
        %1709 = vmatprep.subr.mxu0 0.0
        %1710 = vmatpush2.msra.mxu0 0.0
        %1711 = vmatprep.subr.mxu0 0.0
        %1712 = vmatpush2.msra.mxu0 0.0
        %1713 = vmatprep.subr.mxu0 0.0
        %1714 = vmatpush2.msra.mxu0 0.0
        %1715 = vmatprep.subr.mxu0 0.0
        %1716 = vmatpush2.msra.mxu0 0.0
        %1717 = vmatprep.subr.mxu0 0.0
        %1718 = vmatpush2.msra.mxu0 0.0
        %1719 = vmatprep.subr.mxu0 0.0
        %1720 = vmatpush2.msra.mxu0 0.0
        %1721 = vmatprep.subr.mxu0 0.0
        %1722 = vmatpush2.msra.mxu0 0.0
        %1723 = vmatprep.mubr.f32.mxu0 0.0
        %1724 = vmatmul.mubr.f32.gmra.mxu0 %v1657
        %v1725 = vpop.f32.mrf.mxu0
        %v1726 = vadd.f32 %v1652, %v1725
        %v1727 = vpop.f32.mrf.mxu0
        %1728 = vdwg.mxu0
        %v1729 = vld [vmem:[#allocation4 + $0x2] sm:$0xf]
        %v1730 = vld [vmem:[#allocation4 + $0xa] sm:$0xf]
        %v1731 = vld [vmem:[#allocation10 + $0x5b0] sm:$0xff]
        %v1732 = vld [vmem:[#allocation10 + $0x5b8] sm:$0xff]
        %v1733 = vld [vmem:[#allocation10 + $0x5c0] sm:$0xff]
        %v1734 = vld [vmem:[#allocation10 + $0x5c8] sm:$0xff]
        %v1735 = vld [vmem:[#allocation10 + $0x5d0] sm:$0xff]
        %v1736 = vld [vmem:[#allocation10 + $0x5d8] sm:$0xff]
        %v1737 = vld [vmem:[#allocation10 + $0x5e0] sm:$0xff]
        %v1738 = vld [vmem:[#allocation10 + $0x5e8] sm:$0xff]
        %v1739 = vld [vmem:[#allocation10 + $0x5f0] sm:$0xff]
        %v1740 = vld [vmem:[#allocation10 + $0x5f8] sm:$0xff]
        %v1741 = vld [vmem:[#allocation10 + $0x600] sm:$0xff]
        %v1742 = vld [vmem:[#allocation10 + $0x608] sm:$0xff]
        %v1743 = vld [vmem:[#allocation10 + $0x610] sm:$0xff]
        %v1744 = vld [vmem:[#allocation10 + $0x618] sm:$0xff]
        %v1745 = vld [vmem:[#allocation10 + $0x620] sm:$0xff]
        %v1746 = vld [vmem:[#allocation10 + $0x628] sm:$0xff]
        %v1749 = vcombine.low %v1729, %v1730
        %1751 = vmatprep.subr.mxu0 0.0
        %1752 = vmatpush1.msra.mxu0 %v1746
        %1753 = vmatprep.subr.mxu0 0.0
        %1754 = vmatpush1.msra.mxu0 %v1745
        %1755 = vmatprep.subr.mxu0 0.0
        %1756 = vmatpush1.msra.mxu0 %v1744
        %1757 = vmatprep.subr.mxu0 0.0
        %1758 = vmatpush1.msra.mxu0 %v1743
        %1759 = vmatprep.subr.mxu0 0.0
        %1760 = vmatpush1.msra.mxu0 %v1742
        %1761 = vmatprep.subr.mxu0 0.0
        %1762 = vmatpush1.msra.mxu0 %v1741
        %1763 = vmatprep.subr.mxu0 0.0
        %1764 = vmatpush1.msra.mxu0 %v1740
        %1765 = vmatprep.subr.mxu0 0.0
        %1766 = vmatpush1.msra.mxu0 %v1739
        %1767 = vmatprep.subr.mxu0 0.0
        %1768 = vmatpush1.msra.mxu0 %v1738
        %1769 = vmatprep.subr.mxu0 0.0
        %1770 = vmatpush1.msra.mxu0 %v1737
        %1771 = vmatprep.subr.mxu0 0.0
        %1772 = vmatpush1.msra.mxu0 %v1736
        %1773 = vmatprep.subr.mxu0 0.0
        %1774 = vmatpush1.msra.mxu0 %v1735
        %1775 = vmatprep.subr.mxu0 0.0
        %1776 = vmatpush1.msra.mxu0 %v1734
        %1777 = vmatprep.subr.mxu0 0.0
        %1778 = vmatpush1.msra.mxu0 %v1733
        %1779 = vmatprep.subr.mxu0 0.0
        %1780 = vmatpush1.msra.mxu0 %v1732
        %1781 = vmatprep.subr.mxu0 0.0
        %1782 = vmatpush1.msra.mxu0 %v1731
        %1783 = vmatprep.subr.mxu0 0.0
        %1784 = vmatpush2.msra.mxu0 0.0
        %1785 = vmatprep.subr.mxu0 0.0
        %1786 = vmatpush2.msra.mxu0 0.0
        %1787 = vmatprep.subr.mxu0 0.0
        %1788 = vmatpush2.msra.mxu0 0.0
        %1789 = vmatprep.subr.mxu0 0.0
        %1790 = vmatpush2.msra.mxu0 0.0
        %1791 = vmatprep.subr.mxu0 0.0
        %1792 = vmatpush2.msra.mxu0 0.0
        %1793 = vmatprep.subr.mxu0 0.0
        %1794 = vmatpush2.msra.mxu0 0.0
        %1795 = vmatprep.subr.mxu0 0.0
        %1796 = vmatpush2.msra.mxu0 0.0
        %1797 = vmatprep.subr.mxu0 0.0
        %1798 = vmatpush2.msra.mxu0 0.0
        %1799 = vmatprep.subr.mxu0 0.0
        %1800 = vmatpush2.msra.mxu0 0.0
        %1801 = vmatprep.subr.mxu0 0.0
        %1802 = vmatpush2.msra.mxu0 0.0
        %1803 = vmatprep.subr.mxu0 0.0
        %1804 = vmatpush2.msra.mxu0 0.0
        %1805 = vmatprep.subr.mxu0 0.0
        %1806 = vmatpush2.msra.mxu0 0.0
        %1807 = vmatprep.subr.mxu0 0.0
        %1808 = vmatpush2.msra.mxu0 0.0
        %1809 = vmatprep.subr.mxu0 0.0
        %1810 = vmatpush2.msra.mxu0 0.0
        %1811 = vmatprep.subr.mxu0 0.0
        %1812 = vmatpush2.msra.mxu0 0.0
        %1813 = vmatprep.subr.mxu0 0.0
        %1814 = vmatpush2.msra.mxu0 0.0
        %1815 = vmatprep.mubr.f32.mxu0 0.0
        %1816 = vmatmul.mubr.f32.gmra.mxu0 %v1749
        %v1817 = vpop.f32.mrf.mxu0
        %v1818 = vadd.f32 0.0, %v1817
        %v1819 = vpop.f32.mrf.mxu0
        %1820 = vdwg.mxu0
        %v1821 = vadd.f32 %v1726, %v1818
        %v1822 = vld [vmem:[#allocation10 + $0x1434] sm:$0x1]
        %v1823 = vlaneseq
        %v1824 = vshrl.u32 %v1823, 7
        %v1825 = vsub.s32 0, %v1824
        %v1826 = vrot.slane %v1822, %v1825
        %v1827 = vadd.f32 %v1821, %v1826
        %v1828 = vmax.f32 %v1827, 0.0
        %v1830 = vcombine.high %v1828, %v1828
        %1832 = vst [vmem:[#allocation4 + $0x1] sm:$0xf] %v1828
        %1833 = vst [vmem:[#allocation4 + $0x9] sm:$0xf] %v1830
        %v1834 = vld [vmem:[#allocation4] sm:$0xf]
        %v1835 = vld [vmem:[#allocation4 + $0x8] sm:$0xf]
        %v1836 = vld [vmem:[#allocation10 + $0x630] sm:$0xff]
        %v1837 = vld [vmem:[#allocation10 + $0x638] sm:$0xff]
        %v1838 = vld [vmem:[#allocation10 + $0x640] sm:$0xff]
        %v1839 = vld [vmem:[#allocation10 + $0x648] sm:$0xff]
        %v1840 = vld [vmem:[#allocation10 + $0x650] sm:$0xff]
        %v1841 = vld [vmem:[#allocation10 + $0x658] sm:$0xff]
        %v1842 = vld [vmem:[#allocation10 + $0x660] sm:$0xff]
        %v1843 = vld [vmem:[#allocation10 + $0x668] sm:$0xff]
        %v1844 = vld [vmem:[#allocation10 + $0x670] sm:$0xff]
        %v1845 = vld [vmem:[#allocation10 + $0x678] sm:$0xff]
        %v1846 = vld [vmem:[#allocation10 + $0x680] sm:$0xff]
        %v1847 = vld [vmem:[#allocation10 + $0x688] sm:$0xff]
        %v1848 = vld [vmem:[#allocation10 + $0x690] sm:$0xff]
        %v1849 = vld [vmem:[#allocation10 + $0x698] sm:$0xff]
        %v1850 = vld [vmem:[#allocation10 + $0x6a0] sm:$0xff]
        %v1851 = vld [vmem:[#allocation10 + $0x6a8] sm:$0xff]
        %v1852 = vld [vmem:[#allocation4 + $0x1] sm:$0xf]
        %v1853 = vld [vmem:[#allocation4 + $0x9] sm:$0xf]
        %v1854 = vld [vmem:[#allocation10 + $0x6b0] sm:$0xff]
        %v1855 = vld [vmem:[#allocation10 + $0x6b8] sm:$0xff]
        %v1856 = vld [vmem:[#allocation10 + $0x6c0] sm:$0xff]
        %v1857 = vld [vmem:[#allocation10 + $0x6c8] sm:$0xff]
        %v1858 = vld [vmem:[#allocation10 + $0x6d0] sm:$0xff]
        %v1859 = vld [vmem:[#allocation10 + $0x6d8] sm:$0xff]
        %v1860 = vld [vmem:[#allocation10 + $0x6e0] sm:$0xff]
        %v1861 = vld [vmem:[#allocation10 + $0x6e8] sm:$0xff]
        %v1862 = vld [vmem:[#allocation10 + $0x6f0] sm:$0xff]
        %v1863 = vld [vmem:[#allocation10 + $0x6f8] sm:$0xff]
        %v1864 = vld [vmem:[#allocation10 + $0x700] sm:$0xff]
        %v1865 = vld [vmem:[#allocation10 + $0x708] sm:$0xff]
        %v1866 = vld [vmem:[#allocation10 + $0x710] sm:$0xff]
        %v1867 = vld [vmem:[#allocation10 + $0x718] sm:$0xff]
        %v1868 = vld [vmem:[#allocation10 + $0x720] sm:$0xff]
        %v1869 = vld [vmem:[#allocation10 + $0x728] sm:$0xff]
        %v1872 = vcombine.low %v1852, %v1853
        %1874 = vmatprep.subr.mxu0 0.0
        %1875 = vmatpush1.msra.mxu0 %v1869
        %1876 = vmatprep.subr.mxu0 0.0
        %1877 = vmatpush1.msra.mxu0 %v1868
        %1878 = vmatprep.subr.mxu0 0.0
        %1879 = vmatpush1.msra.mxu0 %v1867
        %1880 = vmatprep.subr.mxu0 0.0
        %1881 = vmatpush1.msra.mxu0 %v1866
        %1882 = vmatprep.subr.mxu0 0.0
        %1883 = vmatpush1.msra.mxu0 %v1865
        %1884 = vmatprep.subr.mxu0 0.0
        %1885 = vmatpush1.msra.mxu0 %v1864
        %1886 = vmatprep.subr.mxu0 0.0
        %1887 = vmatpush1.msra.mxu0 %v1863
        %1888 = vmatprep.subr.mxu0 0.0
        %1889 = vmatpush1.msra.mxu0 %v1862
        %1890 = vmatprep.subr.mxu0 0.0
        %1891 = vmatpush1.msra.mxu0 %v1861
        %1892 = vmatprep.subr.mxu0 0.0
        %1893 = vmatpush1.msra.mxu0 %v1860
        %1894 = vmatprep.subr.mxu0 0.0
        %1895 = vmatpush1.msra.mxu0 %v1859
        %1896 = vmatprep.subr.mxu0 0.0
        %1897 = vmatpush1.msra.mxu0 %v1858
        %1898 = vmatprep.subr.mxu0 0.0
        %1899 = vmatpush1.msra.mxu0 %v1857
        %1900 = vmatprep.subr.mxu0 0.0
        %1901 = vmatpush1.msra.mxu0 %v1856
        %1902 = vmatprep.subr.mxu0 0.0
        %1903 = vmatpush1.msra.mxu0 %v1855
        %1904 = vmatprep.subr.mxu0 0.0
        %1905 = vmatpush1.msra.mxu0 %v1854
        %1906 = vmatprep.subr.mxu0 0.0
        %1907 = vmatpush2.msra.mxu0 0.0
        %1908 = vmatprep.subr.mxu0 0.0
        %1909 = vmatpush2.msra.mxu0 0.0
        %1910 = vmatprep.subr.mxu0 0.0
        %1911 = vmatpush2.msra.mxu0 0.0
        %1912 = vmatprep.subr.mxu0 0.0
        %1913 = vmatpush2.msra.mxu0 0.0
        %1914 = vmatprep.subr.mxu0 0.0
        %1915 = vmatpush2.msra.mxu0 0.0
        %1916 = vmatprep.subr.mxu0 0.0
        %1917 = vmatpush2.msra.mxu0 0.0
        %1918 = vmatprep.subr.mxu0 0.0
        %1919 = vmatpush2.msra.mxu0 0.0
        %1920 = vmatprep.subr.mxu0 0.0
        %1921 = vmatpush2.msra.mxu0 0.0
        %1922 = vmatprep.subr.mxu0 0.0
        %1923 = vmatpush2.msra.mxu0 0.0
        %1924 = vmatprep.subr.mxu0 0.0
        %1925 = vmatpush2.msra.mxu0 0.0
        %1926 = vmatprep.subr.mxu0 0.0
        %1927 = vmatpush2.msra.mxu0 0.0
        %1928 = vmatprep.subr.mxu0 0.0
        %1929 = vmatpush2.msra.mxu0 0.0
        %1930 = vmatprep.subr.mxu0 0.0
        %1931 = vmatpush2.msra.mxu0 0.0
        %1932 = vmatprep.subr.mxu0 0.0
        %1933 = vmatpush2.msra.mxu0 0.0
        %1934 = vmatprep.subr.mxu0 0.0
        %1935 = vmatpush2.msra.mxu0 0.0
        %1936 = vmatprep.subr.mxu0 0.0
        %1937 = vmatpush2.msra.mxu0 0.0
        %1938 = vmatprep.mubr.f32.mxu0 0.0
        %1939 = vmatmul.mubr.f32.gmra.mxu0 %v1872
        %v1940 = vpop.f32.mrf.mxu0
        %v1941 = vadd.f32 0.0, %v1940
        %v1942 = vpop.f32.mrf.mxu0
        %1943 = vdwg.mxu0
        %v1946 = vcombine.low %v1834, %v1835
        %1948 = vmatprep.subr.mxu0 0.0
        %1949 = vmatpush1.msra.mxu0 %v1851
        %1950 = vmatprep.subr.mxu0 0.0
        %1951 = vmatpush1.msra.mxu0 %v1850
        %1952 = vmatprep.subr.mxu0 0.0
        %1953 = vmatpush1.msra.mxu0 %v1849
        %1954 = vmatprep.subr.mxu0 0.0
        %1955 = vmatpush1.msra.mxu0 %v1848
        %1956 = vmatprep.subr.mxu0 0.0
        %1957 = vmatpush1.msra.mxu0 %v1847
        %1958 = vmatprep.subr.mxu0 0.0
        %1959 = vmatpush1.msra.mxu0 %v1846
        %1960 = vmatprep.subr.mxu0 0.0
        %1961 = vmatpush1.msra.mxu0 %v1845
        %1962 = vmatprep.subr.mxu0 0.0
        %1963 = vmatpush1.msra.mxu0 %v1844
        %1964 = vmatprep.subr.mxu0 0.0
        %1965 = vmatpush1.msra.mxu0 %v1843
        %1966 = vmatprep.subr.mxu0 0.0
        %1967 = vmatpush1.msra.mxu0 %v1842
        %1968 = vmatprep.subr.mxu0 0.0
        %1969 = vmatpush1.msra.mxu0 %v1841
        %1970 = vmatprep.subr.mxu0 0.0
        %1971 = vmatpush1.msra.mxu0 %v1840
        %1972 = vmatprep.subr.mxu0 0.0
        %1973 = vmatpush1.msra.mxu0 %v1839
        %1974 = vmatprep.subr.mxu0 0.0
        %1975 = vmatpush1.msra.mxu0 %v1838
        %1976 = vmatprep.subr.mxu0 0.0
        %1977 = vmatpush1.msra.mxu0 %v1837
        %1978 = vmatprep.subr.mxu0 0.0
        %1979 = vmatpush1.msra.mxu0 %v1836
        %1980 = vmatprep.subr.mxu0 0.0
        %1981 = vmatpush2.msra.mxu0 0.0
        %1982 = vmatprep.subr.mxu0 0.0
        %1983 = vmatpush2.msra.mxu0 0.0
        %1984 = vmatprep.subr.mxu0 0.0
        %1985 = vmatpush2.msra.mxu0 0.0
        %1986 = vmatprep.subr.mxu0 0.0
        %1987 = vmatpush2.msra.mxu0 0.0
        %1988 = vmatprep.subr.mxu0 0.0
        %1989 = vmatpush2.msra.mxu0 0.0
        %1990 = vmatprep.subr.mxu0 0.0
        %1991 = vmatpush2.msra.mxu0 0.0
        %1992 = vmatprep.subr.mxu0 0.0
        %1993 = vmatpush2.msra.mxu0 0.0
        %1994 = vmatprep.subr.mxu0 0.0
        %1995 = vmatpush2.msra.mxu0 0.0
        %1996 = vmatprep.subr.mxu0 0.0
        %1997 = vmatpush2.msra.mxu0 0.0
        %1998 = vmatprep.subr.mxu0 0.0
        %1999 = vmatpush2.msra.mxu0 0.0
        %2000 = vmatprep.subr.mxu0 0.0
        %2001 = vmatpush2.msra.mxu0 0.0
        %2002 = vmatprep.subr.mxu0 0.0
        %2003 = vmatpush2.msra.mxu0 0.0
        %2004 = vmatprep.subr.mxu0 0.0
        %2005 = vmatpush2.msra.mxu0 0.0
        %2006 = vmatprep.subr.mxu0 0.0
        %2007 = vmatpush2.msra.mxu0 0.0
        %2008 = vmatprep.subr.mxu0 0.0
        %2009 = vmatpush2.msra.mxu0 0.0
        %2010 = vmatprep.subr.mxu0 0.0
        %2011 = vmatpush2.msra.mxu0 0.0
        %2012 = vmatprep.mubr.f32.mxu0 0.0
        %2013 = vmatmul.mubr.f32.gmra.mxu0 %v1946
        %v2014 = vpop.f32.mrf.mxu0
        %v2015 = vadd.f32 %v1941, %v2014
        %v2016 = vpop.f32.mrf.mxu0
        %2017 = vdwg.mxu0
        %v2018 = vld [vmem:[#allocation4 + $0x2] sm:$0xf]
        %v2019 = vld [vmem:[#allocation4 + $0xa] sm:$0xf]
        %v2020 = vld [vmem:[#allocation10 + $0x730] sm:$0xff]
        %v2021 = vld [vmem:[#allocation10 + $0x738] sm:$0xff]
        %v2022 = vld [vmem:[#allocation10 + $0x740] sm:$0xff]
        %v2023 = vld [vmem:[#allocation10 + $0x748] sm:$0xff]
        %v2024 = vld [vmem:[#allocation10 + $0x750] sm:$0xff]
        %v2025 = vld [vmem:[#allocation10 + $0x758] sm:$0xff]
        %v2026 = vld [vmem:[#allocation10 + $0x760] sm:$0xff]
        %v2027 = vld [vmem:[#allocation10 + $0x768] sm:$0xff]
        %v2028 = vld [vmem:[#allocation10 + $0x770] sm:$0xff]
        %v2029 = vld [vmem:[#allocation10 + $0x778] sm:$0xff]
        %v2030 = vld [vmem:[#allocation10 + $0x780] sm:$0xff]
        %v2031 = vld [vmem:[#allocation10 + $0x788] sm:$0xff]
        %v2032 = vld [vmem:[#allocation10 + $0x790] sm:$0xff]
        %v2033 = vld [vmem:[#allocation10 + $0x798] sm:$0xff]
        %v2034 = vld [vmem:[#allocation10 + $0x7a0] sm:$0xff]
        %v2035 = vld [vmem:[#allocation10 + $0x7a8] sm:$0xff]
        %v2038 = vcombine.low %v2018, %v2019
        %2040 = vmatprep.subr.mxu0 0.0
        %2041 = vmatpush1.msra.mxu0 %v2035
        %2042 = vmatprep.subr.mxu0 0.0
        %2043 = vmatpush1.msra.mxu0 %v2034
        %2044 = vmatprep.subr.mxu0 0.0
        %2045 = vmatpush1.msra.mxu0 %v2033
        %2046 = vmatprep.subr.mxu0 0.0
        %2047 = vmatpush1.msra.mxu0 %v2032
        %2048 = vmatprep.subr.mxu0 0.0
        %2049 = vmatpush1.msra.mxu0 %v2031
        %2050 = vmatprep.subr.mxu0 0.0
        %2051 = vmatpush1.msra.mxu0 %v2030
        %2052 = vmatprep.subr.mxu0 0.0
        %2053 = vmatpush1.msra.mxu0 %v2029
        %2054 = vmatprep.subr.mxu0 0.0
        %2055 = vmatpush1.msra.mxu0 %v2028
        %2056 = vmatprep.subr.mxu0 0.0
        %2057 = vmatpush1.msra.mxu0 %v2027
        %2058 = vmatprep.subr.mxu0 0.0
        %2059 = vmatpush1.msra.mxu0 %v2026
        %2060 = vmatprep.subr.mxu0 0.0
        %2061 = vmatpush1.msra.mxu0 %v2025
        %2062 = vmatprep.subr.mxu0 0.0
        %2063 = vmatpush1.msra.mxu0 %v2024
        %2064 = vmatprep.subr.mxu0 0.0
        %2065 = vmatpush1.msra.mxu0 %v2023
        %2066 = vmatprep.subr.mxu0 0.0
        %2067 = vmatpush1.msra.mxu0 %v2022
        %2068 = vmatprep.subr.mxu0 0.0
        %2069 = vmatpush1.msra.mxu0 %v2021
        %2070 = vmatprep.subr.mxu0 0.0
        %2071 = vmatpush1.msra.mxu0 %v2020
        %2072 = vmatprep.subr.mxu0 0.0
        %2073 = vmatpush2.msra.mxu0 0.0
        %2074 = vmatprep.subr.mxu0 0.0
        %2075 = vmatpush2.msra.mxu0 0.0
        %2076 = vmatprep.subr.mxu0 0.0
        %2077 = vmatpush2.msra.mxu0 0.0
        %2078 = vmatprep.subr.mxu0 0.0
        %2079 = vmatpush2.msra.mxu0 0.0
        %2080 = vmatprep.subr.mxu0 0.0
        %2081 = vmatpush2.msra.mxu0 0.0
        %2082 = vmatprep.subr.mxu0 0.0
        %2083 = vmatpush2.msra.mxu0 0.0
        %2084 = vmatprep.subr.mxu0 0.0
        %2085 = vmatpush2.msra.mxu0 0.0
        %2086 = vmatprep.subr.mxu0 0.0
        %2087 = vmatpush2.msra.mxu0 0.0
        %2088 = vmatprep.subr.mxu0 0.0
        %2089 = vmatpush2.msra.mxu0 0.0
        %2090 = vmatprep.subr.mxu0 0.0
        %2091 = vmatpush2.msra.mxu0 0.0
        %2092 = vmatprep.subr.mxu0 0.0
        %2093 = vmatpush2.msra.mxu0 0.0
        %2094 = vmatprep.subr.mxu0 0.0
        %2095 = vmatpush2.msra.mxu0 0.0
        %2096 = vmatprep.subr.mxu0 0.0
        %2097 = vmatpush2.msra.mxu0 0.0
        %2098 = vmatprep.subr.mxu0 0.0
        %2099 = vmatpush2.msra.mxu0 0.0
        %2100 = vmatprep.subr.mxu0 0.0
        %2101 = vmatpush2.msra.mxu0 0.0
        %2102 = vmatprep.subr.mxu0 0.0
        %2103 = vmatpush2.msra.mxu0 0.0
        %2104 = vmatprep.mubr.f32.mxu0 0.0
        %2105 = vmatmul.mubr.f32.gmra.mxu0 %v2038
        %v2106 = vpop.f32.mrf.mxu0
        %v2107 = vadd.f32 0.0, %v2106
        %v2108 = vpop.f32.mrf.mxu0
        %2109 = vdwg.mxu0
        %v2110 = vadd.f32 %v2015, %v2107
        %v2111 = vld [vmem:[#allocation10 + $0x1435] sm:$0x1]
        %v2112 = vlaneseq
        %v2113 = vshrl.u32 %v2112, 7
        %v2114 = vsub.s32 0, %v2113
        %v2115 = vrot.slane %v2111, %v2114
        %v2116 = vadd.f32 %v2110, %v2115
        %v2117 = vmax.f32 %v2116, 0.0
        %v2118 = vld [vmem:[#allocation10 + $0x1437] sm:$0x1]
        %v2119 = vld [vmem:[#allocation10 + $0x7b0] sm:$0xff]
        %v2120 = vld [vmem:[#allocation10 + $0x7b8] sm:$0xff]
        %v2121 = vld [vmem:[#allocation10 + $0x7c0] sm:$0xff]
        %v2122 = vld [vmem:[#allocation10 + $0x7c8] sm:$0xff]
        %v2123 = vld [vmem:[#allocation10 + $0x7d0] sm:$0xff]
        %v2124 = vld [vmem:[#allocation10 + $0x7d8] sm:$0xff]
        %v2125 = vld [vmem:[#allocation10 + $0x7e0] sm:$0xff]
        %v2126 = vld [vmem:[#allocation10 + $0x7e8] sm:$0xff]
        %v2127 = vld [vmem:[#allocation10 + $0x7f0] sm:$0xff]
        %v2128 = vld [vmem:[#allocation10 + $0x7f8] sm:$0xff]
        %v2129 = vld [vmem:[#allocation10 + $0x800] sm:$0xff]
        %v2130 = vld [vmem:[#allocation10 + $0x808] sm:$0xff]
        %v2131 = vld [vmem:[#allocation10 + $0x810] sm:$0xff]
        %v2132 = vld [vmem:[#allocation10 + $0x818] sm:$0xff]
        %v2133 = vld [vmem:[#allocation10 + $0x820] sm:$0xff]
        %v2134 = vld [vmem:[#allocation10 + $0x828] sm:$0xff]
        %v2135 = vlaneseq
        %v2136 = vshrl.u32 %v2135, 7
        %v2137 = vsub.s32 0, %v2136
        %v2138 = vrot.slane %v2118, %v2137
        %2139 = vmatprep.subr.mxu0 0.0
        %2140 = vmatpush1.msra.mxu0 %v2134
        %2141 = vmatprep.subr.mxu0 0.0
        %2142 = vmatpush1.msra.mxu0 %v2133
        %2143 = vmatprep.subr.mxu0 0.0
        %2144 = vmatpush1.msra.mxu0 %v2132
        %2145 = vmatprep.subr.mxu0 0.0
        %2146 = vmatpush1.msra.mxu0 %v2131
        %2147 = vmatprep.subr.mxu0 0.0
        %2148 = vmatpush1.msra.mxu0 %v2130
        %2149 = vmatprep.subr.mxu0 0.0
        %2150 = vmatpush1.msra.mxu0 %v2129
        %2151 = vmatprep.subr.mxu0 0.0
        %2152 = vmatpush1.msra.mxu0 %v2128
        %2153 = vmatprep.subr.mxu0 0.0
        %2154 = vmatpush1.msra.mxu0 %v2127
        %2155 = vmatprep.subr.mxu0 0.0
        %2156 = vmatpush1.msra.mxu0 %v2126
        %2157 = vmatprep.subr.mxu0 0.0
        %2158 = vmatpush1.msra.mxu0 %v2125
        %2159 = vmatprep.subr.mxu0 0.0
        %2160 = vmatpush1.msra.mxu0 %v2124
        %2161 = vmatprep.subr.mxu0 0.0
        %2162 = vmatpush1.msra.mxu0 %v2123
        %2163 = vmatprep.subr.mxu0 0.0
        %2164 = vmatpush1.msra.mxu0 %v2122
        %2165 = vmatprep.subr.mxu0 0.0
        %2166 = vmatpush1.msra.mxu0 %v2121
        %2167 = vmatprep.subr.mxu0 0.0
        %2168 = vmatpush1.msra.mxu0 %v2120
        %2169 = vmatprep.subr.mxu0 0.0
        %2170 = vmatpush1.msra.mxu0 %v2119
        %2171 = vmatprep.subr.mxu0 0.0
        %2172 = vmatpush2.msra.mxu0 0.0
        %2173 = vmatprep.subr.mxu0 0.0
        %2174 = vmatpush2.msra.mxu0 0.0
        %2175 = vmatprep.subr.mxu0 0.0
        %2176 = vmatpush2.msra.mxu0 0.0
        %2177 = vmatprep.subr.mxu0 0.0
        %2178 = vmatpush2.msra.mxu0 0.0
        %2179 = vmatprep.subr.mxu0 0.0
        %2180 = vmatpush2.msra.mxu0 0.0
        %2181 = vmatprep.subr.mxu0 0.0
        %2182 = vmatpush2.msra.mxu0 0.0
        %2183 = vmatprep.subr.mxu0 0.0
        %2184 = vmatpush2.msra.mxu0 0.0
        %2185 = vmatprep.subr.mxu0 0.0
        %2186 = vmatpush2.msra.mxu0 0.0
        %2187 = vmatprep.subr.mxu0 0.0
        %2188 = vmatpush2.msra.mxu0 0.0
        %2189 = vmatprep.subr.mxu0 0.0
        %2190 = vmatpush2.msra.mxu0 0.0
        %2191 = vmatprep.subr.mxu0 0.0
        %2192 = vmatpush2.msra.mxu0 0.0
        %2193 = vmatprep.subr.mxu0 0.0
        %2194 = vmatpush2.msra.mxu0 0.0
        %2195 = vmatprep.subr.mxu0 0.0
        %2196 = vmatpush2.msra.mxu0 0.0
        %2197 = vmatprep.subr.mxu0 0.0
        %2198 = vmatpush2.msra.mxu0 0.0
        %2199 = vmatprep.subr.mxu0 0.0
        %2200 = vmatpush2.msra.mxu0 0.0
        %2201 = vmatprep.subr.mxu0 0.0
        %2202 = vmatpush2.msra.mxu0 0.0
        %2203 = vmatprep.mubr.f32.mxu0 0.0
        %2204 = vmatmul.mubr.f32.gmra.mxu0 %v2117
        %v2205 = vpop.f32.mrf.mxu0
        %v2206 = vadd.f32 %v2138, %v2205
        %v2207 = vpop.f32.mrf.mxu0
        %2208 = vdwg.mxu0
        %v2210 = vcombine.high %v2206, %v2206
        %2212 = vst [vmem:[#allocation3 + $0x1] sm:$0x1] %v2206
        %2213 = vst [vmem:[#allocation3 + $0x11] sm:$0x1] %v2210
        %2214 = vst [vmem:[#allocation3 + $0x2] sm:$0x2] %v2206
        %2215 = vst [vmem:[#allocation3 + $0x12] sm:$0x2] %v2210
        %2216 = vst [vmem:[#allocation3 + $0x3] sm:$0x4] %v2206
        %2217 = vst [vmem:[#allocation3 + $0x13] sm:$0x4] %v2210
        %2218 = vst [vmem:[#allocation3 + $0x4] sm:$0x8] %v2206
        %2219 = vst [vmem:[#allocation3 + $0x14] sm:$0x8] %v2210
        %v2220 = vld [vmem:[#allocation10 + $0x830] sm:$0xff]
        %v2221 = vld [vmem:[#allocation10 + $0x838] sm:$0xff]
        %v2222 = vld [vmem:[#allocation10 + $0x840] sm:$0xff]
        %v2223 = vld [vmem:[#allocation10 + $0x848] sm:$0xff]
        %v2224 = vld [vmem:[#allocation10 + $0x850] sm:$0xff]
        %v2225 = vld [vmem:[#allocation10 + $0x858] sm:$0xff]
        %v2226 = vld [vmem:[#allocation10 + $0x860] sm:$0xff]
        %v2227 = vld [vmem:[#allocation10 + $0x868] sm:$0xff]
        %v2228 = vld [vmem:[#allocation10 + $0x870] sm:$0xff]
        %v2229 = vld [vmem:[#allocation10 + $0x878] sm:$0xff]
        %v2230 = vld [vmem:[#allocation10 + $0x880] sm:$0xff]
        %v2231 = vld [vmem:[#allocation10 + $0x888] sm:$0xff]
        %v2232 = vld [vmem:[#allocation10 + $0x890] sm:$0xff]
        %v2233 = vld [vmem:[#allocation10 + $0x898] sm:$0xff]
        %v2234 = vld [vmem:[#allocation10 + $0x8a0] sm:$0xff]
        %v2235 = vld [vmem:[#allocation10 + $0x8a8] sm:$0xff]
        %2236 = vmatprep.subr.mxu0 0.0
        %2237 = vmatpush1.msra.mxu0 %v2235
        %2238 = vmatprep.subr.mxu0 0.0
        %2239 = vmatpush1.msra.mxu0 %v2234
        %2240 = vmatprep.subr.mxu0 0.0
        %2241 = vmatpush1.msra.mxu0 %v2233
        %2242 = vmatprep.subr.mxu0 0.0
        %2243 = vmatpush1.msra.mxu0 %v2232
        %2244 = vmatprep.subr.mxu0 0.0
        %2245 = vmatpush1.msra.mxu0 %v2231
        %2246 = vmatprep.subr.mxu0 0.0
        %2247 = vmatpush1.msra.mxu0 %v2230
        %2248 = vmatprep.subr.mxu0 0.0
        %2249 = vmatpush1.msra.mxu0 %v2229
        %2250 = vmatprep.subr.mxu0 0.0
        %2251 = vmatpush1.msra.mxu0 %v2228
        %2252 = vmatprep.subr.mxu0 0.0
        %2253 = vmatpush1.msra.mxu0 %v2227
        %2254 = vmatprep.subr.mxu0 0.0
        %2255 = vmatpush1.msra.mxu0 %v2226
        %2256 = vmatprep.subr.mxu0 0.0
        %2257 = vmatpush1.msra.mxu0 %v2225
        %2258 = vmatprep.subr.mxu0 0.0
        %2259 = vmatpush1.msra.mxu0 %v2224
        %2260 = vmatprep.subr.mxu0 0.0
        %2261 = vmatpush1.msra.mxu0 %v2223
        %2262 = vmatprep.subr.mxu0 0.0
        %2263 = vmatpush1.msra.mxu0 %v2222
        %2264 = vmatprep.subr.mxu0 0.0
        %2265 = vmatpush1.msra.mxu0 %v2221
        %2266 = vmatprep.subr.mxu0 0.0
        %2267 = vmatpush1.msra.mxu0 %v2220
        %2268 = vmatprep.subr.mxu0 0.0
        %2269 = vmatpush2.msra.mxu0 0.0
        %2270 = vmatprep.subr.mxu0 0.0
        %2271 = vmatpush2.msra.mxu0 0.0
        %2272 = vmatprep.subr.mxu0 0.0
        %2273 = vmatpush2.msra.mxu0 0.0
        %2274 = vmatprep.subr.mxu0 0.0
        %2275 = vmatpush2.msra.mxu0 0.0
        %2276 = vmatprep.subr.mxu0 0.0
        %2277 = vmatpush2.msra.mxu0 0.0
        %2278 = vmatprep.subr.mxu0 0.0
        %2279 = vmatpush2.msra.mxu0 0.0
        %2280 = vmatprep.subr.mxu0 0.0
        %2281 = vmatpush2.msra.mxu0 0.0
        %2282 = vmatprep.subr.mxu0 0.0
        %2283 = vmatpush2.msra.mxu0 0.0
        %2284 = vmatprep.subr.mxu0 0.0
        %2285 = vmatpush2.msra.mxu0 0.0
        %2286 = vmatprep.subr.mxu0 0.0
        %2287 = vmatpush2.msra.mxu0 0.0
        %2288 = vmatprep.subr.mxu0 0.0
        %2289 = vmatpush2.msra.mxu0 0.0
        %2290 = vmatprep.subr.mxu0 0.0
        %2291 = vmatpush2.msra.mxu0 0.0
        %2292 = vmatprep.subr.mxu0 0.0
        %2293 = vmatpush2.msra.mxu0 0.0
        %2294 = vmatprep.subr.mxu0 0.0
        %2295 = vmatpush2.msra.mxu0 0.0
        %2296 = vmatprep.subr.mxu0 0.0
        %2297 = vmatpush2.msra.mxu0 0.0
        %2298 = vmatprep.subr.mxu0 0.0
        %2299 = vmatpush2.msra.mxu0 0.0
        %2300 = vmatprep.mubr.f32.mxu0 0.0
        %2301 = vmatmul.mubr.f32.gmra.mxu0 %v2117
        %v2302 = vpop.f32.mrf.mxu0
        %v2303 = vadd.f32 %v2138, %v2302
        %v2304 = vpop.f32.mrf.mxu0
        %2305 = vdwg.mxu0
        %v2307 = vcombine.high %v2303, %v2303
        %2309 = vst [vmem:[#allocation3 + $0x2] sm:$0x1] %v2303
        %2310 = vst [vmem:[#allocation3 + $0x12] sm:$0x1] %v2307
        %2311 = vst [vmem:[#allocation3 + $0x3] sm:$0x2] %v2303
        %2312 = vst [vmem:[#allocation3 + $0x13] sm:$0x2] %v2307
        %2313 = vst [vmem:[#allocation3 + $0x4] sm:$0x4] %v2303
        %2314 = vst [vmem:[#allocation3 + $0x14] sm:$0x4] %v2307
        %2315 = vst [vmem:[#allocation3 + $0x5] sm:$0x8] %v2303
        %2316 = vst [vmem:[#allocation3 + $0x15] sm:$0x8] %v2307
        %v2317 = vld [vmem:[#allocation3] sm:$0xff]
        %v2318 = vld [vmem:[#allocation3 + $0x10] sm:$0xff]
        %v2319 = vld [vmem:[#allocation10 + $0x8b0] sm:$0xff]
        %v2320 = vld [vmem:[#allocation10 + $0x8b8] sm:$0xff]
        %v2321 = vld [vmem:[#allocation10 + $0x8c0] sm:$0xff]
        %v2322 = vld [vmem:[#allocation10 + $0x8c8] sm:$0xff]
        %v2323 = vld [vmem:[#allocation10 + $0x8d0] sm:$0xff]
        %v2324 = vld [vmem:[#allocation10 + $0x8d8] sm:$0xff]
        %v2325 = vld [vmem:[#allocation10 + $0x8e0] sm:$0xff]
        %v2326 = vld [vmem:[#allocation10 + $0x8e8] sm:$0xff]
        %v2327 = vld [vmem:[#allocation10 + $0x8f0] sm:$0xff]
        %v2328 = vld [vmem:[#allocation10 + $0x8f8] sm:$0xff]
        %v2329 = vld [vmem:[#allocation10 + $0x900] sm:$0xff]
        %v2330 = vld [vmem:[#allocation10 + $0x908] sm:$0xff]
        %v2331 = vld [vmem:[#allocation10 + $0x910] sm:$0xff]
        %v2332 = vld [vmem:[#allocation10 + $0x918] sm:$0xff]
        %v2333 = vld [vmem:[#allocation10 + $0x920] sm:$0xff]
        %v2334 = vld [vmem:[#allocation10 + $0x928] sm:$0xff]
        %v2335 = vld [vmem:[#allocation3 + $0x1] sm:$0xff]
        %v2336 = vld [vmem:[#allocation3 + $0x11] sm:$0xff]
        %v2337 = vld [vmem:[#allocation10 + $0x930] sm:$0xff]
        %v2338 = vld [vmem:[#allocation10 + $0x938] sm:$0xff]
        %v2339 = vld [vmem:[#allocation10 + $0x940] sm:$0xff]
        %v2340 = vld [vmem:[#allocation10 + $0x948] sm:$0xff]
        %v2341 = vld [vmem:[#allocation10 + $0x950] sm:$0xff]
        %v2342 = vld [vmem:[#allocation10 + $0x958] sm:$0xff]
        %v2343 = vld [vmem:[#allocation10 + $0x960] sm:$0xff]
        %v2344 = vld [vmem:[#allocation10 + $0x968] sm:$0xff]
        %v2345 = vld [vmem:[#allocation10 + $0x970] sm:$0xff]
        %v2346 = vld [vmem:[#allocation10 + $0x978] sm:$0xff]
        %v2347 = vld [vmem:[#allocation10 + $0x980] sm:$0xff]
        %v2348 = vld [vmem:[#allocation10 + $0x988] sm:$0xff]
        %v2349 = vld [vmem:[#allocation10 + $0x990] sm:$0xff]
        %v2350 = vld [vmem:[#allocation10 + $0x998] sm:$0xff]
        %v2351 = vld [vmem:[#allocation10 + $0x9a0] sm:$0xff]
        %v2352 = vld [vmem:[#allocation10 + $0x9a8] sm:$0xff]
        %2353 = vmatprep.subr.mxu0 0.0
        %2354 = vmatpush1.msra.mxu0 %v2352
        %2355 = vmatprep.subr.mxu0 0.0
        %2356 = vmatpush1.msra.mxu0 %v2351
        %2357 = vmatprep.subr.mxu0 0.0
        %2358 = vmatpush1.msra.mxu0 %v2350
        %2359 = vmatprep.subr.mxu0 0.0
        %2360 = vmatpush1.msra.mxu0 %v2349
        %2361 = vmatprep.subr.mxu0 0.0
        %2362 = vmatpush1.msra.mxu0 %v2348
        %2363 = vmatprep.subr.mxu0 0.0
        %2364 = vmatpush1.msra.mxu0 %v2347
        %2365 = vmatprep.subr.mxu0 0.0
        %2366 = vmatpush1.msra.mxu0 %v2346
        %2367 = vmatprep.subr.mxu0 0.0
        %2368 = vmatpush1.msra.mxu0 %v2345
        %2369 = vmatprep.subr.mxu0 0.0
        %2370 = vmatpush1.msra.mxu0 %v2344
        %2371 = vmatprep.subr.mxu0 0.0
        %2372 = vmatpush1.msra.mxu0 %v2343
        %2373 = vmatprep.subr.mxu0 0.0
        %2374 = vmatpush1.msra.mxu0 %v2342
        %2375 = vmatprep.subr.mxu0 0.0
        %2376 = vmatpush1.msra.mxu0 %v2341
        %2377 = vmatprep.subr.mxu0 0.0
        %2378 = vmatpush1.msra.mxu0 %v2340
        %2379 = vmatprep.subr.mxu0 0.0
        %2380 = vmatpush1.msra.mxu0 %v2339
        %2381 = vmatprep.subr.mxu0 0.0
        %2382 = vmatpush1.msra.mxu0 %v2338
        %2383 = vmatprep.subr.mxu0 0.0
        %2384 = vmatpush1.msra.mxu0 %v2337
        %2385 = vmatprep.subr.mxu0 0.0
        %2386 = vmatpush2.msra.mxu0 0.0
        %2387 = vmatprep.subr.mxu0 0.0
        %2388 = vmatpush2.msra.mxu0 0.0
        %2389 = vmatprep.subr.mxu0 0.0
        %2390 = vmatpush2.msra.mxu0 0.0
        %2391 = vmatprep.subr.mxu0 0.0
        %2392 = vmatpush2.msra.mxu0 0.0
        %2393 = vmatprep.subr.mxu0 0.0
        %2394 = vmatpush2.msra.mxu0 0.0
        %2395 = vmatprep.subr.mxu0 0.0
        %2396 = vmatpush2.msra.mxu0 0.0
        %2397 = vmatprep.subr.mxu0 0.0
        %2398 = vmatpush2.msra.mxu0 0.0
        %2399 = vmatprep.subr.mxu0 0.0
        %2400 = vmatpush2.msra.mxu0 0.0
        %2401 = vmatprep.subr.mxu0 0.0
        %2402 = vmatpush2.msra.mxu0 0.0
        %2403 = vmatprep.subr.mxu0 0.0
        %2404 = vmatpush2.msra.mxu0 0.0
        %2405 = vmatprep.subr.mxu0 0.0
        %2406 = vmatpush2.msra.mxu0 0.0
        %2407 = vmatprep.subr.mxu0 0.0
        %2408 = vmatpush2.msra.mxu0 0.0
        %2409 = vmatprep.subr.mxu0 0.0
        %2410 = vmatpush2.msra.mxu0 0.0
        %2411 = vmatprep.subr.mxu0 0.0
        %2412 = vmatpush2.msra.mxu0 0.0
        %2413 = vmatprep.subr.mxu0 0.0
        %2414 = vmatpush2.msra.mxu0 0.0
        %2415 = vmatprep.subr.mxu0 0.0
        %2416 = vmatpush2.msra.mxu0 0.0
        %2417 = vmatprep.mubr.f32.mxu0 0.0
        %2418 = vmatmul.mubr.f32.gmra.mxu0 %v2335
        %v2419 = vpop.f32.mrf.mxu0
        %v2420 = vadd.f32 0.0, %v2419
        %v2421 = vpop.f32.mrf.mxu0
        %2422 = vmatprep.mubr.f32.mxu0 0.0
        %2423 = vmatmul.mubr.f32.gmra.mxu0 %v2336
        %v2424 = vpop.f32.mrf.mxu0
        %v2425 = vadd.f32 0.0, %v2424
        %v2426 = vpop.f32.mrf.mxu0
        %2427 = vdwg.mxu0
        %2428 = vmatprep.subr.mxu0 0.0
        %2429 = vmatpush1.msra.mxu0 %v2334
        %2430 = vmatprep.subr.mxu0 0.0
        %2431 = vmatpush1.msra.mxu0 %v2333
        %2432 = vmatprep.subr.mxu0 0.0
        %2433 = vmatpush1.msra.mxu0 %v2332
        %2434 = vmatprep.subr.mxu0 0.0
        %2435 = vmatpush1.msra.mxu0 %v2331
        %2436 = vmatprep.subr.mxu0 0.0
        %2437 = vmatpush1.msra.mxu0 %v2330
        %2438 = vmatprep.subr.mxu0 0.0
        %2439 = vmatpush1.msra.mxu0 %v2329
        %2440 = vmatprep.subr.mxu0 0.0
        %2441 = vmatpush1.msra.mxu0 %v2328
        %2442 = vmatprep.subr.mxu0 0.0
        %2443 = vmatpush1.msra.mxu0 %v2327
        %2444 = vmatprep.subr.mxu0 0.0
        %2445 = vmatpush1.msra.mxu0 %v2326
        %2446 = vmatprep.subr.mxu0 0.0
        %2447 = vmatpush1.msra.mxu0 %v2325
        %2448 = vmatprep.subr.mxu0 0.0
        %2449 = vmatpush1.msra.mxu0 %v2324
        %2450 = vmatprep.subr.mxu0 0.0
        %2451 = vmatpush1.msra.mxu0 %v2323
        %2452 = vmatprep.subr.mxu0 0.0
        %2453 = vmatpush1.msra.mxu0 %v2322
        %2454 = vmatprep.subr.mxu0 0.0
        %2455 = vmatpush1.msra.mxu0 %v2321
        %2456 = vmatprep.subr.mxu0 0.0
        %2457 = vmatpush1.msra.mxu0 %v2320
        %2458 = vmatprep.subr.mxu0 0.0
        %2459 = vmatpush1.msra.mxu0 %v2319
        %2460 = vmatprep.subr.mxu0 0.0
        %2461 = vmatpush2.msra.mxu0 0.0
        %2462 = vmatprep.subr.mxu0 0.0
        %2463 = vmatpush2.msra.mxu0 0.0
        %2464 = vmatprep.subr.mxu0 0.0
        %2465 = vmatpush2.msra.mxu0 0.0
        %2466 = vmatprep.subr.mxu0 0.0
        %2467 = vmatpush2.msra.mxu0 0.0
        %2468 = vmatprep.subr.mxu0 0.0
        %2469 = vmatpush2.msra.mxu0 0.0
        %2470 = vmatprep.subr.mxu0 0.0
        %2471 = vmatpush2.msra.mxu0 0.0
        %2472 = vmatprep.subr.mxu0 0.0
        %2473 = vmatpush2.msra.mxu0 0.0
        %2474 = vmatprep.subr.mxu0 0.0
        %2475 = vmatpush2.msra.mxu0 0.0
        %2476 = vmatprep.subr.mxu0 0.0
        %2477 = vmatpush2.msra.mxu0 0.0
        %2478 = vmatprep.subr.mxu0 0.0
        %2479 = vmatpush2.msra.mxu0 0.0
        %2480 = vmatprep.subr.mxu0 0.0
        %2481 = vmatpush2.msra.mxu0 0.0
        %2482 = vmatprep.subr.mxu0 0.0
        %2483 = vmatpush2.msra.mxu0 0.0
        %2484 = vmatprep.subr.mxu0 0.0
        %2485 = vmatpush2.msra.mxu0 0.0
        %2486 = vmatprep.subr.mxu0 0.0
        %2487 = vmatpush2.msra.mxu0 0.0
        %2488 = vmatprep.subr.mxu0 0.0
        %2489 = vmatpush2.msra.mxu0 0.0
        %2490 = vmatprep.subr.mxu0 0.0
        %2491 = vmatpush2.msra.mxu0 0.0
        %2492 = vmatprep.mubr.f32.mxu0 0.0
        %2493 = vmatmul.mubr.f32.gmra.mxu0 %v2317
        %v2494 = vpop.f32.mrf.mxu0
        %v2495 = vadd.f32 %v2420, %v2494
        %v2496 = vpop.f32.mrf.mxu0
        %2497 = vmatprep.mubr.f32.mxu0 0.0
        %2498 = vmatmul.mubr.f32.gmra.mxu0 %v2318
        %v2499 = vpop.f32.mrf.mxu0
        %v2500 = vadd.f32 %v2425, %v2499
        %v2501 = vpop.f32.mrf.mxu0
        %2502 = vdwg.mxu0
        %v2503 = vld [vmem:[#allocation3 + $0x2] sm:$0xff]
        %v2504 = vld [vmem:[#allocation3 + $0x12] sm:$0xff]
        %v2505 = vld [vmem:[#allocation10 + $0x9b0] sm:$0xff]
        %v2506 = vld [vmem:[#allocation10 + $0x9b8] sm:$0xff]
        %v2507 = vld [vmem:[#allocation10 + $0x9c0] sm:$0xff]
        %v2508 = vld [vmem:[#allocation10 + $0x9c8] sm:$0xff]
        %v2509 = vld [vmem:[#allocation10 + $0x9d0] sm:$0xff]
        %v2510 = vld [vmem:[#allocation10 + $0x9d8] sm:$0xff]
        %v2511 = vld [vmem:[#allocation10 + $0x9e0] sm:$0xff]
        %v2512 = vld [vmem:[#allocation10 + $0x9e8] sm:$0xff]
        %v2513 = vld [vmem:[#allocation10 + $0x9f0] sm:$0xff]
        %v2514 = vld [vmem:[#allocation10 + $0x9f8] sm:$0xff]
        %v2515 = vld [vmem:[#allocation10 + $0xa00] sm:$0xff]
        %v2516 = vld [vmem:[#allocation10 + $0xa08] sm:$0xff]
        %v2517 = vld [vmem:[#allocation10 + $0xa10] sm:$0xff]
        %v2518 = vld [vmem:[#allocation10 + $0xa18] sm:$0xff]
        %v2519 = vld [vmem:[#allocation10 + $0xa20] sm:$0xff]
        %v2520 = vld [vmem:[#allocation10 + $0xa28] sm:$0xff]
        %2521 = vmatprep.subr.mxu0 0.0
        %2522 = vmatpush1.msra.mxu0 %v2520
        %2523 = vmatprep.subr.mxu0 0.0
        %2524 = vmatpush1.msra.mxu0 %v2519
        %2525 = vmatprep.subr.mxu0 0.0
        %2526 = vmatpush1.msra.mxu0 %v2518
        %2527 = vmatprep.subr.mxu0 0.0
        %2528 = vmatpush1.msra.mxu0 %v2517
        %2529 = vmatprep.subr.mxu0 0.0
        %2530 = vmatpush1.msra.mxu0 %v2516
        %2531 = vmatprep.subr.mxu0 0.0
        %2532 = vmatpush1.msra.mxu0 %v2515
        %2533 = vmatprep.subr.mxu0 0.0
        %2534 = vmatpush1.msra.mxu0 %v2514
        %2535 = vmatprep.subr.mxu0 0.0
        %2536 = vmatpush1.msra.mxu0 %v2513
        %2537 = vmatprep.subr.mxu0 0.0
        %2538 = vmatpush1.msra.mxu0 %v2512
        %2539 = vmatprep.subr.mxu0 0.0
        %2540 = vmatpush1.msra.mxu0 %v2511
        %2541 = vmatprep.subr.mxu0 0.0
        %2542 = vmatpush1.msra.mxu0 %v2510
        %2543 = vmatprep.subr.mxu0 0.0
        %2544 = vmatpush1.msra.mxu0 %v2509
        %2545 = vmatprep.subr.mxu0 0.0
        %2546 = vmatpush1.msra.mxu0 %v2508
        %2547 = vmatprep.subr.mxu0 0.0
        %2548 = vmatpush1.msra.mxu0 %v2507
        %2549 = vmatprep.subr.mxu0 0.0
        %2550 = vmatpush1.msra.mxu0 %v2506
        %2551 = vmatprep.subr.mxu0 0.0
        %2552 = vmatpush1.msra.mxu0 %v2505
        %2553 = vmatprep.subr.mxu0 0.0
        %2554 = vmatpush2.msra.mxu0 0.0
        %2555 = vmatprep.subr.mxu0 0.0
        %2556 = vmatpush2.msra.mxu0 0.0
        %2557 = vmatprep.subr.mxu0 0.0
        %2558 = vmatpush2.msra.mxu0 0.0
        %2559 = vmatprep.subr.mxu0 0.0
        %2560 = vmatpush2.msra.mxu0 0.0
        %2561 = vmatprep.subr.mxu0 0.0
        %2562 = vmatpush2.msra.mxu0 0.0
        %2563 = vmatprep.subr.mxu0 0.0
        %2564 = vmatpush2.msra.mxu0 0.0
        %2565 = vmatprep.subr.mxu0 0.0
        %2566 = vmatpush2.msra.mxu0 0.0
        %2567 = vmatprep.subr.mxu0 0.0
        %2568 = vmatpush2.msra.mxu0 0.0
        %2569 = vmatprep.subr.mxu0 0.0
        %2570 = vmatpush2.msra.mxu0 0.0
        %2571 = vmatprep.subr.mxu0 0.0
        %2572 = vmatpush2.msra.mxu0 0.0
        %2573 = vmatprep.subr.mxu0 0.0
        %2574 = vmatpush2.msra.mxu0 0.0
        %2575 = vmatprep.subr.mxu0 0.0
        %2576 = vmatpush2.msra.mxu0 0.0
        %2577 = vmatprep.subr.mxu0 0.0
        %2578 = vmatpush2.msra.mxu0 0.0
        %2579 = vmatprep.subr.mxu0 0.0
        %2580 = vmatpush2.msra.mxu0 0.0
        %2581 = vmatprep.subr.mxu0 0.0
        %2582 = vmatpush2.msra.mxu0 0.0
        %2583 = vmatprep.subr.mxu0 0.0
        %2584 = vmatpush2.msra.mxu0 0.0
        %2585 = vmatprep.mubr.f32.mxu0 0.0
        %2586 = vmatmul.mubr.f32.gmra.mxu0 %v2503
        %v2587 = vpop.f32.mrf.mxu0
        %v2588 = vadd.f32 0.0, %v2587
        %v2589 = vpop.f32.mrf.mxu0
        %2590 = vmatprep.mubr.f32.mxu0 0.0
        %2591 = vmatmul.mubr.f32.gmra.mxu0 %v2504
        %v2592 = vpop.f32.mrf.mxu0
        %v2593 = vadd.f32 0.0, %v2592
        %v2594 = vpop.f32.mrf.mxu0
        %2595 = vdwg.mxu0
        %v2596 = vadd.f32 %v2495, %v2588
        %v2597 = vadd.f32 %v2500, %v2593
        %v2598 = vld [vmem:[#allocation10 + $0x1436] sm:$0x1]
        %v2599 = vlaneseq
        %v2600 = vshrl.u32 %v2599, 7
        %v2601 = vsub.s32 0, %v2600
        %v2602 = vrot.slane %v2598, %v2601
        %v2603 = vadd.f32 %v2596, %v2602
        %v2604 = vadd.f32 %v2597, %v2602
        %v2605 = vld [vmem:[#allocation6] sm:$0xff]
        %v2606 = vld [vmem:[#allocation6 + $0x10] sm:$0xff]
        %v2607 = vld [vmem:[#allocation10 + $0xa30] sm:$0xff]
        %v2608 = vld [vmem:[#allocation10 + $0xa38] sm:$0xff]
        %v2609 = vld [vmem:[#allocation10 + $0xa40] sm:$0xff]
        %v2610 = vld [vmem:[#allocation10 + $0xa48] sm:$0xff]
        %v2611 = vld [vmem:[#allocation10 + $0xa50] sm:$0xff]
        %v2612 = vld [vmem:[#allocation10 + $0xa58] sm:$0xff]
        %v2613 = vld [vmem:[#allocation10 + $0xa60] sm:$0xff]
        %v2614 = vld [vmem:[#allocation10 + $0xa68] sm:$0xff]
        %v2615 = vld [vmem:[#allocation10 + $0xa70] sm:$0xff]
        %v2616 = vld [vmem:[#allocation10 + $0xa78] sm:$0xff]
        %v2617 = vld [vmem:[#allocation10 + $0xa80] sm:$0xff]
        %v2618 = vld [vmem:[#allocation10 + $0xa88] sm:$0xff]
        %v2619 = vld [vmem:[#allocation10 + $0xa90] sm:$0xff]
        %v2620 = vld [vmem:[#allocation10 + $0xa98] sm:$0xff]
        %v2621 = vld [vmem:[#allocation10 + $0xaa0] sm:$0xff]
        %v2622 = vld [vmem:[#allocation10 + $0xaa8] sm:$0xff]
        %v2623 = vld [vmem:[#allocation6 + $0x1] sm:$0xff]
        %v2624 = vld [vmem:[#allocation6 + $0x11] sm:$0xff]
        %v2625 = vld [vmem:[#allocation10 + $0xab0] sm:$0xff]
        %v2626 = vld [vmem:[#allocation10 + $0xab8] sm:$0xff]
        %v2627 = vld [vmem:[#allocation10 + $0xac0] sm:$0xff]
        %v2628 = vld [vmem:[#allocation10 + $0xac8] sm:$0xff]
        %v2629 = vld [vmem:[#allocation10 + $0xad0] sm:$0xff]
        %v2630 = vld [vmem:[#allocation10 + $0xad8] sm:$0xff]
        %v2631 = vld [vmem:[#allocation10 + $0xae0] sm:$0xff]
        %v2632 = vld [vmem:[#allocation10 + $0xae8] sm:$0xff]
        %v2633 = vld [vmem:[#allocation10 + $0xaf0] sm:$0xff]
        %v2634 = vld [vmem:[#allocation10 + $0xaf8] sm:$0xff]
        %v2635 = vld [vmem:[#allocation10 + $0xb00] sm:$0xff]
        %v2636 = vld [vmem:[#allocation10 + $0xb08] sm:$0xff]
        %v2637 = vld [vmem:[#allocation10 + $0xb10] sm:$0xff]
        %v2638 = vld [vmem:[#allocation10 + $0xb18] sm:$0xff]
        %v2639 = vld [vmem:[#allocation10 + $0xb20] sm:$0xff]
        %v2640 = vld [vmem:[#allocation10 + $0xb28] sm:$0xff]
        %2641 = vmatprep.subr.mxu0 0.0
        %2642 = vmatpush1.msra.mxu0 %v2640
        %2643 = vmatprep.subr.mxu0 0.0
        %2644 = vmatpush1.msra.mxu0 %v2639
        %2645 = vmatprep.subr.mxu0 0.0
        %2646 = vmatpush1.msra.mxu0 %v2638
        %2647 = vmatprep.subr.mxu0 0.0
        %2648 = vmatpush1.msra.mxu0 %v2637
        %2649 = vmatprep.subr.mxu0 0.0
        %2650 = vmatpush1.msra.mxu0 %v2636
        %2651 = vmatprep.subr.mxu0 0.0
        %2652 = vmatpush1.msra.mxu0 %v2635
        %2653 = vmatprep.subr.mxu0 0.0
        %2654 = vmatpush1.msra.mxu0 %v2634
        %2655 = vmatprep.subr.mxu0 0.0
        %2656 = vmatpush1.msra.mxu0 %v2633
        %2657 = vmatprep.subr.mxu0 0.0
        %2658 = vmatpush1.msra.mxu0 %v2632
        %2659 = vmatprep.subr.mxu0 0.0
        %2660 = vmatpush1.msra.mxu0 %v2631
        %2661 = vmatprep.subr.mxu0 0.0
        %2662 = vmatpush1.msra.mxu0 %v2630
        %2663 = vmatprep.subr.mxu0 0.0
        %2664 = vmatpush1.msra.mxu0 %v2629
        %2665 = vmatprep.subr.mxu0 0.0
        %2666 = vmatpush1.msra.mxu0 %v2628
        %2667 = vmatprep.subr.mxu0 0.0
        %2668 = vmatpush1.msra.mxu0 %v2627
        %2669 = vmatprep.subr.mxu0 0.0
        %2670 = vmatpush1.msra.mxu0 %v2626
        %2671 = vmatprep.subr.mxu0 0.0
        %2672 = vmatpush1.msra.mxu0 %v2625
        %2673 = vmatprep.subr.mxu0 0.0
        %2674 = vmatpush2.msra.mxu0 0.0
        %2675 = vmatprep.subr.mxu0 0.0
        %2676 = vmatpush2.msra.mxu0 0.0
        %2677 = vmatprep.subr.mxu0 0.0
        %2678 = vmatpush2.msra.mxu0 0.0
        %2679 = vmatprep.subr.mxu0 0.0
        %2680 = vmatpush2.msra.mxu0 0.0
        %2681 = vmatprep.subr.mxu0 0.0
        %2682 = vmatpush2.msra.mxu0 0.0
        %2683 = vmatprep.subr.mxu0 0.0
        %2684 = vmatpush2.msra.mxu0 0.0
        %2685 = vmatprep.subr.mxu0 0.0
        %2686 = vmatpush2.msra.mxu0 0.0
        %2687 = vmatprep.subr.mxu0 0.0
        %2688 = vmatpush2.msra.mxu0 0.0
        %2689 = vmatprep.subr.mxu0 0.0
        %2690 = vmatpush2.msra.mxu0 0.0
        %2691 = vmatprep.subr.mxu0 0.0
        %2692 = vmatpush2.msra.mxu0 0.0
        %2693 = vmatprep.subr.mxu0 0.0
        %2694 = vmatpush2.msra.mxu0 0.0
        %2695 = vmatprep.subr.mxu0 0.0
        %2696 = vmatpush2.msra.mxu0 0.0
        %2697 = vmatprep.subr.mxu0 0.0
        %2698 = vmatpush2.msra.mxu0 0.0
        %2699 = vmatprep.subr.mxu0 0.0
        %2700 = vmatpush2.msra.mxu0 0.0
        %2701 = vmatprep.subr.mxu0 0.0
        %2702 = vmatpush2.msra.mxu0 0.0
        %2703 = vmatprep.subr.mxu0 0.0
        %2704 = vmatpush2.msra.mxu0 0.0
        %2705 = vmatprep.mubr.f32.mxu0 0.0
        %2706 = vmatmul.mubr.f32.gmra.mxu0 %v2623
        %v2707 = vpop.f32.mrf.mxu0
        %v2708 = vadd.f32 0.0, %v2707
        %v2709 = vpop.f32.mrf.mxu0
        %2710 = vmatprep.mubr.f32.mxu0 0.0
        %2711 = vmatmul.mubr.f32.gmra.mxu0 %v2624
        %v2712 = vpop.f32.mrf.mxu0
        %v2713 = vadd.f32 0.0, %v2712
        %v2714 = vpop.f32.mrf.mxu0
        %2715 = vdwg.mxu0
        %2716 = vmatprep.subr.mxu0 0.0
        %2717 = vmatpush1.msra.mxu0 %v2622
        %2718 = vmatprep.subr.mxu0 0.0
        %2719 = vmatpush1.msra.mxu0 %v2621
        %2720 = vmatprep.subr.mxu0 0.0
        %2721 = vmatpush1.msra.mxu0 %v2620
        %2722 = vmatprep.subr.mxu0 0.0
        %2723 = vmatpush1.msra.mxu0 %v2619
        %2724 = vmatprep.subr.mxu0 0.0
        %2725 = vmatpush1.msra.mxu0 %v2618
        %2726 = vmatprep.subr.mxu0 0.0
        %2727 = vmatpush1.msra.mxu0 %v2617
        %2728 = vmatprep.subr.mxu0 0.0
        %2729 = vmatpush1.msra.mxu0 %v2616
        %2730 = vmatprep.subr.mxu0 0.0
        %2731 = vmatpush1.msra.mxu0 %v2615
        %2732 = vmatprep.subr.mxu0 0.0
        %2733 = vmatpush1.msra.mxu0 %v2614
        %2734 = vmatprep.subr.mxu0 0.0
        %2735 = vmatpush1.msra.mxu0 %v2613
        %2736 = vmatprep.subr.mxu0 0.0
        %2737 = vmatpush1.msra.mxu0 %v2612
        %2738 = vmatprep.subr.mxu0 0.0
        %2739 = vmatpush1.msra.mxu0 %v2611
        %2740 = vmatprep.subr.mxu0 0.0
        %2741 = vmatpush1.msra.mxu0 %v2610
        %2742 = vmatprep.subr.mxu0 0.0
        %2743 = vmatpush1.msra.mxu0 %v2609
        %2744 = vmatprep.subr.mxu0 0.0
        %2745 = vmatpush1.msra.mxu0 %v2608
        %2746 = vmatprep.subr.mxu0 0.0
        %2747 = vmatpush1.msra.mxu0 %v2607
        %2748 = vmatprep.subr.mxu0 0.0
        %2749 = vmatpush2.msra.mxu0 0.0
        %2750 = vmatprep.subr.mxu0 0.0
        %2751 = vmatpush2.msra.mxu0 0.0
        %2752 = vmatprep.subr.mxu0 0.0
        %2753 = vmatpush2.msra.mxu0 0.0
        %2754 = vmatprep.subr.mxu0 0.0
        %2755 = vmatpush2.msra.mxu0 0.0
        %2756 = vmatprep.subr.mxu0 0.0
        %2757 = vmatpush2.msra.mxu0 0.0
        %2758 = vmatprep.subr.mxu0 0.0
        %2759 = vmatpush2.msra.mxu0 0.0
        %2760 = vmatprep.subr.mxu0 0.0
        %2761 = vmatpush2.msra.mxu0 0.0
        %2762 = vmatprep.subr.mxu0 0.0
        %2763 = vmatpush2.msra.mxu0 0.0
        %2764 = vmatprep.subr.mxu0 0.0
        %2765 = vmatpush2.msra.mxu0 0.0
        %2766 = vmatprep.subr.mxu0 0.0
        %2767 = vmatpush2.msra.mxu0 0.0
        %2768 = vmatprep.subr.mxu0 0.0
        %2769 = vmatpush2.msra.mxu0 0.0
        %2770 = vmatprep.subr.mxu0 0.0
        %2771 = vmatpush2.msra.mxu0 0.0
        %2772 = vmatprep.subr.mxu0 0.0
        %2773 = vmatpush2.msra.mxu0 0.0
        %2774 = vmatprep.subr.mxu0 0.0
        %2775 = vmatpush2.msra.mxu0 0.0
        %2776 = vmatprep.subr.mxu0 0.0
        %2777 = vmatpush2.msra.mxu0 0.0
        %2778 = vmatprep.subr.mxu0 0.0
        %2779 = vmatpush2.msra.mxu0 0.0
        %2780 = vmatprep.mubr.f32.mxu0 0.0
        %2781 = vmatmul.mubr.f32.gmra.mxu0 %v2605
        %v2782 = vpop.f32.mrf.mxu0
        %v2783 = vadd.f32 %v2708, %v2782
        %v2784 = vpop.f32.mrf.mxu0
        %2785 = vmatprep.mubr.f32.mxu0 0.0
        %2786 = vmatmul.mubr.f32.gmra.mxu0 %v2606
        %v2787 = vpop.f32.mrf.mxu0
        %v2788 = vadd.f32 %v2713, %v2787
        %v2789 = vpop.f32.mrf.mxu0
        %2790 = vdwg.mxu0
        %v2791 = vld [vmem:[#allocation6 + $0x2] sm:$0xff]
        %v2792 = vld [vmem:[#allocation6 + $0x12] sm:$0xff]
        %v2793 = vld [vmem:[#allocation10 + $0xb30] sm:$0xff]
        %v2794 = vld [vmem:[#allocation10 + $0xb38] sm:$0xff]
        %v2795 = vld [vmem:[#allocation10 + $0xb40] sm:$0xff]
        %v2796 = vld [vmem:[#allocation10 + $0xb48] sm:$0xff]
        %v2797 = vld [vmem:[#allocation10 + $0xb50] sm:$0xff]
        %v2798 = vld [vmem:[#allocation10 + $0xb58] sm:$0xff]
        %v2799 = vld [vmem:[#allocation10 + $0xb60] sm:$0xff]
        %v2800 = vld [vmem:[#allocation10 + $0xb68] sm:$0xff]
        %v2801 = vld [vmem:[#allocation10 + $0xb70] sm:$0xff]
        %v2802 = vld [vmem:[#allocation10 + $0xb78] sm:$0xff]
        %v2803 = vld [vmem:[#allocation10 + $0xb80] sm:$0xff]
        %v2804 = vld [vmem:[#allocation10 + $0xb88] sm:$0xff]
        %v2805 = vld [vmem:[#allocation10 + $0xb90] sm:$0xff]
        %v2806 = vld [vmem:[#allocation10 + $0xb98] sm:$0xff]
        %v2807 = vld [vmem:[#allocation10 + $0xba0] sm:$0xff]
        %v2808 = vld [vmem:[#allocation10 + $0xba8] sm:$0xff]
        %2809 = vmatprep.subr.mxu0 0.0
        %2810 = vmatpush1.msra.mxu0 %v2808
        %2811 = vmatprep.subr.mxu0 0.0
        %2812 = vmatpush1.msra.mxu0 %v2807
        %2813 = vmatprep.subr.mxu0 0.0
        %2814 = vmatpush1.msra.mxu0 %v2806
        %2815 = vmatprep.subr.mxu0 0.0
        %2816 = vmatpush1.msra.mxu0 %v2805
        %2817 = vmatprep.subr.mxu0 0.0
        %2818 = vmatpush1.msra.mxu0 %v2804
        %2819 = vmatprep.subr.mxu0 0.0
        %2820 = vmatpush1.msra.mxu0 %v2803
        %2821 = vmatprep.subr.mxu0 0.0
        %2822 = vmatpush1.msra.mxu0 %v2802
        %2823 = vmatprep.subr.mxu0 0.0
        %2824 = vmatpush1.msra.mxu0 %v2801
        %2825 = vmatprep.subr.mxu0 0.0
        %2826 = vmatpush1.msra.mxu0 %v2800
        %2827 = vmatprep.subr.mxu0 0.0
        %2828 = vmatpush1.msra.mxu0 %v2799
        %2829 = vmatprep.subr.mxu0 0.0
        %2830 = vmatpush1.msra.mxu0 %v2798
        %2831 = vmatprep.subr.mxu0 0.0
        %2832 = vmatpush1.msra.mxu0 %v2797
        %2833 = vmatprep.subr.mxu0 0.0
        %2834 = vmatpush1.msra.mxu0 %v2796
        %2835 = vmatprep.subr.mxu0 0.0
        %2836 = vmatpush1.msra.mxu0 %v2795
        %2837 = vmatprep.subr.mxu0 0.0
        %2838 = vmatpush1.msra.mxu0 %v2794
        %2839 = vmatprep.subr.mxu0 0.0
        %2840 = vmatpush1.msra.mxu0 %v2793
        %2841 = vmatprep.subr.mxu0 0.0
        %2842 = vmatpush2.msra.mxu0 0.0
        %2843 = vmatprep.subr.mxu0 0.0
        %2844 = vmatpush2.msra.mxu0 0.0
        %2845 = vmatprep.subr.mxu0 0.0
        %2846 = vmatpush2.msra.mxu0 0.0
        %2847 = vmatprep.subr.mxu0 0.0
        %2848 = vmatpush2.msra.mxu0 0.0
        %2849 = vmatprep.subr.mxu0 0.0
        %2850 = vmatpush2.msra.mxu0 0.0
        %2851 = vmatprep.subr.mxu0 0.0
        %2852 = vmatpush2.msra.mxu0 0.0
        %2853 = vmatprep.subr.mxu0 0.0
        %2854 = vmatpush2.msra.mxu0 0.0
        %2855 = vmatprep.subr.mxu0 0.0
        %2856 = vmatpush2.msra.mxu0 0.0
        %2857 = vmatprep.subr.mxu0 0.0
        %2858 = vmatpush2.msra.mxu0 0.0
        %2859 = vmatprep.subr.mxu0 0.0
        %2860 = vmatpush2.msra.mxu0 0.0
        %2861 = vmatprep.subr.mxu0 0.0
        %2862 = vmatpush2.msra.mxu0 0.0
        %2863 = vmatprep.subr.mxu0 0.0
        %2864 = vmatpush2.msra.mxu0 0.0
        %2865 = vmatprep.subr.mxu0 0.0
        %2866 = vmatpush2.msra.mxu0 0.0
        %2867 = vmatprep.subr.mxu0 0.0
        %2868 = vmatpush2.msra.mxu0 0.0
        %2869 = vmatprep.subr.mxu0 0.0
        %2870 = vmatpush2.msra.mxu0 0.0
        %2871 = vmatprep.subr.mxu0 0.0
        %2872 = vmatpush2.msra.mxu0 0.0
        %2873 = vmatprep.mubr.f32.mxu0 0.0
        %2874 = vmatmul.mubr.f32.gmra.mxu0 %v2791
        %v2875 = vpop.f32.mrf.mxu0
        %v2876 = vadd.f32 0.0, %v2875
        %v2877 = vpop.f32.mrf.mxu0
        %2878 = vmatprep.mubr.f32.mxu0 0.0
        %2879 = vmatmul.mubr.f32.gmra.mxu0 %v2792
        %v2880 = vpop.f32.mrf.mxu0
        %v2881 = vadd.f32 0.0, %v2880
        %v2882 = vpop.f32.mrf.mxu0
        %2883 = vdwg.mxu0
        %v2884 = vadd.f32 %v2783, %v2876
        %v2885 = vadd.f32 %v2788, %v2881
        %v2886 = vadd.f32 %v2603, %v2884
        %v2887 = vadd.f32 %v2604, %v2885
        %v2888 = vmax.f32 %v2886, 0.0
        %v2889 = vmax.f32 %v2887, 0.0
        %2890 = vst [vmem:[#allocation3 + $0x1] sm:$0xff] %v2888
        %2891 = vst [vmem:[#allocation3 + $0x11] sm:$0xff] %v2889
        %v2892 = vld [vmem:[#allocation3] sm:$0xff]
        %v2893 = vld [vmem:[#allocation3 + $0x10] sm:$0xff]
        %v2894 = vld [vmem:[#allocation10 + $0xbb0] sm:$0xff]
        %v2895 = vld [vmem:[#allocation10 + $0xbb8] sm:$0xff]
        %v2896 = vld [vmem:[#allocation10 + $0xbc0] sm:$0xff]
        %v2897 = vld [vmem:[#allocation10 + $0xbc8] sm:$0xff]
        %v2898 = vld [vmem:[#allocation10 + $0xbd0] sm:$0xff]
        %v2899 = vld [vmem:[#allocation10 + $0xbd8] sm:$0xff]
        %v2900 = vld [vmem:[#allocation10 + $0xbe0] sm:$0xff]
        %v2901 = vld [vmem:[#allocation10 + $0xbe8] sm:$0xff]
        %v2902 = vld [vmem:[#allocation10 + $0xbf0] sm:$0xff]
        %v2903 = vld [vmem:[#allocation10 + $0xbf8] sm:$0xff]
        %v2904 = vld [vmem:[#allocation10 + $0xc00] sm:$0xff]
        %v2905 = vld [vmem:[#allocation10 + $0xc08] sm:$0xff]
        %v2906 = vld [vmem:[#allocation10 + $0xc10] sm:$0xff]
        %v2907 = vld [vmem:[#allocation10 + $0xc18] sm:$0xff]
        %v2908 = vld [vmem:[#allocation10 + $0xc20] sm:$0xff]
        %v2909 = vld [vmem:[#allocation10 + $0xc28] sm:$0xff]
        %v2910 = vld [vmem:[#allocation3 + $0x1] sm:$0xff]
        %v2911 = vld [vmem:[#allocation3 + $0x11] sm:$0xff]
        %v2912 = vld [vmem:[#allocation10 + $0xc30] sm:$0xff]
        %v2913 = vld [vmem:[#allocation10 + $0xc38] sm:$0xff]
        %v2914 = vld [vmem:[#allocation10 + $0xc40] sm:$0xff]
        %v2915 = vld [vmem:[#allocation10 + $0xc48] sm:$0xff]
        %v2916 = vld [vmem:[#allocation10 + $0xc50] sm:$0xff]
        %v2917 = vld [vmem:[#allocation10 + $0xc58] sm:$0xff]
        %v2918 = vld [vmem:[#allocation10 + $0xc60] sm:$0xff]
        %v2919 = vld [vmem:[#allocation10 + $0xc68] sm:$0xff]
        %v2920 = vld [vmem:[#allocation10 + $0xc70] sm:$0xff]
        %v2921 = vld [vmem:[#allocation10 + $0xc78] sm:$0xff]
        %v2922 = vld [vmem:[#allocation10 + $0xc80] sm:$0xff]
        %v2923 = vld [vmem:[#allocation10 + $0xc88] sm:$0xff]
        %v2924 = vld [vmem:[#allocation10 + $0xc90] sm:$0xff]
        %v2925 = vld [vmem:[#allocation10 + $0xc98] sm:$0xff]
        %v2926 = vld [vmem:[#allocation10 + $0xca0] sm:$0xff]
        %v2927 = vld [vmem:[#allocation10 + $0xca8] sm:$0xff]
        %2928 = vmatprep.subr.mxu0 0.0
        %2929 = vmatpush1.msra.mxu0 %v2927
        %2930 = vmatprep.subr.mxu0 0.0
        %2931 = vmatpush1.msra.mxu0 %v2926
        %2932 = vmatprep.subr.mxu0 0.0
        %2933 = vmatpush1.msra.mxu0 %v2925
        %2934 = vmatprep.subr.mxu0 0.0
        %2935 = vmatpush1.msra.mxu0 %v2924
        %2936 = vmatprep.subr.mxu0 0.0
        %2937 = vmatpush1.msra.mxu0 %v2923
        %2938 = vmatprep.subr.mxu0 0.0
        %2939 = vmatpush1.msra.mxu0 %v2922
        %2940 = vmatprep.subr.mxu0 0.0
        %2941 = vmatpush1.msra.mxu0 %v2921
        %2942 = vmatprep.subr.mxu0 0.0
        %2943 = vmatpush1.msra.mxu0 %v2920
        %2944 = vmatprep.subr.mxu0 0.0
        %2945 = vmatpush1.msra.mxu0 %v2919
        %2946 = vmatprep.subr.mxu0 0.0
        %2947 = vmatpush1.msra.mxu0 %v2918
        %2948 = vmatprep.subr.mxu0 0.0
        %2949 = vmatpush1.msra.mxu0 %v2917
        %2950 = vmatprep.subr.mxu0 0.0
        %2951 = vmatpush1.msra.mxu0 %v2916
        %2952 = vmatprep.subr.mxu0 0.0
        %2953 = vmatpush1.msra.mxu0 %v2915
        %2954 = vmatprep.subr.mxu0 0.0
        %2955 = vmatpush1.msra.mxu0 %v2914
        %2956 = vmatprep.subr.mxu0 0.0
        %2957 = vmatpush1.msra.mxu0 %v2913
        %2958 = vmatprep.subr.mxu0 0.0
        %2959 = vmatpush1.msra.mxu0 %v2912
        %2960 = vmatprep.subr.mxu0 0.0
        %2961 = vmatpush2.msra.mxu0 0.0
        %2962 = vmatprep.subr.mxu0 0.0
        %2963 = vmatpush2.msra.mxu0 0.0
        %2964 = vmatprep.subr.mxu0 0.0
        %2965 = vmatpush2.msra.mxu0 0.0
        %2966 = vmatprep.subr.mxu0 0.0
        %2967 = vmatpush2.msra.mxu0 0.0
        %2968 = vmatprep.subr.mxu0 0.0
        %2969 = vmatpush2.msra.mxu0 0.0
        %2970 = vmatprep.subr.mxu0 0.0
        %2971 = vmatpush2.msra.mxu0 0.0
        %2972 = vmatprep.subr.mxu0 0.0
        %2973 = vmatpush2.msra.mxu0 0.0
        %2974 = vmatprep.subr.mxu0 0.0
        %2975 = vmatpush2.msra.mxu0 0.0
        %2976 = vmatprep.subr.mxu0 0.0
        %2977 = vmatpush2.msra.mxu0 0.0
        %2978 = vmatprep.subr.mxu0 0.0
        %2979 = vmatpush2.msra.mxu0 0.0
        %2980 = vmatprep.subr.mxu0 0.0
        %2981 = vmatpush2.msra.mxu0 0.0
        %2982 = vmatprep.subr.mxu0 0.0
        %2983 = vmatpush2.msra.mxu0 0.0
        %2984 = vmatprep.subr.mxu0 0.0
        %2985 = vmatpush2.msra.mxu0 0.0
        %2986 = vmatprep.subr.mxu0 0.0
        %2987 = vmatpush2.msra.mxu0 0.0
        %2988 = vmatprep.subr.mxu0 0.0
        %2989 = vmatpush2.msra.mxu0 0.0
        %2990 = vmatprep.subr.mxu0 0.0
        %2991 = vmatpush2.msra.mxu0 0.0
        %2992 = vmatprep.mubr.f32.mxu0 0.0
        %2993 = vmatmul.mubr.f32.gmra.mxu0 %v2910
        %v2994 = vpop.f32.mrf.mxu0
        %v2995 = vadd.f32 0.0, %v2994
        %v2996 = vpop.f32.mrf.mxu0
        %2997 = vmatprep.mubr.f32.mxu0 0.0
        %2998 = vmatmul.mubr.f32.gmra.mxu0 %v2911
        %v2999 = vpop.f32.mrf.mxu0
        %v3000 = vadd.f32 0.0, %v2999
        %v3001 = vpop.f32.mrf.mxu0
        %3002 = vdwg.mxu0
        %3003 = vmatprep.subr.mxu0 0.0
        %3004 = vmatpush1.msra.mxu0 %v2909
        %3005 = vmatprep.subr.mxu0 0.0
        %3006 = vmatpush1.msra.mxu0 %v2908
        %3007 = vmatprep.subr.mxu0 0.0
        %3008 = vmatpush1.msra.mxu0 %v2907
        %3009 = vmatprep.subr.mxu0 0.0
        %3010 = vmatpush1.msra.mxu0 %v2906
        %3011 = vmatprep.subr.mxu0 0.0
        %3012 = vmatpush1.msra.mxu0 %v2905
        %3013 = vmatprep.subr.mxu0 0.0
        %3014 = vmatpush1.msra.mxu0 %v2904
        %3015 = vmatprep.subr.mxu0 0.0
        %3016 = vmatpush1.msra.mxu0 %v2903
        %3017 = vmatprep.subr.mxu0 0.0
        %3018 = vmatpush1.msra.mxu0 %v2902
        %3019 = vmatprep.subr.mxu0 0.0
        %3020 = vmatpush1.msra.mxu0 %v2901
        %3021 = vmatprep.subr.mxu0 0.0
        %3022 = vmatpush1.msra.mxu0 %v2900
        %3023 = vmatprep.subr.mxu0 0.0
        %3024 = vmatpush1.msra.mxu0 %v2899
        %3025 = vmatprep.subr.mxu0 0.0
        %3026 = vmatpush1.msra.mxu0 %v2898
        %3027 = vmatprep.subr.mxu0 0.0
        %3028 = vmatpush1.msra.mxu0 %v2897
        %3029 = vmatprep.subr.mxu0 0.0
        %3030 = vmatpush1.msra.mxu0 %v2896
        %3031 = vmatprep.subr.mxu0 0.0
        %3032 = vmatpush1.msra.mxu0 %v2895
        %3033 = vmatprep.subr.mxu0 0.0
        %3034 = vmatpush1.msra.mxu0 %v2894
        %3035 = vmatprep.subr.mxu0 0.0
        %3036 = vmatpush2.msra.mxu0 0.0
        %3037 = vmatprep.subr.mxu0 0.0
        %3038 = vmatpush2.msra.mxu0 0.0
        %3039 = vmatprep.subr.mxu0 0.0
        %3040 = vmatpush2.msra.mxu0 0.0
        %3041 = vmatprep.subr.mxu0 0.0
        %3042 = vmatpush2.msra.mxu0 0.0
        %3043 = vmatprep.subr.mxu0 0.0
        %3044 = vmatpush2.msra.mxu0 0.0
        %3045 = vmatprep.subr.mxu0 0.0
        %3046 = vmatpush2.msra.mxu0 0.0
        %3047 = vmatprep.subr.mxu0 0.0
        %3048 = vmatpush2.msra.mxu0 0.0
        %3049 = vmatprep.subr.mxu0 0.0
        %3050 = vmatpush2.msra.mxu0 0.0
        %3051 = vmatprep.subr.mxu0 0.0
        %3052 = vmatpush2.msra.mxu0 0.0
        %3053 = vmatprep.subr.mxu0 0.0
        %3054 = vmatpush2.msra.mxu0 0.0
        %3055 = vmatprep.subr.mxu0 0.0
        %3056 = vmatpush2.msra.mxu0 0.0
        %3057 = vmatprep.subr.mxu0 0.0
        %3058 = vmatpush2.msra.mxu0 0.0
        %3059 = vmatprep.subr.mxu0 0.0
        %3060 = vmatpush2.msra.mxu0 0.0
        %3061 = vmatprep.subr.mxu0 0.0
        %3062 = vmatpush2.msra.mxu0 0.0
        %3063 = vmatprep.subr.mxu0 0.0
        %3064 = vmatpush2.msra.mxu0 0.0
        %3065 = vmatprep.subr.mxu0 0.0
        %3066 = vmatpush2.msra.mxu0 0.0
        %3067 = vmatprep.mubr.f32.mxu0 0.0
        %3068 = vmatmul.mubr.f32.gmra.mxu0 %v2892
        %v3069 = vpop.f32.mrf.mxu0
        %v3070 = vadd.f32 %v2995, %v3069
        %v3071 = vpop.f32.mrf.mxu0
        %3072 = vmatprep.mubr.f32.mxu0 0.0
        %3073 = vmatmul.mubr.f32.gmra.mxu0 %v2893
        %v3074 = vpop.f32.mrf.mxu0
        %v3075 = vadd.f32 %v3000, %v3074
        %v3076 = vpop.f32.mrf.mxu0
        %3077 = vdwg.mxu0
        %v3078 = vld [vmem:[#allocation3 + $0x2] sm:$0xff]
        %v3079 = vld [vmem:[#allocation3 + $0x12] sm:$0xff]
        %v3080 = vld [vmem:[#allocation10 + $0xcb0] sm:$0xff]
        %v3081 = vld [vmem:[#allocation10 + $0xcb8] sm:$0xff]
        %v3082 = vld [vmem:[#allocation10 + $0xcc0] sm:$0xff]
        %v3083 = vld [vmem:[#allocation10 + $0xcc8] sm:$0xff]
        %v3084 = vld [vmem:[#allocation10 + $0xcd0] sm:$0xff]
        %v3085 = vld [vmem:[#allocation10 + $0xcd8] sm:$0xff]
        %v3086 = vld [vmem:[#allocation10 + $0xce0] sm:$0xff]
        %v3087 = vld [vmem:[#allocation10 + $0xce8] sm:$0xff]
        %v3088 = vld [vmem:[#allocation10 + $0xcf0] sm:$0xff]
        %v3089 = vld [vmem:[#allocation10 + $0xcf8] sm:$0xff]
        %v3090 = vld [vmem:[#allocation10 + $0xd00] sm:$0xff]
        %v3091 = vld [vmem:[#allocation10 + $0xd08] sm:$0xff]
        %v3092 = vld [vmem:[#allocation10 + $0xd10] sm:$0xff]
        %v3093 = vld [vmem:[#allocation10 + $0xd18] sm:$0xff]
        %v3094 = vld [vmem:[#allocation10 + $0xd20] sm:$0xff]
        %v3095 = vld [vmem:[#allocation10 + $0xd28] sm:$0xff]
        %3096 = vmatprep.subr.mxu0 0.0
        %3097 = vmatpush1.msra.mxu0 %v3095
        %3098 = vmatprep.subr.mxu0 0.0
        %3099 = vmatpush1.msra.mxu0 %v3094
        %3100 = vmatprep.subr.mxu0 0.0
        %3101 = vmatpush1.msra.mxu0 %v3093
        %3102 = vmatprep.subr.mxu0 0.0
        %3103 = vmatpush1.msra.mxu0 %v3092
        %3104 = vmatprep.subr.mxu0 0.0
        %3105 = vmatpush1.msra.mxu0 %v3091
        %3106 = vmatprep.subr.mxu0 0.0
        %3107 = vmatpush1.msra.mxu0 %v3090
        %3108 = vmatprep.subr.mxu0 0.0
        %3109 = vmatpush1.msra.mxu0 %v3089
        %3110 = vmatprep.subr.mxu0 0.0
        %3111 = vmatpush1.msra.mxu0 %v3088
        %3112 = vmatprep.subr.mxu0 0.0
        %3113 = vmatpush1.msra.mxu0 %v3087
        %3114 = vmatprep.subr.mxu0 0.0
        %3115 = vmatpush1.msra.mxu0 %v3086
        %3116 = vmatprep.subr.mxu0 0.0
        %3117 = vmatpush1.msra.mxu0 %v3085
        %3118 = vmatprep.subr.mxu0 0.0
        %3119 = vmatpush1.msra.mxu0 %v3084
        %3120 = vmatprep.subr.mxu0 0.0
        %3121 = vmatpush1.msra.mxu0 %v3083
        %3122 = vmatprep.subr.mxu0 0.0
        %3123 = vmatpush1.msra.mxu0 %v3082
        %3124 = vmatprep.subr.mxu0 0.0
        %3125 = vmatpush1.msra.mxu0 %v3081
        %3126 = vmatprep.subr.mxu0 0.0
        %3127 = vmatpush1.msra.mxu0 %v3080
        %3128 = vmatprep.subr.mxu0 0.0
        %3129 = vmatpush2.msra.mxu0 0.0
        %3130 = vmatprep.subr.mxu0 0.0
        %3131 = vmatpush2.msra.mxu0 0.0
        %3132 = vmatprep.subr.mxu0 0.0
        %3133 = vmatpush2.msra.mxu0 0.0
        %3134 = vmatprep.subr.mxu0 0.0
        %3135 = vmatpush2.msra.mxu0 0.0
        %3136 = vmatprep.subr.mxu0 0.0
        %3137 = vmatpush2.msra.mxu0 0.0
        %3138 = vmatprep.subr.mxu0 0.0
        %3139 = vmatpush2.msra.mxu0 0.0
        %3140 = vmatprep.subr.mxu0 0.0
        %3141 = vmatpush2.msra.mxu0 0.0
        %3142 = vmatprep.subr.mxu0 0.0
        %3143 = vmatpush2.msra.mxu0 0.0
        %3144 = vmatprep.subr.mxu0 0.0
        %3145 = vmatpush2.msra.mxu0 0.0
        %3146 = vmatprep.subr.mxu0 0.0
        %3147 = vmatpush2.msra.mxu0 0.0
        %3148 = vmatprep.subr.mxu0 0.0
        %3149 = vmatpush2.msra.mxu0 0.0
        %3150 = vmatprep.subr.mxu0 0.0
        %3151 = vmatpush2.msra.mxu0 0.0
        %3152 = vmatprep.subr.mxu0 0.0
        %3153 = vmatpush2.msra.mxu0 0.0
        %3154 = vmatprep.subr.mxu0 0.0
        %3155 = vmatpush2.msra.mxu0 0.0
        %3156 = vmatprep.subr.mxu0 0.0
        %3157 = vmatpush2.msra.mxu0 0.0
        %3158 = vmatprep.subr.mxu0 0.0
        %3159 = vmatpush2.msra.mxu0 0.0
        %3160 = vmatprep.mubr.f32.mxu0 0.0
        %3161 = vmatmul.mubr.f32.gmra.mxu0 %v3078
        %v3162 = vpop.f32.mrf.mxu0
        %v3163 = vadd.f32 0.0, %v3162
        %v3164 = vpop.f32.mrf.mxu0
        %3165 = vmatprep.mubr.f32.mxu0 0.0
        %3166 = vmatmul.mubr.f32.gmra.mxu0 %v3079
        %v3167 = vpop.f32.mrf.mxu0
        %v3168 = vadd.f32 0.0, %v3167
        %v3169 = vpop.f32.mrf.mxu0
        %3170 = vdwg.mxu0
        %v3171 = vadd.f32 %v3070, %v3163
        %v3172 = vadd.f32 %v3075, %v3168
        %v3173 = vld [vmem:[#allocation10 + $0x1438] sm:$0x1]
        %v3174 = vlaneseq
        %v3175 = vshrl.u32 %v3174, 7
        %v3176 = vsub.s32 0, %v3175
        %v3177 = vrot.slane %v3173, %v3176
        %v3178 = vadd.f32 %v3171, %v3177
        %v3179 = vadd.f32 %v3172, %v3177
        %v3180 = vmax.f32 %v3178, 0.0
        %v3181 = vmax.f32 %v3179, 0.0
        %v3182 = vld [vmem:[#allocation10 + $0x143a] sm:$0x1]
        %v3183 = vld [vmem:[#allocation10 + $0xd30] sm:$0xff]
        %v3184 = vld [vmem:[#allocation10 + $0xd38] sm:$0xff]
        %v3185 = vld [vmem:[#allocation10 + $0xd40] sm:$0xff]
        %v3186 = vld [vmem:[#allocation10 + $0xd48] sm:$0xff]
        %v3187 = vld [vmem:[#allocation10 + $0xd50] sm:$0xff]
        %v3188 = vld [vmem:[#allocation10 + $0xd58] sm:$0xff]
        %v3189 = vld [vmem:[#allocation10 + $0xd60] sm:$0xff]
        %v3190 = vld [vmem:[#allocation10 + $0xd68] sm:$0xff]
        %v3191 = vld [vmem:[#allocation10 + $0xd70] sm:$0xff]
        %v3192 = vld [vmem:[#allocation10 + $0xd78] sm:$0xff]
        %v3193 = vld [vmem:[#allocation10 + $0xd80] sm:$0xff]
        %v3194 = vld [vmem:[#allocation10 + $0xd88] sm:$0xff]
        %v3195 = vld [vmem:[#allocation10 + $0xd90] sm:$0xff]
        %v3196 = vld [vmem:[#allocation10 + $0xd98] sm:$0xff]
        %v3197 = vld [vmem:[#allocation10 + $0xda0] sm:$0xff]
        %v3198 = vld [vmem:[#allocation10 + $0xda8] sm:$0xff]
        %v3199 = vlaneseq
        %v3200 = vshrl.u32 %v3199, 7
        %v3201 = vsub.s32 0, %v3200
        %v3202 = vrot.slane %v3182, %v3201
        %3203 = vmatprep.subr.mxu0 0.0
        %3204 = vmatpush1.msra.mxu0 %v3198
        %3205 = vmatprep.subr.mxu0 0.0
        %3206 = vmatpush1.msra.mxu0 %v3197
        %3207 = vmatprep.subr.mxu0 0.0
        %3208 = vmatpush1.msra.mxu0 %v3196
        %3209 = vmatprep.subr.mxu0 0.0
        %3210 = vmatpush1.msra.mxu0 %v3195
        %3211 = vmatprep.subr.mxu0 0.0
        %3212 = vmatpush1.msra.mxu0 %v3194
        %3213 = vmatprep.subr.mxu0 0.0
        %3214 = vmatpush1.msra.mxu0 %v3193
        %3215 = vmatprep.subr.mxu0 0.0
        %3216 = vmatpush1.msra.mxu0 %v3192
        %3217 = vmatprep.subr.mxu0 0.0
        %3218 = vmatpush1.msra.mxu0 %v3191
        %3219 = vmatprep.subr.mxu0 0.0
        %3220 = vmatpush1.msra.mxu0 %v3190
        %3221 = vmatprep.subr.mxu0 0.0
        %3222 = vmatpush1.msra.mxu0 %v3189
        %3223 = vmatprep.subr.mxu0 0.0
        %3224 = vmatpush1.msra.mxu0 %v3188
        %3225 = vmatprep.subr.mxu0 0.0
        %3226 = vmatpush1.msra.mxu0 %v3187
        %3227 = vmatprep.subr.mxu0 0.0
        %3228 = vmatpush1.msra.mxu0 %v3186
        %3229 = vmatprep.subr.mxu0 0.0
        %3230 = vmatpush1.msra.mxu0 %v3185
        %3231 = vmatprep.subr.mxu0 0.0
        %3232 = vmatpush1.msra.mxu0 %v3184
        %3233 = vmatprep.subr.mxu0 0.0
        %3234 = vmatpush1.msra.mxu0 %v3183
        %3235 = vmatprep.subr.mxu0 0.0
        %3236 = vmatpush2.msra.mxu0 0.0
        %3237 = vmatprep.subr.mxu0 0.0
        %3238 = vmatpush2.msra.mxu0 0.0
        %3239 = vmatprep.subr.mxu0 0.0
        %3240 = vmatpush2.msra.mxu0 0.0
        %3241 = vmatprep.subr.mxu0 0.0
        %3242 = vmatpush2.msra.mxu0 0.0
        %3243 = vmatprep.subr.mxu0 0.0
        %3244 = vmatpush2.msra.mxu0 0.0
        %3245 = vmatprep.subr.mxu0 0.0
        %3246 = vmatpush2.msra.mxu0 0.0
        %3247 = vmatprep.subr.mxu0 0.0
        %3248 = vmatpush2.msra.mxu0 0.0
        %3249 = vmatprep.subr.mxu0 0.0
        %3250 = vmatpush2.msra.mxu0 0.0
        %3251 = vmatprep.subr.mxu0 0.0
        %3252 = vmatpush2.msra.mxu0 0.0
        %3253 = vmatprep.subr.mxu0 0.0
        %3254 = vmatpush2.msra.mxu0 0.0
        %3255 = vmatprep.subr.mxu0 0.0
        %3256 = vmatpush2.msra.mxu0 0.0
        %3257 = vmatprep.subr.mxu0 0.0
        %3258 = vmatpush2.msra.mxu0 0.0
        %3259 = vmatprep.subr.mxu0 0.0
        %3260 = vmatpush2.msra.mxu0 0.0
        %3261 = vmatprep.subr.mxu0 0.0
        %3262 = vmatpush2.msra.mxu0 0.0
        %3263 = vmatprep.subr.mxu0 0.0
        %3264 = vmatpush2.msra.mxu0 0.0
        %3265 = vmatprep.subr.mxu0 0.0
        %3266 = vmatpush2.msra.mxu0 0.0
        %3267 = vmatprep.mubr.f32.mxu0 0.0
        %3268 = vmatmul.mubr.f32.gmra.mxu0 %v3180
        %v3269 = vpop.f32.mrf.mxu0
        %v3270 = vadd.f32 %v3202, %v3269
        %v3271 = vpop.f32.mrf.mxu0
        %3272 = vmatprep.mubr.f32.mxu0 0.0
        %3273 = vmatmul.mubr.f32.gmra.mxu0 %v3181
        %v3274 = vpop.f32.mrf.mxu0
        %v3275 = vadd.f32 %v3202, %v3274
        %v3276 = vpop.f32.mrf.mxu0
        %3277 = vdwg.mxu0
        %3278 = vst [vmem:[#allocation2 + $0x1] sm:$0x1] %v3270
        %3279 = vst [vmem:[#allocation2 + $0x19] sm:$0x1] %v3275
        %3280 = vst [vmem:[#allocation2 + $0x2] sm:$0x2] %v3270
        %3281 = vst [vmem:[#allocation2 + $0x1a] sm:$0x2] %v3275
        %3282 = vst [vmem:[#allocation2 + $0x3] sm:$0x4] %v3270
        %3283 = vst [vmem:[#allocation2 + $0x1b] sm:$0x4] %v3275
        %3284 = vst [vmem:[#allocation2 + $0x4] sm:$0x8] %v3270
        %3285 = vst [vmem:[#allocation2 + $0x1c] sm:$0x8] %v3275
        %3286 = vst [vmem:[#allocation2 + $0x5] sm:$0x10] %v3270
        %3287 = vst [vmem:[#allocation2 + $0x1d] sm:$0x10] %v3275
        %3288 = vst [vmem:[#allocation2 + $0x6] sm:$0x20] %v3270
        %3289 = vst [vmem:[#allocation2 + $0x1e] sm:$0x20] %v3275
        %3290 = vst [vmem:[#allocation2 + $0x7] sm:$0x40] %v3270
        %3291 = vst [vmem:[#allocation2 + $0x1f] sm:$0x40] %v3275
        %3292 = vst [vmem:[#allocation2 + $0x8] sm:$0x80] %v3270
        %3293 = vst [vmem:[#allocation2 + $0x20] sm:$0x80] %v3275
        %v3294 = vld [vmem:[#allocation10 + $0xdb0] sm:$0xff]
        %v3295 = vld [vmem:[#allocation10 + $0xdb8] sm:$0xff]
        %v3296 = vld [vmem:[#allocation10 + $0xdc0] sm:$0xff]
        %v3297 = vld [vmem:[#allocation10 + $0xdc8] sm:$0xff]
        %v3298 = vld [vmem:[#allocation10 + $0xdd0] sm:$0xff]
        %v3299 = vld [vmem:[#allocation10 + $0xdd8] sm:$0xff]
        %v3300 = vld [vmem:[#allocation10 + $0xde0] sm:$0xff]
        %v3301 = vld [vmem:[#allocation10 + $0xde8] sm:$0xff]
        %v3302 = vld [vmem:[#allocation10 + $0xdf0] sm:$0xff]
        %v3303 = vld [vmem:[#allocation10 + $0xdf8] sm:$0xff]
        %v3304 = vld [vmem:[#allocation10 + $0xe00] sm:$0xff]
        %v3305 = vld [vmem:[#allocation10 + $0xe08] sm:$0xff]
        %v3306 = vld [vmem:[#allocation10 + $0xe10] sm:$0xff]
        %v3307 = vld [vmem:[#allocation10 + $0xe18] sm:$0xff]
        %v3308 = vld [vmem:[#allocation10 + $0xe20] sm:$0xff]
        %v3309 = vld [vmem:[#allocation10 + $0xe28] sm:$0xff]
        %3310 = vmatprep.subr.mxu0 0.0
        %3311 = vmatpush1.msra.mxu0 %v3309
        %3312 = vmatprep.subr.mxu0 0.0
        %3313 = vmatpush1.msra.mxu0 %v3308
        %3314 = vmatprep.subr.mxu0 0.0
        %3315 = vmatpush1.msra.mxu0 %v3307
        %3316 = vmatprep.subr.mxu0 0.0
        %3317 = vmatpush1.msra.mxu0 %v3306
        %3318 = vmatprep.subr.mxu0 0.0
        %3319 = vmatpush1.msra.mxu0 %v3305
        %3320 = vmatprep.subr.mxu0 0.0
        %3321 = vmatpush1.msra.mxu0 %v3304
        %3322 = vmatprep.subr.mxu0 0.0
        %3323 = vmatpush1.msra.mxu0 %v3303
        %3324 = vmatprep.subr.mxu0 0.0
        %3325 = vmatpush1.msra.mxu0 %v3302
        %3326 = vmatprep.subr.mxu0 0.0
        %3327 = vmatpush1.msra.mxu0 %v3301
        %3328 = vmatprep.subr.mxu0 0.0
        %3329 = vmatpush1.msra.mxu0 %v3300
        %3330 = vmatprep.subr.mxu0 0.0
        %3331 = vmatpush1.msra.mxu0 %v3299
        %3332 = vmatprep.subr.mxu0 0.0
        %3333 = vmatpush1.msra.mxu0 %v3298
        %3334 = vmatprep.subr.mxu0 0.0
        %3335 = vmatpush1.msra.mxu0 %v3297
        %3336 = vmatprep.subr.mxu0 0.0
        %3337 = vmatpush1.msra.mxu0 %v3296
        %3338 = vmatprep.subr.mxu0 0.0
        %3339 = vmatpush1.msra.mxu0 %v3295
        %3340 = vmatprep.subr.mxu0 0.0
        %3341 = vmatpush1.msra.mxu0 %v3294
        %3342 = vmatprep.subr.mxu0 0.0
        %3343 = vmatpush2.msra.mxu0 0.0
        %3344 = vmatprep.subr.mxu0 0.0
        %3345 = vmatpush2.msra.mxu0 0.0
        %3346 = vmatprep.subr.mxu0 0.0
        %3347 = vmatpush2.msra.mxu0 0.0
        %3348 = vmatprep.subr.mxu0 0.0
        %3349 = vmatpush2.msra.mxu0 0.0
        %3350 = vmatprep.subr.mxu0 0.0
        %3351 = vmatpush2.msra.mxu0 0.0
        %3352 = vmatprep.subr.mxu0 0.0
        %3353 = vmatpush2.msra.mxu0 0.0
        %3354 = vmatprep.subr.mxu0 0.0
        %3355 = vmatpush2.msra.mxu0 0.0
        %3356 = vmatprep.subr.mxu0 0.0
        %3357 = vmatpush2.msra.mxu0 0.0
        %3358 = vmatprep.subr.mxu0 0.0
        %3359 = vmatpush2.msra.mxu0 0.0
        %3360 = vmatprep.subr.mxu0 0.0
        %3361 = vmatpush2.msra.mxu0 0.0
        %3362 = vmatprep.subr.mxu0 0.0
        %3363 = vmatpush2.msra.mxu0 0.0
        %3364 = vmatprep.subr.mxu0 0.0
        %3365 = vmatpush2.msra.mxu0 0.0
        %3366 = vmatprep.subr.mxu0 0.0
        %3367 = vmatpush2.msra.mxu0 0.0
        %3368 = vmatprep.subr.mxu0 0.0
        %3369 = vmatpush2.msra.mxu0 0.0
        %3370 = vmatprep.subr.mxu0 0.0
        %3371 = vmatpush2.msra.mxu0 0.0
        %3372 = vmatprep.subr.mxu0 0.0
        %3373 = vmatpush2.msra.mxu0 0.0
        %3374 = vmatprep.mubr.f32.mxu0 0.0
        %3375 = vmatmul.mubr.f32.gmra.mxu0 %v3180
        %v3376 = vpop.f32.mrf.mxu0
        %v3377 = vadd.f32 %v3202, %v3376
        %v3378 = vpop.f32.mrf.mxu0
        %3379 = vmatprep.mubr.f32.mxu0 0.0
        %3380 = vmatmul.mubr.f32.gmra.mxu0 %v3181
        %v3381 = vpop.f32.mrf.mxu0
        %v3382 = vadd.f32 %v3202, %v3381
        %v3383 = vpop.f32.mrf.mxu0
        %3384 = vdwg.mxu0
        %3385 = vst [vmem:[#allocation2 + $0x2] sm:$0x1] %v3377
        %3386 = vst [vmem:[#allocation2 + $0x1a] sm:$0x1] %v3382
        %3387 = vst [vmem:[#allocation2 + $0x3] sm:$0x2] %v3377
        %3388 = vst [vmem:[#allocation2 + $0x1b] sm:$0x2] %v3382
        %3389 = vst [vmem:[#allocation2 + $0x4] sm:$0x4] %v3377
        %3390 = vst [vmem:[#allocation2 + $0x1c] sm:$0x4] %v3382
        %3391 = vst [vmem:[#allocation2 + $0x5] sm:$0x8] %v3377
        %3392 = vst [vmem:[#allocation2 + $0x1d] sm:$0x8] %v3382
        %3393 = vst [vmem:[#allocation2 + $0x6] sm:$0x10] %v3377
        %3394 = vst [vmem:[#allocation2 + $0x1e] sm:$0x10] %v3382
        %3395 = vst [vmem:[#allocation2 + $0x7] sm:$0x20] %v3377
        %3396 = vst [vmem:[#allocation2 + $0x1f] sm:$0x20] %v3382
        %3397 = vst [vmem:[#allocation2 + $0x8] sm:$0x40] %v3377
        %3398 = vst [vmem:[#allocation2 + $0x20] sm:$0x40] %v3382
        %3399 = vst [vmem:[#allocation2 + $0x9] sm:$0x80] %v3377
        %3400 = vst [vmem:[#allocation2 + $0x21] sm:$0x80] %v3382
        %v3401 = vld [vmem:[#allocation2] sm:$0xff]
        %v3402 = vld [vmem:[#allocation2 + $0x8] sm:$0xff]
        %v3403 = vld [vmem:[#allocation2 + $0x18] sm:$0xff]
        %v3404 = vld [vmem:[#allocation2 + $0x20] sm:$0xff]
        %v3405 = vld [vmem:[#allocation10 + $0xe30] sm:$0xff]
        %v3406 = vld [vmem:[#allocation10 + $0xe38] sm:$0xff]
        %v3407 = vld [vmem:[#allocation10 + $0xe40] sm:$0xff]
        %v3408 = vld [vmem:[#allocation10 + $0xe48] sm:$0xff]
        %v3409 = vld [vmem:[#allocation10 + $0xe50] sm:$0xff]
        %v3410 = vld [vmem:[#allocation10 + $0xe58] sm:$0xff]
        %v3411 = vld [vmem:[#allocation10 + $0xe60] sm:$0xff]
        %v3412 = vld [vmem:[#allocation10 + $0xe68] sm:$0xff]
        %v3413 = vld [vmem:[#allocation10 + $0xe70] sm:$0xff]
        %v3414 = vld [vmem:[#allocation10 + $0xe78] sm:$0xff]
        %v3415 = vld [vmem:[#allocation10 + $0xe80] sm:$0xff]
        %v3416 = vld [vmem:[#allocation10 + $0xe88] sm:$0xff]
        %v3417 = vld [vmem:[#allocation10 + $0xe90] sm:$0xff]
        %v3418 = vld [vmem:[#allocation10 + $0xe98] sm:$0xff]
        %v3419 = vld [vmem:[#allocation10 + $0xea0] sm:$0xff]
        %v3420 = vld [vmem:[#allocation10 + $0xea8] sm:$0xff]
        %v3421 = vld [vmem:[#allocation2 + $0x1] sm:$0xff]
        %v3422 = vld [vmem:[#allocation2 + $0x9] sm:$0xff]
        %v3423 = vld [vmem:[#allocation2 + $0x19] sm:$0xff]
        %v3424 = vld [vmem:[#allocation2 + $0x21] sm:$0xff]
        %v3425 = vld [vmem:[#allocation10 + $0xeb0] sm:$0xff]
        %v3426 = vld [vmem:[#allocation10 + $0xeb8] sm:$0xff]
        %v3427 = vld [vmem:[#allocation10 + $0xec0] sm:$0xff]
        %v3428 = vld [vmem:[#allocation10 + $0xec8] sm:$0xff]
        %v3429 = vld [vmem:[#allocation10 + $0xed0] sm:$0xff]
        %v3430 = vld [vmem:[#allocation10 + $0xed8] sm:$0xff]
        %v3431 = vld [vmem:[#allocation10 + $0xee0] sm:$0xff]
        %v3432 = vld [vmem:[#allocation10 + $0xee8] sm:$0xff]
        %v3433 = vld [vmem:[#allocation10 + $0xef0] sm:$0xff]
        %v3434 = vld [vmem:[#allocation10 + $0xef8] sm:$0xff]
        %v3435 = vld [vmem:[#allocation10 + $0xf00] sm:$0xff]
        %v3436 = vld [vmem:[#allocation10 + $0xf08] sm:$0xff]
        %v3437 = vld [vmem:[#allocation10 + $0xf10] sm:$0xff]
        %v3438 = vld [vmem:[#allocation10 + $0xf18] sm:$0xff]
        %v3439 = vld [vmem:[#allocation10 + $0xf20] sm:$0xff]
        %v3440 = vld [vmem:[#allocation10 + $0xf28] sm:$0xff]
        %3441 = vmatprep.subr.mxu0 0.0
        %3442 = vmatpush1.msra.mxu0 %v3440
        %3443 = vmatprep.subr.mxu0 0.0
        %3444 = vmatpush1.msra.mxu0 %v3439
        %3445 = vmatprep.subr.mxu0 0.0
        %3446 = vmatpush1.msra.mxu0 %v3438
        %3447 = vmatprep.subr.mxu0 0.0
        %3448 = vmatpush1.msra.mxu0 %v3437
        %3449 = vmatprep.subr.mxu0 0.0
        %3450 = vmatpush1.msra.mxu0 %v3436
        %3451 = vmatprep.subr.mxu0 0.0
        %3452 = vmatpush1.msra.mxu0 %v3435
        %3453 = vmatprep.subr.mxu0 0.0
        %3454 = vmatpush1.msra.mxu0 %v3434
        %3455 = vmatprep.subr.mxu0 0.0
        %3456 = vmatpush1.msra.mxu0 %v3433
        %3457 = vmatprep.subr.mxu0 0.0
        %3458 = vmatpush1.msra.mxu0 %v3432
        %3459 = vmatprep.subr.mxu0 0.0
        %3460 = vmatpush1.msra.mxu0 %v3431
        %3461 = vmatprep.subr.mxu0 0.0
        %3462 = vmatpush1.msra.mxu0 %v3430
        %3463 = vmatprep.subr.mxu0 0.0
        %3464 = vmatpush1.msra.mxu0 %v3429
        %3465 = vmatprep.subr.mxu0 0.0
        %3466 = vmatpush1.msra.mxu0 %v3428
        %3467 = vmatprep.subr.mxu0 0.0
        %3468 = vmatpush1.msra.mxu0 %v3427
        %3469 = vmatprep.subr.mxu0 0.0
        %3470 = vmatpush1.msra.mxu0 %v3426
        %3471 = vmatprep.subr.mxu0 0.0
        %3472 = vmatpush1.msra.mxu0 %v3425
        %3473 = vmatprep.subr.mxu0 0.0
        %3474 = vmatpush2.msra.mxu0 0.0
        %3475 = vmatprep.subr.mxu0 0.0
        %3476 = vmatpush2.msra.mxu0 0.0
        %3477 = vmatprep.subr.mxu0 0.0
        %3478 = vmatpush2.msra.mxu0 0.0
        %3479 = vmatprep.subr.mxu0 0.0
        %3480 = vmatpush2.msra.mxu0 0.0
        %3481 = vmatprep.subr.mxu0 0.0
        %3482 = vmatpush2.msra.mxu0 0.0
        %3483 = vmatprep.subr.mxu0 0.0
        %3484 = vmatpush2.msra.mxu0 0.0
        %3485 = vmatprep.subr.mxu0 0.0
        %3486 = vmatpush2.msra.mxu0 0.0
        %3487 = vmatprep.subr.mxu0 0.0
        %3488 = vmatpush2.msra.mxu0 0.0
        %3489 = vmatprep.subr.mxu0 0.0
        %3490 = vmatpush2.msra.mxu0 0.0
        %3491 = vmatprep.subr.mxu0 0.0
        %3492 = vmatpush2.msra.mxu0 0.0
        %3493 = vmatprep.subr.mxu0 0.0
        %3494 = vmatpush2.msra.mxu0 0.0
        %3495 = vmatprep.subr.mxu0 0.0
        %3496 = vmatpush2.msra.mxu0 0.0
        %3497 = vmatprep.subr.mxu0 0.0
        %3498 = vmatpush2.msra.mxu0 0.0
        %3499 = vmatprep.subr.mxu0 0.0
        %3500 = vmatpush2.msra.mxu0 0.0
        %3501 = vmatprep.subr.mxu0 0.0
        %3502 = vmatpush2.msra.mxu0 0.0
        %3503 = vmatprep.subr.mxu0 0.0
        %3504 = vmatpush2.msra.mxu0 0.0
        %3505 = vmatprep.mubr.f32.mxu0 0.0
        %3506 = vmatmul.mubr.f32.gmra.mxu0 %v3421
        %v3507 = vpop.f32.mrf.mxu0
        %v3508 = vadd.f32 0.0, %v3507
        %v3509 = vpop.f32.mrf.mxu0
        %3510 = vmatprep.mubr.f32.mxu0 0.0
        %3511 = vmatmul.mubr.f32.gmra.mxu0 %v3422
        %v3512 = vpop.f32.mrf.mxu0
        %v3513 = vadd.f32 0.0, %v3512
        %v3514 = vpop.f32.mrf.mxu0
        %3515 = vmatprep.mubr.f32.mxu0 0.0
        %3516 = vmatmul.mubr.f32.gmra.mxu0 %v3423
        %v3517 = vpop.f32.mrf.mxu0
        %v3518 = vadd.f32 0.0, %v3517
        %v3519 = vpop.f32.mrf.mxu0
        %3520 = vmatprep.mubr.f32.mxu0 0.0
        %3521 = vmatmul.mubr.f32.gmra.mxu0 %v3424
        %v3522 = vpop.f32.mrf.mxu0
        %v3523 = vadd.f32 0.0, %v3522
        %v3524 = vpop.f32.mrf.mxu0
        %3525 = vdwg.mxu0
        %3526 = vmatprep.subr.mxu0 0.0
        %3527 = vmatpush1.msra.mxu0 %v3420
        %3528 = vmatprep.subr.mxu0 0.0
        %3529 = vmatpush1.msra.mxu0 %v3419
        %3530 = vmatprep.subr.mxu0 0.0
        %3531 = vmatpush1.msra.mxu0 %v3418
        %3532 = vmatprep.subr.mxu0 0.0
        %3533 = vmatpush1.msra.mxu0 %v3417
        %3534 = vmatprep.subr.mxu0 0.0
        %3535 = vmatpush1.msra.mxu0 %v3416
        %3536 = vmatprep.subr.mxu0 0.0
        %3537 = vmatpush1.msra.mxu0 %v3415
        %3538 = vmatprep.subr.mxu0 0.0
        %3539 = vmatpush1.msra.mxu0 %v3414
        %3540 = vmatprep.subr.mxu0 0.0
        %3541 = vmatpush1.msra.mxu0 %v3413
        %3542 = vmatprep.subr.mxu0 0.0
        %3543 = vmatpush1.msra.mxu0 %v3412
        %3544 = vmatprep.subr.mxu0 0.0
        %3545 = vmatpush1.msra.mxu0 %v3411
        %3546 = vmatprep.subr.mxu0 0.0
        %3547 = vmatpush1.msra.mxu0 %v3410
        %3548 = vmatprep.subr.mxu0 0.0
        %3549 = vmatpush1.msra.mxu0 %v3409
        %3550 = vmatprep.subr.mxu0 0.0
        %3551 = vmatpush1.msra.mxu0 %v3408
        %3552 = vmatprep.subr.mxu0 0.0
        %3553 = vmatpush1.msra.mxu0 %v3407
        %3554 = vmatprep.subr.mxu0 0.0
        %3555 = vmatpush1.msra.mxu0 %v3406
        %3556 = vmatprep.subr.mxu0 0.0
        %3557 = vmatpush1.msra.mxu0 %v3405
        %3558 = vmatprep.subr.mxu0 0.0
        %3559 = vmatpush2.msra.mxu0 0.0
        %3560 = vmatprep.subr.mxu0 0.0
        %3561 = vmatpush2.msra.mxu0 0.0
        %3562 = vmatprep.subr.mxu0 0.0
        %3563 = vmatpush2.msra.mxu0 0.0
        %3564 = vmatprep.subr.mxu0 0.0
        %3565 = vmatpush2.msra.mxu0 0.0
        %3566 = vmatprep.subr.mxu0 0.0
        %3567 = vmatpush2.msra.mxu0 0.0
        %3568 = vmatprep.subr.mxu0 0.0
        %3569 = vmatpush2.msra.mxu0 0.0
        %3570 = vmatprep.subr.mxu0 0.0
        %3571 = vmatpush2.msra.mxu0 0.0
        %3572 = vmatprep.subr.mxu0 0.0
        %3573 = vmatpush2.msra.mxu0 0.0
        %3574 = vmatprep.subr.mxu0 0.0
        %3575 = vmatpush2.msra.mxu0 0.0
        %3576 = vmatprep.subr.mxu0 0.0
        %3577 = vmatpush2.msra.mxu0 0.0
        %3578 = vmatprep.subr.mxu0 0.0
        %3579 = vmatpush2.msra.mxu0 0.0
        %3580 = vmatprep.subr.mxu0 0.0
        %3581 = vmatpush2.msra.mxu0 0.0
        %3582 = vmatprep.subr.mxu0 0.0
        %3583 = vmatpush2.msra.mxu0 0.0
        %3584 = vmatprep.subr.mxu0 0.0
        %3585 = vmatpush2.msra.mxu0 0.0
        %3586 = vmatprep.subr.mxu0 0.0
        %3587 = vmatpush2.msra.mxu0 0.0
        %3588 = vmatprep.subr.mxu0 0.0
        %3589 = vmatpush2.msra.mxu0 0.0
        %3590 = vmatprep.mubr.f32.mxu0 0.0
        %3591 = vmatmul.mubr.f32.gmra.mxu0 %v3401
        %v3592 = vpop.f32.mrf.mxu0
        %v3593 = vadd.f32 %v3508, %v3592
        %v3594 = vpop.f32.mrf.mxu0
        %3595 = vmatprep.mubr.f32.mxu0 0.0
        %3596 = vmatmul.mubr.f32.gmra.mxu0 %v3402
        %v3597 = vpop.f32.mrf.mxu0
        %v3598 = vadd.f32 %v3513, %v3597
        %v3599 = vpop.f32.mrf.mxu0
        %3600 = vmatprep.mubr.f32.mxu0 0.0
        %3601 = vmatmul.mubr.f32.gmra.mxu0 %v3403
        %v3602 = vpop.f32.mrf.mxu0
        %v3603 = vadd.f32 %v3518, %v3602
        %v3604 = vpop.f32.mrf.mxu0
        %3605 = vmatprep.mubr.f32.mxu0 0.0
        %3606 = vmatmul.mubr.f32.gmra.mxu0 %v3404
        %v3607 = vpop.f32.mrf.mxu0
        %v3608 = vadd.f32 %v3523, %v3607
        %v3609 = vpop.f32.mrf.mxu0
        %3610 = vdwg.mxu0
        %v3611 = vld [vmem:[#allocation2 + $0x2] sm:$0xff]
        %v3612 = vld [vmem:[#allocation2 + $0xa] sm:$0xff]
        %v3613 = vld [vmem:[#allocation2 + $0x1a] sm:$0xff]
        %v3614 = vld [vmem:[#allocation2 + $0x22] sm:$0xff]
        %v3615 = vld [vmem:[#allocation10 + $0xf30] sm:$0xff]
        %v3616 = vld [vmem:[#allocation10 + $0xf38] sm:$0xff]
        %v3617 = vld [vmem:[#allocation10 + $0xf40] sm:$0xff]
        %v3618 = vld [vmem:[#allocation10 + $0xf48] sm:$0xff]
        %v3619 = vld [vmem:[#allocation10 + $0xf50] sm:$0xff]
        %v3620 = vld [vmem:[#allocation10 + $0xf58] sm:$0xff]
        %v3621 = vld [vmem:[#allocation10 + $0xf60] sm:$0xff]
        %v3622 = vld [vmem:[#allocation10 + $0xf68] sm:$0xff]
        %v3623 = vld [vmem:[#allocation10 + $0xf70] sm:$0xff]
        %v3624 = vld [vmem:[#allocation10 + $0xf78] sm:$0xff]
        %v3625 = vld [vmem:[#allocation10 + $0xf80] sm:$0xff]
        %v3626 = vld [vmem:[#allocation10 + $0xf88] sm:$0xff]
        %v3627 = vld [vmem:[#allocation10 + $0xf90] sm:$0xff]
        %v3628 = vld [vmem:[#allocation10 + $0xf98] sm:$0xff]
        %v3629 = vld [vmem:[#allocation10 + $0xfa0] sm:$0xff]
        %v3630 = vld [vmem:[#allocation10 + $0xfa8] sm:$0xff]
        %3631 = vmatprep.subr.mxu0 0.0
        %3632 = vmatpush1.msra.mxu0 %v3630
        %3633 = vmatprep.subr.mxu0 0.0
        %3634 = vmatpush1.msra.mxu0 %v3629
        %3635 = vmatprep.subr.mxu0 0.0
        %3636 = vmatpush1.msra.mxu0 %v3628
        %3637 = vmatprep.subr.mxu0 0.0
        %3638 = vmatpush1.msra.mxu0 %v3627
        %3639 = vmatprep.subr.mxu0 0.0
        %3640 = vmatpush1.msra.mxu0 %v3626
        %3641 = vmatprep.subr.mxu0 0.0
        %3642 = vmatpush1.msra.mxu0 %v3625
        %3643 = vmatprep.subr.mxu0 0.0
        %3644 = vmatpush1.msra.mxu0 %v3624
        %3645 = vmatprep.subr.mxu0 0.0
        %3646 = vmatpush1.msra.mxu0 %v3623
        %3647 = vmatprep.subr.mxu0 0.0
        %3648 = vmatpush1.msra.mxu0 %v3622
        %3649 = vmatprep.subr.mxu0 0.0
        %3650 = vmatpush1.msra.mxu0 %v3621
        %3651 = vmatprep.subr.mxu0 0.0
        %3652 = vmatpush1.msra.mxu0 %v3620
        %3653 = vmatprep.subr.mxu0 0.0
        %3654 = vmatpush1.msra.mxu0 %v3619
        %3655 = vmatprep.subr.mxu0 0.0
        %3656 = vmatpush1.msra.mxu0 %v3618
        %3657 = vmatprep.subr.mxu0 0.0
        %3658 = vmatpush1.msra.mxu0 %v3617
        %3659 = vmatprep.subr.mxu0 0.0
        %3660 = vmatpush1.msra.mxu0 %v3616
        %3661 = vmatprep.subr.mxu0 0.0
        %3662 = vmatpush1.msra.mxu0 %v3615
        %3663 = vmatprep.subr.mxu0 0.0
        %3664 = vmatpush2.msra.mxu0 0.0
        %3665 = vmatprep.subr.mxu0 0.0
        %3666 = vmatpush2.msra.mxu0 0.0
        %3667 = vmatprep.subr.mxu0 0.0
        %3668 = vmatpush2.msra.mxu0 0.0
        %3669 = vmatprep.subr.mxu0 0.0
        %3670 = vmatpush2.msra.mxu0 0.0
        %3671 = vmatprep.subr.mxu0 0.0
        %3672 = vmatpush2.msra.mxu0 0.0
        %3673 = vmatprep.subr.mxu0 0.0
        %3674 = vmatpush2.msra.mxu0 0.0
        %3675 = vmatprep.subr.mxu0 0.0
        %3676 = vmatpush2.msra.mxu0 0.0
        %3677 = vmatprep.subr.mxu0 0.0
        %3678 = vmatpush2.msra.mxu0 0.0
        %3679 = vmatprep.subr.mxu0 0.0
        %3680 = vmatpush2.msra.mxu0 0.0
        %3681 = vmatprep.subr.mxu0 0.0
        %3682 = vmatpush2.msra.mxu0 0.0
        %3683 = vmatprep.subr.mxu0 0.0
        %3684 = vmatpush2.msra.mxu0 0.0
        %3685 = vmatprep.subr.mxu0 0.0
        %3686 = vmatpush2.msra.mxu0 0.0
        %3687 = vmatprep.subr.mxu0 0.0
        %3688 = vmatpush2.msra.mxu0 0.0
        %3689 = vmatprep.subr.mxu0 0.0
        %3690 = vmatpush2.msra.mxu0 0.0
        %3691 = vmatprep.subr.mxu0 0.0
        %3692 = vmatpush2.msra.mxu0 0.0
        %3693 = vmatprep.subr.mxu0 0.0
        %3694 = vmatpush2.msra.mxu0 0.0
        %3695 = vmatprep.mubr.f32.mxu0 0.0
        %3696 = vmatmul.mubr.f32.gmra.mxu0 %v3611
        %v3697 = vpop.f32.mrf.mxu0
        %v3698 = vadd.f32 0.0, %v3697
        %v3699 = vpop.f32.mrf.mxu0
        %3700 = vmatprep.mubr.f32.mxu0 0.0
        %3701 = vmatmul.mubr.f32.gmra.mxu0 %v3612
        %v3702 = vpop.f32.mrf.mxu0
        %v3703 = vadd.f32 0.0, %v3702
        %v3704 = vpop.f32.mrf.mxu0
        %3705 = vmatprep.mubr.f32.mxu0 0.0
        %3706 = vmatmul.mubr.f32.gmra.mxu0 %v3613
        %v3707 = vpop.f32.mrf.mxu0
        %v3708 = vadd.f32 0.0, %v3707
        %v3709 = vpop.f32.mrf.mxu0
        %3710 = vmatprep.mubr.f32.mxu0 0.0
        %3711 = vmatmul.mubr.f32.gmra.mxu0 %v3614
        %v3712 = vpop.f32.mrf.mxu0
        %v3713 = vadd.f32 0.0, %v3712
        %v3714 = vpop.f32.mrf.mxu0
        %3715 = vdwg.mxu0
        %v3716 = vadd.f32 %v3593, %v3698
        %v3717 = vadd.f32 %v3598, %v3703
        %v3718 = vadd.f32 %v3603, %v3708
        %v3719 = vadd.f32 %v3608, %v3713
        %v3720 = vld [vmem:[#allocation10 + $0x1439] sm:$0x1]
        %v3721 = vlaneseq
        %v3722 = vshrl.u32 %v3721, 7
        %v3723 = vsub.s32 0, %v3722
        %v3724 = vrot.slane %v3720, %v3723
        %v3725 = vadd.f32 %v3716, %v3724
        %v3726 = vadd.f32 %v3717, %v3724
        %v3727 = vadd.f32 %v3718, %v3724
        %v3728 = vadd.f32 %v3719, %v3724
        %v3729 = vld [vmem:[#allocation5] sm:$0xff]
        %v3730 = vld [vmem:[#allocation5 + $0x8] sm:$0xff]
        %v3731 = vld [vmem:[#allocation5 + $0x18] sm:$0xff]
        %v3732 = vld [vmem:[#allocation5 + $0x20] sm:$0xff]
        %v3733 = vld [vmem:[#allocation10 + $0xfb0] sm:$0xff]
        %v3734 = vld [vmem:[#allocation10 + $0xfb8] sm:$0xff]
        %v3735 = vld [vmem:[#allocation10 + $0xfc0] sm:$0xff]
        %v3736 = vld [vmem:[#allocation10 + $0xfc8] sm:$0xff]
        %v3737 = vld [vmem:[#allocation10 + $0xfd0] sm:$0xff]
        %v3738 = vld [vmem:[#allocation10 + $0xfd8] sm:$0xff]
        %v3739 = vld [vmem:[#allocation10 + $0xfe0] sm:$0xff]
        %v3740 = vld [vmem:[#allocation10 + $0xfe8] sm:$0xff]
        %v3741 = vld [vmem:[#allocation10 + $0xff0] sm:$0xff]
        %v3742 = vld [vmem:[#allocation10 + $0xff8] sm:$0xff]
        %v3743 = vld [vmem:[#allocation10 + $0x1000] sm:$0xff]
        %v3744 = vld [vmem:[#allocation10 + $0x1008] sm:$0xff]
        %v3745 = vld [vmem:[#allocation10 + $0x1010] sm:$0xff]
        %v3746 = vld [vmem:[#allocation10 + $0x1018] sm:$0xff]
        %v3747 = vld [vmem:[#allocation10 + $0x1020] sm:$0xff]
        %v3748 = vld [vmem:[#allocation10 + $0x1028] sm:$0xff]
        %v3749 = vld [vmem:[#allocation5 + $0x1] sm:$0xff]
        %v3750 = vld [vmem:[#allocation5 + $0x9] sm:$0xff]
        %v3751 = vld [vmem:[#allocation5 + $0x19] sm:$0xff]
        %v3752 = vld [vmem:[#allocation5 + $0x21] sm:$0xff]
        %v3753 = vld [vmem:[#allocation10 + $0x1030] sm:$0xff]
        %v3754 = vld [vmem:[#allocation10 + $0x1038] sm:$0xff]
        %v3755 = vld [vmem:[#allocation10 + $0x1040] sm:$0xff]
        %v3756 = vld [vmem:[#allocation10 + $0x1048] sm:$0xff]
        %v3757 = vld [vmem:[#allocation10 + $0x1050] sm:$0xff]
        %v3758 = vld [vmem:[#allocation10 + $0x1058] sm:$0xff]
        %v3759 = vld [vmem:[#allocation10 + $0x1060] sm:$0xff]
        %v3760 = vld [vmem:[#allocation10 + $0x1068] sm:$0xff]
        %v3761 = vld [vmem:[#allocation10 + $0x1070] sm:$0xff]
        %v3762 = vld [vmem:[#allocation10 + $0x1078] sm:$0xff]
        %v3763 = vld [vmem:[#allocation10 + $0x1080] sm:$0xff]
        %v3764 = vld [vmem:[#allocation10 + $0x1088] sm:$0xff]
        %v3765 = vld [vmem:[#allocation10 + $0x1090] sm:$0xff]
        %v3766 = vld [vmem:[#allocation10 + $0x1098] sm:$0xff]
        %v3767 = vld [vmem:[#allocation10 + $0x10a0] sm:$0xff]
        %v3768 = vld [vmem:[#allocation10 + $0x10a8] sm:$0xff]
        %3769 = vmatprep.subr.mxu0 0.0
        %3770 = vmatpush1.msra.mxu0 %v3768
        %3771 = vmatprep.subr.mxu0 0.0
        %3772 = vmatpush1.msra.mxu0 %v3767
        %3773 = vmatprep.subr.mxu0 0.0
        %3774 = vmatpush1.msra.mxu0 %v3766
        %3775 = vmatprep.subr.mxu0 0.0
        %3776 = vmatpush1.msra.mxu0 %v3765
        %3777 = vmatprep.subr.mxu0 0.0
        %3778 = vmatpush1.msra.mxu0 %v3764
        %3779 = vmatprep.subr.mxu0 0.0
        %3780 = vmatpush1.msra.mxu0 %v3763
        %3781 = vmatprep.subr.mxu0 0.0
        %3782 = vmatpush1.msra.mxu0 %v3762
        %3783 = vmatprep.subr.mxu0 0.0
        %3784 = vmatpush1.msra.mxu0 %v3761
        %3785 = vmatprep.subr.mxu0 0.0
        %3786 = vmatpush1.msra.mxu0 %v3760
        %3787 = vmatprep.subr.mxu0 0.0
        %3788 = vmatpush1.msra.mxu0 %v3759
        %3789 = vmatprep.subr.mxu0 0.0
        %3790 = vmatpush1.msra.mxu0 %v3758
        %3791 = vmatprep.subr.mxu0 0.0
        %3792 = vmatpush1.msra.mxu0 %v3757
        %3793 = vmatprep.subr.mxu0 0.0
        %3794 = vmatpush1.msra.mxu0 %v3756
        %3795 = vmatprep.subr.mxu0 0.0
        %3796 = vmatpush1.msra.mxu0 %v3755
        %3797 = vmatprep.subr.mxu0 0.0
        %3798 = vmatpush1.msra.mxu0 %v3754
        %3799 = vmatprep.subr.mxu0 0.0
        %3800 = vmatpush1.msra.mxu0 %v3753
        %3801 = vmatprep.subr.mxu0 0.0
        %3802 = vmatpush2.msra.mxu0 0.0
        %3803 = vmatprep.subr.mxu0 0.0
        %3804 = vmatpush2.msra.mxu0 0.0
        %3805 = vmatprep.subr.mxu0 0.0
        %3806 = vmatpush2.msra.mxu0 0.0
        %3807 = vmatprep.subr.mxu0 0.0
        %3808 = vmatpush2.msra.mxu0 0.0
        %3809 = vmatprep.subr.mxu0 0.0
        %3810 = vmatpush2.msra.mxu0 0.0
        %3811 = vmatprep.subr.mxu0 0.0
        %3812 = vmatpush2.msra.mxu0 0.0
        %3813 = vmatprep.subr.mxu0 0.0
        %3814 = vmatpush2.msra.mxu0 0.0
        %3815 = vmatprep.subr.mxu0 0.0
        %3816 = vmatpush2.msra.mxu0 0.0
        %3817 = vmatprep.subr.mxu0 0.0
        %3818 = vmatpush2.msra.mxu0 0.0
        %3819 = vmatprep.subr.mxu0 0.0
        %3820 = vmatpush2.msra.mxu0 0.0
        %3821 = vmatprep.subr.mxu0 0.0
        %3822 = vmatpush2.msra.mxu0 0.0
        %3823 = vmatprep.subr.mxu0 0.0
        %3824 = vmatpush2.msra.mxu0 0.0
        %3825 = vmatprep.subr.mxu0 0.0
        %3826 = vmatpush2.msra.mxu0 0.0
        %3827 = vmatprep.subr.mxu0 0.0
        %3828 = vmatpush2.msra.mxu0 0.0
        %3829 = vmatprep.subr.mxu0 0.0
        %3830 = vmatpush2.msra.mxu0 0.0
        %3831 = vmatprep.subr.mxu0 0.0
        %3832 = vmatpush2.msra.mxu0 0.0
        %3833 = vmatprep.mubr.f32.mxu0 0.0
        %3834 = vmatmul.mubr.f32.gmra.mxu0 %v3749
        %v3835 = vpop.f32.mrf.mxu0
        %v3836 = vadd.f32 0.0, %v3835
        %v3837 = vpop.f32.mrf.mxu0
        %3838 = vmatprep.mubr.f32.mxu0 0.0
        %3839 = vmatmul.mubr.f32.gmra.mxu0 %v3750
        %v3840 = vpop.f32.mrf.mxu0
        %v3841 = vadd.f32 0.0, %v3840
        %v3842 = vpop.f32.mrf.mxu0
        %3843 = vmatprep.mubr.f32.mxu0 0.0
        %3844 = vmatmul.mubr.f32.gmra.mxu0 %v3751
        %v3845 = vpop.f32.mrf.mxu0
        %v3846 = vadd.f32 0.0, %v3845
        %v3847 = vpop.f32.mrf.mxu0
        %3848 = vmatprep.mubr.f32.mxu0 0.0
        %3849 = vmatmul.mubr.f32.gmra.mxu0 %v3752
        %v3850 = vpop.f32.mrf.mxu0
        %v3851 = vadd.f32 0.0, %v3850
        %v3852 = vpop.f32.mrf.mxu0
        %3853 = vdwg.mxu0
        %3854 = vmatprep.subr.mxu0 0.0
        %3855 = vmatpush1.msra.mxu0 %v3748
        %3856 = vmatprep.subr.mxu0 0.0
        %3857 = vmatpush1.msra.mxu0 %v3747
        %3858 = vmatprep.subr.mxu0 0.0
        %3859 = vmatpush1.msra.mxu0 %v3746
        %3860 = vmatprep.subr.mxu0 0.0
        %3861 = vmatpush1.msra.mxu0 %v3745
        %3862 = vmatprep.subr.mxu0 0.0
        %3863 = vmatpush1.msra.mxu0 %v3744
        %3864 = vmatprep.subr.mxu0 0.0
        %3865 = vmatpush1.msra.mxu0 %v3743
        %3866 = vmatprep.subr.mxu0 0.0
        %3867 = vmatpush1.msra.mxu0 %v3742
        %3868 = vmatprep.subr.mxu0 0.0
        %3869 = vmatpush1.msra.mxu0 %v3741
        %3870 = vmatprep.subr.mxu0 0.0
        %3871 = vmatpush1.msra.mxu0 %v3740
        %3872 = vmatprep.subr.mxu0 0.0
        %3873 = vmatpush1.msra.mxu0 %v3739
        %3874 = vmatprep.subr.mxu0 0.0
        %3875 = vmatpush1.msra.mxu0 %v3738
        %3876 = vmatprep.subr.mxu0 0.0
        %3877 = vmatpush1.msra.mxu0 %v3737
        %3878 = vmatprep.subr.mxu0 0.0
        %3879 = vmatpush1.msra.mxu0 %v3736
        %3880 = vmatprep.subr.mxu0 0.0
        %3881 = vmatpush1.msra.mxu0 %v3735
        %3882 = vmatprep.subr.mxu0 0.0
        %3883 = vmatpush1.msra.mxu0 %v3734
        %3884 = vmatprep.subr.mxu0 0.0
        %3885 = vmatpush1.msra.mxu0 %v3733
        %3886 = vmatprep.subr.mxu0 0.0
        %3887 = vmatpush2.msra.mxu0 0.0
        %3888 = vmatprep.subr.mxu0 0.0
        %3889 = vmatpush2.msra.mxu0 0.0
        %3890 = vmatprep.subr.mxu0 0.0
        %3891 = vmatpush2.msra.mxu0 0.0
        %3892 = vmatprep.subr.mxu0 0.0
        %3893 = vmatpush2.msra.mxu0 0.0
        %3894 = vmatprep.subr.mxu0 0.0
        %3895 = vmatpush2.msra.mxu0 0.0
        %3896 = vmatprep.subr.mxu0 0.0
        %3897 = vmatpush2.msra.mxu0 0.0
        %3898 = vmatprep.subr.mxu0 0.0
        %3899 = vmatpush2.msra.mxu0 0.0
        %3900 = vmatprep.subr.mxu0 0.0
        %3901 = vmatpush2.msra.mxu0 0.0
        %3902 = vmatprep.subr.mxu0 0.0
        %3903 = vmatpush2.msra.mxu0 0.0
        %3904 = vmatprep.subr.mxu0 0.0
        %3905 = vmatpush2.msra.mxu0 0.0
        %3906 = vmatprep.subr.mxu0 0.0
        %3907 = vmatpush2.msra.mxu0 0.0
        %3908 = vmatprep.subr.mxu0 0.0
        %3909 = vmatpush2.msra.mxu0 0.0
        %3910 = vmatprep.subr.mxu0 0.0
        %3911 = vmatpush2.msra.mxu0 0.0
        %3912 = vmatprep.subr.mxu0 0.0
        %3913 = vmatpush2.msra.mxu0 0.0
        %3914 = vmatprep.subr.mxu0 0.0
        %3915 = vmatpush2.msra.mxu0 0.0
        %3916 = vmatprep.subr.mxu0 0.0
        %3917 = vmatpush2.msra.mxu0 0.0
        %3918 = vmatprep.mubr.f32.mxu0 0.0
        %3919 = vmatmul.mubr.f32.gmra.mxu0 %v3729
        %v3920 = vpop.f32.mrf.mxu0
        %v3921 = vadd.f32 %v3836, %v3920
        %v3922 = vpop.f32.mrf.mxu0
        %3923 = vmatprep.mubr.f32.mxu0 0.0
        %3924 = vmatmul.mubr.f32.gmra.mxu0 %v3730
        %v3925 = vpop.f32.mrf.mxu0
        %v3926 = vadd.f32 %v3841, %v3925
        %v3927 = vpop.f32.mrf.mxu0
        %3928 = vmatprep.mubr.f32.mxu0 0.0
        %3929 = vmatmul.mubr.f32.gmra.mxu0 %v3731
        %v3930 = vpop.f32.mrf.mxu0
        %v3931 = vadd.f32 %v3846, %v3930
        %v3932 = vpop.f32.mrf.mxu0
        %3933 = vmatprep.mubr.f32.mxu0 0.0
        %3934 = vmatmul.mubr.f32.gmra.mxu0 %v3732
        %v3935 = vpop.f32.mrf.mxu0
        %v3936 = vadd.f32 %v3851, %v3935
        %v3937 = vpop.f32.mrf.mxu0
        %3938 = vdwg.mxu0
        %v3939 = vld [vmem:[#allocation5 + $0x2] sm:$0xff]
        %v3940 = vld [vmem:[#allocation5 + $0xa] sm:$0xff]
        %v3941 = vld [vmem:[#allocation5 + $0x1a] sm:$0xff]
        %v3942 = vld [vmem:[#allocation5 + $0x22] sm:$0xff]
        %v3943 = vld [vmem:[#allocation10 + $0x10b0] sm:$0xff]
        %v3944 = vld [vmem:[#allocation10 + $0x10b8] sm:$0xff]
        %v3945 = vld [vmem:[#allocation10 + $0x10c0] sm:$0xff]
        %v3946 = vld [vmem:[#allocation10 + $0x10c8] sm:$0xff]
        %v3947 = vld [vmem:[#allocation10 + $0x10d0] sm:$0xff]
        %v3948 = vld [vmem:[#allocation10 + $0x10d8] sm:$0xff]
        %v3949 = vld [vmem:[#allocation10 + $0x10e0] sm:$0xff]
        %v3950 = vld [vmem:[#allocation10 + $0x10e8] sm:$0xff]
        %v3951 = vld [vmem:[#allocation10 + $0x10f0] sm:$0xff]
        %v3952 = vld [vmem:[#allocation10 + $0x10f8] sm:$0xff]
        %v3953 = vld [vmem:[#allocation10 + $0x1100] sm:$0xff]
        %v3954 = vld [vmem:[#allocation10 + $0x1108] sm:$0xff]
        %v3955 = vld [vmem:[#allocation10 + $0x1110] sm:$0xff]
        %v3956 = vld [vmem:[#allocation10 + $0x1118] sm:$0xff]
        %v3957 = vld [vmem:[#allocation10 + $0x1120] sm:$0xff]
        %v3958 = vld [vmem:[#allocation10 + $0x1128] sm:$0xff]
        %3959 = vmatprep.subr.mxu0 0.0
        %3960 = vmatpush1.msra.mxu0 %v3958
        %3961 = vmatprep.subr.mxu0 0.0
        %3962 = vmatpush1.msra.mxu0 %v3957
        %3963 = vmatprep.subr.mxu0 0.0
        %3964 = vmatpush1.msra.mxu0 %v3956
        %3965 = vmatprep.subr.mxu0 0.0
        %3966 = vmatpush1.msra.mxu0 %v3955
        %3967 = vmatprep.subr.mxu0 0.0
        %3968 = vmatpush1.msra.mxu0 %v3954
        %3969 = vmatprep.subr.mxu0 0.0
        %3970 = vmatpush1.msra.mxu0 %v3953
        %3971 = vmatprep.subr.mxu0 0.0
        %3972 = vmatpush1.msra.mxu0 %v3952
        %3973 = vmatprep.subr.mxu0 0.0
        %3974 = vmatpush1.msra.mxu0 %v3951
        %3975 = vmatprep.subr.mxu0 0.0
        %3976 = vmatpush1.msra.mxu0 %v3950
        %3977 = vmatprep.subr.mxu0 0.0
        %3978 = vmatpush1.msra.mxu0 %v3949
        %3979 = vmatprep.subr.mxu0 0.0
        %3980 = vmatpush1.msra.mxu0 %v3948
        %3981 = vmatprep.subr.mxu0 0.0
        %3982 = vmatpush1.msra.mxu0 %v3947
        %3983 = vmatprep.subr.mxu0 0.0
        %3984 = vmatpush1.msra.mxu0 %v3946
        %3985 = vmatprep.subr.mxu0 0.0
        %3986 = vmatpush1.msra.mxu0 %v3945
        %3987 = vmatprep.subr.mxu0 0.0
        %3988 = vmatpush1.msra.mxu0 %v3944
        %3989 = vmatprep.subr.mxu0 0.0
        %3990 = vmatpush1.msra.mxu0 %v3943
        %3991 = vmatprep.subr.mxu0 0.0
        %3992 = vmatpush2.msra.mxu0 0.0
        %3993 = vmatprep.subr.mxu0 0.0
        %3994 = vmatpush2.msra.mxu0 0.0
        %3995 = vmatprep.subr.mxu0 0.0
        %3996 = vmatpush2.msra.mxu0 0.0
        %3997 = vmatprep.subr.mxu0 0.0
        %3998 = vmatpush2.msra.mxu0 0.0
        %3999 = vmatprep.subr.mxu0 0.0
        %4000 = vmatpush2.msra.mxu0 0.0
        %4001 = vmatprep.subr.mxu0 0.0
        %4002 = vmatpush2.msra.mxu0 0.0
        %4003 = vmatprep.subr.mxu0 0.0
        %4004 = vmatpush2.msra.mxu0 0.0
        %4005 = vmatprep.subr.mxu0 0.0
        %4006 = vmatpush2.msra.mxu0 0.0
        %4007 = vmatprep.subr.mxu0 0.0
        %4008 = vmatpush2.msra.mxu0 0.0
        %4009 = vmatprep.subr.mxu0 0.0
        %4010 = vmatpush2.msra.mxu0 0.0
        %4011 = vmatprep.subr.mxu0 0.0
        %4012 = vmatpush2.msra.mxu0 0.0
        %4013 = vmatprep.subr.mxu0 0.0
        %4014 = vmatpush2.msra.mxu0 0.0
        %4015 = vmatprep.subr.mxu0 0.0
        %4016 = vmatpush2.msra.mxu0 0.0
        %4017 = vmatprep.subr.mxu0 0.0
        %4018 = vmatpush2.msra.mxu0 0.0
        %4019 = vmatprep.subr.mxu0 0.0
        %4020 = vmatpush2.msra.mxu0 0.0
        %4021 = vmatprep.subr.mxu0 0.0
        %4022 = vmatpush2.msra.mxu0 0.0
        %4023 = vmatprep.mubr.f32.mxu0 0.0
        %4024 = vmatmul.mubr.f32.gmra.mxu0 %v3939
        %v4025 = vpop.f32.mrf.mxu0
        %v4026 = vadd.f32 0.0, %v4025
        %v4027 = vpop.f32.mrf.mxu0
        %4028 = vmatprep.mubr.f32.mxu0 0.0
        %4029 = vmatmul.mubr.f32.gmra.mxu0 %v3940
        %v4030 = vpop.f32.mrf.mxu0
        %v4031 = vadd.f32 0.0, %v4030
        %v4032 = vpop.f32.mrf.mxu0
        %4033 = vmatprep.mubr.f32.mxu0 0.0
        %4034 = vmatmul.mubr.f32.gmra.mxu0 %v3941
        %v4035 = vpop.f32.mrf.mxu0
        %v4036 = vadd.f32 0.0, %v4035
        %v4037 = vpop.f32.mrf.mxu0
        %4038 = vmatprep.mubr.f32.mxu0 0.0
        %4039 = vmatmul.mubr.f32.gmra.mxu0 %v3942
        %v4040 = vpop.f32.mrf.mxu0
        %v4041 = vadd.f32 0.0, %v4040
        %v4042 = vpop.f32.mrf.mxu0
        %4043 = vdwg.mxu0
        %v4044 = vadd.f32 %v3921, %v4026
        %v4045 = vadd.f32 %v3926, %v4031
        %v4046 = vadd.f32 %v3931, %v4036
        %v4047 = vadd.f32 %v3936, %v4041
        %v4048 = vadd.f32 %v3725, %v4044
        %v4049 = vadd.f32 %v3726, %v4045
        %v4050 = vadd.f32 %v3727, %v4046
        %v4051 = vadd.f32 %v3728, %v4047
        %v4052 = vmax.f32 %v4048, 0.0
        %v4053 = vmax.f32 %v4049, 0.0
        %v4054 = vmax.f32 %v4050, 0.0
        %v4055 = vmax.f32 %v4051, 0.0
        %4056 = vst [vmem:[#allocation2 + $0x1] sm:$0xff] %v4052
        %4057 = vst [vmem:[#allocation2 + $0x9] sm:$0xff] %v4053
        %4058 = vst [vmem:[#allocation2 + $0x19] sm:$0xff] %v4054
        %4059 = vst [vmem:[#allocation2 + $0x21] sm:$0xff] %v4055
        %v4060 = vld [vmem:[#allocation2] sm:$0xff]
        %v4061 = vld [vmem:[#allocation2 + $0x8] sm:$0xff]
        %v4062 = vld [vmem:[#allocation2 + $0x18] sm:$0xff]
        %v4063 = vld [vmem:[#allocation2 + $0x20] sm:$0xff]
        %v4064 = vld [vmem:[#allocation10 + $0x1130] sm:$0xff]
        %v4065 = vld [vmem:[#allocation10 + $0x1138] sm:$0xff]
        %v4066 = vld [vmem:[#allocation10 + $0x1140] sm:$0xff]
        %v4067 = vld [vmem:[#allocation10 + $0x1148] sm:$0xff]
        %v4068 = vld [vmem:[#allocation10 + $0x1150] sm:$0xff]
        %v4069 = vld [vmem:[#allocation10 + $0x1158] sm:$0xff]
        %v4070 = vld [vmem:[#allocation10 + $0x1160] sm:$0xff]
        %v4071 = vld [vmem:[#allocation10 + $0x1168] sm:$0xff]
        %v4072 = vld [vmem:[#allocation10 + $0x1170] sm:$0xff]
        %v4073 = vld [vmem:[#allocation10 + $0x1178] sm:$0xff]
        %v4074 = vld [vmem:[#allocation10 + $0x1180] sm:$0xff]
        %v4075 = vld [vmem:[#allocation10 + $0x1188] sm:$0xff]
        %v4076 = vld [vmem:[#allocation10 + $0x1190] sm:$0xff]
        %v4077 = vld [vmem:[#allocation10 + $0x1198] sm:$0xff]
        %v4078 = vld [vmem:[#allocation10 + $0x11a0] sm:$0xff]
        %v4079 = vld [vmem:[#allocation10 + $0x11a8] sm:$0xff]
        %v4080 = vld [vmem:[#allocation2 + $0x1] sm:$0xff]
        %v4081 = vld [vmem:[#allocation2 + $0x9] sm:$0xff]
        %v4082 = vld [vmem:[#allocation2 + $0x19] sm:$0xff]
        %v4083 = vld [vmem:[#allocation2 + $0x21] sm:$0xff]
        %v4084 = vld [vmem:[#allocation10 + $0x11b0] sm:$0xff]
        %v4085 = vld [vmem:[#allocation10 + $0x11b8] sm:$0xff]
        %v4086 = vld [vmem:[#allocation10 + $0x11c0] sm:$0xff]
        %v4087 = vld [vmem:[#allocation10 + $0x11c8] sm:$0xff]
        %v4088 = vld [vmem:[#allocation10 + $0x11d0] sm:$0xff]
        %v4089 = vld [vmem:[#allocation10 + $0x11d8] sm:$0xff]
        %v4090 = vld [vmem:[#allocation10 + $0x11e0] sm:$0xff]
        %v4091 = vld [vmem:[#allocation10 + $0x11e8] sm:$0xff]
        %v4092 = vld [vmem:[#allocation10 + $0x11f0] sm:$0xff]
        %v4093 = vld [vmem:[#allocation10 + $0x11f8] sm:$0xff]
        %v4094 = vld [vmem:[#allocation10 + $0x1200] sm:$0xff]
        %v4095 = vld [vmem:[#allocation10 + $0x1208] sm:$0xff]
        %v4096 = vld [vmem:[#allocation10 + $0x1210] sm:$0xff]
        %v4097 = vld [vmem:[#allocation10 + $0x1218] sm:$0xff]
        %v4098 = vld [vmem:[#allocation10 + $0x1220] sm:$0xff]
        %v4099 = vld [vmem:[#allocation10 + $0x1228] sm:$0xff]
        %4100 = vmatprep.subr.mxu0 0.0
        %4101 = vmatpush1.msra.mxu0 %v4099
        %4102 = vmatprep.subr.mxu0 0.0
        %4103 = vmatpush1.msra.mxu0 %v4098
        %4104 = vmatprep.subr.mxu0 0.0
        %4105 = vmatpush1.msra.mxu0 %v4097
        %4106 = vmatprep.subr.mxu0 0.0
        %4107 = vmatpush1.msra.mxu0 %v4096
        %4108 = vmatprep.subr.mxu0 0.0
        %4109 = vmatpush1.msra.mxu0 %v4095
        %4110 = vmatprep.subr.mxu0 0.0
        %4111 = vmatpush1.msra.mxu0 %v4094
        %4112 = vmatprep.subr.mxu0 0.0
        %4113 = vmatpush1.msra.mxu0 %v4093
        %4114 = vmatprep.subr.mxu0 0.0
        %4115 = vmatpush1.msra.mxu0 %v4092
        %4116 = vmatprep.subr.mxu0 0.0
        %4117 = vmatpush1.msra.mxu0 %v4091
        %4118 = vmatprep.subr.mxu0 0.0
        %4119 = vmatpush1.msra.mxu0 %v4090
        %4120 = vmatprep.subr.mxu0 0.0
        %4121 = vmatpush1.msra.mxu0 %v4089
        %4122 = vmatprep.subr.mxu0 0.0
        %4123 = vmatpush1.msra.mxu0 %v4088
        %4124 = vmatprep.subr.mxu0 0.0
        %4125 = vmatpush1.msra.mxu0 %v4087
        %4126 = vmatprep.subr.mxu0 0.0
        %4127 = vmatpush1.msra.mxu0 %v4086
        %4128 = vmatprep.subr.mxu0 0.0
        %4129 = vmatpush1.msra.mxu0 %v4085
        %4130 = vmatprep.subr.mxu0 0.0
        %4131 = vmatpush1.msra.mxu0 %v4084
        %4132 = vmatprep.subr.mxu0 0.0
        %4133 = vmatpush2.msra.mxu0 0.0
        %4134 = vmatprep.subr.mxu0 0.0
        %4135 = vmatpush2.msra.mxu0 0.0
        %4136 = vmatprep.subr.mxu0 0.0
        %4137 = vmatpush2.msra.mxu0 0.0
        %4138 = vmatprep.subr.mxu0 0.0
        %4139 = vmatpush2.msra.mxu0 0.0
        %4140 = vmatprep.subr.mxu0 0.0
        %4141 = vmatpush2.msra.mxu0 0.0
        %4142 = vmatprep.subr.mxu0 0.0
        %4143 = vmatpush2.msra.mxu0 0.0
        %4144 = vmatprep.subr.mxu0 0.0
        %4145 = vmatpush2.msra.mxu0 0.0
        %4146 = vmatprep.subr.mxu0 0.0
        %4147 = vmatpush2.msra.mxu0 0.0
        %4148 = vmatprep.subr.mxu0 0.0
        %4149 = vmatpush2.msra.mxu0 0.0
        %4150 = vmatprep.subr.mxu0 0.0
        %4151 = vmatpush2.msra.mxu0 0.0
        %4152 = vmatprep.subr.mxu0 0.0
        %4153 = vmatpush2.msra.mxu0 0.0
        %4154 = vmatprep.subr.mxu0 0.0
        %4155 = vmatpush2.msra.mxu0 0.0
        %4156 = vmatprep.subr.mxu0 0.0
        %4157 = vmatpush2.msra.mxu0 0.0
        %4158 = vmatprep.subr.mxu0 0.0
        %4159 = vmatpush2.msra.mxu0 0.0
        %4160 = vmatprep.subr.mxu0 0.0
        %4161 = vmatpush2.msra.mxu0 0.0
        %4162 = vmatprep.subr.mxu0 0.0
        %4163 = vmatpush2.msra.mxu0 0.0
        %4164 = vmatprep.mubr.f32.mxu0 0.0
        %4165 = vmatmul.mubr.f32.gmra.mxu0 %v4080
        %v4166 = vpop.f32.mrf.mxu0
        %v4167 = vadd.f32 0.0, %v4166
        %v4168 = vpop.f32.mrf.mxu0
        %4169 = vmatprep.mubr.f32.mxu0 0.0
        %4170 = vmatmul.mubr.f32.gmra.mxu0 %v4081
        %v4171 = vpop.f32.mrf.mxu0
        %v4172 = vadd.f32 0.0, %v4171
        %v4173 = vpop.f32.mrf.mxu0
        %4174 = vmatprep.mubr.f32.mxu0 0.0
        %4175 = vmatmul.mubr.f32.gmra.mxu0 %v4082
        %v4176 = vpop.f32.mrf.mxu0
        %v4177 = vadd.f32 0.0, %v4176
        %v4178 = vpop.f32.mrf.mxu0
        %4179 = vmatprep.mubr.f32.mxu0 0.0
        %4180 = vmatmul.mubr.f32.gmra.mxu0 %v4083
        %v4181 = vpop.f32.mrf.mxu0
        %v4182 = vadd.f32 0.0, %v4181
        %v4183 = vpop.f32.mrf.mxu0
        %4184 = vdwg.mxu0
        %4185 = vmatprep.subr.mxu0 0.0
        %4186 = vmatpush1.msra.mxu0 %v4079
        %4187 = vmatprep.subr.mxu0 0.0
        %4188 = vmatpush1.msra.mxu0 %v4078
        %4189 = vmatprep.subr.mxu0 0.0
        %4190 = vmatpush1.msra.mxu0 %v4077
        %4191 = vmatprep.subr.mxu0 0.0
        %4192 = vmatpush1.msra.mxu0 %v4076
        %4193 = vmatprep.subr.mxu0 0.0
        %4194 = vmatpush1.msra.mxu0 %v4075
        %4195 = vmatprep.subr.mxu0 0.0
        %4196 = vmatpush1.msra.mxu0 %v4074
        %4197 = vmatprep.subr.mxu0 0.0
        %4198 = vmatpush1.msra.mxu0 %v4073
        %4199 = vmatprep.subr.mxu0 0.0
        %4200 = vmatpush1.msra.mxu0 %v4072
        %4201 = vmatprep.subr.mxu0 0.0
        %4202 = vmatpush1.msra.mxu0 %v4071
        %4203 = vmatprep.subr.mxu0 0.0
        %4204 = vmatpush1.msra.mxu0 %v4070
        %4205 = vmatprep.subr.mxu0 0.0
        %4206 = vmatpush1.msra.mxu0 %v4069
        %4207 = vmatprep.subr.mxu0 0.0
        %4208 = vmatpush1.msra.mxu0 %v4068
        %4209 = vmatprep.subr.mxu0 0.0
        %4210 = vmatpush1.msra.mxu0 %v4067
        %4211 = vmatprep.subr.mxu0 0.0
        %4212 = vmatpush1.msra.mxu0 %v4066
        %4213 = vmatprep.subr.mxu0 0.0
        %4214 = vmatpush1.msra.mxu0 %v4065
        %4215 = vmatprep.subr.mxu0 0.0
        %4216 = vmatpush1.msra.mxu0 %v4064
        %4217 = vmatprep.subr.mxu0 0.0
        %4218 = vmatpush2.msra.mxu0 0.0
        %4219 = vmatprep.subr.mxu0 0.0
        %4220 = vmatpush2.msra.mxu0 0.0
        %4221 = vmatprep.subr.mxu0 0.0
        %4222 = vmatpush2.msra.mxu0 0.0
        %4223 = vmatprep.subr.mxu0 0.0
        %4224 = vmatpush2.msra.mxu0 0.0
        %4225 = vmatprep.subr.mxu0 0.0
        %4226 = vmatpush2.msra.mxu0 0.0
        %4227 = vmatprep.subr.mxu0 0.0
        %4228 = vmatpush2.msra.mxu0 0.0
        %4229 = vmatprep.subr.mxu0 0.0
        %4230 = vmatpush2.msra.mxu0 0.0
        %4231 = vmatprep.subr.mxu0 0.0
        %4232 = vmatpush2.msra.mxu0 0.0
        %4233 = vmatprep.subr.mxu0 0.0
        %4234 = vmatpush2.msra.mxu0 0.0
        %4235 = vmatprep.subr.mxu0 0.0
        %4236 = vmatpush2.msra.mxu0 0.0
        %4237 = vmatprep.subr.mxu0 0.0
        %4238 = vmatpush2.msra.mxu0 0.0
        %4239 = vmatprep.subr.mxu0 0.0
        %4240 = vmatpush2.msra.mxu0 0.0
        %4241 = vmatprep.subr.mxu0 0.0
        %4242 = vmatpush2.msra.mxu0 0.0
        %4243 = vmatprep.subr.mxu0 0.0
        %4244 = vmatpush2.msra.mxu0 0.0
        %4245 = vmatprep.subr.mxu0 0.0
        %4246 = vmatpush2.msra.mxu0 0.0
        %4247 = vmatprep.subr.mxu0 0.0
        %4248 = vmatpush2.msra.mxu0 0.0
        %4249 = vmatprep.mubr.f32.mxu0 0.0
        %4250 = vmatmul.mubr.f32.gmra.mxu0 %v4060
        %v4251 = vpop.f32.mrf.mxu0
        %v4252 = vadd.f32 %v4167, %v4251
        %v4253 = vpop.f32.mrf.mxu0
        %4254 = vmatprep.mubr.f32.mxu0 0.0
        %4255 = vmatmul.mubr.f32.gmra.mxu0 %v4061
        %v4256 = vpop.f32.mrf.mxu0
        %v4257 = vadd.f32 %v4172, %v4256
        %v4258 = vpop.f32.mrf.mxu0
        %4259 = vmatprep.mubr.f32.mxu0 0.0
        %4260 = vmatmul.mubr.f32.gmra.mxu0 %v4062
        %v4261 = vpop.f32.mrf.mxu0
        %v4262 = vadd.f32 %v4177, %v4261
        %v4263 = vpop.f32.mrf.mxu0
        %4264 = vmatprep.mubr.f32.mxu0 0.0
        %4265 = vmatmul.mubr.f32.gmra.mxu0 %v4063
        %v4266 = vpop.f32.mrf.mxu0
        %v4267 = vadd.f32 %v4182, %v4266
        %v4268 = vpop.f32.mrf.mxu0
        %4269 = vdwg.mxu0
        %v4270 = vld [vmem:[#allocation2 + $0x2] sm:$0xff]
        %v4271 = vld [vmem:[#allocation2 + $0xa] sm:$0xff]
        %v4272 = vld [vmem:[#allocation2 + $0x1a] sm:$0xff]
        %v4273 = vld [vmem:[#allocation2 + $0x22] sm:$0xff]
        %v4274 = vld [vmem:[#allocation10 + $0x1230] sm:$0xff]
        %v4275 = vld [vmem:[#allocation10 + $0x1238] sm:$0xff]
        %v4276 = vld [vmem:[#allocation10 + $0x1240] sm:$0xff]
        %v4277 = vld [vmem:[#allocation10 + $0x1248] sm:$0xff]
        %v4278 = vld [vmem:[#allocation10 + $0x1250] sm:$0xff]
        %v4279 = vld [vmem:[#allocation10 + $0x1258] sm:$0xff]
        %v4280 = vld [vmem:[#allocation10 + $0x1260] sm:$0xff]
        %v4281 = vld [vmem:[#allocation10 + $0x1268] sm:$0xff]
        %v4282 = vld [vmem:[#allocation10 + $0x1270] sm:$0xff]
        %v4283 = vld [vmem:[#allocation10 + $0x1278] sm:$0xff]
        %v4284 = vld [vmem:[#allocation10 + $0x1280] sm:$0xff]
        %v4285 = vld [vmem:[#allocation10 + $0x1288] sm:$0xff]
        %v4286 = vld [vmem:[#allocation10 + $0x1290] sm:$0xff]
        %v4287 = vld [vmem:[#allocation10 + $0x1298] sm:$0xff]
        %v4288 = vld [vmem:[#allocation10 + $0x12a0] sm:$0xff]
        %v4289 = vld [vmem:[#allocation10 + $0x12a8] sm:$0xff]
        %4290 = vmatprep.subr.mxu0 0.0
        %4291 = vmatpush1.msra.mxu0 %v4289
        %4292 = vmatprep.subr.mxu0 0.0
        %4293 = vmatpush1.msra.mxu0 %v4288
        %4294 = vmatprep.subr.mxu0 0.0
        %4295 = vmatpush1.msra.mxu0 %v4287
        %4296 = vmatprep.subr.mxu0 0.0
        %4297 = vmatpush1.msra.mxu0 %v4286
        %4298 = vmatprep.subr.mxu0 0.0
        %4299 = vmatpush1.msra.mxu0 %v4285
        %4300 = vmatprep.subr.mxu0 0.0
        %4301 = vmatpush1.msra.mxu0 %v4284
        %4302 = vmatprep.subr.mxu0 0.0
        %4303 = vmatpush1.msra.mxu0 %v4283
        %4304 = vmatprep.subr.mxu0 0.0
        %4305 = vmatpush1.msra.mxu0 %v4282
        %4306 = vmatprep.subr.mxu0 0.0
        %4307 = vmatpush1.msra.mxu0 %v4281
        %4308 = vmatprep.subr.mxu0 0.0
        %4309 = vmatpush1.msra.mxu0 %v4280
        %4310 = vmatprep.subr.mxu0 0.0
        %4311 = vmatpush1.msra.mxu0 %v4279
        %4312 = vmatprep.subr.mxu0 0.0
        %4313 = vmatpush1.msra.mxu0 %v4278
        %4314 = vmatprep.subr.mxu0 0.0
        %4315 = vmatpush1.msra.mxu0 %v4277
        %4316 = vmatprep.subr.mxu0 0.0
        %4317 = vmatpush1.msra.mxu0 %v4276
        %4318 = vmatprep.subr.mxu0 0.0
        %4319 = vmatpush1.msra.mxu0 %v4275
        %4320 = vmatprep.subr.mxu0 0.0
        %4321 = vmatpush1.msra.mxu0 %v4274
        %4322 = vmatprep.subr.mxu0 0.0
        %4323 = vmatpush2.msra.mxu0 0.0
        %4324 = vmatprep.subr.mxu0 0.0
        %4325 = vmatpush2.msra.mxu0 0.0
        %4326 = vmatprep.subr.mxu0 0.0
        %4327 = vmatpush2.msra.mxu0 0.0
        %4328 = vmatprep.subr.mxu0 0.0
        %4329 = vmatpush2.msra.mxu0 0.0
        %4330 = vmatprep.subr.mxu0 0.0
        %4331 = vmatpush2.msra.mxu0 0.0
        %4332 = vmatprep.subr.mxu0 0.0
        %4333 = vmatpush2.msra.mxu0 0.0
        %4334 = vmatprep.subr.mxu0 0.0
        %4335 = vmatpush2.msra.mxu0 0.0
        %4336 = vmatprep.subr.mxu0 0.0
        %4337 = vmatpush2.msra.mxu0 0.0
        %4338 = vmatprep.subr.mxu0 0.0
        %4339 = vmatpush2.msra.mxu0 0.0
        %4340 = vmatprep.subr.mxu0 0.0
        %4341 = vmatpush2.msra.mxu0 0.0
        %4342 = vmatprep.subr.mxu0 0.0
        %4343 = vmatpush2.msra.mxu0 0.0
        %4344 = vmatprep.subr.mxu0 0.0
        %4345 = vmatpush2.msra.mxu0 0.0
        %4346 = vmatprep.subr.mxu0 0.0
        %4347 = vmatpush2.msra.mxu0 0.0
        %4348 = vmatprep.subr.mxu0 0.0
        %4349 = vmatpush2.msra.mxu0 0.0
        %4350 = vmatprep.subr.mxu0 0.0
        %4351 = vmatpush2.msra.mxu0 0.0
        %4352 = vmatprep.subr.mxu0 0.0
        %4353 = vmatpush2.msra.mxu0 0.0
        %4354 = vmatprep.mubr.f32.mxu0 0.0
        %4355 = vmatmul.mubr.f32.gmra.mxu0 %v4270
        %v4356 = vpop.f32.mrf.mxu0
        %v4357 = vadd.f32 0.0, %v4356
        %v4358 = vpop.f32.mrf.mxu0
        %4359 = vmatprep.mubr.f32.mxu0 0.0
        %4360 = vmatmul.mubr.f32.gmra.mxu0 %v4271
        %v4361 = vpop.f32.mrf.mxu0
        %v4362 = vadd.f32 0.0, %v4361
        %v4363 = vpop.f32.mrf.mxu0
        %4364 = vmatprep.mubr.f32.mxu0 0.0
        %4365 = vmatmul.mubr.f32.gmra.mxu0 %v4272
        %v4366 = vpop.f32.mrf.mxu0
        %v4367 = vadd.f32 0.0, %v4366
        %v4368 = vpop.f32.mrf.mxu0
        %4369 = vmatprep.mubr.f32.mxu0 0.0
        %4370 = vmatmul.mubr.f32.gmra.mxu0 %v4273
        %v4371 = vpop.f32.mrf.mxu0
        %v4372 = vadd.f32 0.0, %v4371
        %v4373 = vpop.f32.mrf.mxu0
        %4374 = vdwg.mxu0
        %v4375 = vadd.f32 %v4252, %v4357
        %v4376 = vadd.f32 %v4257, %v4362
        %v4377 = vadd.f32 %v4262, %v4367
        %v4378 = vadd.f32 %v4267, %v4372
        %v4379 = vld [vmem:[#allocation10 + $0x143b] sm:$0x1]
        %v4380 = vlaneseq
        %v4381 = vshrl.u32 %v4380, 7
        %v4382 = vsub.s32 0, %v4381
        %v4383 = vrot.slane %v4379, %v4382
        %v4384 = vadd.f32 %v4375, %v4383
        %v4385 = vadd.f32 %v4376, %v4383
        %v4386 = vadd.f32 %v4377, %v4383
        %v4387 = vadd.f32 %v4378, %v4383
        %v4388 = vmax.f32 %v4384, 0.0
        %v4389 = vmax.f32 %v4385, 0.0
        %v4390 = vmax.f32 %v4386, 0.0
        %v4391 = vmax.f32 %v4387, 0.0
        %4392 = vst [vmem:[#allocation2 + $0x1] sm:$0xff] %v4388
        %4393 = vst [vmem:[#allocation2 + $0x9] sm:$0xff] %v4389
        %4394 = vst [vmem:[#allocation2 + $0x19] sm:$0xff] %v4390
        %4395 = vst [vmem:[#allocation2 + $0x21] sm:$0xff] %v4391
        %v4396 = vld [vmem:[#allocation2] sm:$0xff]
        %v4397 = vld [vmem:[#allocation2 + $0x8] sm:$0xff]
        %v4398 = vld [vmem:[#allocation2 + $0x18] sm:$0xff]
        %v4399 = vld [vmem:[#allocation2 + $0x20] sm:$0xff]
        %v4400 = vld [vmem:[#allocation10 + $0x12b0] sm:$0xff]
        %v4401 = vld [vmem:[#allocation10 + $0x12b8] sm:$0xff]
        %v4402 = vld [vmem:[#allocation10 + $0x12c0] sm:$0xff]
        %v4403 = vld [vmem:[#allocation10 + $0x12c8] sm:$0xff]
        %v4404 = vld [vmem:[#allocation10 + $0x12d0] sm:$0xff]
        %v4405 = vld [vmem:[#allocation10 + $0x12d8] sm:$0xff]
        %v4406 = vld [vmem:[#allocation10 + $0x12e0] sm:$0xff]
        %v4407 = vld [vmem:[#allocation10 + $0x12e8] sm:$0xff]
        %v4408 = vld [vmem:[#allocation10 + $0x12f0] sm:$0xff]
        %v4409 = vld [vmem:[#allocation10 + $0x12f8] sm:$0xff]
        %v4410 = vld [vmem:[#allocation10 + $0x1300] sm:$0xff]
        %v4411 = vld [vmem:[#allocation10 + $0x1308] sm:$0xff]
        %v4412 = vld [vmem:[#allocation10 + $0x1310] sm:$0xff]
        %v4413 = vld [vmem:[#allocation10 + $0x1318] sm:$0xff]
        %v4414 = vld [vmem:[#allocation10 + $0x1320] sm:$0xff]
        %v4415 = vld [vmem:[#allocation10 + $0x1328] sm:$0xff]
        %v4416 = vld [vmem:[#allocation2 + $0x1] sm:$0xff]
        %v4417 = vld [vmem:[#allocation2 + $0x9] sm:$0xff]
        %v4418 = vld [vmem:[#allocation2 + $0x19] sm:$0xff]
        %v4419 = vld [vmem:[#allocation2 + $0x21] sm:$0xff]
        %v4420 = vld [vmem:[#allocation10 + $0x1330] sm:$0xff]
        %v4421 = vld [vmem:[#allocation10 + $0x1338] sm:$0xff]
        %v4422 = vld [vmem:[#allocation10 + $0x1340] sm:$0xff]
        %v4423 = vld [vmem:[#allocation10 + $0x1348] sm:$0xff]
        %v4424 = vld [vmem:[#allocation10 + $0x1350] sm:$0xff]
        %v4425 = vld [vmem:[#allocation10 + $0x1358] sm:$0xff]
        %v4426 = vld [vmem:[#allocation10 + $0x1360] sm:$0xff]
        %v4427 = vld [vmem:[#allocation10 + $0x1368] sm:$0xff]
        %v4428 = vld [vmem:[#allocation10 + $0x1370] sm:$0xff]
        %v4429 = vld [vmem:[#allocation10 + $0x1378] sm:$0xff]
        %v4430 = vld [vmem:[#allocation10 + $0x1380] sm:$0xff]
        %v4431 = vld [vmem:[#allocation10 + $0x1388] sm:$0xff]
        %v4432 = vld [vmem:[#allocation10 + $0x1390] sm:$0xff]
        %v4433 = vld [vmem:[#allocation10 + $0x1398] sm:$0xff]
        %v4434 = vld [vmem:[#allocation10 + $0x13a0] sm:$0xff]
        %v4435 = vld [vmem:[#allocation10 + $0x13a8] sm:$0xff]
        %4436 = vmatprep.subr.mxu0 0.0
        %4437 = vmatpush1.msra.mxu0 %v4435
        %4438 = vmatprep.subr.mxu0 0.0
        %4439 = vmatpush1.msra.mxu0 %v4434
        %4440 = vmatprep.subr.mxu0 0.0
        %4441 = vmatpush1.msra.mxu0 %v4433
        %4442 = vmatprep.subr.mxu0 0.0
        %4443 = vmatpush1.msra.mxu0 %v4432
        %4444 = vmatprep.subr.mxu0 0.0
        %4445 = vmatpush1.msra.mxu0 %v4431
        %4446 = vmatprep.subr.mxu0 0.0
        %4447 = vmatpush1.msra.mxu0 %v4430
        %4448 = vmatprep.subr.mxu0 0.0
        %4449 = vmatpush1.msra.mxu0 %v4429
        %4450 = vmatprep.subr.mxu0 0.0
        %4451 = vmatpush1.msra.mxu0 %v4428
        %4452 = vmatprep.subr.mxu0 0.0
        %4453 = vmatpush1.msra.mxu0 %v4427
        %4454 = vmatprep.subr.mxu0 0.0
        %4455 = vmatpush1.msra.mxu0 %v4426
        %4456 = vmatprep.subr.mxu0 0.0
        %4457 = vmatpush1.msra.mxu0 %v4425
        %4458 = vmatprep.subr.mxu0 0.0
        %4459 = vmatpush1.msra.mxu0 %v4424
        %4460 = vmatprep.subr.mxu0 0.0
        %4461 = vmatpush1.msra.mxu0 %v4423
        %4462 = vmatprep.subr.mxu0 0.0
        %4463 = vmatpush1.msra.mxu0 %v4422
        %4464 = vmatprep.subr.mxu0 0.0
        %4465 = vmatpush1.msra.mxu0 %v4421
        %4466 = vmatprep.subr.mxu0 0.0
        %4467 = vmatpush1.msra.mxu0 %v4420
        %4468 = vmatprep.subr.mxu0 0.0
        %4469 = vmatpush2.msra.mxu0 0.0
        %4470 = vmatprep.subr.mxu0 0.0
        %4471 = vmatpush2.msra.mxu0 0.0
        %4472 = vmatprep.subr.mxu0 0.0
        %4473 = vmatpush2.msra.mxu0 0.0
        %4474 = vmatprep.subr.mxu0 0.0
        %4475 = vmatpush2.msra.mxu0 0.0
        %4476 = vmatprep.subr.mxu0 0.0
        %4477 = vmatpush2.msra.mxu0 0.0
        %4478 = vmatprep.subr.mxu0 0.0
        %4479 = vmatpush2.msra.mxu0 0.0
        %4480 = vmatprep.subr.mxu0 0.0
        %4481 = vmatpush2.msra.mxu0 0.0
        %4482 = vmatprep.subr.mxu0 0.0
        %4483 = vmatpush2.msra.mxu0 0.0
        %4484 = vmatprep.subr.mxu0 0.0
        %4485 = vmatpush2.msra.mxu0 0.0
        %4486 = vmatprep.subr.mxu0 0.0
        %4487 = vmatpush2.msra.mxu0 0.0
        %4488 = vmatprep.subr.mxu0 0.0
        %4489 = vmatpush2.msra.mxu0 0.0
        %4490 = vmatprep.subr.mxu0 0.0
        %4491 = vmatpush2.msra.mxu0 0.0
        %4492 = vmatprep.subr.mxu0 0.0
        %4493 = vmatpush2.msra.mxu0 0.0
        %4494 = vmatprep.subr.mxu0 0.0
        %4495 = vmatpush2.msra.mxu0 0.0
        %4496 = vmatprep.subr.mxu0 0.0
        %4497 = vmatpush2.msra.mxu0 0.0
        %4498 = vmatprep.subr.mxu0 0.0
        %4499 = vmatpush2.msra.mxu0 0.0
        %4500 = vmatprep.mubr.f32.mxu0 0.0
        %4501 = vmatmul.mubr.f32.gmra.mxu0 %v4416
        %v4502 = vpop.f32.mrf.mxu0
        %v4503 = vadd.f32 0.0, %v4502
        %v4504 = vpop.f32.mrf.mxu0
        %4505 = vmatprep.mubr.f32.mxu0 0.0
        %4506 = vmatmul.mubr.f32.gmra.mxu0 %v4417
        %v4507 = vpop.f32.mrf.mxu0
        %v4508 = vadd.f32 0.0, %v4507
        %v4509 = vpop.f32.mrf.mxu0
        %4510 = vmatprep.mubr.f32.mxu0 0.0
        %4511 = vmatmul.mubr.f32.gmra.mxu0 %v4418
        %v4512 = vpop.f32.mrf.mxu0
        %v4513 = vadd.f32 0.0, %v4512
        %v4514 = vpop.f32.mrf.mxu0
        %4515 = vmatprep.mubr.f32.mxu0 0.0
        %4516 = vmatmul.mubr.f32.gmra.mxu0 %v4419
        %v4517 = vpop.f32.mrf.mxu0
        %v4518 = vadd.f32 0.0, %v4517
        %v4519 = vpop.f32.mrf.mxu0
        %4520 = vdwg.mxu0
        %4521 = vmatprep.subr.mxu0 0.0
        %4522 = vmatpush1.msra.mxu0 %v4415
        %4523 = vmatprep.subr.mxu0 0.0
        %4524 = vmatpush1.msra.mxu0 %v4414
        %4525 = vmatprep.subr.mxu0 0.0
        %4526 = vmatpush1.msra.mxu0 %v4413
        %4527 = vmatprep.subr.mxu0 0.0
        %4528 = vmatpush1.msra.mxu0 %v4412
        %4529 = vmatprep.subr.mxu0 0.0
        %4530 = vmatpush1.msra.mxu0 %v4411
        %4531 = vmatprep.subr.mxu0 0.0
        %4532 = vmatpush1.msra.mxu0 %v4410
        %4533 = vmatprep.subr.mxu0 0.0
        %4534 = vmatpush1.msra.mxu0 %v4409
        %4535 = vmatprep.subr.mxu0 0.0
        %4536 = vmatpush1.msra.mxu0 %v4408
        %4537 = vmatprep.subr.mxu0 0.0
        %4538 = vmatpush1.msra.mxu0 %v4407
        %4539 = vmatprep.subr.mxu0 0.0
        %4540 = vmatpush1.msra.mxu0 %v4406
        %4541 = vmatprep.subr.mxu0 0.0
        %4542 = vmatpush1.msra.mxu0 %v4405
        %4543 = vmatprep.subr.mxu0 0.0
        %4544 = vmatpush1.msra.mxu0 %v4404
        %4545 = vmatprep.subr.mxu0 0.0
        %4546 = vmatpush1.msra.mxu0 %v4403
        %4547 = vmatprep.subr.mxu0 0.0
        %4548 = vmatpush1.msra.mxu0 %v4402
        %4549 = vmatprep.subr.mxu0 0.0
        %4550 = vmatpush1.msra.mxu0 %v4401
        %4551 = vmatprep.subr.mxu0 0.0
        %4552 = vmatpush1.msra.mxu0 %v4400
        %4553 = vmatprep.subr.mxu0 0.0
        %4554 = vmatpush2.msra.mxu0 0.0
        %4555 = vmatprep.subr.mxu0 0.0
        %4556 = vmatpush2.msra.mxu0 0.0
        %4557 = vmatprep.subr.mxu0 0.0
        %4558 = vmatpush2.msra.mxu0 0.0
        %4559 = vmatprep.subr.mxu0 0.0
        %4560 = vmatpush2.msra.mxu0 0.0
        %4561 = vmatprep.subr.mxu0 0.0
        %4562 = vmatpush2.msra.mxu0 0.0
        %4563 = vmatprep.subr.mxu0 0.0
        %4564 = vmatpush2.msra.mxu0 0.0
        %4565 = vmatprep.subr.mxu0 0.0
        %4566 = vmatpush2.msra.mxu0 0.0
        %4567 = vmatprep.subr.mxu0 0.0
        %4568 = vmatpush2.msra.mxu0 0.0
        %4569 = vmatprep.subr.mxu0 0.0
        %4570 = vmatpush2.msra.mxu0 0.0
        %4571 = vmatprep.subr.mxu0 0.0
        %4572 = vmatpush2.msra.mxu0 0.0
        %4573 = vmatprep.subr.mxu0 0.0
        %4574 = vmatpush2.msra.mxu0 0.0
        %4575 = vmatprep.subr.mxu0 0.0
        %4576 = vmatpush2.msra.mxu0 0.0
        %4577 = vmatprep.subr.mxu0 0.0
        %4578 = vmatpush2.msra.mxu0 0.0
        %4579 = vmatprep.subr.mxu0 0.0
        %4580 = vmatpush2.msra.mxu0 0.0
        %4581 = vmatprep.subr.mxu0 0.0
        %4582 = vmatpush2.msra.mxu0 0.0
        %4583 = vmatprep.subr.mxu0 0.0
        %4584 = vmatpush2.msra.mxu0 0.0
        %4585 = vmatprep.mubr.f32.mxu0 0.0
        %4586 = vmatmul.mubr.f32.gmra.mxu0 %v4396
        %v4587 = vpop.f32.mrf.mxu0
        %v4588 = vadd.f32 %v4503, %v4587
        %v4589 = vpop.f32.mrf.mxu0
        %4590 = vmatprep.mubr.f32.mxu0 0.0
        %4591 = vmatmul.mubr.f32.gmra.mxu0 %v4397
        %v4592 = vpop.f32.mrf.mxu0
        %v4593 = vadd.f32 %v4508, %v4592
        %v4594 = vpop.f32.mrf.mxu0
        %4595 = vmatprep.mubr.f32.mxu0 0.0
        %4596 = vmatmul.mubr.f32.gmra.mxu0 %v4398
        %v4597 = vpop.f32.mrf.mxu0
        %v4598 = vadd.f32 %v4513, %v4597
        %v4599 = vpop.f32.mrf.mxu0
        %4600 = vmatprep.mubr.f32.mxu0 0.0
        %4601 = vmatmul.mubr.f32.gmra.mxu0 %v4399
        %v4602 = vpop.f32.mrf.mxu0
        %v4603 = vadd.f32 %v4518, %v4602
        %v4604 = vpop.f32.mrf.mxu0
        %4605 = vdwg.mxu0
        %v4606 = vld [vmem:[#allocation2 + $0x2] sm:$0xff]
        %v4607 = vld [vmem:[#allocation2 + $0xa] sm:$0xff]
        %v4608 = vld [vmem:[#allocation2 + $0x1a] sm:$0xff]
        %v4609 = vld [vmem:[#allocation2 + $0x22] sm:$0xff]
        %v4610 = vld [vmem:[#allocation10 + $0x13b0] sm:$0xff]
        %v4611 = vld [vmem:[#allocation10 + $0x13b8] sm:$0xff]
        %v4612 = vld [vmem:[#allocation10 + $0x13c0] sm:$0xff]
        %v4613 = vld [vmem:[#allocation10 + $0x13c8] sm:$0xff]
        %v4614 = vld [vmem:[#allocation10 + $0x13d0] sm:$0xff]
        %v4615 = vld [vmem:[#allocation10 + $0x13d8] sm:$0xff]
        %v4616 = vld [vmem:[#allocation10 + $0x13e0] sm:$0xff]
        %v4617 = vld [vmem:[#allocation10 + $0x13e8] sm:$0xff]
        %v4618 = vld [vmem:[#allocation10 + $0x13f0] sm:$0xff]
        %v4619 = vld [vmem:[#allocation10 + $0x13f8] sm:$0xff]
        %v4620 = vld [vmem:[#allocation10 + $0x1400] sm:$0xff]
        %v4621 = vld [vmem:[#allocation10 + $0x1408] sm:$0xff]
        %v4622 = vld [vmem:[#allocation10 + $0x1410] sm:$0xff]
        %v4623 = vld [vmem:[#allocation10 + $0x1418] sm:$0xff]
        %v4624 = vld [vmem:[#allocation10 + $0x1420] sm:$0xff]
        %v4625 = vld [vmem:[#allocation10 + $0x1428] sm:$0xff]
        %4626 = vmatprep.subr.mxu0 0.0
        %4627 = vmatpush1.msra.mxu0 %v4625
        %4628 = vmatprep.subr.mxu0 0.0
        %4629 = vmatpush1.msra.mxu0 %v4624
        %4630 = vmatprep.subr.mxu0 0.0
        %4631 = vmatpush1.msra.mxu0 %v4623
        %4632 = vmatprep.subr.mxu0 0.0
        %4633 = vmatpush1.msra.mxu0 %v4622
        %4634 = vmatprep.subr.mxu0 0.0
        %4635 = vmatpush1.msra.mxu0 %v4621
        %4636 = vmatprep.subr.mxu0 0.0
        %4637 = vmatpush1.msra.mxu0 %v4620
        %4638 = vmatprep.subr.mxu0 0.0
        %4639 = vmatpush1.msra.mxu0 %v4619
        %4640 = vmatprep.subr.mxu0 0.0
        %4641 = vmatpush1.msra.mxu0 %v4618
        %4642 = vmatprep.subr.mxu0 0.0
        %4643 = vmatpush1.msra.mxu0 %v4617
        %4644 = vmatprep.subr.mxu0 0.0
        %4645 = vmatpush1.msra.mxu0 %v4616
        %4646 = vmatprep.subr.mxu0 0.0
        %4647 = vmatpush1.msra.mxu0 %v4615
        %4648 = vmatprep.subr.mxu0 0.0
        %4649 = vmatpush1.msra.mxu0 %v4614
        %4650 = vmatprep.subr.mxu0 0.0
        %4651 = vmatpush1.msra.mxu0 %v4613
        %4652 = vmatprep.subr.mxu0 0.0
        %4653 = vmatpush1.msra.mxu0 %v4612
        %4654 = vmatprep.subr.mxu0 0.0
        %4655 = vmatpush1.msra.mxu0 %v4611
        %4656 = vmatprep.subr.mxu0 0.0
        %4657 = vmatpush1.msra.mxu0 %v4610
        %4658 = vmatprep.subr.mxu0 0.0
        %4659 = vmatpush2.msra.mxu0 0.0
        %4660 = vmatprep.subr.mxu0 0.0
        %4661 = vmatpush2.msra.mxu0 0.0
        %4662 = vmatprep.subr.mxu0 0.0
        %4663 = vmatpush2.msra.mxu0 0.0
        %4664 = vmatprep.subr.mxu0 0.0
        %4665 = vmatpush2.msra.mxu0 0.0
        %4666 = vmatprep.subr.mxu0 0.0
        %4667 = vmatpush2.msra.mxu0 0.0
        %4668 = vmatprep.subr.mxu0 0.0
        %4669 = vmatpush2.msra.mxu0 0.0
        %4670 = vmatprep.subr.mxu0 0.0
        %4671 = vmatpush2.msra.mxu0 0.0
        %4672 = vmatprep.subr.mxu0 0.0
        %4673 = vmatpush2.msra.mxu0 0.0
        %4674 = vmatprep.subr.mxu0 0.0
        %4675 = vmatpush2.msra.mxu0 0.0
        %4676 = vmatprep.subr.mxu0 0.0
        %4677 = vmatpush2.msra.mxu0 0.0
        %4678 = vmatprep.subr.mxu0 0.0
        %4679 = vmatpush2.msra.mxu0 0.0
        %4680 = vmatprep.subr.mxu0 0.0
        %4681 = vmatpush2.msra.mxu0 0.0
        %4682 = vmatprep.subr.mxu0 0.0
        %4683 = vmatpush2.msra.mxu0 0.0
        %4684 = vmatprep.subr.mxu0 0.0
        %4685 = vmatpush2.msra.mxu0 0.0
        %4686 = vmatprep.subr.mxu0 0.0
        %4687 = vmatpush2.msra.mxu0 0.0
        %4688 = vmatprep.subr.mxu0 0.0
        %4689 = vmatpush2.msra.mxu0 0.0
        %4690 = vmatprep.mubr.f32.mxu0 0.0
        %4691 = vmatmul.mubr.f32.gmra.mxu0 %v4606
        %v4692 = vpop.f32.mrf.mxu0
        %v4693 = vadd.f32 0.0, %v4692
        %v4694 = vpop.f32.mrf.mxu0
        %4695 = vmatprep.mubr.f32.mxu0 0.0
        %4696 = vmatmul.mubr.f32.gmra.mxu0 %v4607
        %v4697 = vpop.f32.mrf.mxu0
        %v4698 = vadd.f32 0.0, %v4697
        %v4699 = vpop.f32.mrf.mxu0
        %4700 = vmatprep.mubr.f32.mxu0 0.0
        %4701 = vmatmul.mubr.f32.gmra.mxu0 %v4608
        %v4702 = vpop.f32.mrf.mxu0
        %v4703 = vadd.f32 0.0, %v4702
        %v4704 = vpop.f32.mrf.mxu0
        %4705 = vmatprep.mubr.f32.mxu0 0.0
        %4706 = vmatmul.mubr.f32.gmra.mxu0 %v4609
        %v4707 = vpop.f32.mrf.mxu0
        %v4708 = vadd.f32 0.0, %v4707
        %v4709 = vpop.f32.mrf.mxu0
        %4710 = vdwg.mxu0
        %v4711 = vadd.f32 %v4588, %v4693
        %v4712 = vadd.f32 %v4593, %v4698
        %v4713 = vadd.f32 %v4598, %v4703
        %v4714 = vadd.f32 %v4603, %v4708
        %v4715 = vld [vmem:[#allocation10 + $0x143c] sm:$0x1]
        %v4716 = vlaneseq
        %v4717 = vshrl.u32 %v4716, 7
        %v4718 = vsub.s32 0, %v4717
        %v4719 = vrot.slane %v4715, %v4718
        %v4720 = vadd.f32 %v4711, %v4719
        %v4721 = vadd.f32 %v4712, %v4719
        %v4722 = vadd.f32 %v4713, %v4719
        %v4723 = vadd.f32 %v4714, %v4719
        %v4724 = vxor.u32 %v4720, 2147483648
        %v4725 = vxor.u32 %v4721, 2147483648
        %v4726 = vxor.u32 %v4722, 2147483648
        %v4727 = vxor.u32 %v4723, 2147483648
        %v4728 = vmul.f32 %v4724, 1.442695
        %v4729 = vpow.pop %v4728
        %v4730 = vmul.f32 %v4725, 1.442695
        %v4731 = vpow.pop %v4730
        %v4732 = vmul.f32 %v4726, 1.442695
        %v4733 = vpow.pop %v4732
        %v4734 = vmul.f32 %v4727, 1.442695
        %v4735 = vpow.pop %v4734
        %v4736 = vadd.f32 %v4729, 1.0
        %v4737 = vadd.f32 %v4731, 1.0
        %v4738 = vadd.f32 %v4733, 1.0
        %v4739 = vadd.f32 %v4735, 1.0
        %v4740 = vrcp.pop %v4736
        %v4741 = vmul.f32 1.0, %v4740
        %v4742 = vrcp.pop %v4737
        %v4743 = vmul.f32 1.0, %v4742
        %v4744 = vrcp.pop %v4738
        %v4745 = vmul.f32 1.0, %v4744
        %v4746 = vrcp.pop %v4739
        %v4747 = vmul.f32 1.0, %v4746
        %4748 = vst.msk [vmem:[%s177] sm:$0xff] %vm204, %v4741
        %4749 = vst.msk [vmem:[%s177 + $0x8] sm:$0xff] %vm204, %v4743
        %4750 = vst.msk [vmem:[%s177 + $0x10] sm:$0xff] %vm204, %v4745
        %4751 = vst.msk [vmem:[%s177 + $0x18] sm:$0xff] %vm204, %v4747
        %s4752 = sand.u32 %s75, 1
        %s4753 = scalar_lea.sflag [#allocation9], %s4752
        %s4754 = sand.u32 %s75, 1
        %s4755 = smul.addr %s4754, 32
        %s4756 = scalar_lea.vmem [#allocation12], %s4755
        // Predicated region
        $region37: #{unet_forward.1} parent=27 // pred_check
          %p4757 = pneg %p85
        $region38: #{unet_forward.1} parent=27 // pred_check_branch
          %4759 = sbr.rel (%p4757) target = $region40
        $region39: #{unet_forward.1} parent=27 // pred_region
          %s4760 = smul.u32 2, %s20
          %s4762 = ssub.s32 512, 512
          %4763 = vsyncadd %s4753, %s4762
          %s4764 = smul.addr %s4760, 2
          %s4765 = smul.addr %s4764, 128
          %s4766 = scalar_lea.hbm %s2, %s4765
          %s4767 = sshll.u32 %s4756, 4
          %s4768 = int_to_ptr.vmem [resolvable:$true] %s4767
          %4773 = dma.vmem_to_hbm [thread:$0]  %s4768, 512, %s4766, %s4753, 128, 128, 8
        $region40: #{unet_forward.1} parent=27 // pred_fallthru
          _
      $region28: #{unet_forward.1} parent=5 // pred_fallthru
        _
      %p4774 = scmp.le.s32.totalorder 2, %s15
      // Predicated region
      $region41: #{unet_forward.1} parent=5 // pred_check
        %p4775 = pneg %p4774
      $region42: #{unet_forward.1} parent=5 // pred_check_branch
        %4777 = sbr.rel (%p4775) target = $region44
      $region43: #{unet_forward.1} parent=5 // pred_region
        %s4778 = ssub.s32 %s15, 2
        // Predicated region
        $region45: #{unet_forward.1} parent=43 // pred_check
          %p4779 = pneg %p91
        $region46: #{unet_forward.1} parent=43 // pred_check_branch
          %4781 = sbr.rel (%p4779) target = $region48
        $region47: #{unet_forward.1} parent=43 // pred_region
          %s4782 = sand.u32 %s76, 1
          %s4783 = scalar_lea.sflag [#allocation9], %s4782
          %s4784 = sand.u32 %s76, 1
          %s4785 = smul.addr %s4784, 32
          %s4786 = scalar_lea.vmem [#allocation12], %s4785
          %4787 = dma.done %s4783, 512
        $region48: #{unet_forward.1} parent=43 // pred_fallthru
          _
      $region44: #{unet_forward.1} parent=5 // pred_fallthru
        _
    $region6: #{unet_forward.1} parent=1 // loop_footer
      %s19 = sadd.s32 1, %s15
    $region7: #{unet_forward.1} parent=1 // loop_footer_branch
      %14 = sbr.rel target = $region3
    $region8: #{unet_forward.1} parent=1 // loop_exit
      _
    %4788 = vsyncpa [#allocation8], 1
    %s4789 = scalar_lea.sflag [#allocation8], 1
    %4790 = vsyncpa %s4789, 1
    %4791 = vsyncpa [#allocation11], 1
    %4792 = vsyncpa [#allocation9], 1
    %s4793 = scalar_lea.sflag [#allocation9], 1
    %4794 = vsyncpa %s4793, 1

</llo_original>
